<compile_context>
chip_gen: v5e
topology: v5e:2x2
jax: 0.10.0
libtpu: 0.0.40
codegen_flags: <defaults>
</compile_context>

<pallas_src>
from functools import partial

import jax
import jax.numpy as jnp
from jax.experimental import pallas as pl
from jax.experimental.pallas import tpu as pltpu


def _round_up(a, m):
    return (a + m - 1) // m * m


def _pick_pad(d, cands):
    """Padded size for dim d: smallest 128-multiple, or a larger tile's
    multiple if the extra padding stays within ~12.5%."""
    base = _round_up(d, cands[0])
    best = base
    for c in cands[1:]:
        p = _round_up(d, c)
        if p <= base + base // 8:
            best = p
    return best


def _tile_from_padded(dp, cands):
    """Largest candidate tile that exactly divides the (pre-)padded dim."""
    t = cands[0]
    for c in cands:
        if dp % c == 0:
            t = c
    return t


# ----------------------------------------------------------------------------
# Pallas kernel: tiled matmul, bias folded into accumulator init, optional ReLU
# ----------------------------------------------------------------------------
def _matmul_bias_act_kernel(x_ref, w_ref, b_ref, o_ref, acc_ref, *, relu):
    k = pl.program_id(2)

    @pl.when(k == 0)
    def _():
        # bias block is resident (index_map ignores k) -> free init
        acc_ref[...] = jnp.broadcast_to(b_ref[...], acc_ref.shape)

    acc_ref[...] += jnp.dot(
        x_ref[...], w_ref[...], preferred_element_type=jnp.float32
    )

    @pl.when(k == pl.num_programs(2) - 1)
    def _():
        y = acc_ref[...]
        if relu:
            y = jnp.maximum(y, 0.0)
        o_ref[...] = y.astype(o_ref.dtype)


def matmul_bias_act(x, wp, bp, n_out, relu=False, out_dtype=jnp.bfloat16):
    """x: (M, K) activations; wp: (Kp, Np) pre-padded bf16 weights;
    bp: (1, Np) f32 bias.  Returns (M, n_out)."""
    M, K = x.shape
    Kp, Np = wp.shape

    TM = min(128, _round_up(M, 16))          # bf16 sublane packing = 16
    TK = _tile_from_padded(Kp, (128, 256, 512))
    TN = _tile_from_padded(Np, (128, 256))
    Mp = _round_up(M, TM)

    xp = x.astype(jnp.bfloat16)
    if (Mp, Kp) != (M, K):
        xp = jnp.pad(xp, ((0, Mp - M), (0, Kp - K)))

    grid = (Mp // TM, Np // TN, Kp // TK)
    out = pl.pallas_call(
        partial(_matmul_bias_act_kernel, relu=relu),
        out_shape=jax.ShapeDtypeStruct((Mp, Np), out_dtype),
        grid_spec=pltpu.PrefetchScalarGridSpec(
            num_scalar_prefetch=0,
            grid=grid,
            in_specs=[
                pl.BlockSpec((TM, TK), lambda i, j, k: (i, k)),
                pl.BlockSpec((TK, TN), lambda i, j, k: (k, j)),
                pl.BlockSpec((1, TN), lambda i, j, k: (0, j)),
            ],
            out_specs=pl.BlockSpec((TM, TN), lambda i, j, k: (i, j)),
            scratch_shapes=[pltpu.VMEM((TM, TN), jnp.float32)],
        ),
        compiler_params=pltpu.CompilerParams(
            dimension_semantics=("parallel", "parallel", "arbitrary")
        ),
    )(xp, wp, bp)
    return out[:M, :n_out]


# ----------------------------------------------------------------------------
# Pallas kernel: fused DHA aggregation (1x1 conv + ReLU) + heads (1x1 conv)
# ----------------------------------------------------------------------------
def _agg_head_kernel(x_ref, wa_ref, ba_ref, wh_ref, bh_ref, o_ref):
    y = jnp.dot(x_ref[...], wa_ref[...], preferred_element_type=jnp.float32)
    y = jnp.maximum(y + ba_ref[...], 0.0)
    h = jnp.dot(y.astype(jnp.bfloat16), wh_ref[...],
                preferred_element_type=jnp.float32)
    o_ref[...] = (h + bh_ref[...]).astype(o_ref.dtype)


def agg_head(cat, p):
    """cat: (M, 96) fused concat features.  Returns (M, 4) f32:
    channel 0 = head_1 output, channels 1:4 = head_2 output."""
    M, K = cat.shape
    Kp, Na = p["w_agg"].shape     # (128, 128)
    Nh = p["w_head"].shape[1]     # 128

    TM = min(128, _round_up(M, 16))
    Mp = _round_up(M, TM)
    xp = jnp.pad(cat.astype(jnp.bfloat16), ((0, Mp - M), (0, Kp - K)))

    out = pl.pallas_call(
        _agg_head_kernel,
        out_shape=jax.ShapeDtypeStruct((Mp, Nh), jnp.float32),
        grid_spec=pltpu.PrefetchScalarGridSpec(
            num_scalar_prefetch=0,
            grid=(Mp // TM,),
            in_specs=[
                pl.BlockSpec((TM, Kp), lambda i: (i, 0)),
                pl.BlockSpec((Kp, Na), lambda i: (0, 0)),
                pl.BlockSpec((1, Na), lambda i: (0, 0)),
                pl.BlockSpec((Na, Nh), lambda i: (0, 0)),
                pl.BlockSpec((1, Nh), lambda i: (0, 0)),
            ],
            out_specs=pl.BlockSpec((TM, Nh), lambda i: (i, 0)),
        ),
        compiler_params=pltpu.CompilerParams(
            dimension_semantics=("parallel",)
        ),
    )(xp, p["w_agg"], p["b_agg"], p["w_head"], p["b_head"])
    return out[:M, :4]


# ----------------------------------------------------------------------------
# Convolution = im2col (glue) + Pallas matmul (hot path)
# ----------------------------------------------------------------------------
# TODO(synk): for large spatial sizes the 9-slice im2col re-materializes 9x the
# activation bytes for 3x3 convs; folding the taps into the Pallas grid would
# remove that, but is omitted here (strided-window index_map restructure).
def _im2col(x, k, stride, pad):
    """x: NHWC -> (N*Ho*Wo, k*k*C), plus output spatial dims."""
    N, H, W, C = x.shape
    if k == 1 and stride == 1 and pad == 0:
        return x.reshape(N * H * W, C), (N, H, W)
    xp = jnp.pad(x, ((0, 0), (pad, pad), (pad, pad), (0, 0)))
    Ho = (H + 2 * pad - k) // stride + 1
    Wo = (W + 2 * pad - k) // stride + 1
    cols = []
    for i in range(k):
        for j in range(k):
            cols.append(
                xp[:, i : i + (Ho - 1) * stride + 1 : stride,
                      j : j + (Wo - 1) * stride + 1 : stride, :]
            )
    patches = jnp.concatenate(cols, axis=-1)  # (N, Ho, Wo, k*k*C)
    return patches.reshape(N * Ho * Wo, k * k * C), (N, Ho, Wo)


def conv2d(x, layer, *, cout, k=1, stride=1, pad=0, relu=False,
           out_dtype=jnp.bfloat16):
    cols, (n, ho, wo) = _im2col(x, k, stride, pad)
    y = matmul_bias_act(cols, layer["w"], layer["b"], cout,
                        relu=relu, out_dtype=out_dtype)
    return y.reshape(n, ho, wo, cout)


def upsample_nearest(x, s):
    # NHWC nearest-neighbor upsample by integer factor s (glue, not hot path).
    return jnp.repeat(jnp.repeat(x, s, axis=1), s, axis=2)


# ----------------------------------------------------------------------------
# Parameter construction (deterministic, synthetic), pre-padded + bf16 once
# ----------------------------------------------------------------------------
def _raw_conv(key, k, cin, cout, scale=0.05):
    kw, kb = jax.random.split(key)
    w = jax.random.normal(kw, (k * k * cin, cout), jnp.float32) * scale
    b = jax.random.normal(kb, (cout,), jnp.float32) * scale
    return w, b


def _pad_conv(w, b):
    K, N = w.shape
    Kp = _pick_pad(K, (128, 256, 512))
    Np = _pick_pad(N, (128, 256))
    wp = jnp.pad(w, ((0, Kp - K), (0, Np - N))).astype(jnp.bfloat16)
    bp = jnp.pad(b, (0, Np - N)).astype(jnp.float32).reshape(1, Np)
    return {"w": wp, "b": bp}


def make_params(key):
    keys = jax.random.split(key, 12)
    p = {}
    # Simplified HarDNet-like encoder producing x3(320,/8) x4(640,/16) x5(1024,/32)
    # TODO(synk): hardnet() internals not provided; channel/stride contract kept.
    p["enc1"] = _pad_conv(*_raw_conv(keys[0], 3, 3, 32))
    p["enc2"] = _pad_conv(*_raw_conv(keys[1], 3, 32, 64))
    p["enc3"] = _pad_conv(*_raw_conv(keys[2], 3, 64, 320))
    p["enc4"] = _pad_conv(*_raw_conv(keys[3], 3, 320, 640))
    p["enc5"] = _pad_conv(*_raw_conv(keys[4], 3, 640, 1024))
    # RFB blocks reduce to 32 channels.
    # TODO(synk): RFBblock dilated-branch internals not provided; 1x1 reduction used.
    p["rfb3"] = _pad_conv(*_raw_conv(keys[5], 1, 320, 32))
    p["rfb4"] = _pad_conv(*_raw_conv(keys[6], 1, 640, 32))
    p["rfb5"] = _pad_conv(*_raw_conv(keys[7], 1, 1024, 32))

    # Fused DHA aggregation (agg1 || agg2 -> 64 out channels) and fused heads
    # (block-diagonal 64 -> 4: col 0 = head_1(agg1), cols 1:4 = head_2(agg2)).
    # TODO(synk): DHA / Head internals not provided; upsample+concat+1x1 used.
    wa1, ba1 = _raw_conv(keys[8], 1, 96, 32)
    wa2, ba2 = _raw_conv(keys[9], 1, 96, 32)
    wh1, bh1 = _raw_conv(keys[10], 1, 32, 1)
    wh2, bh2 = _raw_conv(keys[11], 1, 32, 3)
    w_agg = jnp.concatenate([wa1, wa2], axis=1)                # (96, 64)
    b_agg = jnp.concatenate([ba1, ba2], axis=0)                # (64,)
    w_head = jnp.zeros((64, 4), jnp.float32)
    w_head = w_head.at[:32, 0:1].set(wh1).at[32:, 1:4].set(wh2)
    b_head = jnp.concatenate([bh1, bh2], axis=0)               # (4,)
    p["agg_head"] = {
        "w_agg": jnp.pad(w_agg, ((0, 32), (0, 64))).astype(jnp.bfloat16),
        "b_agg": jnp.pad(b_agg, (0, 64)).reshape(1, 128).astype(jnp.float32),
        "w_head": jnp.pad(w_head, ((0, 64), (0, 124))).astype(jnp.bfloat16),
        "b_head": jnp.pad(b_head, (0, 124)).reshape(1, 128).astype(jnp.float32),
    }
    return p


# ----------------------------------------------------------------------------
# BlazeNeo forward (auxiliary=True, aggregation='DHA')
# ----------------------------------------------------------------------------
@jax.jit
def blazeneo_forward(x_nchw, params):
    x = jnp.transpose(x_nchw, (0, 2, 3, 1)).astype(jnp.bfloat16)  # NCHW -> NHWC

    # encoder
    h = conv2d(x, params["enc1"], cout=32, k=3, stride=2, pad=1, relu=True)    # /2
    h = conv2d(h, params["enc2"], cout=64, k=3, stride=2, pad=1, relu=True)    # /4
    x3 = conv2d(h, params["enc3"], cout=320, k=3, stride=2, pad=1, relu=True)  # /8
    x4 = conv2d(x3, params["enc4"], cout=640, k=3, stride=2, pad=1, relu=True) # /16
    x5 = conv2d(x4, params["enc5"], cout=1024, k=3, stride=2, pad=1, relu=True)# /32

    # RFB reductions to 32 channels
    x3_rfb = conv2d(x3, params["rfb3"], cout=32, relu=True)
    x4_rfb = conv2d(x4, params["rfb4"], cout=32, relu=True)
    x5_rfb = conv2d(x5, params["rfb5"], cout=32, relu=True)

    # DHA aggregation (agg1 + agg2) and heads fused into a single Pallas call.
    cat = jnp.concatenate(
        [upsample_nearest(x5_rfb, 4), upsample_nearest(x4_rfb, 2), x3_rfb],
        axis=-1,
    )  # (N, H/8, W/8, 96)
    n, hh, ww, c = cat.shape
    heads = agg_head(cat.reshape(n * hh * ww, c), params["agg_head"])
    heads = heads.reshape(n, hh, ww, 4)
    h1 = heads[..., 0:1]   # head_1(agg1): 1 channel
    h2 = heads[..., 1:4]   # head_2(agg2): 3 channels

    S_1 = upsample_nearest(h1, 8)
    S_2 = upsample_nearest(h2, 8)

    # back to NCHW to match PyTorch output convention
    return (
        jnp.transpose(S_1, (0, 3, 1, 2)),
        jnp.transpose(S_2, (0, 3, 1, 2)),
    )


if __name__ == "__main__":
    key = jax.random.PRNGKey(0)
    k_in, k_par = jax.random.split(key)
    x = jax.random.normal(k_in, (2, 3, 64, 64), jnp.float32)  # NCHW input
    params = make_params(k_par)

    S_1, S_2 = blazeneo_forward(x, params)
    jax.block_until_ready((S_1, S_2))

    assert S_1.shape == (2, 1, 64, 64), S_1.shape
    assert S_2.shape == (2, 3, 64, 64), S_2.shape
    assert jnp.all(jnp.isfinite(S_1)) and jnp.all(jnp.isfinite(S_2))
    print("KERNEL_OK")
</pallas_src>

<mosaic_0001>
module attributes {stable_mosaic.version = 11 : i64} {
  func.func @_matmul_bias_act_kernel(%arg0: i32, %arg1: i32, %arg2: i32, %arg3: memref<128x128xbf16, #tpu.memory_space<vmem>>, %arg4: memref<128x128xbf16, #tpu.memory_space<vmem>>, %arg5: memref<1x128xf32, #tpu.memory_space<vmem>>, %arg6: memref<128x128xbf16, #tpu.memory_space<vmem>>, %arg7: memref<128x128xf32, #tpu.memory_space<vmem>>) attributes {dimension_semantics = [#tpu.dimension_semantics<parallel>, #tpu.dimension_semantics<parallel>, #tpu.dimension_semantics<arbitrary>], iteration_bounds = array<i64: 16, 1, 1>, scalar_prefetch = 0 : i64, scratch_operands = 1 : i64, tpu.core_type = #tpu.core_type<tc>, window_params = [{transform_indices = @transform_0, window_bounds = array<i64: 128, 128>}, {transform_indices = @transform_1, window_bounds = array<i64: 128, 128>}, {transform_indices = @transform_2, window_bounds = array<i64: 1, 128>}, {transform_indices = @transform_3, window_bounds = array<i64: 128, 128>}]} {
    %c0_i32 = arith.constant 0 : i32
    %0 = arith.cmpi eq, %arg2, %c0_i32 : i32
    %1 = arith.extui %0 : i1 to i32
    %c0_i32_0 = arith.constant 0 : i32
    %2 = arith.cmpi ne, %1, %c0_i32_0 : i32
    scf.if %2 {
      %c0_10 = arith.constant 0 : index
      %c0_11 = arith.constant 0 : index
      %12 = vector.load %arg5[%c0_10, %c0_11] : memref<1x128xf32, #tpu.memory_space<vmem>>, vector<1x128xf32>
      %13 = vector.shape_cast %12 : vector<1x128xf32> to vector<1x128xf32>
      %14 = vector.broadcast %13 : vector<1x128xf32> to vector<128x128xf32>
      %c0_12 = arith.constant 0 : index
      %c0_13 = arith.constant 0 : index
      %15 = vector.load %arg7[%c0_12, %c0_13] : memref<128x128xf32, #tpu.memory_space<vmem>>, vector<128x128xf32>
      tpu.vector_store %arg7[%c0_12, %c0_13], %14 {strides = array<i32>} : memref<128x128xf32, #tpu.memory_space<vmem>>, vector<128x128xf32>,
    } else {
    }
    %c0 = arith.constant 0 : index
    %c0_1 = arith.constant 0 : index
    %3 = vector.load %arg7[%c0, %c0_1] : memref<128x128xf32, #tpu.memory_space<vmem>>, vector<128x128xf32>
    %c0_2 = arith.constant 0 : index
    %c0_3 = arith.constant 0 : index
    %4 = vector.load %arg3[%c0_2, %c0_3] : memref<128x128xbf16, #tpu.memory_space<vmem>>, vector<128x128xbf16>
    %c0_4 = arith.constant 0 : index
    %c0_5 = arith.constant 0 : index
    %5 = vector.load %arg4[%c0_4, %c0_5] : memref<128x128xbf16, #tpu.memory_space<vmem>>, vector<128x128xbf16>
    %cst = arith.constant dense<0.000000e+00> : vector<128x128xf32>
    %6 = tpu.matmul %4, %5, %cst {dimension_numbers = #tpu.dot_dimension_numbers<[1], [0], [0], [1], [0, 0, 1, 1], [], []>} : vector<128x128xbf16>, vector<128x128xbf16>, vector<128x128xf32> -> vector<128x128xf32>
    %7 = arith.addf %3, %6 : vector<128x128xf32>
    %c0_6 = arith.constant 0 : index
    %c0_7 = arith.constant 0 : index
    %8 = vector.load %arg7[%c0_6, %c0_7] : memref<128x128xf32, #tpu.memory_space<vmem>>, vector<128x128xf32>
    tpu.vector_store %arg7[%c0_6, %c0_7], %7 {strides = array<i32>} : memref<128x128xf32, #tpu.memory_space<vmem>>, vector<128x128xf32>,
    %c0_i32_8 = arith.constant 0 : i32
    %9 = arith.cmpi eq, %arg2, %c0_i32_8 : i32
    %10 = arith.extui %9 : i1 to i32
    %c0_i32_9 = arith.constant 0 : i32
    %11 = arith.cmpi ne, %10, %c0_i32_9 : i32
    scf.if %11 {
      %c0_10 = arith.constant 0 : index
      %c0_11 = arith.constant 0 : index
      %12 = vector.load %arg7[%c0_10, %c0_11] : memref<128x128xf32, #tpu.memory_space<vmem>>, vector<128x128xf32>
      %cst_12 = arith.constant 0.000000e+00 : f32
      %13 = vector.broadcast %cst_12 : f32 to vector<128x128xf32>
      %14 = arith.maximumf %12, %13 : vector<128x128xf32>
      %15 = arith.truncf %14 : vector<128x128xf32> to vector<128x128xbf16>
      %c0_13 = arith.constant 0 : index
      %c0_14 = arith.constant 0 : index
      %16 = vector.load %arg6[%c0_13, %c0_14] : memref<128x128xbf16, #tpu.memory_space<vmem>>, vector<128x128xbf16>
      tpu.vector_store %arg6[%c0_13, %c0_14], %15 {strides = array<i32>} : memref<128x128xbf16, #tpu.memory_space<vmem>>, vector<128x128xbf16>,
    } else {
    }
    return
  }
  func.func @transform_0(%arg0: i32, %arg1: i32, %arg2: i32) -> (i32, i32) {
    %c0_i32 = arith.constant 0 : i32
    return %arg0, %arg2 : i32, i32
  }
  func.func @transform_1(%arg0: i32, %arg1: i32, %arg2: i32) -> (i32, i32) {
    %c0_i32 = arith.constant 0 : i32
    return %arg2, %arg1 : i32, i32
  }
  func.func @transform_2(%arg0: i32, %arg1: i32, %arg2: i32) -> (i32, i32) {
    %c0_i32 = arith.constant 0 : i32
    %c0_i32_0 = arith.constant 0 : i32
    return %c0_i32, %arg1 : i32, i32
  }
  func.func @transform_3(%arg0: i32, %arg1: i32, %arg2: i32) -> (i32, i32) {
    %c0_i32 = arith.constant 0 : i32
    return %arg0, %arg1 : i32, i32
  }
}

module attributes {stable_mosaic.version = 11 : i64} {
  func.func @_matmul_bias_act_kernel(%arg0: i32, %arg1: i32, %arg2: i32, %arg3: memref<128x128xbf16, #tpu.memory_space<vmem>>, %arg4: memref<128x128xbf16, #tpu.memory_space<vmem>>, %arg5: memref<1x128xf32, #tpu.memory_space<vmem>>, %arg6: memref<128x128xbf16, #tpu.memory_space<vmem>>, %arg7: memref<128x128xf32, #tpu.memory_space<vmem>>) attributes {dimension_semantics = [#tpu.dimension_semantics<parallel>, #tpu.dimension_semantics<parallel>, #tpu.dimension_semantics<arbitrary>], iteration_bounds = array<i64: 4, 1, 3>, scalar_prefetch = 0 : i64, scratch_operands = 1 : i64, tpu.core_type = #tpu.core_type<tc>, window_params = [{transform_indices = @transform_0, window_bounds = array<i64: 128, 128>}, {transform_indices = @transform_1, window_bounds = array<i64: 128, 128>}, {transform_indices = @transform_2, window_bounds = array<i64: 1, 128>}, {transform_indices = @transform_3, window_bounds = array<i64: 128, 128>}]} {
    %c0_i32 = arith.constant 0 : i32
    %0 = arith.cmpi eq, %arg2, %c0_i32 : i32
    %1 = arith.extui %0 : i1 to i32
    %c0_i32_0 = arith.constant 0 : i32
    %2 = arith.cmpi ne, %1, %c0_i32_0 : i32
    scf.if %2 {
      %c0_9 = arith.constant 0 : index
      %c0_10 = arith.constant 0 : index
      %12 = vector.load %arg5[%c0_9, %c0_10] : memref<1x128xf32, #tpu.memory_space<vmem>>, vector<1x128xf32>
      %13 = vector.shape_cast %12 : vector<1x128xf32> to vector<1x128xf32>
      %14 = vector.broadcast %13 : vector<1x128xf32> to vector<128x128xf32>
      %c0_11 = arith.constant 0 : index
      %c0_12 = arith.constant 0 : index
      %15 = vector.load %arg7[%c0_11, %c0_12] : memref<128x128xf32, #tpu.memory_space<vmem>>, vector<128x128xf32>
      tpu.vector_store %arg7[%c0_11, %c0_12], %14 {strides = array<i32>} : memref<128x128xf32, #tpu.memory_space<vmem>>, vector<128x128xf32>,
    } else {
    }
    %c0 = arith.constant 0 : index
    %c0_1 = arith.constant 0 : index
    %3 = vector.load %arg7[%c0, %c0_1] : memref<128x128xf32, #tpu.memory_space<vmem>>, vector<128x128xf32>
    %c0_2 = arith.constant 0 : index
    %c0_3 = arith.constant 0 : index
    %4 = vector.load %arg3[%c0_2, %c0_3] : memref<128x128xbf16, #tpu.memory_space<vmem>>, vector<128x128xbf16>
    %c0_4 = arith.constant 0 : index
    %c0_5 = arith.constant 0 : index
    %5 = vector.load %arg4[%c0_4, %c0_5] : memref<128x128xbf16, #tpu.memory_space<vmem>>, vector<128x128xbf16>
    %cst = arith.constant dense<0.000000e+00> : vector<128x128xf32>
    %6 = tpu.matmul %4, %5, %cst {dimension_numbers = #tpu.dot_dimension_numbers<[1], [0], [0], [1], [0, 0, 1, 1], [], []>} : vector<128x128xbf16>, vector<128x128xbf16>, vector<128x128xf32> -> vector<128x128xf32>
    %7 = arith.addf %3, %6 : vector<128x128xf32>
    %c0_6 = arith.constant 0 : index
    %c0_7 = arith.constant 0 : index
    %8 = vector.load %arg7[%c0_6, %c0_7] : memref<128x128xf32, #tpu.memory_space<vmem>>, vector<128x128xf32>
    tpu.vector_store %arg7[%c0_6, %c0_7], %7 {strides = array<i32>} : memref<128x128xf32, #tpu.memory_space<vmem>>, vector<128x128xf32>,
    %c2_i32 = arith.constant 2 : i32
    %9 = arith.cmpi eq, %arg2, %c2_i32 : i32
    %10 = arith.extui %9 : i1 to i32
    %c0_i32_8 = arith.constant 0 : i32
    %11 = arith.cmpi ne, %10, %c0_i32_8 : i32
    scf.if %11 {
      %c0_9 = arith.constant 0 : index
      %c0_10 = arith.constant 0 : index
      %12 = vector.load %arg7[%c0_9, %c0_10] : memref<128x128xf32, #tpu.memory_space<vmem>>, vector<128x128xf32>
      %cst_11 = arith.constant 0.000000e+00 : f32
      %13 = vector.broadcast %cst_11 : f32 to vector<128x128xf32>
      %14 = arith.maximumf %12, %13 : vector<128x128xf32>
      %15 = arith.truncf %14 : vector<128x128xf32> to vector<128x128xbf16>
      %c0_12 = arith.constant 0 : index
      %c0_13 = arith.constant 0 : index
      %16 = vector.load %arg6[%c0_12, %c0_13] : memref<128x128xbf16, #tpu.memory_space<vmem>>, vector<128x128xbf16>
      tpu.vector_store %arg6[%c0_12, %c0_13], %15 {strides = array<i32>} : memref<128x128xbf16, #tpu.memory_space<vmem>>, vector<128x128xbf16>,
    } else {
    }
    return
  }
  func.func @transform_0(%arg0: i32, %arg1: i32, %arg2: i32) -> (i32, i32) {
    %c0_i32 = arith.constant 0 : i32
    return %arg0, %arg2 : i32, i32
  }
  func.func @transform_1(%arg0: i32, %arg1: i32, %arg2: i32) -> (i32, i32) {
    %c0_i32 = arith.constant 0 : i32
    return %arg2, %arg1 : i32, i32
  }
  func.func @transform_2(%arg0: i32, %arg1: i32, %arg2: i32) -> (i32, i32) {
    %c0_i32 = arith.constant 0 : i32
    %c0_i32_0 = arith.constant 0 : i32
    return %c0_i32, %arg1 : i32, i32
  }
  func.func @transform_3(%arg0: i32, %arg1: i32, %arg2: i32) -> (i32, i32) {
    %c0_i32 = arith.constant 0 : i32
    return %arg0, %arg1 : i32, i32
  }
}

module attributes {stable_mosaic.version = 11 : i64} {
  func.func @_matmul_bias_act_kernel(%arg0: i32, %arg1: i32, %arg2: i32, %arg3: memref<128x128xbf16, #tpu.memory_space<vmem>>, %arg4: memref<128x128xbf16, #tpu.memory_space<vmem>>, %arg5: memref<1x128xf32, #tpu.memory_space<vmem>>, %arg6: memref<128x128xbf16, #tpu.memory_space<vmem>>, %arg7: memref<128x128xf32, #tpu.memory_space<vmem>>) attributes {dimension_semantics = [#tpu.dimension_semantics<parallel>, #tpu.dimension_semantics<parallel>, #tpu.dimension_semantics<arbitrary>], iteration_bounds = array<i64: 1, 3, 5>, scalar_prefetch = 0 : i64, scratch_operands = 1 : i64, tpu.core_type = #tpu.core_type<tc>, window_params = [{transform_indices = @transform_0, window_bounds = array<i64: 128, 128>}, {transform_indices = @transform_1, window_bounds = array<i64: 128, 128>}, {transform_indices = @transform_2, window_bounds = array<i64: 1, 128>}, {transform_indices = @transform_3, window_bounds = array<i64: 128, 128>}]} {
    %c0_i32 = arith.constant 0 : i32
    %0 = arith.cmpi eq, %arg2, %c0_i32 : i32
    %1 = arith.extui %0 : i1 to i32
    %c0_i32_0 = arith.constant 0 : i32
    %2 = arith.cmpi ne, %1, %c0_i32_0 : i32
    scf.if %2 {
      %c0_9 = arith.constant 0 : index
      %c0_10 = arith.constant 0 : index
      %12 = vector.load %arg5[%c0_9, %c0_10] : memref<1x128xf32, #tpu.memory_space<vmem>>, vector<1x128xf32>
      %13 = vector.shape_cast %12 : vector<1x128xf32> to vector<1x128xf32>
      %14 = vector.broadcast %13 : vector<1x128xf32> to vector<128x128xf32>
      %c0_11 = arith.constant 0 : index
      %c0_12 = arith.constant 0 : index
      %15 = vector.load %arg7[%c0_11, %c0_12] : memref<128x128xf32, #tpu.memory_space<vmem>>, vector<128x128xf32>
      tpu.vector_store %arg7[%c0_11, %c0_12], %14 {strides = array<i32>} : memref<128x128xf32, #tpu.memory_space<vmem>>, vector<128x128xf32>,
    } else {
    }
    %c0 = arith.constant 0 : index
    %c0_1 = arith.constant 0 : index
    %3 = vector.load %arg7[%c0, %c0_1] : memref<128x128xf32, #tpu.memory_space<vmem>>, vector<128x128xf32>
    %c0_2 = arith.constant 0 : index
    %c0_3 = arith.constant 0 : index
    %4 = vector.load %arg3[%c0_2, %c0_3] : memref<128x128xbf16, #tpu.memory_space<vmem>>, vector<128x128xbf16>
    %c0_4 = arith.constant 0 : index
    %c0_5 = arith.constant 0 : index
    %5 = vector.load %arg4[%c0_4, %c0_5] : memref<128x128xbf16, #tpu.memory_space<vmem>>, vector<128x128xbf16>
    %cst = arith.constant dense<0.000000e+00> : vector<128x128xf32>
    %6 = tpu.matmul %4, %5, %cst {dimension_numbers = #tpu.dot_dimension_numbers<[1], [0], [0], [1], [0, 0, 1, 1], [], []>} : vector<128x128xbf16>, vector<128x128xbf16>, vector<128x128xf32> -> vector<128x128xf32>
    %7 = arith.addf %3, %6 : vector<128x128xf32>
    %c0_6 = arith.constant 0 : index
    %c0_7 = arith.constant 0 : index
    %8 = vector.load %arg7[%c0_6, %c0_7] : memref<128x128xf32, #tpu.memory_space<vmem>>, vector<128x128xf32>
    tpu.vector_store %arg7[%c0_6, %c0_7], %7 {strides = array<i32>} : memref<128x128xf32, #tpu.memory_space<vmem>>, vector<128x128xf32>,
    %c4_i32 = arith.constant 4 : i32
    %9 = arith.cmpi eq, %arg2, %c4_i32 : i32
    %10 = arith.extui %9 : i1 to i32
    %c0_i32_8 = arith.constant 0 : i32
    %11 = arith.cmpi ne, %10, %c0_i32_8 : i32
    scf.if %11 {
      %c0_9 = arith.constant 0 : index
      %c0_10 = arith.constant 0 : index
      %12 = vector.load %arg7[%c0_9, %c0_10] : memref<128x128xf32, #tpu.memory_space<vmem>>, vector<128x128xf32>
      %cst_11 = arith.constant 0.000000e+00 : f32
      %13 = vector.broadcast %cst_11 : f32 to vector<128x128xf32>
      %14 = arith.maximumf %12, %13 : vector<128x128xf32>
      %15 = arith.truncf %14 : vector<128x128xf32> to vector<128x128xbf16>
      %c0_12 = arith.constant 0 : index
      %c0_13 = arith.constant 0 : index
      %16 = vector.load %arg6[%c0_12, %c0_13] : memref<128x128xbf16, #tpu.memory_space<vmem>>, vector<128x128xbf16>
      tpu.vector_store %arg6[%c0_12, %c0_13], %15 {strides = array<i32>} : memref<128x128xbf16, #tpu.memory_space<vmem>>, vector<128x128xbf16>,
    } else {
    }
    return
  }
  func.func @transform_0(%arg0: i32, %arg1: i32, %arg2: i32) -> (i32, i32) {
    %c0_i32 = arith.constant 0 : i32
    return %arg0, %arg2 : i32, i32
  }
  func.func @transform_1(%arg0: i32, %arg1: i32, %arg2: i32) -> (i32, i32) {
    %c0_i32 = arith.constant 0 : i32
    return %arg2, %arg1 : i32, i32
  }
  func.func @transform_2(%arg0: i32, %arg1: i32, %arg2: i32) -> (i32, i32) {
    %c0_i32 = arith.constant 0 : i32
    %c0_i32_0 = arith.constant 0 : i32
    return %c0_i32, %arg1 : i32, i32
  }
  func.func @transform_3(%arg0: i32, %arg1: i32, %arg2: i32) -> (i32, i32) {
    %c0_i32 = arith.constant 0 : i32
    return %arg0, %arg1 : i32, i32
  }
}

module attributes {stable_mosaic.version = 11 : i64} {
  func.func @_matmul_bias_act_kernel(%arg0: i32, %arg1: i32, %arg2: i32, %arg3: memref<128x128xbf16, #tpu.memory_space<vmem>>, %arg4: memref<128x128xbf16, #tpu.memory_space<vmem>>, %arg5: memref<1x128xf32, #tpu.memory_space<vmem>>, %arg6: memref<128x128xbf16, #tpu.memory_space<vmem>>, %arg7: memref<128x128xf32, #tpu.memory_space<vmem>>) attributes {dimension_semantics = [#tpu.dimension_semantics<parallel>, #tpu.dimension_semantics<parallel>, #tpu.dimension_semantics<arbitrary>], iteration_bounds = array<i64: 1, 1, 3>, scalar_prefetch = 0 : i64, scratch_operands = 1 : i64, tpu.core_type = #tpu.core_type<tc>, window_params = [{transform_indices = @transform_0, window_bounds = array<i64: 128, 128>}, {transform_indices = @transform_1, window_bounds = array<i64: 128, 128>}, {transform_indices = @transform_2, window_bounds = array<i64: 1, 128>}, {transform_indices = @transform_3, window_bounds = array<i64: 128, 128>}]} {
    %c0_i32 = arith.constant 0 : i32
    %0 = arith.cmpi eq, %arg2, %c0_i32 : i32
    %1 = arith.extui %0 : i1 to i32
    %c0_i32_0 = arith.constant 0 : i32
    %2 = arith.cmpi ne, %1, %c0_i32_0 : i32
    scf.if %2 {
      %c0_9 = arith.constant 0 : index
      %c0_10 = arith.constant 0 : index
      %12 = vector.load %arg5[%c0_9, %c0_10] : memref<1x128xf32, #tpu.memory_space<vmem>>, vector<1x128xf32>
      %13 = vector.shape_cast %12 : vector<1x128xf32> to vector<1x128xf32>
      %14 = vector.broadcast %13 : vector<1x128xf32> to vector<128x128xf32>
      %c0_11 = arith.constant 0 : index
      %c0_12 = arith.constant 0 : index
      %15 = vector.load %arg7[%c0_11, %c0_12] : memref<128x128xf32, #tpu.memory_space<vmem>>, vector<128x128xf32>
      tpu.vector_store %arg7[%c0_11, %c0_12], %14 {strides = array<i32>} : memref<128x128xf32, #tpu.memory_space<vmem>>, vector<128x128xf32>,
    } else {
    }
    %c0 = arith.constant 0 : index
    %c0_1 = arith.constant 0 : index
    %3 = vector.load %arg7[%c0, %c0_1] : memref<128x128xf32, #tpu.memory_space<vmem>>, vector<128x128xf32>
    %c0_2 = arith.constant 0 : index
    %c0_3 = arith.constant 0 : index
    %4 = vector.load %arg3[%c0_2, %c0_3] : memref<128x128xbf16, #tpu.memory_space<vmem>>, vector<128x128xbf16>
    %c0_4 = arith.constant 0 : index
    %c0_5 = arith.constant 0 : index
    %5 = vector.load %arg4[%c0_4, %c0_5] : memref<128x128xbf16, #tpu.memory_space<vmem>>, vector<128x128xbf16>
    %cst = arith.constant dense<0.000000e+00> : vector<128x128xf32>
    %6 = tpu.matmul %4, %5, %cst {dimension_numbers = #tpu.dot_dimension_numbers<[1], [0], [0], [1], [0, 0, 1, 1], [], []>} : vector<128x128xbf16>, vector<128x128xbf16>, vector<128x128xf32> -> vector<128x128xf32>
    %7 = arith.addf %3, %6 : vector<128x128xf32>
    %c0_6 = arith.constant 0 : index
    %c0_7 = arith.constant 0 : index
    %8 = vector.load %arg7[%c0_6, %c0_7] : memref<128x128xf32, #tpu.memory_space<vmem>>, vector<128x128xf32>
    tpu.vector_store %arg7[%c0_6, %c0_7], %7 {strides = array<i32>} : memref<128x128xf32, #tpu.memory_space<vmem>>, vector<128x128xf32>,
    %c2_i32 = arith.constant 2 : i32
    %9 = arith.cmpi eq, %arg2, %c2_i32 : i32
    %10 = arith.extui %9 : i1 to i32
    %c0_i32_8 = arith.constant 0 : i32
    %11 = arith.cmpi ne, %10, %c0_i32_8 : i32
    scf.if %11 {
      %c0_9 = arith.constant 0 : index
      %c0_10 = arith.constant 0 : index
      %12 = vector.load %arg7[%c0_9, %c0_10] : memref<128x128xf32, #tpu.memory_space<vmem>>, vector<128x128xf32>
      %cst_11 = arith.constant 0.000000e+00 : f32
      %13 = vector.broadcast %cst_11 : f32 to vector<128x128xf32>
      %14 = arith.maximumf %12, %13 : vector<128x128xf32>
      %15 = arith.truncf %14 : vector<128x128xf32> to vector<128x128xbf16>
      %c0_12 = arith.constant 0 : index
      %c0_13 = arith.constant 0 : index
      %16 = vector.load %arg6[%c0_12, %c0_13] : memref<128x128xbf16, #tpu.memory_space<vmem>>, vector<128x128xbf16>
      tpu.vector_store %arg6[%c0_12, %c0_13], %15 {strides = array<i32>} : memref<128x128xbf16, #tpu.memory_space<vmem>>, vector<128x128xbf16>,
    } else {
    }
    return
  }
  func.func @transform_0(%arg0: i32, %arg1: i32, %arg2: i32) -> (i32, i32) {
    %c0_i32 = arith.constant 0 : i32
    return %arg0, %arg2 : i32, i32
  }
  func.func @transform_1(%arg0: i32, %arg1: i32, %arg2: i32) -> (i32, i32) {
    %c0_i32 = arith.constant 0 : i32
    return %arg2, %arg1 : i32, i32
  }
  func.func @transform_2(%arg0: i32, %arg1: i32, %arg2: i32) -> (i32, i32) {
    %c0_i32 = arith.constant 0 : i32
    %c0_i32_0 = arith.constant 0 : i32
    return %c0_i32, %arg1 : i32, i32
  }
  func.func @transform_3(%arg0: i32, %arg1: i32, %arg2: i32) -> (i32, i32) {
    %c0_i32 = arith.constant 0 : i32
    return %arg0, %arg1 : i32, i32
  }
}

module attributes {stable_mosaic.version = 11 : i64} {
  func.func @_matmul_bias_act_kernel(%arg0: i32, %arg1: i32, %arg2: i32, %arg3: memref<32x512xbf16, #tpu.memory_space<vmem>>, %arg4: memref<512x128xbf16, #tpu.memory_space<vmem>>, %arg5: memref<1x128xf32, #tpu.memory_space<vmem>>, %arg6: memref<32x128xbf16, #tpu.memory_space<vmem>>, %arg7: memref<32x128xf32, #tpu.memory_space<vmem>>) attributes {dimension_semantics = [#tpu.dimension_semantics<parallel>, #tpu.dimension_semantics<parallel>, #tpu.dimension_semantics<arbitrary>], iteration_bounds = array<i64: 1, 5, 6>, scalar_prefetch = 0 : i64, scratch_operands = 1 : i64, tpu.core_type = #tpu.core_type<tc>, window_params = [{transform_indices = @transform_0, window_bounds = array<i64: 32, 512>}, {transform_indices = @transform_1, window_bounds = array<i64: 512, 128>}, {transform_indices = @transform_2, window_bounds = array<i64: 1, 128>}, {transform_indices = @transform_3, window_bounds = array<i64: 32, 128>}]} {
    %c0_i32 = arith.constant 0 : i32
    %0 = arith.cmpi eq, %arg2, %c0_i32 : i32
    %1 = arith.extui %0 : i1 to i32
    %c0_i32_0 = arith.constant 0 : i32
    %2 = arith.cmpi ne, %1, %c0_i32_0 : i32
    scf.if %2 {
      %c0_9 = arith.constant 0 : index
      %c0_10 = arith.constant 0 : index
      %12 = vector.load %arg5[%c0_9, %c0_10] : memref<1x128xf32, #tpu.memory_space<vmem>>, vector<1x128xf32>
      %13 = vector.shape_cast %12 : vector<1x128xf32> to vector<1x128xf32>
      %14 = vector.broadcast %13 : vector<1x128xf32> to vector<32x128xf32>
      %c0_11 = arith.constant 0 : index
      %c0_12 = arith.constant 0 : index
      %15 = vector.load %arg7[%c0_11, %c0_12] : memref<32x128xf32, #tpu.memory_space<vmem>>, vector<32x128xf32>
      tpu.vector_store %arg7[%c0_11, %c0_12], %14 {strides = array<i32>} : memref<32x128xf32, #tpu.memory_space<vmem>>, vector<32x128xf32>,
    } else {
    }
    %c0 = arith.constant 0 : index
    %c0_1 = arith.constant 0 : index
    %3 = vector.load %arg7[%c0, %c0_1] : memref<32x128xf32, #tpu.memory_space<vmem>>, vector<32x128xf32>
    %c0_2 = arith.constant 0 : index
    %c0_3 = arith.constant 0 : index
    %4 = vector.load %arg3[%c0_2, %c0_3] : memref<32x512xbf16, #tpu.memory_space<vmem>>, vector<32x512xbf16>
    %c0_4 = arith.constant 0 : index
    %c0_5 = arith.constant 0 : index
    %5 = vector.load %arg4[%c0_4, %c0_5] : memref<512x128xbf16, #tpu.memory_space<vmem>>, vector<512x128xbf16>
    %cst = arith.constant dense<0.000000e+00> : vector<32x128xf32>
    %6 = tpu.matmul %4, %5, %cst {dimension_numbers = #tpu.dot_dimension_numbers<[1], [0], [0], [1], [0, 0, 1, 1], [], []>} : vector<32x512xbf16>, vector<512x128xbf16>, vector<32x128xf32> -> vector<32x128xf32>
    %7 = arith.addf %3, %6 : vector<32x128xf32>
    %c0_6 = arith.constant 0 : index
    %c0_7 = arith.constant 0 : index
    %8 = vector.load %arg7[%c0_6, %c0_7] : memref<32x128xf32, #tpu.memory_space<vmem>>, vector<32x128xf32>
    tpu.vector_store %arg7[%c0_6, %c0_7], %7 {strides = array<i32>} : memref<32x128xf32, #tpu.memory_space<vmem>>, vector<32x128xf32>,
    %c5_i32 = arith.constant 5 : i32
    %9 = arith.cmpi eq, %arg2, %c5_i32 : i32
    %10 = arith.extui %9 : i1 to i32
    %c0_i32_8 = arith.constant 0 : i32
    %11 = arith.cmpi ne, %10, %c0_i32_8 : i32
    scf.if %11 {
      %c0_9 = arith.constant 0 : index
      %c0_10 = arith.constant 0 : index
      %12 = vector.load %arg7[%c0_9, %c0_10] : memref<32x128xf32, #tpu.memory_space<vmem>>, vector<32x128xf32>
      %cst_11 = arith.constant 0.000000e+00 : f32
      %13 = vector.broadcast %cst_11 : f32 to vector<32x128xf32>
      %14 = arith.maximumf %12, %13 : vector<32x128xf32>
      %15 = arith.truncf %14 : vector<32x128xf32> to vector<32x128xbf16>
      %c0_12 = arith.constant 0 : index
      %c0_13 = arith.constant 0 : index
      %16 = vector.load %arg6[%c0_12, %c0_13] : memref<32x128xbf16, #tpu.memory_space<vmem>>, vector<32x128xbf16>
      tpu.vector_store %arg6[%c0_12, %c0_13], %15 {strides = array<i32>} : memref<32x128xbf16, #tpu.memory_space<vmem>>, vector<32x128xbf16>,
    } else {
    }
    return
  }
  func.func @transform_0(%arg0: i32, %arg1: i32, %arg2: i32) -> (i32, i32) {
    %c0_i32 = arith.constant 0 : i32
    return %arg0, %arg2 : i32, i32
  }
  func.func @transform_1(%arg0: i32, %arg1: i32, %arg2: i32) -> (i32, i32) {
    %c0_i32 = arith.constant 0 : i32
    return %arg2, %arg1 : i32, i32
  }
  func.func @transform_2(%arg0: i32, %arg1: i32, %arg2: i32) -> (i32, i32) {
    %c0_i32 = arith.constant 0 : i32
    %c0_i32_0 = arith.constant 0 : i32
    return %c0_i32, %arg1 : i32, i32
  }
  func.func @transform_3(%arg0: i32, %arg1: i32, %arg2: i32) -> (i32, i32) {
    %c0_i32 = arith.constant 0 : i32
    return %arg0, %arg1 : i32, i32
  }
}

module attributes {stable_mosaic.version = 11 : i64} {
  func.func @_matmul_bias_act_kernel(%arg0: i32, %arg1: i32, %arg2: i32, %arg3: memref<32x128xbf16, #tpu.memory_space<vmem>>, %arg4: memref<128x128xbf16, #tpu.memory_space<vmem>>, %arg5: memref<1x128xf32, #tpu.memory_space<vmem>>, %arg6: memref<32x128xbf16, #tpu.memory_space<vmem>>, %arg7: memref<32x128xf32, #tpu.memory_space<vmem>>) attributes {dimension_semantics = [#tpu.dimension_semantics<parallel>, #tpu.dimension_semantics<parallel>, #tpu.dimension_semantics<arbitrary>], iteration_bounds = array<i64: 1, 1, 5>, scalar_prefetch = 0 : i64, scratch_operands = 1 : i64, tpu.core_type = #tpu.core_type<tc>, window_params = [{transform_indices = @transform_0, window_bounds = array<i64: 32, 128>}, {transform_indices = @transform_1, window_bounds = array<i64: 128, 128>}, {transform_indices = @transform_2, window_bounds = array<i64: 1, 128>}, {transform_indices = @transform_3, window_bounds = array<i64: 32, 128>}]} {
    %c0_i32 = arith.constant 0 : i32
    %0 = arith.cmpi eq, %arg2, %c0_i32 : i32
    %1 = arith.extui %0 : i1 to i32
    %c0_i32_0 = arith.constant 0 : i32
    %2 = arith.cmpi ne, %1, %c0_i32_0 : i32
    scf.if %2 {
      %c0_9 = arith.constant 0 : index
      %c0_10 = arith.constant 0 : index
      %12 = vector.load %arg5[%c0_9, %c0_10] : memref<1x128xf32, #tpu.memory_space<vmem>>, vector<1x128xf32>
      %13 = vector.shape_cast %12 : vector<1x128xf32> to vector<1x128xf32>
      %14 = vector.broadcast %13 : vector<1x128xf32> to vector<32x128xf32>
      %c0_11 = arith.constant 0 : index
      %c0_12 = arith.constant 0 : index
      %15 = vector.load %arg7[%c0_11, %c0_12] : memref<32x128xf32, #tpu.memory_space<vmem>>, vector<32x128xf32>
      tpu.vector_store %arg7[%c0_11, %c0_12], %14 {strides = array<i32>} : memref<32x128xf32, #tpu.memory_space<vmem>>, vector<32x128xf32>,
    } else {
    }
    %c0 = arith.constant 0 : index
    %c0_1 = arith.constant 0 : index
    %3 = vector.load %arg7[%c0, %c0_1] : memref<32x128xf32, #tpu.memory_space<vmem>>, vector<32x128xf32>
    %c0_2 = arith.constant 0 : index
    %c0_3 = arith.constant 0 : index
    %4 = vector.load %arg3[%c0_2, %c0_3] : memref<32x128xbf16, #tpu.memory_space<vmem>>, vector<32x128xbf16>
    %c0_4 = arith.constant 0 : index
    %c0_5 = arith.constant 0 : index
    %5 = vector.load %arg4[%c0_4, %c0_5] : memref<128x128xbf16, #tpu.memory_space<vmem>>, vector<128x128xbf16>
    %cst = arith.constant dense<0.000000e+00> : vector<32x128xf32>
    %6 = tpu.matmul %4, %5, %cst {dimension_numbers = #tpu.dot_dimension_numbers<[1], [0], [0], [1], [0, 0, 1, 1], [], []>} : vector<32x128xbf16>, vector<128x128xbf16>, vector<32x128xf32> -> vector<32x128xf32>
    %7 = arith.addf %3, %6 : vector<32x128xf32>
    %c0_6 = arith.constant 0 : index
    %c0_7 = arith.constant 0 : index
    %8 = vector.load %arg7[%c0_6, %c0_7] : memref<32x128xf32, #tpu.memory_space<vmem>>, vector<32x128xf32>
    tpu.vector_store %arg7[%c0_6, %c0_7], %7 {strides = array<i32>} : memref<32x128xf32, #tpu.memory_space<vmem>>, vector<32x128xf32>,
    %c4_i32 = arith.constant 4 : i32
    %9 = arith.cmpi eq, %arg2, %c4_i32 : i32
    %10 = arith.extui %9 : i1 to i32
    %c0_i32_8 = arith.constant 0 : i32
    %11 = arith.cmpi ne, %10, %c0_i32_8 : i32
    scf.if %11 {
      %c0_9 = arith.constant 0 : index
      %c0_10 = arith.constant 0 : index
      %12 = vector.load %arg7[%c0_9, %c0_10] : memref<32x128xf32, #tpu.memory_space<vmem>>, vector<32x128xf32>
      %cst_11 = arith.constant 0.000000e+00 : f32
      %13 = vector.broadcast %cst_11 : f32 to vector<32x128xf32>
      %14 = arith.maximumf %12, %13 : vector<32x128xf32>
      %15 = arith.truncf %14 : vector<32x128xf32> to vector<32x128xbf16>
      %c0_12 = arith.constant 0 : index
      %c0_13 = arith.constant 0 : index
      %16 = vector.load %arg6[%c0_12, %c0_13] : memref<32x128xbf16, #tpu.memory_space<vmem>>, vector<32x128xbf16>
      tpu.vector_store %arg6[%c0_12, %c0_13], %15 {strides = array<i32>} : memref<32x128xbf16, #tpu.memory_space<vmem>>, vector<32x128xbf16>,
    } else {
    }
    return
  }
  func.func @transform_0(%arg0: i32, %arg1: i32, %arg2: i32) -> (i32, i32) {
    %c0_i32 = arith.constant 0 : i32
    return %arg0, %arg2 : i32, i32
  }
  func.func @transform_1(%arg0: i32, %arg1: i32, %arg2: i32) -> (i32, i32) {
    %c0_i32 = arith.constant 0 : i32
    return %arg2, %arg1 : i32, i32
  }
  func.func @transform_2(%arg0: i32, %arg1: i32, %arg2: i32) -> (i32, i32) {
    %c0_i32 = arith.constant 0 : i32
    %c0_i32_0 = arith.constant 0 : i32
    return %c0_i32, %arg1 : i32, i32
  }
  func.func @transform_3(%arg0: i32, %arg1: i32, %arg2: i32) -> (i32, i32) {
    %c0_i32 = arith.constant 0 : i32
    return %arg0, %arg1 : i32, i32
  }
}

module attributes {stable_mosaic.version = 11 : i64} {
  func.func @_matmul_bias_act_kernel(%arg0: i32, %arg1: i32, %arg2: i32, %arg3: memref<16x512xbf16, #tpu.memory_space<vmem>>, %arg4: memref<512x256xbf16, #tpu.memory_space<vmem>>, %arg5: memref<1x256xf32, #tpu.memory_space<vmem>>, %arg6: memref<16x256xbf16, #tpu.memory_space<vmem>>, %arg7: memref<16x256xf32, #tpu.memory_space<vmem>>) attributes {dimension_semantics = [#tpu.dimension_semantics<parallel>, #tpu.dimension_semantics<parallel>, #tpu.dimension_semantics<arbitrary>], iteration_bounds = array<i64: 1, 4, 12>, scalar_prefetch = 0 : i64, scratch_operands = 1 : i64, tpu.core_type = #tpu.core_type<tc>, window_params = [{transform_indices = @transform_0, window_bounds = array<i64: 16, 512>}, {transform_indices = @transform_1, window_bounds = array<i64: 512, 256>}, {transform_indices = @transform_2, window_bounds = array<i64: 1, 256>}, {transform_indices = @transform_3, window_bounds = array<i64: 16, 256>}]} {
    %c0_i32 = arith.constant 0 : i32
    %0 = arith.cmpi eq, %arg2, %c0_i32 : i32
    %1 = arith.extui %0 : i1 to i32
    %c0_i32_0 = arith.constant 0 : i32
    %2 = arith.cmpi ne, %1, %c0_i32_0 : i32
    scf.if %2 {
      %c0_9 = arith.constant 0 : index
      %c0_10 = arith.constant 0 : index
      %12 = vector.load %arg5[%c0_9, %c0_10] : memref<1x256xf32, #tpu.memory_space<vmem>>, vector<1x256xf32>
      %13 = vector.shape_cast %12 : vector<1x256xf32> to vector<1x256xf32>
      %14 = vector.broadcast %13 : vector<1x256xf32> to vector<16x256xf32>
      %c0_11 = arith.constant 0 : index
      %c0_12 = arith.constant 0 : index
      %15 = vector.load %arg7[%c0_11, %c0_12] : memref<16x256xf32, #tpu.memory_space<vmem>>, vector<16x256xf32>
      tpu.vector_store %arg7[%c0_11, %c0_12], %14 {strides = array<i32>} : memref<16x256xf32, #tpu.memory_space<vmem>>, vector<16x256xf32>,
    } else {
    }
    %c0 = arith.constant 0 : index
    %c0_1 = arith.constant 0 : index
    %3 = vector.load %arg7[%c0, %c0_1] : memref<16x256xf32, #tpu.memory_space<vmem>>, vector<16x256xf32>
    %c0_2 = arith.constant 0 : index
    %c0_3 = arith.constant 0 : index
    %4 = vector.load %arg3[%c0_2, %c0_3] : memref<16x512xbf16, #tpu.memory_space<vmem>>, vector<16x512xbf16>
    %c0_4 = arith.constant 0 : index
    %c0_5 = arith.constant 0 : index
    %5 = vector.load %arg4[%c0_4, %c0_5] : memref<512x256xbf16, #tpu.memory_space<vmem>>, vector<512x256xbf16>
    %cst = arith.constant dense<0.000000e+00> : vector<16x256xf32>
    %6 = tpu.matmul %4, %5, %cst {dimension_numbers = #tpu.dot_dimension_numbers<[1], [0], [0], [1], [0, 0, 1, 1], [], []>} : vector<16x512xbf16>, vector<512x256xbf16>, vector<16x256xf32> -> vector<16x256xf32>
    %7 = arith.addf %3, %6 : vector<16x256xf32>
    %c0_6 = arith.constant 0 : index
    %c0_7 = arith.constant 0 : index
    %8 = vector.load %arg7[%c0_6, %c0_7] : memref<16x256xf32, #tpu.memory_space<vmem>>, vector<16x256xf32>
    tpu.vector_store %arg7[%c0_6, %c0_7], %7 {strides = array<i32>} : memref<16x256xf32, #tpu.memory_space<vmem>>, vector<16x256xf32>,
    %c11_i32 = arith.constant 11 : i32
    %9 = arith.cmpi eq, %arg2, %c11_i32 : i32
    %10 = arith.extui %9 : i1 to i32
    %c0_i32_8 = arith.constant 0 : i32
    %11 = arith.cmpi ne, %10, %c0_i32_8 : i32
    scf.if %11 {
      %c0_9 = arith.constant 0 : index
      %c0_10 = arith.constant 0 : index
      %12 = vector.load %arg7[%c0_9, %c0_10] : memref<16x256xf32, #tpu.memory_space<vmem>>, vector<16x256xf32>
      %cst_11 = arith.constant 0.000000e+00 : f32
      %13 = vector.broadcast %cst_11 : f32 to vector<16x256xf32>
      %14 = arith.maximumf %12, %13 : vector<16x256xf32>
      %15 = arith.truncf %14 : vector<16x256xf32> to vector<16x256xbf16>
      %c0_12 = arith.constant 0 : index
      %c0_13 = arith.constant 0 : index
      %16 = vector.load %arg6[%c0_12, %c0_13] : memref<16x256xbf16, #tpu.memory_space<vmem>>, vector<16x256xbf16>
      tpu.vector_store %arg6[%c0_12, %c0_13], %15 {strides = array<i32>} : memref<16x256xbf16, #tpu.memory_space<vmem>>, vector<16x256xbf16>,
    } else {
    }
    return
  }
  func.func @transform_0(%arg0: i32, %arg1: i32, %arg2: i32) -> (i32, i32) {
    %c0_i32 = arith.constant 0 : i32
    return %arg0, %arg2 : i32, i32
  }
  func.func @transform_1(%arg0: i32, %arg1: i32, %arg2: i32) -> (i32, i32) {
    %c0_i32 = arith.constant 0 : i32
    return %arg2, %arg1 : i32, i32
  }
  func.func @transform_2(%arg0: i32, %arg1: i32, %arg2: i32) -> (i32, i32) {
    %c0_i32 = arith.constant 0 : i32
    %c0_i32_0 = arith.constant 0 : i32
    return %c0_i32, %arg1 : i32, i32
  }
  func.func @transform_3(%arg0: i32, %arg1: i32, %arg2: i32) -> (i32, i32) {
    %c0_i32 = arith.constant 0 : i32
    return %arg0, %arg1 : i32, i32
  }
}

module attributes {stable_mosaic.version = 11 : i64} {
  func.func @_matmul_bias_act_kernel(%arg0: i32, %arg1: i32, %arg2: i32, %arg3: memref<16x512xbf16, #tpu.memory_space<vmem>>, %arg4: memref<512x128xbf16, #tpu.memory_space<vmem>>, %arg5: memref<1x128xf32, #tpu.memory_space<vmem>>, %arg6: memref<16x128xbf16, #tpu.memory_space<vmem>>, %arg7: memref<16x128xf32, #tpu.memory_space<vmem>>) attributes {dimension_semantics = [#tpu.dimension_semantics<parallel>, #tpu.dimension_semantics<parallel>, #tpu.dimension_semantics<arbitrary>], iteration_bounds = array<i64: 1, 1, 2>, scalar_prefetch = 0 : i64, scratch_operands = 1 : i64, tpu.core_type = #tpu.core_type<tc>, window_params = [{transform_indices = @transform_0, window_bounds = array<i64: 16, 512>}, {transform_indices = @transform_1, window_bounds = array<i64: 512, 128>}, {transform_indices = @transform_2, window_bounds = array<i64: 1, 128>}, {transform_indices = @transform_3, window_bounds = array<i64: 16, 128>}]} {
    %c0_i32 = arith.constant 0 : i32
    %0 = arith.cmpi eq, %arg2, %c0_i32 : i32
    %1 = arith.extui %0 : i1 to i32
    %c0_i32_0 = arith.constant 0 : i32
    %2 = arith.cmpi ne, %1, %c0_i32_0 : i32
    scf.if %2 {
      %c0_9 = arith.constant 0 : index
      %c0_10 = arith.constant 0 : index
      %12 = vector.load %arg5[%c0_9, %c0_10] : memref<1x128xf32, #tpu.memory_space<vmem>>, vector<1x128xf32>
      %13 = vector.shape_cast %12 : vector<1x128xf32> to vector<1x128xf32>
      %14 = vector.broadcast %13 : vector<1x128xf32> to vector<16x128xf32>
      %c0_11 = arith.constant 0 : index
      %c0_12 = arith.constant 0 : index
      %15 = vector.load %arg7[%c0_11, %c0_12] : memref<16x128xf32, #tpu.memory_space<vmem>>, vector<16x128xf32>
      tpu.vector_store %arg7[%c0_11, %c0_12], %14 {strides = array<i32>} : memref<16x128xf32, #tpu.memory_space<vmem>>, vector<16x128xf32>,
    } else {
    }
    %c0 = arith.constant 0 : index
    %c0_1 = arith.constant 0 : index
    %3 = vector.load %arg7[%c0, %c0_1] : memref<16x128xf32, #tpu.memory_space<vmem>>, vector<16x128xf32>
    %c0_2 = arith.constant 0 : index
    %c0_3 = arith.constant 0 : index
    %4 = vector.load %arg3[%c0_2, %c0_3] : memref<16x512xbf16, #tpu.memory_space<vmem>>, vector<16x512xbf16>
    %c0_4 = arith.constant 0 : index
    %c0_5 = arith.constant 0 : index
    %5 = vector.load %arg4[%c0_4, %c0_5] : memref<512x128xbf16, #tpu.memory_space<vmem>>, vector<512x128xbf16>
    %cst = arith.constant dense<0.000000e+00> : vector<16x128xf32>
    %6 = tpu.matmul %4, %5, %cst {dimension_numbers = #tpu.dot_dimension_numbers<[1], [0], [0], [1], [0, 0, 1, 1], [], []>} : vector<16x512xbf16>, vector<512x128xbf16>, vector<16x128xf32> -> vector<16x128xf32>
    %7 = arith.addf %3, %6 : vector<16x128xf32>
    %c0_6 = arith.constant 0 : index
    %c0_7 = arith.constant 0 : index
    %8 = vector.load %arg7[%c0_6, %c0_7] : memref<16x128xf32, #tpu.memory_space<vmem>>, vector<16x128xf32>
    tpu.vector_store %arg7[%c0_6, %c0_7], %7 {strides = array<i32>} : memref<16x128xf32, #tpu.memory_space<vmem>>, vector<16x128xf32>,
    %c1_i32 = arith.constant 1 : i32
    %9 = arith.cmpi eq, %arg2, %c1_i32 : i32
    %10 = arith.extui %9 : i1 to i32
    %c0_i32_8 = arith.constant 0 : i32
    %11 = arith.cmpi ne, %10, %c0_i32_8 : i32
    scf.if %11 {
      %c0_9 = arith.constant 0 : index
      %c0_10 = arith.constant 0 : index
      %12 = vector.load %arg7[%c0_9, %c0_10] : memref<16x128xf32, #tpu.memory_space<vmem>>, vector<16x128xf32>
      %cst_11 = arith.constant 0.000000e+00 : f32
      %13 = vector.broadcast %cst_11 : f32 to vector<16x128xf32>
      %14 = arith.maximumf %12, %13 : vector<16x128xf32>
      %15 = arith.truncf %14 : vector<16x128xf32> to vector<16x128xbf16>
      %c0_12 = arith.constant 0 : index
      %c0_13 = arith.constant 0 : index
      %16 = vector.load %arg6[%c0_12, %c0_13] : memref<16x128xbf16, #tpu.memory_space<vmem>>, vector<16x128xbf16>
      tpu.vector_store %arg6[%c0_12, %c0_13], %15 {strides = array<i32>} : memref<16x128xbf16, #tpu.memory_space<vmem>>, vector<16x128xbf16>,
    } else {
    }
    return
  }
  func.func @transform_0(%arg0: i32, %arg1: i32, %arg2: i32) -> (i32, i32) {
    %c0_i32 = arith.constant 0 : i32
    return %arg0, %arg2 : i32, i32
  }
  func.func @transform_1(%arg0: i32, %arg1: i32, %arg2: i32) -> (i32, i32) {
    %c0_i32 = arith.constant 0 : i32
    return %arg2, %arg1 : i32, i32
  }
  func.func @transform_2(%arg0: i32, %arg1: i32, %arg2: i32) -> (i32, i32) {
    %c0_i32 = arith.constant 0 : i32
    %c0_i32_0 = arith.constant 0 : i32
    return %c0_i32, %arg1 : i32, i32
  }
  func.func @transform_3(%arg0: i32, %arg1: i32, %arg2: i32) -> (i32, i32) {
    %c0_i32 = arith.constant 0 : i32
    return %arg0, %arg1 : i32, i32
  }
}

module attributes {stable_mosaic.version = 11 : i64} {
  func.func @_agg_head_kernel(%arg0: i32, %arg1: memref<128x128xbf16, #tpu.memory_space<vmem>>, %arg2: memref<128x128xbf16, #tpu.memory_space<vmem>>, %arg3: memref<1x128xf32, #tpu.memory_space<vmem>>, %arg4: memref<128x128xbf16, #tpu.memory_space<vmem>>, %arg5: memref<1x128xf32, #tpu.memory_space<vmem>>, %arg6: memref<128x128xf32, #tpu.memory_space<vmem>>) attributes {dimension_semantics = [#tpu.dimension_semantics<parallel>], iteration_bounds = array<i64: 1>, scalar_prefetch = 0 : i64, scratch_operands = 0 : i64, tpu.core_type = #tpu.core_type<tc>, window_params = [{transform_indices = @transform_0, window_bounds = array<i64: 128, 128>}, {pipeline_mode = #tpu.pipeline_mode<synchronous>, transform_indices = @transform_1, window_bounds = array<i64: 128, 128>}, {pipeline_mode = #tpu.pipeline_mode<synchronous>, transform_indices = @transform_2, window_bounds = array<i64: 1, 128>}, {pipeline_mode = #tpu.pipeline_mode<synchronous>, transform_indices = @transform_3, window_bounds = array<i64: 128, 128>}, {pipeline_mode = #tpu.pipeline_mode<synchronous>, transform_indices = @transform_4, window_bounds = array<i64: 1, 128>}, {transform_indices = @transform_5, window_bounds = array<i64: 128, 128>}]} {
    %c0 = arith.constant 0 : index
    %c0_0 = arith.constant 0 : index
    %0 = vector.load %arg1[%c0, %c0_0] : memref<128x128xbf16, #tpu.memory_space<vmem>>, vector<128x128xbf16>
    %c0_1 = arith.constant 0 : index
    %c0_2 = arith.constant 0 : index
    %1 = vector.load %arg2[%c0_1, %c0_2] : memref<128x128xbf16, #tpu.memory_space<vmem>>, vector<128x128xbf16>
    %cst = arith.constant dense<0.000000e+00> : vector<128x128xf32>
    %2 = tpu.matmul %0, %1, %cst {dimension_numbers = #tpu.dot_dimension_numbers<[1], [0], [0], [1], [0, 0, 1, 1], [], []>} : vector<128x128xbf16>, vector<128x128xbf16>, vector<128x128xf32> -> vector<128x128xf32>
    %c0_3 = arith.constant 0 : index
    %c0_4 = arith.constant 0 : index
    %3 = vector.load %arg3[%c0_3, %c0_4] : memref<1x128xf32, #tpu.memory_space<vmem>>, vector<1x128xf32>
    %4 = vector.broadcast %3 : vector<1x128xf32> to vector<128x128xf32>
    %5 = arith.addf %2, %4 : vector<128x128xf32>
    %cst_5 = arith.constant 0.000000e+00 : f32
    %6 = vector.broadcast %cst_5 : f32 to vector<128x128xf32>
    %7 = arith.maximumf %5, %6 : vector<128x128xf32>
    %8 = arith.truncf %7 : vector<128x128xf32> to vector<128x128xbf16>
    %c0_6 = arith.constant 0 : index
    %c0_7 = arith.constant 0 : index
    %9 = vector.load %arg4[%c0_6, %c0_7] : memref<128x128xbf16, #tpu.memory_space<vmem>>, vector<128x128xbf16>
    %cst_8 = arith.constant dense<0.000000e+00> : vector<128x128xf32>
    %10 = tpu.matmul %8, %9, %cst_8 {dimension_numbers = #tpu.dot_dimension_numbers<[1], [0], [0], [1], [0, 0, 1, 1], [], []>} : vector<128x128xbf16>, vector<128x128xbf16>, vector<128x128xf32> -> vector<128x128xf32>
    %c0_9 = arith.constant 0 : index
    %c0_10 = arith.constant 0 : index
    %11 = vector.load %arg5[%c0_9, %c0_10] : memref<1x128xf32, #tpu.memory_space<vmem>>, vector<1x128xf32>
    %12 = vector.broadcast %11 : vector<1x128xf32> to vector<128x128xf32>
    %13 = arith.addf %10, %12 : vector<128x128xf32>
    %c0_11 = arith.constant 0 : index
    %c0_12 = arith.constant 0 : index
    %14 = vector.load %arg6[%c0_11, %c0_12] : memref<128x128xf32, #tpu.memory_space<vmem>>, vector<128x128xf32>
    tpu.vector_store %arg6[%c0_11, %c0_12], %13 {strides = array<i32>} : memref<128x128xf32, #tpu.memory_space<vmem>>, vector<128x128xf32>,
    return
  }
  func.func @transform_0(%arg0: i32) -> (i32, i32) {
    %c0_i32 = arith.constant 0 : i32
    %c0_i32_0 = arith.constant 0 : i32
    return %arg0, %c0_i32 : i32, i32
  }
  func.func @transform_1(%arg0: i32) -> (i32, i32) {
    %c0_i32 = arith.constant 0 : i32
    %c0_i32_0 = arith.constant 0 : i32
    %c0_i32_1 = arith.constant 0 : i32
    return %c0_i32, %c0_i32_0 : i32, i32
  }
  func.func @transform_2(%arg0: i32) -> (i32, i32) {
    %c0_i32 = arith.constant 0 : i32
    %c0_i32_0 = arith.constant 0 : i32
    %c0_i32_1 = arith.constant 0 : i32
    return %c0_i32, %c0_i32_0 : i32, i32
  }
  func.func @transform_3(%arg0: i32) -> (i32, i32) {
    %c0_i32 = arith.constant 0 : i32
    %c0_i32_0 = arith.constant 0 : i32
    %c0_i32_1 = arith.constant 0 : i32
    return %c0_i32, %c0_i32_0 : i32, i32
  }
  func.func @transform_4(%arg0: i32) -> (i32, i32) {
    %c0_i32 = arith.constant 0 : i32
    %c0_i32_0 = arith.constant 0 : i32
    %c0_i32_1 = arith.constant 0 : i32
    return %c0_i32, %c0_i32_0 : i32, i32
  }
  func.func @transform_5(%arg0: i32) -> (i32, i32) {
    %c0_i32 = arith.constant 0 : i32
    %c0_i32_0 = arith.constant 0 : i32
    return %arg0, %c0_i32 : i32, i32
  }
}

</mosaic_0001>

<llo_original>
// kernel: blazeneo_forward.9
$region0: #{blazeneo_forward.9}
  #allocation0 [shape = 'u32[]', space=smem, size = 0x4, offset = 0x4, fixed_abs, tag = 'smem constant byte address 0x4 - core index']
  #allocation1 [shape = 'u32[72,128]{1,0:T(1,128)}', space=vmem, size = 0x9000, scoped, tag = 'internal scratch']
  #allocation2 [shape = 'f32[128,128]{1,0:T(8,128)}', space=vmem, size = 0x10000, scoped, tag = 'scratch operand']
  %s0 = inlined_call_operand.vmem [shape: bf16[2048,128], index: 0, kind: input, shape index: {}]
  %s1 = inlined_call_operand.hbm [shape: bf16[128,128], index: 1, kind: input, shape index: {}]
  %s2 = inlined_call_operand.hbm [shape: f32[1,128], index: 2, kind: input, shape index: {}]
  %s3 = inlined_call_operand.vmem [shape: bf16[2048,128], index: 3, kind: output, shape index: {}]
  %s4 = sld [smem:[#allocation0]]
  $region61: #{blazeneo_forward.9} parent=0
    _
  %s6 = ssub.s32 1, %s4
  %s7 = scalar_select 0, %s6, %s4
  $region1: #{blazeneo_forward.9} parent=0
    #allocation3 [shape = 'u8[32768]{0}', space=vmem, size = 0x8000, scoped, tag = 'input window, operand 1, single buffered']
    #allocation4 [shape = 's32[2]{0}', space=sflag, size = 0x8, scoped, tag = 'scoped memory for blazeneo_forward.9']
    #allocation5 [shape = 'u8[512]{0}', space=vmem, size = 0x400, scoped, tag = 'input window, operand 2, single buffered']
    #allocation6 [shape = 's32[1]{0}', space=sflag, size = 0x4, scoped, tag = 'scoped memory for blazeneo_forward.9']
    %8 = vsyncpa [#allocation4], 0
    %9 = vsyncpa [#allocation6], 0
    loop: start=0, step=1, limit=18
    $region2: #{blazeneo_forward.9} parent=1 // loop_pre_header
      _
    $region3: #{blazeneo_forward.9} parent=1 // loop_header
      %s11 = sphi 0, %s15
      %p12 = scmp.ge.s32.totalorder %s11, 18
      %s18 = sphi 0, %s37
      %s19 = sphi 0, %s33
      %s20 = sphi 0, %s29
      %s21 = sphi 0, %s18
      %s22 = sphi 0, %s19
      %s23 = sphi 0, %s20
      %s24 = sphi 0, %s21
      %s25 = sphi 0, %s22
      %s26 = sphi 0, %s23
      %s42 = sphi 0, %s44
      %s45 = sphi 0, %s42
      %s46 = sphi 0, %s45
      %s62 = sphi 0, %s46
      %s70 = sphi 0, %s72
      %s73 = sphi 0, %s70
      %s74 = sphi 0, %s73
      %s90 = sphi 0, %s74
      %s96 = sphi 0, %s98
      %s99 = sphi 0, %s96
      %s100 = sphi 0, %s99
      %s116 = sphi 0, %s100
      %s124 = sphi 0, %s126
      %s127 = sphi 0, %s124
      %s128 = sphi 0, %s127
      %s144 = sphi 0, %s128
    $region4: #{blazeneo_forward.9} parent=1 // loop_header_branch
      %14 = sbr.rel (%p12) target = $region8
    $region5: #{blazeneo_forward.9} parent=1 // loop_body
      %s16 = ssub.s32 %s11, 1
      %s17 = ssub.s32 %s11, 2
      %s27 = sadd.s32 1, %s20
      %p28 = scmp.ge.s32.totalorder %s27, 1
      %s29 = scalar_select %p28, 0, %s27
      %s30 = sadd.s32 1, %s19
      %s31 = scalar_select %p28, %s30, %s19
      %p32 = scmp.ge.s32.totalorder %s31, 1
      %s33 = scalar_select %p32, 0, %s31
      %s34 = sadd.s32 1, %s18
      %s35 = scalar_select %p32, %s34, %s18
      %p36 = scmp.ge.s32.totalorder %s35, 16
      %s37 = scalar_select %p36, 0, %s35
      %s38 = ssub.s32 %s18, %s37
      %s39 = ssub.s32 %s20, %s29
      %s40 = sor.u32 %s38, %s39
      %p41 = scmp.eq.s32.totalorder %s40, 0
      %s43 = sadd.s32 %s42, 1
      %s44 = scalar_select %p41, %s42, %s43
      %p47 = pneg %p41
      %p48 = scmp.eq.s32.totalorder %s11, 15
      %p49 = por %p47, %p48
      %p50 = scmp.ne.s32.totalorder %s42, %s45
      %p51 = scmp.eq.s32.totalorder %s11, 0
      %p52 = por %p50, %p51
      %p53 = scmp.ne.s32.totalorder %s42, %s45
      %p54 = scmp.eq.s32.totalorder %s16, 15
      %p55 = por %p53, %p54
      %p56 = scmp.ne.s32.totalorder %s45, %s46
      %p57 = scmp.eq.s32.totalorder %s16, 0
      %p58 = por %p56, %p57
      %p59 = scmp.ne.s32.totalorder %s45, %s46
      %p60 = scmp.eq.s32.totalorder %s17, 15
      %p61 = por %p59, %p60
      %p63 = scmp.ne.s32.totalorder %s46, %s62
      %p64 = scmp.eq.s32.totalorder %s17, 0
      %p65 = por %p63, %p64
      %s66 = ssub.s32 %s20, %s29
      %s67 = ssub.s32 %s19, %s33
      %s68 = sor.u32 %s66, %s67
      %p69 = scmp.eq.s32.totalorder %s68, 0
      %s71 = sadd.s32 %s70, 1
      %s72 = scalar_select %p69, %s70, %s71
      %p75 = pneg %p69
      %p76 = scmp.eq.s32.totalorder %s11, 15
      %p77 = por %p75, %p76
      %p78 = scmp.ne.s32.totalorder %s70, %s73
      %p79 = scmp.eq.s32.totalorder %s11, 0
      %p80 = por %p78, %p79
      %p81 = scmp.ne.s32.totalorder %s70, %s73
      %p82 = scmp.eq.s32.totalorder %s16, 15
      %p83 = por %p81, %p82
      %p84 = scmp.ne.s32.totalorder %s73, %s74
      %p85 = scmp.eq.s32.totalorder %s16, 0
      %p86 = por %p84, %p85
      %p87 = scmp.ne.s32.totalorder %s73, %s74
      %p88 = scmp.eq.s32.totalorder %s17, 15
      %p89 = por %p87, %p88
      %p91 = scmp.ne.s32.totalorder %s74, %s90
      %p92 = scmp.eq.s32.totalorder %s17, 0
      %p93 = por %p91, %p92
      %s94 = ssub.s32 %s19, %s33
      %p95 = scmp.eq.s32.totalorder %s94, 0
      %s97 = sadd.s32 %s96, 1
      %s98 = scalar_select %p95, %s96, %s97
      %p101 = pneg %p95
      %p102 = scmp.eq.s32.totalorder %s11, 15
      %p103 = por %p101, %p102
      %p104 = scmp.ne.s32.totalorder %s96, %s99
      %p105 = scmp.eq.s32.totalorder %s11, 0
      %p106 = por %p104, %p105
      %p107 = scmp.ne.s32.totalorder %s96, %s99
      %p108 = scmp.eq.s32.totalorder %s16, 15
      %p109 = por %p107, %p108
      %p110 = scmp.ne.s32.totalorder %s99, %s100
      %p111 = scmp.eq.s32.totalorder %s16, 0
      %p112 = por %p110, %p111
      %p113 = scmp.ne.s32.totalorder %s99, %s100
      %p114 = scmp.eq.s32.totalorder %s17, 15
      %p115 = por %p113, %p114
      %p117 = scmp.ne.s32.totalorder %s100, %s116
      %p118 = scmp.eq.s32.totalorder %s17, 0
      %p119 = por %p117, %p118
      %s120 = ssub.s32 %s18, %s37
      %s121 = ssub.s32 %s19, %s33
      %s122 = sor.u32 %s120, %s121
      %p123 = scmp.eq.s32.totalorder %s122, 0
      %s125 = sadd.s32 %s124, 1
      %s126 = scalar_select %p123, %s124, %s125
      %p129 = pneg %p123
      %p130 = scmp.eq.s32.totalorder %s11, 15
      %p131 = por %p129, %p130
      %p132 = scmp.ne.s32.totalorder %s124, %s127
      %p133 = scmp.eq.s32.totalorder %s11, 0
      %p134 = por %p132, %p133
      %p135 = scmp.ne.s32.totalorder %s124, %s127
      %p136 = scmp.eq.s32.totalorder %s16, 15
      %p137 = por %p135, %p136
      %p138 = scmp.ne.s32.totalorder %s127, %s128
      %p139 = scmp.eq.s32.totalorder %s16, 0
      %p140 = por %p138, %p139
      %p141 = scmp.ne.s32.totalorder %s127, %s128
      %p142 = scmp.eq.s32.totalorder %s17, 15
      %p143 = por %p141, %p142
      %p145 = scmp.ne.s32.totalorder %s128, %s144
      %p146 = scmp.eq.s32.totalorder %s17, 0
      %p147 = por %p145, %p146
      %p148 = scmp.le.s32.totalorder 1, %s11
      %p149 = scmp.lt.s32.totalorder %s11, 17
      %p150 = pnand %p148, %p149
      %p151 = pneg %p150
      // Predicated region
      $region9: #{blazeneo_forward.9} parent=5 // pred_check
        _
      $region10: #{blazeneo_forward.9} parent=5 // pred_check_branch
        %153 = sbr.rel (%p150) target = $region12
      $region11: #{blazeneo_forward.9} parent=5 // pred_region
        %s154 = ssub.s32 %s11, 1
        // Predicated region
        $region13: #{blazeneo_forward.9} parent=11 // pred_check
          %p155 = pneg %p86
        $region14: #{blazeneo_forward.9} parent=11 // pred_check_branch
          %157 = sbr.rel (%p155) target = $region16
        $region15: #{blazeneo_forward.9} parent=11 // pred_region
          %s158 = smul.u32 16, %s23
          %160 = vsyncadd [#allocation4], 0
          %s161 = sadd.s32 %s22, %s158
          %s162 = smul.addr %s161, 4
          %s163 = scalar_lea.hbm %s1, %s162
          %s164 = sshll.u32 %s163, 4
          %s165 = int_to_ptr.hbm [resolvable:$true] %s164
          %s166 = sshll.u32 [#allocation3], 4
          %s167 = int_to_ptr.vmem [resolvable:$true] %s166
          %172 = dma.hbm_to_vmem [thread:$0]  %s165, 1024, %s167, [#allocation4], 64, 64, 4
        $region16: #{blazeneo_forward.9} parent=11 // pred_fallthru
          _
        // Predicated region
        $region17: #{blazeneo_forward.9} parent=11 // pred_check
          %p173 = pneg %p112
        $region18: #{blazeneo_forward.9} parent=11 // pred_check_branch
          %175 = sbr.rel (%p173) target = $region20
        $region19: #{blazeneo_forward.9} parent=11 // pred_region
          %177 = vsyncadd [#allocation6], 0
          %s178 = scalar_lea.hbm %s2, %s22
          %s180 = sshll.u32 %s178, 4
          %s181 = int_to_ptr.hbm [resolvable:$true] %s180
          %s182 = sshll.u32 [#allocation5], 4
          %s183 = int_to_ptr.vmem [resolvable:$true] %s182
          %185 = dma.hbm_to_vmem [thread:$0]  %s181, 16, %s183, [#allocation6]
        $region20: #{blazeneo_forward.9} parent=11 // pred_fallthru
          _
      $region12: #{blazeneo_forward.9} parent=5 // pred_fallthru
        _
      %p186 = scmp.lt.s32.totalorder %s11, 16
      // Predicated region
      $region21: #{blazeneo_forward.9} parent=5 // pred_check
        %p187 = pneg %p186
      $region22: #{blazeneo_forward.9} parent=5 // pred_check_branch
        %189 = sbr.rel (%p187) target = $region24
      $region23: #{blazeneo_forward.9} parent=5 // pred_region
        // Predicated region
        $region25: #{blazeneo_forward.9} parent=23 // pred_check
          %p190 = pneg %p52
        $region26: #{blazeneo_forward.9} parent=23 // pred_check_branch
          %192 = sbr.rel (%p190) target = $region28
        $region27: #{blazeneo_forward.9} parent=23 // pred_region
          %s193 = smul.u32 16, %s18
          %p194 = scmp.lt.s32.totalorder %s193, 255
          %s195 = scalar_select %p194, %s193, 255
          %p196 = scmp.lt.s32.totalorder %s20, 0
          %s197 = scalar_select %p196, %s20, 0
          %s198 = sadd.s32 %s197, %s195
          %s199 = smul.addr %s198, 4
          %s200 = scalar_lea.vmem %s0, %s199
          %s201 = smul.u32 16, %s18
        $region28: #{blazeneo_forward.9} parent=23 // pred_fallthru
          _
      $region24: #{blazeneo_forward.9} parent=5 // pred_fallthru
        _
      %p202 = scmp.le.s32.totalorder 1, %s11
      %p203 = scmp.lt.s32.totalorder %s11, 17
      %p204 = pnand %p202, %p203
      %p205 = pneg %p204
      // Predicated region
      $region29: #{blazeneo_forward.9} parent=5 // pred_check
        _
      $region30: #{blazeneo_forward.9} parent=5 // pred_check_branch
        %207 = sbr.rel (%p204) target = $region32
      $region31: #{blazeneo_forward.9} parent=5 // pred_region
        %s208 = ssub.s32 %s11, 1
        // Predicated region
        $region33: #{blazeneo_forward.9} parent=31 // pred_check
          %p209 = pneg %p86
        $region34: #{blazeneo_forward.9} parent=31 // pred_check_branch
          %211 = sbr.rel (%p209) target = $region36
        $region35: #{blazeneo_forward.9} parent=31 // pred_region
          %213 = dma.done [#allocation4], 1024
        $region36: #{blazeneo_forward.9} parent=31 // pred_fallthru
          _
        // Predicated region
        $region37: #{blazeneo_forward.9} parent=31 // pred_check
          %p214 = pneg %p112
        $region38: #{blazeneo_forward.9} parent=31 // pred_check_branch
          %216 = sbr.rel (%p214) target = $region40
        $region39: #{blazeneo_forward.9} parent=31 // pred_region
          %218 = dma.done [#allocation6], 16
        $region40: #{blazeneo_forward.9} parent=31 // pred_fallthru
          _
        %s219 = smul.u32 16, %s21
        %p220 = scmp.lt.s32.totalorder %s219, 255
        %s221 = scalar_select %p220, %s219, 255
        %p222 = scmp.lt.s32.totalorder %s23, 0
        %s223 = scalar_select %p222, %s23, 0
        %s224 = sadd.s32 %s223, %s221
        %s225 = smul.addr %s224, 4
        %s226 = scalar_lea.vmem %s0, %s225
        %p227 = pneg %p58
        %p228 = pneg %p55
        %p229 = pneg %p86
        %p230 = pneg %p83
        %p231 = pneg %p112
        %p232 = pneg %p109
        %p233 = pneg %p140
        %p234 = pneg %p137
        %s235 = smul.u32 16, %s21
        %p236 = scmp.lt.s32.totalorder %s235, 255
        %s237 = scalar_select %p236, %s235, 255
        %p238 = scmp.lt.s32.totalorder %s22, 0
        %s239 = scalar_select %p238, %s22, 0
        %s240 = sadd.s32 %s239, %s237
        %s241 = smul.addr %s240, 4
        %s242 = scalar_lea.vmem %s3, %s241
        %s243 = smul.u32 16, %s21
        %p244 = scmp.lt.s32.totalorder %s243, 255
        %s245 = scalar_select %p244, %s243, 255
        %p246 = scmp.lt.s32.totalorder %s23, 0
        %s247 = scalar_select %p246, %s23, 0
        %s248 = sadd.s32 %s247, %s245
        %s249 = smul.addr %s248, 4
        %s250 = scalar_lea.vmem %s0, %s249
        %s251 = smul.u32 16, %s21
        %s252 = smul.u32 16, %s23
        %s253 = smul.u32 16, %s21
        %p254 = scmp.lt.s32.totalorder %s253, 255
        %s255 = scalar_select %p254, %s253, 255
        %p256 = scmp.lt.s32.totalorder %s22, 0
        %s257 = scalar_select %p256, %s22, 0
        %s258 = sadd.s32 %s257, %s255
        %s259 = smul.addr %s258, 4
        %s260 = scalar_lea.vmem %s3, %s259
        %s261 = smul.u32 16, %s21
        %p262 = scmp.eq.s32.totalorder %s23, 0
        // Predicated region
        $region41: #{blazeneo_forward.9} parent=31 // pred_check
          %p263 = pneg %p262
        $region42: #{blazeneo_forward.9} parent=31 // pred_check_branch
          %265 = sbr.rel (%p263) target = $region44
        $region43: #{blazeneo_forward.9} parent=31 // pred_region
          %v266 = vld [vmem:[#allocation5] sm:$0x1]
          %v268 = vperm.slane %v266, 0
          %270 = vst [vmem:[#allocation2] sm:$0xff] %v268
          %271 = vst [vmem:[#allocation2 + $0x8] sm:$0xff] %v268
          %272 = vst [vmem:[#allocation2 + $0x10] sm:$0xff] %v268
          %273 = vst [vmem:[#allocation2 + $0x18] sm:$0xff] %v268
          %274 = vst [vmem:[#allocation2 + $0x20] sm:$0xff] %v268
          %275 = vst [vmem:[#allocation2 + $0x28] sm:$0xff] %v268
          %276 = vst [vmem:[#allocation2 + $0x30] sm:$0xff] %v268
          %277 = vst [vmem:[#allocation2 + $0x38] sm:$0xff] %v268
          %278 = vst [vmem:[#allocation2 + $0x40] sm:$0xff] %v268
          %279 = vst [vmem:[#allocation2 + $0x48] sm:$0xff] %v268
          %280 = vst [vmem:[#allocation2 + $0x50] sm:$0xff] %v268
          %281 = vst [vmem:[#allocation2 + $0x58] sm:$0xff] %v268
          %282 = vst [vmem:[#allocation2 + $0x60] sm:$0xff] %v268
          %283 = vst [vmem:[#allocation2 + $0x68] sm:$0xff] %v268
          %284 = vst [vmem:[#allocation2 + $0x70] sm:$0xff] %v268
          %285 = vst [vmem:[#allocation2 + $0x78] sm:$0xff] %v268
        $region44: #{blazeneo_forward.9} parent=31 // pred_fallthru
          _
        %v286 = vld [vmem:[#allocation2] sm:$0xff]
        %v287 = vld [vmem:[#allocation2 + $0x8] sm:$0xff]
        %v288 = vld [vmem:[#allocation2 + $0x10] sm:$0xff]
        %v289 = vld [vmem:[#allocation2 + $0x18] sm:$0xff]
        %v290 = vld [vmem:[#allocation2 + $0x20] sm:$0xff]
        %v291 = vld [vmem:[#allocation2 + $0x28] sm:$0xff]
        %v292 = vld [vmem:[#allocation2 + $0x30] sm:$0xff]
        %v293 = vld [vmem:[#allocation2 + $0x38] sm:$0xff]
        %v294 = vld [vmem:[#allocation2 + $0x40] sm:$0xff]
        %v295 = vld [vmem:[#allocation2 + $0x48] sm:$0xff]
        %v296 = vld [vmem:[#allocation2 + $0x50] sm:$0xff]
        %v297 = vld [vmem:[#allocation2 + $0x58] sm:$0xff]
        %v298 = vld [vmem:[#allocation2 + $0x60] sm:$0xff]
        %v299 = vld [vmem:[#allocation2 + $0x68] sm:$0xff]
        %v300 = vld [vmem:[#allocation2 + $0x70] sm:$0xff]
        %v301 = vld [vmem:[#allocation2 + $0x78] sm:$0xff]
        %v302 = vld [vmem:[%s250] sm:$0xf]
        %v303 = vld [vmem:[%s250 + $0x4] sm:$0xf]
        %v304 = vld [vmem:[%s250 + $0x8] sm:$0xf]
        %v305 = vld [vmem:[%s250 + $0xc] sm:$0xf]
        %v306 = vld [vmem:[%s250 + $0x10] sm:$0xf]
        %v307 = vld [vmem:[%s250 + $0x14] sm:$0xf]
        %v308 = vld [vmem:[%s250 + $0x18] sm:$0xf]
        %v309 = vld [vmem:[%s250 + $0x1c] sm:$0xf]
        %v310 = vld [vmem:[%s250 + $0x20] sm:$0xf]
        %v311 = vld [vmem:[%s250 + $0x24] sm:$0xf]
        %v312 = vld [vmem:[%s250 + $0x28] sm:$0xf]
        %v313 = vld [vmem:[%s250 + $0x2c] sm:$0xf]
        %v314 = vld [vmem:[%s250 + $0x30] sm:$0xf]
        %v315 = vld [vmem:[%s250 + $0x34] sm:$0xf]
        %v316 = vld [vmem:[%s250 + $0x38] sm:$0xf]
        %v317 = vld [vmem:[%s250 + $0x3c] sm:$0xf]
        %v318 = vld [vmem:[#allocation3] sm:$0xf]
        %v319 = vld [vmem:[#allocation3 + $0x4] sm:$0xf]
        %v320 = vld [vmem:[#allocation3 + $0x8] sm:$0xf]
        %v321 = vld [vmem:[#allocation3 + $0xc] sm:$0xf]
        %v322 = vld [vmem:[#allocation3 + $0x10] sm:$0xf]
        %v323 = vld [vmem:[#allocation3 + $0x14] sm:$0xf]
        %v324 = vld [vmem:[#allocation3 + $0x18] sm:$0xf]
        %v325 = vld [vmem:[#allocation3 + $0x1c] sm:$0xf]
        %v326 = vld [vmem:[#allocation3 + $0x20] sm:$0xf]
        %v327 = vld [vmem:[#allocation3 + $0x24] sm:$0xf]
        %v328 = vld [vmem:[#allocation3 + $0x28] sm:$0xf]
        %v329 = vld [vmem:[#allocation3 + $0x2c] sm:$0xf]
        %v330 = vld [vmem:[#allocation3 + $0x30] sm:$0xf]
        %v331 = vld [vmem:[#allocation3 + $0x34] sm:$0xf]
        %v332 = vld [vmem:[#allocation3 + $0x38] sm:$0xf]
        %v333 = vld [vmem:[#allocation3 + $0x3c] sm:$0xf]
        %v350 = vunpack.c.l.b16 %v302
        %v351 = vunpack.c.l.b16 %v303
        %v352 = vunpack.c.l.b16 %v304
        %v353 = vunpack.c.l.b16 %v305
        %v354 = vunpack.c.l.b16 %v306
        %v355 = vunpack.c.l.b16 %v307
        %v356 = vunpack.c.l.b16 %v308
        %v357 = vunpack.c.l.b16 %v309
        %v358 = vunpack.c.l.b16 %v310
        %v359 = vunpack.c.l.b16 %v311
        %v360 = vunpack.c.l.b16 %v312
        %v361 = vunpack.c.l.b16 %v313
        %v362 = vunpack.c.l.b16 %v314
        %v363 = vunpack.c.l.b16 %v315
        %v364 = vunpack.c.l.b16 %v316
        %v365 = vunpack.c.l.b16 %v317
        %v366 = vpack.c.b16 %v351, %v350
        %v367 = vpack.c.b16 %v353, %v352
        %v368 = vpack.c.b16 %v355, %v354
        %v369 = vpack.c.b16 %v357, %v356
        %v370 = vpack.c.b16 %v359, %v358
        %v371 = vpack.c.b16 %v361, %v360
        %v372 = vpack.c.b16 %v363, %v362
        %v373 = vpack.c.b16 %v365, %v364
        %v398 = vunpack.c.l.b16 %v318
        %v399 = vunpack.c.l.b16 %v319
        %v400 = vunpack.c.l.b16 %v320
        %v401 = vunpack.c.l.b16 %v321
        %v402 = vunpack.c.l.b16 %v322
        %v403 = vunpack.c.l.b16 %v323
        %v404 = vunpack.c.l.b16 %v324
        %v405 = vunpack.c.l.b16 %v325
        %v406 = vunpack.c.l.b16 %v326
        %v407 = vunpack.c.l.b16 %v327
        %v408 = vunpack.c.l.b16 %v328
        %v409 = vunpack.c.l.b16 %v329
        %v410 = vunpack.c.l.b16 %v330
        %v411 = vunpack.c.l.b16 %v331
        %v412 = vunpack.c.l.b16 %v332
        %v413 = vunpack.c.l.b16 %v333
        %v414 = vpack.c.b16 %v399, %v398
        %v415 = vpack.c.b16 %v401, %v400
        %v416 = vpack.c.b16 %v403, %v402
        %v417 = vpack.c.b16 %v405, %v404
        %v418 = vpack.c.b16 %v407, %v406
        %v419 = vpack.c.b16 %v409, %v408
        %v420 = vpack.c.b16 %v411, %v410
        %v421 = vpack.c.b16 %v413, %v412
        %430 = vmatpush.bf16.msra.mxu0 %v421
        %431 = vmatpush.bf16.msra.mxu0 %v420
        %432 = vmatpush.bf16.msra.mxu0 %v419
        %433 = vmatpush.bf16.msra.mxu0 %v418
        %434 = vmatpush.bf16.msra.mxu0 %v417
        %435 = vmatpush.bf16.msra.mxu0 %v416
        %436 = vmatpush.bf16.msra.mxu0 %v415
        %437 = vmatpush.bf16.msra.mxu0 %v414
        %438 = vmatmul.bf16.gmra.mxu0 %v366
        %v439 = vpop.f32.mrf.mxu0
        %v440 = vadd.f32 0.0, %v439
        %v441 = vpop.f32.mrf.mxu0
        %v442 = vadd.f32 0.0, %v441
        %443 = vmatmul.bf16.gmra.mxu0 %v367
        %v444 = vpop.f32.mrf.mxu0
        %v445 = vadd.f32 0.0, %v444
        %v446 = vpop.f32.mrf.mxu0
        %v447 = vadd.f32 0.0, %v446
        %448 = vmatmul.bf16.gmra.mxu0 %v368
        %v449 = vpop.f32.mrf.mxu0
        %v450 = vadd.f32 0.0, %v449
        %v451 = vpop.f32.mrf.mxu0
        %v452 = vadd.f32 0.0, %v451
        %453 = vmatmul.bf16.gmra.mxu0 %v369
        %v454 = vpop.f32.mrf.mxu0
        %v455 = vadd.f32 0.0, %v454
        %v456 = vpop.f32.mrf.mxu0
        %v457 = vadd.f32 0.0, %v456
        %458 = vmatmul.bf16.gmra.mxu0 %v370
        %v459 = vpop.f32.mrf.mxu0
        %v460 = vadd.f32 0.0, %v459
        %v461 = vpop.f32.mrf.mxu0
        %v462 = vadd.f32 0.0, %v461
        %463 = vmatmul.bf16.gmra.mxu0 %v371
        %v464 = vpop.f32.mrf.mxu0
        %v465 = vadd.f32 0.0, %v464
        %v466 = vpop.f32.mrf.mxu0
        %v467 = vadd.f32 0.0, %v466
        %468 = vmatmul.bf16.gmra.mxu0 %v372
        %v469 = vpop.f32.mrf.mxu0
        %v470 = vadd.f32 0.0, %v469
        %v471 = vpop.f32.mrf.mxu0
        %v472 = vadd.f32 0.0, %v471
        %473 = vmatmul.bf16.gmra.mxu0 %v373
        %v474 = vpop.f32.mrf.mxu0
        %v475 = vadd.f32 0.0, %v474
        %v476 = vpop.f32.mrf.mxu0
        %v477 = vadd.f32 0.0, %v476
        %478 = vdwg.mxu0
        %v479 = vadd.f32 %v286, %v440
        %v480 = vadd.f32 %v287, %v442
        %v481 = vadd.f32 %v288, %v445
        %v482 = vadd.f32 %v289, %v447
        %v483 = vadd.f32 %v290, %v450
        %v484 = vadd.f32 %v291, %v452
        %v485 = vadd.f32 %v292, %v455
        %v486 = vadd.f32 %v293, %v457
        %v487 = vadd.f32 %v294, %v460
        %v488 = vadd.f32 %v295, %v462
        %v489 = vadd.f32 %v296, %v465
        %v490 = vadd.f32 %v297, %v467
        %v491 = vadd.f32 %v298, %v470
        %v492 = vadd.f32 %v299, %v472
        %v493 = vadd.f32 %v300, %v475
        %v494 = vadd.f32 %v301, %v477
        %495 = vst [vmem:[#allocation2] sm:$0xff] %v479
        %496 = vst [vmem:[#allocation2 + $0x8] sm:$0xff] %v480
        %497 = vst [vmem:[#allocation2 + $0x10] sm:$0xff] %v481
        %498 = vst [vmem:[#allocation2 + $0x18] sm:$0xff] %v482
        %499 = vst [vmem:[#allocation2 + $0x20] sm:$0xff] %v483
        %500 = vst [vmem:[#allocation2 + $0x28] sm:$0xff] %v484
        %501 = vst [vmem:[#allocation2 + $0x30] sm:$0xff] %v485
        %502 = vst [vmem:[#allocation2 + $0x38] sm:$0xff] %v486
        %503 = vst [vmem:[#allocation2 + $0x40] sm:$0xff] %v487
        %504 = vst [vmem:[#allocation2 + $0x48] sm:$0xff] %v488
        %505 = vst [vmem:[#allocation2 + $0x50] sm:$0xff] %v489
        %506 = vst [vmem:[#allocation2 + $0x58] sm:$0xff] %v490
        %507 = vst [vmem:[#allocation2 + $0x60] sm:$0xff] %v491
        %508 = vst [vmem:[#allocation2 + $0x68] sm:$0xff] %v492
        %509 = vst [vmem:[#allocation2 + $0x70] sm:$0xff] %v493
        %510 = vst [vmem:[#allocation2 + $0x78] sm:$0xff] %v494
        // Predicated region
        $region45: #{blazeneo_forward.9} parent=31 // pred_check
          %p511 = pneg %p262
        $region46: #{blazeneo_forward.9} parent=31 // pred_check_branch
          %513 = sbr.rel (%p511) target = $region48
        $region47: #{blazeneo_forward.9} parent=31 // pred_region
          %v514 = vld [vmem:[#allocation2] sm:$0xff]
          %v515 = vld [vmem:[#allocation2 + $0x8] sm:$0xff]
          %v516 = vld [vmem:[#allocation2 + $0x10] sm:$0xff]
          %v517 = vld [vmem:[#allocation2 + $0x18] sm:$0xff]
          %v518 = vld [vmem:[#allocation2 + $0x20] sm:$0xff]
          %v519 = vld [vmem:[#allocation2 + $0x28] sm:$0xff]
          %v520 = vld [vmem:[#allocation2 + $0x30] sm:$0xff]
          %v521 = vld [vmem:[#allocation2 + $0x38] sm:$0xff]
          %v522 = vld [vmem:[#allocation2 + $0x40] sm:$0xff]
          %v523 = vld [vmem:[#allocation2 + $0x48] sm:$0xff]
          %v524 = vld [vmem:[#allocation2 + $0x50] sm:$0xff]
          %v525 = vld [vmem:[#allocation2 + $0x58] sm:$0xff]
          %v526 = vld [vmem:[#allocation2 + $0x60] sm:$0xff]
          %v527 = vld [vmem:[#allocation2 + $0x68] sm:$0xff]
          %v528 = vld [vmem:[#allocation2 + $0x70] sm:$0xff]
          %v529 = vld [vmem:[#allocation2 + $0x78] sm:$0xff]
          %v530 = vmax.f32 %v514, 0.0
          %v531 = vmax.f32 %v515, 0.0
          %v532 = vmax.f32 %v516, 0.0
          %v533 = vmax.f32 %v517, 0.0
          %v534 = vmax.f32 %v518, 0.0
          %v535 = vmax.f32 %v519, 0.0
          %v536 = vmax.f32 %v520, 0.0
          %v537 = vmax.f32 %v521, 0.0
          %v538 = vmax.f32 %v522, 0.0
          %v539 = vmax.f32 %v523, 0.0
          %v540 = vmax.f32 %v524, 0.0
          %v541 = vmax.f32 %v525, 0.0
          %v542 = vmax.f32 %v526, 0.0
          %v543 = vmax.f32 %v527, 0.0
          %v544 = vmax.f32 %v528, 0.0
          %v545 = vmax.f32 %v529, 0.0
          %v546 = vpack.c.bf16 %v530, %v530
          %v547 = vpack.c.bf16 %v531, %v531
          %v548 = vpack.c.bf16 %v532, %v532
          %v549 = vpack.c.bf16 %v533, %v533
          %v550 = vpack.c.bf16 %v534, %v534
          %v551 = vpack.c.bf16 %v535, %v535
          %v552 = vpack.c.bf16 %v536, %v536
          %v553 = vpack.c.bf16 %v537, %v537
          %v554 = vpack.c.bf16 %v538, %v538
          %v555 = vpack.c.bf16 %v539, %v539
          %v556 = vpack.c.bf16 %v540, %v540
          %v557 = vpack.c.bf16 %v541, %v541
          %v558 = vpack.c.bf16 %v542, %v542
          %v559 = vpack.c.bf16 %v543, %v543
          %v560 = vpack.c.bf16 %v544, %v544
          %v561 = vpack.c.bf16 %v545, %v545
          %562 = vst [vmem:[%s260] sm:$0xf] %v546
          %563 = vst [vmem:[%s260 + $0x4] sm:$0xf] %v547
          %564 = vst [vmem:[%s260 + $0x8] sm:$0xf] %v548
          %565 = vst [vmem:[%s260 + $0xc] sm:$0xf] %v549
          %566 = vst [vmem:[%s260 + $0x10] sm:$0xf] %v550
          %567 = vst [vmem:[%s260 + $0x14] sm:$0xf] %v551
          %568 = vst [vmem:[%s260 + $0x18] sm:$0xf] %v552
          %569 = vst [vmem:[%s260 + $0x1c] sm:$0xf] %v553
          %570 = vst [vmem:[%s260 + $0x20] sm:$0xf] %v554
          %571 = vst [vmem:[%s260 + $0x24] sm:$0xf] %v555
          %572 = vst [vmem:[%s260 + $0x28] sm:$0xf] %v556
          %573 = vst [vmem:[%s260 + $0x2c] sm:$0xf] %v557
          %574 = vst [vmem:[%s260 + $0x30] sm:$0xf] %v558
          %575 = vst [vmem:[%s260 + $0x34] sm:$0xf] %v559
          %576 = vst [vmem:[%s260 + $0x38] sm:$0xf] %v560
          %577 = vst [vmem:[%s260 + $0x3c] sm:$0xf] %v561
        $region48: #{blazeneo_forward.9} parent=31 // pred_fallthru
          _
        %s578 = smul.u32 16, %s21
        %p579 = scmp.lt.s32.totalorder %s578, 255
        %s580 = scalar_select %p579, %s578, 255
        %p581 = scmp.lt.s32.totalorder %s22, 0
        %s582 = scalar_select %p581, %s22, 0
        %s583 = sadd.s32 %s582, %s580
        %s584 = smul.addr %s583, 4
        %s585 = scalar_lea.vmem %s3, %s584
        // Predicated region
        $region49: #{blazeneo_forward.9} parent=31 // pred_check
          %p586 = pneg %p137
        $region50: #{blazeneo_forward.9} parent=31 // pred_check_branch
          %588 = sbr.rel (%p586) target = $region52
        $region51: #{blazeneo_forward.9} parent=31 // pred_region
          %s589 = smul.u32 16, %s21
        $region52: #{blazeneo_forward.9} parent=31 // pred_fallthru
          _
      $region32: #{blazeneo_forward.9} parent=5 // pred_fallthru
        _
      %p590 = scmp.le.s32.totalorder 2, %s11
      // Predicated region
      $region53: #{blazeneo_forward.9} parent=5 // pred_check
        %p591 = pneg %p590
      $region54: #{blazeneo_forward.9} parent=5 // pred_check_branch
        %593 = sbr.rel (%p591) target = $region56
      $region55: #{blazeneo_forward.9} parent=5 // pred_region
        %s594 = ssub.s32 %s11, 2
        // Predicated region
        $region57: #{blazeneo_forward.9} parent=55 // pred_check
          %p595 = pneg %p143
        $region58: #{blazeneo_forward.9} parent=55 // pred_check_branch
          %597 = sbr.rel (%p595) target = $region60
        $region59: #{blazeneo_forward.9} parent=55 // pred_region
          %s598 = smul.u32 16, %s24
          %p599 = scmp.lt.s32.totalorder %s598, 255
          %s600 = scalar_select %p599, %s598, 255
          %p601 = scmp.lt.s32.totalorder %s25, 0
          %s602 = scalar_select %p601, %s25, 0
          %s603 = sadd.s32 %s602, %s600
          %s604 = smul.addr %s603, 4
          %s605 = scalar_lea.vmem %s3, %s604
        $region60: #{blazeneo_forward.9} parent=55 // pred_fallthru
          _
      $region56: #{blazeneo_forward.9} parent=5 // pred_fallthru
        _
    $region6: #{blazeneo_forward.9} parent=1 // loop_footer
      %s15 = sadd.s32 1, %s11
    $region7: #{blazeneo_forward.9} parent=1 // loop_footer_branch
      %10 = sbr.rel target = $region3
    $region8: #{blazeneo_forward.9} parent=1 // loop_exit
      _
    %606 = vsyncpa [#allocation4], 1
    %s607 = scalar_lea.sflag [#allocation4], 1
    %608 = vsyncpa %s607, 1
    %609 = vsyncpa [#allocation6], 1

// kernel: blazeneo_forward.10
$region0: #{blazeneo_forward.10}
  #allocation0 [shape = 'u32[]', space=smem, size = 0x4, offset = 0x4, fixed_abs, tag = 'smem constant byte address 0x4 - core index']
  #allocation1 [shape = 'u32[72,128]{1,0:T(1,128)}', space=vmem, size = 0x9000, scoped, tag = 'internal scratch']
  #allocation2 [shape = 'f32[128,128]{1,0:T(8,128)}', space=vmem, size = 0x10000, scoped, tag = 'scratch operand']
  %s0 = inlined_call_operand.vmem [shape: bf16[512,384], index: 0, kind: input, shape index: {}]
  %s1 = inlined_call_operand.hbm [shape: bf16[384,128], index: 1, kind: input, shape index: {}]
  %s2 = inlined_call_operand.hbm [shape: f32[1,128], index: 2, kind: input, shape index: {}]
  %s3 = inlined_call_operand.vmem [shape: bf16[512,128], index: 3, kind: output, shape index: {}]
  %s4 = sld [smem:[#allocation0]]
  $region102: #{blazeneo_forward.10} parent=0
    _
  %s6 = ssub.s32 1, %s4
  %s7 = scalar_select 0, %s6, %s4
  $region1: #{blazeneo_forward.10} parent=0
    #allocation3 [shape = 'u8[65536]{0}', space=vmem, size = 0x10000, scoped, tag = 'input window, operand 0']
    #allocation4 [shape = 'u8[65536]{0}', space=vmem, size = 0x10000, scoped, tag = 'input window, operand 1']
    #allocation5 [shape = 's32[2]{0}', space=sflag, size = 0x8, scoped, tag = 'scoped memory for blazeneo_forward.10']
    #allocation6 [shape = 'u8[512]{0}', space=vmem, size = 0x400, scoped, tag = 'input window, operand 2, single buffered']
    #allocation7 [shape = 's32[1]{0}', space=sflag, size = 0x4, scoped, tag = 'scoped memory for blazeneo_forward.10']
    %8 = vsyncpa [#allocation5], 0
    %s9 = scalar_lea.sflag [#allocation5], 1
    %10 = vsyncpa %s9, 0
    %11 = vsyncpa [#allocation7], 0
    loop: start=0, step=1, limit=14
    $region2: #{blazeneo_forward.10} parent=1 // loop_pre_header
      _
    $region3: #{blazeneo_forward.10} parent=1 // loop_header
      %s13 = sphi 0, %s17
      %p14 = scmp.ge.s32.totalorder %s13, 14
      %s20 = sphi 0, %s39
      %s21 = sphi 0, %s35
      %s22 = sphi 0, %s31
      %s23 = sphi 0, %s20
      %s24 = sphi 0, %s21
      %s25 = sphi 0, %s22
      %s26 = sphi 0, %s23
      %s27 = sphi 0, %s24
      %s28 = sphi 0, %s25
      %s44 = sphi 0, %s46
      %s47 = sphi 0, %s44
      %s48 = sphi 0, %s47
      %s64 = sphi 0, %s48
      %s72 = sphi 0, %s74
      %s75 = sphi 0, %s72
      %s76 = sphi 0, %s75
      %s92 = sphi 0, %s76
      %s98 = sphi 0, %s100
      %s101 = sphi 0, %s98
      %s102 = sphi 0, %s101
      %s118 = sphi 0, %s102
      %s126 = sphi 0, %s128
      %s129 = sphi 0, %s126
      %s130 = sphi 0, %s129
      %s146 = sphi 0, %s130
    $region4: #{blazeneo_forward.10} parent=1 // loop_header_branch
      %16 = sbr.rel (%p14) target = $region8
    $region5: #{blazeneo_forward.10} parent=1 // loop_body
      %s18 = ssub.s32 %s13, 1
      %s19 = ssub.s32 %s13, 2
      %s29 = sadd.s32 1, %s22
      %p30 = scmp.ge.s32.totalorder %s29, 3
      %s31 = scalar_select %p30, 0, %s29
      %s32 = sadd.s32 1, %s21
      %s33 = scalar_select %p30, %s32, %s21
      %p34 = scmp.ge.s32.totalorder %s33, 1
      %s35 = scalar_select %p34, 0, %s33
      %s36 = sadd.s32 1, %s20
      %s37 = scalar_select %p34, %s36, %s20
      %p38 = scmp.ge.s32.totalorder %s37, 4
      %s39 = scalar_select %p38, 0, %s37
      %s40 = ssub.s32 %s20, %s39
      %s41 = ssub.s32 %s22, %s31
      %s42 = sor.u32 %s40, %s41
      %p43 = scmp.eq.s32.totalorder %s42, 0
      %s45 = sadd.s32 %s44, 1
      %s46 = scalar_select %p43, %s44, %s45
      %p49 = pneg %p43
      %p50 = scmp.eq.s32.totalorder %s13, 11
      %p51 = por %p49, %p50
      %p52 = scmp.ne.s32.totalorder %s44, %s47
      %p53 = scmp.eq.s32.totalorder %s13, 0
      %p54 = por %p52, %p53
      %p55 = scmp.ne.s32.totalorder %s44, %s47
      %p56 = scmp.eq.s32.totalorder %s18, 11
      %p57 = por %p55, %p56
      %p58 = scmp.ne.s32.totalorder %s47, %s48
      %p59 = scmp.eq.s32.totalorder %s18, 0
      %p60 = por %p58, %p59
      %p61 = scmp.ne.s32.totalorder %s47, %s48
      %p62 = scmp.eq.s32.totalorder %s19, 11
      %p63 = por %p61, %p62
      %p65 = scmp.ne.s32.totalorder %s48, %s64
      %p66 = scmp.eq.s32.totalorder %s19, 0
      %p67 = por %p65, %p66
      %s68 = ssub.s32 %s22, %s31
      %s69 = ssub.s32 %s21, %s35
      %s70 = sor.u32 %s68, %s69
      %p71 = scmp.eq.s32.totalorder %s70, 0
      %s73 = sadd.s32 %s72, 1
      %s74 = scalar_select %p71, %s72, %s73
      %p77 = pneg %p71
      %p78 = scmp.eq.s32.totalorder %s13, 11
      %p79 = por %p77, %p78
      %p80 = scmp.ne.s32.totalorder %s72, %s75
      %p81 = scmp.eq.s32.totalorder %s13, 0
      %p82 = por %p80, %p81
      %p83 = scmp.ne.s32.totalorder %s72, %s75
      %p84 = scmp.eq.s32.totalorder %s18, 11
      %p85 = por %p83, %p84
      %p86 = scmp.ne.s32.totalorder %s75, %s76
      %p87 = scmp.eq.s32.totalorder %s18, 0
      %p88 = por %p86, %p87
      %p89 = scmp.ne.s32.totalorder %s75, %s76
      %p90 = scmp.eq.s32.totalorder %s19, 11
      %p91 = por %p89, %p90
      %p93 = scmp.ne.s32.totalorder %s76, %s92
      %p94 = scmp.eq.s32.totalorder %s19, 0
      %p95 = por %p93, %p94
      %s96 = ssub.s32 %s21, %s35
      %p97 = scmp.eq.s32.totalorder %s96, 0
      %s99 = sadd.s32 %s98, 1
      %s100 = scalar_select %p97, %s98, %s99
      %p103 = pneg %p97
      %p104 = scmp.eq.s32.totalorder %s13, 11
      %p105 = por %p103, %p104
      %p106 = scmp.ne.s32.totalorder %s98, %s101
      %p107 = scmp.eq.s32.totalorder %s13, 0
      %p108 = por %p106, %p107
      %p109 = scmp.ne.s32.totalorder %s98, %s101
      %p110 = scmp.eq.s32.totalorder %s18, 11
      %p111 = por %p109, %p110
      %p112 = scmp.ne.s32.totalorder %s101, %s102
      %p113 = scmp.eq.s32.totalorder %s18, 0
      %p114 = por %p112, %p113
      %p115 = scmp.ne.s32.totalorder %s101, %s102
      %p116 = scmp.eq.s32.totalorder %s19, 11
      %p117 = por %p115, %p116
      %p119 = scmp.ne.s32.totalorder %s102, %s118
      %p120 = scmp.eq.s32.totalorder %s19, 0
      %p121 = por %p119, %p120
      %s122 = ssub.s32 %s20, %s39
      %s123 = ssub.s32 %s21, %s35
      %s124 = sor.u32 %s122, %s123
      %p125 = scmp.eq.s32.totalorder %s124, 0
      %s127 = sadd.s32 %s126, 1
      %s128 = scalar_select %p125, %s126, %s127
      %p131 = pneg %p125
      %p132 = scmp.eq.s32.totalorder %s13, 11
      %p133 = por %p131, %p132
      %p134 = scmp.ne.s32.totalorder %s126, %s129
      %p135 = scmp.eq.s32.totalorder %s13, 0
      %p136 = por %p134, %p135
      %p137 = scmp.ne.s32.totalorder %s126, %s129
      %p138 = scmp.eq.s32.totalorder %s18, 11
      %p139 = por %p137, %p138
      %p140 = scmp.ne.s32.totalorder %s129, %s130
      %p141 = scmp.eq.s32.totalorder %s18, 0
      %p142 = por %p140, %p141
      %p143 = scmp.ne.s32.totalorder %s129, %s130
      %p144 = scmp.eq.s32.totalorder %s19, 11
      %p145 = por %p143, %p144
      %p147 = scmp.ne.s32.totalorder %s130, %s146
      %p148 = scmp.eq.s32.totalorder %s19, 0
      %p149 = por %p147, %p148
      %p150 = scmp.le.s32.totalorder 1, %s13
      %p151 = scmp.lt.s32.totalorder %s13, 13
      %p152 = pnand %p150, %p151
      %p153 = pneg %p152
      // Predicated region
      $region9: #{blazeneo_forward.10} parent=5 // pred_check
        _
      $region10: #{blazeneo_forward.10} parent=5 // pred_check_branch
        %155 = sbr.rel (%p152) target = $region12
      $region11: #{blazeneo_forward.10} parent=5 // pred_region
        %s156 = ssub.s32 %s13, 1
        // Predicated region
        $region13: #{blazeneo_forward.10} parent=11 // pred_check
          %p157 = pneg %p114
        $region14: #{blazeneo_forward.10} parent=11 // pred_check_branch
          %159 = sbr.rel (%p157) target = $region16
        $region15: #{blazeneo_forward.10} parent=11 // pred_region
          %161 = vsyncadd [#allocation7], 0
          %s162 = scalar_lea.hbm %s2, %s24
          %s164 = sshll.u32 %s162, 4
          %s165 = int_to_ptr.hbm [resolvable:$true] %s164
          %s166 = sshll.u32 [#allocation6], 4
          %s167 = int_to_ptr.vmem [resolvable:$true] %s166
          %169 = dma.hbm_to_vmem [thread:$0]  %s165, 16, %s167, [#allocation7]
        $region16: #{blazeneo_forward.10} parent=11 // pred_fallthru
          _
      $region12: #{blazeneo_forward.10} parent=5 // pred_fallthru
        _
      %p170 = scmp.lt.s32.totalorder %s13, 12
      // Predicated region
      $region17: #{blazeneo_forward.10} parent=5 // pred_check
        %p171 = pneg %p170
      $region18: #{blazeneo_forward.10} parent=5 // pred_check_branch
        %173 = sbr.rel (%p171) target = $region20
      $region19: #{blazeneo_forward.10} parent=5 // pred_region
        // Predicated region
        $region21: #{blazeneo_forward.10} parent=19 // pred_check
          %p174 = pneg %p54
        $region22: #{blazeneo_forward.10} parent=19 // pred_check_branch
          %176 = sbr.rel (%p174) target = $region24
        $region23: #{blazeneo_forward.10} parent=19 // pred_region
          %s177 = sand.u32 %s44, 1
          %s178 = sand.u32 %s44, 1
          %s179 = smul.addr %s178, 64
          %s180 = scalar_lea.vmem [#allocation3], %s179
          %s181 = smul.u32 16, %s20
          %s182 = smul.addr %s181, 3
          %s183 = sadd.s32 %s22, %s182
          %s184 = smul.addr %s183, 4
          %s185 = scalar_lea.vmem %s0, %s184
          // Predicated region
          $region25: #{blazeneo_forward.10} parent=23 // pred_check
            _
          $region26: #{blazeneo_forward.10} parent=23 // pred_check_branch
            %187 = sbr.rel (0) target = $region28
          $region27: #{blazeneo_forward.10} parent=23 // pred_region
            // Predicated region
            $region29: #{blazeneo_forward.10} parent=27 // pred_check
              _
            $region30: #{blazeneo_forward.10} parent=27 // pred_check_branch
              %189 = sbr.rel target = $region32
            $region31: #{blazeneo_forward.10} parent=27 // pred_region
              // Predicated region
              $region44: #{blazeneo_forward.10} parent=31 // pred_check
                _
              $region45: #{blazeneo_forward.10} parent=31 // pred_check_branch
                %235 = sbr.rel (0) target = $region47
              $region46: #{blazeneo_forward.10} parent=31 // pred_region
                loop: start=0, step=1, limit=1
                $region48: #{blazeneo_forward.10} parent=46 // loop_pre_header
                  _
                $region49: #{blazeneo_forward.10} parent=46 // loop_header
                  %s237 = sphi 0, %s241
                  %p238 = scmp.ge.s32.totalorder %s237, 1
                  %s242 = sphi %s185, %s185
                  %s243 = sphi %s180, %s180
                $region50: #{blazeneo_forward.10} parent=46 // loop_header_branch
                  %240 = sbr.rel (%p238) target = $region54
                $region51: #{blazeneo_forward.10} parent=46 // loop_body
                  _
                $region52: #{blazeneo_forward.10} parent=46 // loop_footer
                  %s241 = sadd.s32 1, %s237
                $region53: #{blazeneo_forward.10} parent=46 // loop_footer_branch
                  %236 = sbr.rel target = $region49
                $region54: #{blazeneo_forward.10} parent=46 // loop_exit
                  _
                %s245 = ssub.s32 16, 1
                loop: start=0, step=1, limit=1
                $region55: #{blazeneo_forward.10} parent=46 // loop_pre_header
                  _
                $region56: #{blazeneo_forward.10} parent=46 // loop_header
                  %s247 = sphi 0, %s251
                  %p248 = scmp.ge.s32.totalorder %s247, 1
                  %s252 = sphi %s185, %s185
                  %s253 = sphi %s180, %s180
                $region57: #{blazeneo_forward.10} parent=46 // loop_header_branch
                  %250 = sbr.rel (%p248) target = $region61
                $region58: #{blazeneo_forward.10} parent=46 // loop_body
                  %v254 = vld [vmem:[%s252] sm:%s245]
                  %255 = vst [vmem:[%s253] sm:%s245] %v254
                  %v256 = vld [vmem:[%s252 + $0xc] sm:%s245]
                  %257 = vst [vmem:[%s253 + $0x4] sm:%s245] %v256
                  %v258 = vld [vmem:[%s252 + $0x18] sm:%s245]
                  %259 = vst [vmem:[%s253 + $0x8] sm:%s245] %v258
                  %v260 = vld [vmem:[%s252 + $0x24] sm:%s245]
                  %261 = vst [vmem:[%s253 + $0xc] sm:%s245] %v260
                  %v262 = vld [vmem:[%s252 + $0x30] sm:%s245]
                  %263 = vst [vmem:[%s253 + $0x10] sm:%s245] %v262
                  %v264 = vld [vmem:[%s252 + $0x3c] sm:%s245]
                  %265 = vst [vmem:[%s253 + $0x14] sm:%s245] %v264
                  %v266 = vld [vmem:[%s252 + $0x48] sm:%s245]
                  %267 = vst [vmem:[%s253 + $0x18] sm:%s245] %v266
                  %v268 = vld [vmem:[%s252 + $0x54] sm:%s245]
                  %269 = vst [vmem:[%s253 + $0x1c] sm:%s245] %v268
                  %v270 = vld [vmem:[%s252 + $0x60] sm:%s245]
                  %271 = vst [vmem:[%s253 + $0x20] sm:%s245] %v270
                  %v272 = vld [vmem:[%s252 + $0x6c] sm:%s245]
                  %273 = vst [vmem:[%s253 + $0x24] sm:%s245] %v272
                  %v274 = vld [vmem:[%s252 + $0x78] sm:%s245]
                  %275 = vst [vmem:[%s253 + $0x28] sm:%s245] %v274
                  %v276 = vld [vmem:[%s252 + $0x84] sm:%s245]
                  %277 = vst [vmem:[%s253 + $0x2c] sm:%s245] %v276
                  %v278 = vld [vmem:[%s252 + $0x90] sm:%s245]
                  %279 = vst [vmem:[%s253 + $0x30] sm:%s245] %v278
                  %v280 = vld [vmem:[%s252 + $0x9c] sm:%s245]
                  %281 = vst [vmem:[%s253 + $0x34] sm:%s245] %v280
                  %v282 = vld [vmem:[%s252 + $0xa8] sm:%s245]
                  %283 = vst [vmem:[%s253 + $0x38] sm:%s245] %v282
                  %v284 = vld [vmem:[%s252 + $0xb4] sm:%s245]
                  %285 = vst [vmem:[%s253 + $0x3c] sm:%s245] %v284
                $region59: #{blazeneo_forward.10} parent=46 // loop_footer
                  %s251 = sadd.s32 1, %s247
                $region60: #{blazeneo_forward.10} parent=46 // loop_footer_branch
                  %246 = sbr.rel target = $region56
                $region61: #{blazeneo_forward.10} parent=46 // loop_exit
                  _
              $region47: #{blazeneo_forward.10} parent=31 // pred_fallthru
                _
            $region32: #{blazeneo_forward.10} parent=27 // pred_fallthru
              _
            // Predicated region
            $region33: #{blazeneo_forward.10} parent=27 // pred_check
              _
            $region34: #{blazeneo_forward.10} parent=27 // pred_check_branch
              %191 = sbr.rel (0) target = $region36
            $region35: #{blazeneo_forward.10} parent=27 // pred_region
              %s193 = ssub.s32 16, 1
              loop: start=0, step=1, limit=1
              $region37: #{blazeneo_forward.10} parent=35 // loop_pre_header
                _
              $region38: #{blazeneo_forward.10} parent=35 // loop_header
                %s195 = sphi 0, %s199
                %p196 = scmp.ge.s32.totalorder %s195, 1
                %s200 = sphi %s185, %s185
                %s201 = sphi %s180, %s180
              $region39: #{blazeneo_forward.10} parent=35 // loop_header_branch
                %198 = sbr.rel (%p196) target = $region43
              $region40: #{blazeneo_forward.10} parent=35 // loop_body
                %v202 = vld [vmem:[%s200] sm:%s193]
                %203 = vst [vmem:[%s201] sm:%s193] %v202
                %v204 = vld [vmem:[%s200 + $0xc] sm:%s193]
                %205 = vst [vmem:[%s201 + $0x4] sm:%s193] %v204
                %v206 = vld [vmem:[%s200 + $0x18] sm:%s193]
                %207 = vst [vmem:[%s201 + $0x8] sm:%s193] %v206
                %v208 = vld [vmem:[%s200 + $0x24] sm:%s193]
                %209 = vst [vmem:[%s201 + $0xc] sm:%s193] %v208
                %v210 = vld [vmem:[%s200 + $0x30] sm:%s193]
                %211 = vst [vmem:[%s201 + $0x10] sm:%s193] %v210
                %v212 = vld [vmem:[%s200 + $0x3c] sm:%s193]
                %213 = vst [vmem:[%s201 + $0x14] sm:%s193] %v212
                %v214 = vld [vmem:[%s200 + $0x48] sm:%s193]
                %215 = vst [vmem:[%s201 + $0x18] sm:%s193] %v214
                %v216 = vld [vmem:[%s200 + $0x54] sm:%s193]
                %217 = vst [vmem:[%s201 + $0x1c] sm:%s193] %v216
                %v218 = vld [vmem:[%s200 + $0x60] sm:%s193]
                %219 = vst [vmem:[%s201 + $0x20] sm:%s193] %v218
                %v220 = vld [vmem:[%s200 + $0x6c] sm:%s193]
                %221 = vst [vmem:[%s201 + $0x24] sm:%s193] %v220
                %v222 = vld [vmem:[%s200 + $0x78] sm:%s193]
                %223 = vst [vmem:[%s201 + $0x28] sm:%s193] %v222
                %v224 = vld [vmem:[%s200 + $0x84] sm:%s193]
                %225 = vst [vmem:[%s201 + $0x2c] sm:%s193] %v224
                %v226 = vld [vmem:[%s200 + $0x90] sm:%s193]
                %227 = vst [vmem:[%s201 + $0x30] sm:%s193] %v226
                %v228 = vld [vmem:[%s200 + $0x9c] sm:%s193]
                %229 = vst [vmem:[%s201 + $0x34] sm:%s193] %v228
                %v230 = vld [vmem:[%s200 + $0xa8] sm:%s193]
                %231 = vst [vmem:[%s201 + $0x38] sm:%s193] %v230
                %v232 = vld [vmem:[%s200 + $0xb4] sm:%s193]
                %233 = vst [vmem:[%s201 + $0x3c] sm:%s193] %v232
              $region41: #{blazeneo_forward.10} parent=35 // loop_footer
                %s199 = sadd.s32 1, %s195
              $region42: #{blazeneo_forward.10} parent=35 // loop_footer_branch
                %194 = sbr.rel target = $region38
              $region43: #{blazeneo_forward.10} parent=35 // loop_exit
                _
            $region36: #{blazeneo_forward.10} parent=27 // pred_fallthru
              _
          $region28: #{blazeneo_forward.10} parent=23 // pred_fallthru
            _
          %286 = vnop
        $region24: #{blazeneo_forward.10} parent=19 // pred_fallthru
          _
        // Predicated region
        $region62: #{blazeneo_forward.10} parent=19 // pred_check
          %p287 = pneg %p82
        $region63: #{blazeneo_forward.10} parent=19 // pred_check_branch
          %289 = sbr.rel (%p287) target = $region65
        $region64: #{blazeneo_forward.10} parent=19 // pred_region
          %s290 = sand.u32 %s72, 1
          %s291 = scalar_lea.sflag [#allocation5], %s290
          %s292 = sand.u32 %s72, 1
          %s293 = smul.addr %s292, 64
          %s294 = scalar_lea.vmem [#allocation4], %s293
          %s295 = smul.u32 16, %s22
          %297 = vsyncadd %s291, 0
          %s298 = sadd.s32 %s21, %s295
          %s299 = smul.addr %s298, 4
          %s300 = scalar_lea.hbm %s1, %s299
          %s301 = sshll.u32 %s300, 4
          %s302 = int_to_ptr.hbm [resolvable:$true] %s301
          %s303 = sshll.u32 %s294, 4
          %s304 = int_to_ptr.vmem [resolvable:$true] %s303
          %309 = dma.hbm_to_vmem [thread:$0]  %s302, 1024, %s304, %s291, 64, 64, 4
        $region65: #{blazeneo_forward.10} parent=19 // pred_fallthru
          _
      $region20: #{blazeneo_forward.10} parent=5 // pred_fallthru
        _
      %p310 = scmp.le.s32.totalorder 1, %s13
      %p311 = scmp.lt.s32.totalorder %s13, 13
      %p312 = pnand %p310, %p311
      %p313 = pneg %p312
      // Predicated region
      $region66: #{blazeneo_forward.10} parent=5 // pred_check
        _
      $region67: #{blazeneo_forward.10} parent=5 // pred_check_branch
        %315 = sbr.rel (%p312) target = $region69
      $region68: #{blazeneo_forward.10} parent=5 // pred_region
        %s316 = ssub.s32 %s13, 1
        %s317 = sand.u32 %s47, 1
        %s318 = sand.u32 %s47, 1
        %s319 = smul.addr %s318, 64
        %s320 = scalar_lea.vmem [#allocation3], %s319
        // Predicated region
        $region70: #{blazeneo_forward.10} parent=68 // pred_check
          %p321 = pneg %p60
        $region71: #{blazeneo_forward.10} parent=68 // pred_check_branch
          %323 = sbr.rel (%p321) target = $region73
        $region72: #{blazeneo_forward.10} parent=68 // pred_region
          _
        $region73: #{blazeneo_forward.10} parent=68 // pred_fallthru
          _
        %s324 = sand.u32 %s75, 1
        %s325 = scalar_lea.sflag [#allocation5], %s324
        %s326 = sand.u32 %s75, 1
        %s327 = smul.addr %s326, 64
        %s328 = scalar_lea.vmem [#allocation4], %s327
        // Predicated region
        $region74: #{blazeneo_forward.10} parent=68 // pred_check
          %p329 = pneg %p88
        $region75: #{blazeneo_forward.10} parent=68 // pred_check_branch
          %331 = sbr.rel (%p329) target = $region77
        $region76: #{blazeneo_forward.10} parent=68 // pred_region
          %333 = dma.done %s325, 1024
        $region77: #{blazeneo_forward.10} parent=68 // pred_fallthru
          _
        // Predicated region
        $region78: #{blazeneo_forward.10} parent=68 // pred_check
          %p334 = pneg %p114
        $region79: #{blazeneo_forward.10} parent=68 // pred_check_branch
          %336 = sbr.rel (%p334) target = $region81
        $region80: #{blazeneo_forward.10} parent=68 // pred_region
          %338 = dma.done [#allocation7], 16
        $region81: #{blazeneo_forward.10} parent=68 // pred_fallthru
          _
        %s339 = sand.u32 %s47, 1
        %s340 = sand.u32 %s47, 1
        %s341 = smul.addr %s340, 64
        %s342 = scalar_lea.vmem [#allocation3], %s341
        %p343 = pneg %p60
        %p344 = pneg %p57
        %s345 = sand.u32 %s75, 1
        %s346 = scalar_lea.sflag [#allocation5], %s345
        %s347 = sand.u32 %s75, 1
        %s348 = smul.addr %s347, 64
        %s349 = scalar_lea.vmem [#allocation4], %s348
        %p350 = pneg %p88
        %p351 = pneg %p85
        %p352 = pneg %p114
        %p353 = pneg %p111
        %p354 = pneg %p142
        %p355 = pneg %p139
        %s356 = smul.u32 16, %s23
        %p357 = scmp.lt.s32.totalorder %s356, 63
        %s358 = scalar_select %p357, %s356, 63
        %p359 = scmp.lt.s32.totalorder %s24, 0
        %s360 = scalar_select %p359, %s24, 0
        %s361 = sadd.s32 %s360, %s358
        %s362 = smul.addr %s361, 4
        %s363 = scalar_lea.vmem %s3, %s362
        %s364 = smul.u32 16, %s23
        %s365 = smul.u32 16, %s25
        %s366 = smul.u32 16, %s23
        %p367 = scmp.lt.s32.totalorder %s366, 63
        %s368 = scalar_select %p367, %s366, 63
        %p369 = scmp.lt.s32.totalorder %s24, 0
        %s370 = scalar_select %p369, %s24, 0
        %s371 = sadd.s32 %s370, %s368
        %s372 = smul.addr %s371, 4
        %s373 = scalar_lea.vmem %s3, %s372
        %s374 = smul.u32 16, %s23
        %p375 = scmp.eq.s32.totalorder %s25, 0
        // Predicated region
        $region82: #{blazeneo_forward.10} parent=68 // pred_check
          %p376 = pneg %p375
        $region83: #{blazeneo_forward.10} parent=68 // pred_check_branch
          %378 = sbr.rel (%p376) target = $region85
        $region84: #{blazeneo_forward.10} parent=68 // pred_region
          %v379 = vld [vmem:[#allocation6] sm:$0x1]
          %v381 = vperm.slane %v379, 0
          %383 = vst [vmem:[#allocation2] sm:$0xff] %v381
          %384 = vst [vmem:[#allocation2 + $0x8] sm:$0xff] %v381
          %385 = vst [vmem:[#allocation2 + $0x10] sm:$0xff] %v381
          %386 = vst [vmem:[#allocation2 + $0x18] sm:$0xff] %v381
          %387 = vst [vmem:[#allocation2 + $0x20] sm:$0xff] %v381
          %388 = vst [vmem:[#allocation2 + $0x28] sm:$0xff] %v381
          %389 = vst [vmem:[#allocation2 + $0x30] sm:$0xff] %v381
          %390 = vst [vmem:[#allocation2 + $0x38] sm:$0xff] %v381
          %391 = vst [vmem:[#allocation2 + $0x40] sm:$0xff] %v381
          %392 = vst [vmem:[#allocation2 + $0x48] sm:$0xff] %v381
          %393 = vst [vmem:[#allocation2 + $0x50] sm:$0xff] %v381
          %394 = vst [vmem:[#allocation2 + $0x58] sm:$0xff] %v381
          %395 = vst [vmem:[#allocation2 + $0x60] sm:$0xff] %v381
          %396 = vst [vmem:[#allocation2 + $0x68] sm:$0xff] %v381
          %397 = vst [vmem:[#allocation2 + $0x70] sm:$0xff] %v381
          %398 = vst [vmem:[#allocation2 + $0x78] sm:$0xff] %v381
        $region85: #{blazeneo_forward.10} parent=68 // pred_fallthru
          _
        %v399 = vld [vmem:[#allocation2] sm:$0xff]
        %v400 = vld [vmem:[#allocation2 + $0x8] sm:$0xff]
        %v401 = vld [vmem:[#allocation2 + $0x10] sm:$0xff]
        %v402 = vld [vmem:[#allocation2 + $0x18] sm:$0xff]
        %v403 = vld [vmem:[#allocation2 + $0x20] sm:$0xff]
        %v404 = vld [vmem:[#allocation2 + $0x28] sm:$0xff]
        %v405 = vld [vmem:[#allocation2 + $0x30] sm:$0xff]
        %v406 = vld [vmem:[#allocation2 + $0x38] sm:$0xff]
        %v407 = vld [vmem:[#allocation2 + $0x40] sm:$0xff]
        %v408 = vld [vmem:[#allocation2 + $0x48] sm:$0xff]
        %v409 = vld [vmem:[#allocation2 + $0x50] sm:$0xff]
        %v410 = vld [vmem:[#allocation2 + $0x58] sm:$0xff]
        %v411 = vld [vmem:[#allocation2 + $0x60] sm:$0xff]
        %v412 = vld [vmem:[#allocation2 + $0x68] sm:$0xff]
        %v413 = vld [vmem:[#allocation2 + $0x70] sm:$0xff]
        %v414 = vld [vmem:[#allocation2 + $0x78] sm:$0xff]
        %v415 = vld [vmem:[%s320] sm:$0xf]
        %v416 = vld [vmem:[%s320 + $0x4] sm:$0xf]
        %v417 = vld [vmem:[%s320 + $0x8] sm:$0xf]
        %v418 = vld [vmem:[%s320 + $0xc] sm:$0xf]
        %v419 = vld [vmem:[%s320 + $0x10] sm:$0xf]
        %v420 = vld [vmem:[%s320 + $0x14] sm:$0xf]
        %v421 = vld [vmem:[%s320 + $0x18] sm:$0xf]
        %v422 = vld [vmem:[%s320 + $0x1c] sm:$0xf]
        %v423 = vld [vmem:[%s320 + $0x20] sm:$0xf]
        %v424 = vld [vmem:[%s320 + $0x24] sm:$0xf]
        %v425 = vld [vmem:[%s320 + $0x28] sm:$0xf]
        %v426 = vld [vmem:[%s320 + $0x2c] sm:$0xf]
        %v427 = vld [vmem:[%s320 + $0x30] sm:$0xf]
        %v428 = vld [vmem:[%s320 + $0x34] sm:$0xf]
        %v429 = vld [vmem:[%s320 + $0x38] sm:$0xf]
        %v430 = vld [vmem:[%s320 + $0x3c] sm:$0xf]
        %v431 = vld [vmem:[%s328] sm:$0xf]
        %v432 = vld [vmem:[%s328 + $0x4] sm:$0xf]
        %v433 = vld [vmem:[%s328 + $0x8] sm:$0xf]
        %v434 = vld [vmem:[%s328 + $0xc] sm:$0xf]
        %v435 = vld [vmem:[%s328 + $0x10] sm:$0xf]
        %v436 = vld [vmem:[%s328 + $0x14] sm:$0xf]
        %v437 = vld [vmem:[%s328 + $0x18] sm:$0xf]
        %v438 = vld [vmem:[%s328 + $0x1c] sm:$0xf]
        %v439 = vld [vmem:[%s328 + $0x20] sm:$0xf]
        %v440 = vld [vmem:[%s328 + $0x24] sm:$0xf]
        %v441 = vld [vmem:[%s328 + $0x28] sm:$0xf]
        %v442 = vld [vmem:[%s328 + $0x2c] sm:$0xf]
        %v443 = vld [vmem:[%s328 + $0x30] sm:$0xf]
        %v444 = vld [vmem:[%s328 + $0x34] sm:$0xf]
        %v445 = vld [vmem:[%s328 + $0x38] sm:$0xf]
        %v446 = vld [vmem:[%s328 + $0x3c] sm:$0xf]
        %v463 = vunpack.c.l.b16 %v415
        %v464 = vunpack.c.l.b16 %v416
        %v465 = vunpack.c.l.b16 %v417
        %v466 = vunpack.c.l.b16 %v418
        %v467 = vunpack.c.l.b16 %v419
        %v468 = vunpack.c.l.b16 %v420
        %v469 = vunpack.c.l.b16 %v421
        %v470 = vunpack.c.l.b16 %v422
        %v471 = vunpack.c.l.b16 %v423
        %v472 = vunpack.c.l.b16 %v424
        %v473 = vunpack.c.l.b16 %v425
        %v474 = vunpack.c.l.b16 %v426
        %v475 = vunpack.c.l.b16 %v427
        %v476 = vunpack.c.l.b16 %v428
        %v477 = vunpack.c.l.b16 %v429
        %v478 = vunpack.c.l.b16 %v430
        %v479 = vpack.c.b16 %v464, %v463
        %v480 = vpack.c.b16 %v466, %v465
        %v481 = vpack.c.b16 %v468, %v467
        %v482 = vpack.c.b16 %v470, %v469
        %v483 = vpack.c.b16 %v472, %v471
        %v484 = vpack.c.b16 %v474, %v473
        %v485 = vpack.c.b16 %v476, %v475
        %v486 = vpack.c.b16 %v478, %v477
        %v511 = vunpack.c.l.b16 %v431
        %v512 = vunpack.c.l.b16 %v432
        %v513 = vunpack.c.l.b16 %v433
        %v514 = vunpack.c.l.b16 %v434
        %v515 = vunpack.c.l.b16 %v435
        %v516 = vunpack.c.l.b16 %v436
        %v517 = vunpack.c.l.b16 %v437
        %v518 = vunpack.c.l.b16 %v438
        %v519 = vunpack.c.l.b16 %v439
        %v520 = vunpack.c.l.b16 %v440
        %v521 = vunpack.c.l.b16 %v441
        %v522 = vunpack.c.l.b16 %v442
        %v523 = vunpack.c.l.b16 %v443
        %v524 = vunpack.c.l.b16 %v444
        %v525 = vunpack.c.l.b16 %v445
        %v526 = vunpack.c.l.b16 %v446
        %v527 = vpack.c.b16 %v512, %v511
        %v528 = vpack.c.b16 %v514, %v513
        %v529 = vpack.c.b16 %v516, %v515
        %v530 = vpack.c.b16 %v518, %v517
        %v531 = vpack.c.b16 %v520, %v519
        %v532 = vpack.c.b16 %v522, %v521
        %v533 = vpack.c.b16 %v524, %v523
        %v534 = vpack.c.b16 %v526, %v525
        %543 = vmatpush.bf16.msra.mxu0 %v534
        %544 = vmatpush.bf16.msra.mxu0 %v533
        %545 = vmatpush.bf16.msra.mxu0 %v532
        %546 = vmatpush.bf16.msra.mxu0 %v531
        %547 = vmatpush.bf16.msra.mxu0 %v530
        %548 = vmatpush.bf16.msra.mxu0 %v529
        %549 = vmatpush.bf16.msra.mxu0 %v528
        %550 = vmatpush.bf16.msra.mxu0 %v527
        %551 = vmatmul.bf16.gmra.mxu0 %v479
        %v552 = vpop.f32.mrf.mxu0
        %v553 = vadd.f32 0.0, %v552
        %v554 = vpop.f32.mrf.mxu0
        %v555 = vadd.f32 0.0, %v554
        %556 = vmatmul.bf16.gmra.mxu0 %v480
        %v557 = vpop.f32.mrf.mxu0
        %v558 = vadd.f32 0.0, %v557
        %v559 = vpop.f32.mrf.mxu0
        %v560 = vadd.f32 0.0, %v559
        %561 = vmatmul.bf16.gmra.mxu0 %v481
        %v562 = vpop.f32.mrf.mxu0
        %v563 = vadd.f32 0.0, %v562
        %v564 = vpop.f32.mrf.mxu0
        %v565 = vadd.f32 0.0, %v564
        %566 = vmatmul.bf16.gmra.mxu0 %v482
        %v567 = vpop.f32.mrf.mxu0
        %v568 = vadd.f32 0.0, %v567
        %v569 = vpop.f32.mrf.mxu0
        %v570 = vadd.f32 0.0, %v569
        %571 = vmatmul.bf16.gmra.mxu0 %v483
        %v572 = vpop.f32.mrf.mxu0
        %v573 = vadd.f32 0.0, %v572
        %v574 = vpop.f32.mrf.mxu0
        %v575 = vadd.f32 0.0, %v574
        %576 = vmatmul.bf16.gmra.mxu0 %v484
        %v577 = vpop.f32.mrf.mxu0
        %v578 = vadd.f32 0.0, %v577
        %v579 = vpop.f32.mrf.mxu0
        %v580 = vadd.f32 0.0, %v579
        %581 = vmatmul.bf16.gmra.mxu0 %v485
        %v582 = vpop.f32.mrf.mxu0
        %v583 = vadd.f32 0.0, %v582
        %v584 = vpop.f32.mrf.mxu0
        %v585 = vadd.f32 0.0, %v584
        %586 = vmatmul.bf16.gmra.mxu0 %v486
        %v587 = vpop.f32.mrf.mxu0
        %v588 = vadd.f32 0.0, %v587
        %v589 = vpop.f32.mrf.mxu0
        %v590 = vadd.f32 0.0, %v589
        %591 = vdwg.mxu0
        %v592 = vadd.f32 %v399, %v553
        %v593 = vadd.f32 %v400, %v555
        %v594 = vadd.f32 %v401, %v558
        %v595 = vadd.f32 %v402, %v560
        %v596 = vadd.f32 %v403, %v563
        %v597 = vadd.f32 %v404, %v565
        %v598 = vadd.f32 %v405, %v568
        %v599 = vadd.f32 %v406, %v570
        %v600 = vadd.f32 %v407, %v573
        %v601 = vadd.f32 %v408, %v575
        %v602 = vadd.f32 %v409, %v578
        %v603 = vadd.f32 %v410, %v580
        %v604 = vadd.f32 %v411, %v583
        %v605 = vadd.f32 %v412, %v585
        %v606 = vadd.f32 %v413, %v588
        %v607 = vadd.f32 %v414, %v590
        %608 = vst [vmem:[#allocation2] sm:$0xff] %v592
        %609 = vst [vmem:[#allocation2 + $0x8] sm:$0xff] %v593
        %610 = vst [vmem:[#allocation2 + $0x10] sm:$0xff] %v594
        %611 = vst [vmem:[#allocation2 + $0x18] sm:$0xff] %v595
        %612 = vst [vmem:[#allocation2 + $0x20] sm:$0xff] %v596
        %613 = vst [vmem:[#allocation2 + $0x28] sm:$0xff] %v597
        %614 = vst [vmem:[#allocation2 + $0x30] sm:$0xff] %v598
        %615 = vst [vmem:[#allocation2 + $0x38] sm:$0xff] %v599
        %616 = vst [vmem:[#allocation2 + $0x40] sm:$0xff] %v600
        %617 = vst [vmem:[#allocation2 + $0x48] sm:$0xff] %v601
        %618 = vst [vmem:[#allocation2 + $0x50] sm:$0xff] %v602
        %619 = vst [vmem:[#allocation2 + $0x58] sm:$0xff] %v603
        %620 = vst [vmem:[#allocation2 + $0x60] sm:$0xff] %v604
        %621 = vst [vmem:[#allocation2 + $0x68] sm:$0xff] %v605
        %622 = vst [vmem:[#allocation2 + $0x70] sm:$0xff] %v606
        %623 = vst [vmem:[#allocation2 + $0x78] sm:$0xff] %v607
        %p624 = scmp.eq.s32.totalorder %s25, 2
        // Predicated region
        $region86: #{blazeneo_forward.10} parent=68 // pred_check
          %p625 = pneg %p624
        $region87: #{blazeneo_forward.10} parent=68 // pred_check_branch
          %627 = sbr.rel (%p625) target = $region89
        $region88: #{blazeneo_forward.10} parent=68 // pred_region
          %v628 = vld [vmem:[#allocation2] sm:$0xff]
          %v629 = vld [vmem:[#allocation2 + $0x8] sm:$0xff]
          %v630 = vld [vmem:[#allocation2 + $0x10] sm:$0xff]
          %v631 = vld [vmem:[#allocation2 + $0x18] sm:$0xff]
          %v632 = vld [vmem:[#allocation2 + $0x20] sm:$0xff]
          %v633 = vld [vmem:[#allocation2 + $0x28] sm:$0xff]
          %v634 = vld [vmem:[#allocation2 + $0x30] sm:$0xff]
          %v635 = vld [vmem:[#allocation2 + $0x38] sm:$0xff]
          %v636 = vld [vmem:[#allocation2 + $0x40] sm:$0xff]
          %v637 = vld [vmem:[#allocation2 + $0x48] sm:$0xff]
          %v638 = vld [vmem:[#allocation2 + $0x50] sm:$0xff]
          %v639 = vld [vmem:[#allocation2 + $0x58] sm:$0xff]
          %v640 = vld [vmem:[#allocation2 + $0x60] sm:$0xff]
          %v641 = vld [vmem:[#allocation2 + $0x68] sm:$0xff]
          %v642 = vld [vmem:[#allocation2 + $0x70] sm:$0xff]
          %v643 = vld [vmem:[#allocation2 + $0x78] sm:$0xff]
          %v644 = vmax.f32 %v628, 0.0
          %v645 = vmax.f32 %v629, 0.0
          %v646 = vmax.f32 %v630, 0.0
          %v647 = vmax.f32 %v631, 0.0
          %v648 = vmax.f32 %v632, 0.0
          %v649 = vmax.f32 %v633, 0.0
          %v650 = vmax.f32 %v634, 0.0
          %v651 = vmax.f32 %v635, 0.0
          %v652 = vmax.f32 %v636, 0.0
          %v653 = vmax.f32 %v637, 0.0
          %v654 = vmax.f32 %v638, 0.0
          %v655 = vmax.f32 %v639, 0.0
          %v656 = vmax.f32 %v640, 0.0
          %v657 = vmax.f32 %v641, 0.0
          %v658 = vmax.f32 %v642, 0.0
          %v659 = vmax.f32 %v643, 0.0
          %v660 = vpack.c.bf16 %v644, %v644
          %v661 = vpack.c.bf16 %v645, %v645
          %v662 = vpack.c.bf16 %v646, %v646
          %v663 = vpack.c.bf16 %v647, %v647
          %v664 = vpack.c.bf16 %v648, %v648
          %v665 = vpack.c.bf16 %v649, %v649
          %v666 = vpack.c.bf16 %v650, %v650
          %v667 = vpack.c.bf16 %v651, %v651
          %v668 = vpack.c.bf16 %v652, %v652
          %v669 = vpack.c.bf16 %v653, %v653
          %v670 = vpack.c.bf16 %v654, %v654
          %v671 = vpack.c.bf16 %v655, %v655
          %v672 = vpack.c.bf16 %v656, %v656
          %v673 = vpack.c.bf16 %v657, %v657
          %v674 = vpack.c.bf16 %v658, %v658
          %v675 = vpack.c.bf16 %v659, %v659
          %676 = vst [vmem:[%s373] sm:$0xf] %v660
          %677 = vst [vmem:[%s373 + $0x4] sm:$0xf] %v661
          %678 = vst [vmem:[%s373 + $0x8] sm:$0xf] %v662
          %679 = vst [vmem:[%s373 + $0xc] sm:$0xf] %v663
          %680 = vst [vmem:[%s373 + $0x10] sm:$0xf] %v664
          %681 = vst [vmem:[%s373 + $0x14] sm:$0xf] %v665
          %682 = vst [vmem:[%s373 + $0x18] sm:$0xf] %v666
          %683 = vst [vmem:[%s373 + $0x1c] sm:$0xf] %v667
          %684 = vst [vmem:[%s373 + $0x20] sm:$0xf] %v668
          %685 = vst [vmem:[%s373 + $0x24] sm:$0xf] %v669
          %686 = vst [vmem:[%s373 + $0x28] sm:$0xf] %v670
          %687 = vst [vmem:[%s373 + $0x2c] sm:$0xf] %v671
          %688 = vst [vmem:[%s373 + $0x30] sm:$0xf] %v672
          %689 = vst [vmem:[%s373 + $0x34] sm:$0xf] %v673
          %690 = vst [vmem:[%s373 + $0x38] sm:$0xf] %v674
          %691 = vst [vmem:[%s373 + $0x3c] sm:$0xf] %v675
        $region89: #{blazeneo_forward.10} parent=68 // pred_fallthru
          _
        %s692 = smul.u32 16, %s23
        %p693 = scmp.lt.s32.totalorder %s692, 63
        %s694 = scalar_select %p693, %s692, 63
        %p695 = scmp.lt.s32.totalorder %s24, 0
        %s696 = scalar_select %p695, %s24, 0
        %s697 = sadd.s32 %s696, %s694
        %s698 = smul.addr %s697, 4
        %s699 = scalar_lea.vmem %s3, %s698
        // Predicated region
        $region90: #{blazeneo_forward.10} parent=68 // pred_check
          %p700 = pneg %p139
        $region91: #{blazeneo_forward.10} parent=68 // pred_check_branch
          %702 = sbr.rel (%p700) target = $region93
        $region92: #{blazeneo_forward.10} parent=68 // pred_region
          %s703 = smul.u32 16, %s23
        $region93: #{blazeneo_forward.10} parent=68 // pred_fallthru
          _
      $region69: #{blazeneo_forward.10} parent=5 // pred_fallthru
        _
      %p704 = scmp.le.s32.totalorder 2, %s13
      // Predicated region
      $region94: #{blazeneo_forward.10} parent=5 // pred_check
        %p705 = pneg %p704
      $region95: #{blazeneo_forward.10} parent=5 // pred_check_branch
        %707 = sbr.rel (%p705) target = $region97
      $region96: #{blazeneo_forward.10} parent=5 // pred_region
        %s708 = ssub.s32 %s13, 2
        // Predicated region
        $region98: #{blazeneo_forward.10} parent=96 // pred_check
          %p709 = pneg %p145
        $region99: #{blazeneo_forward.10} parent=96 // pred_check_branch
          %711 = sbr.rel (%p709) target = $region101
        $region100: #{blazeneo_forward.10} parent=96 // pred_region
          %s712 = smul.u32 16, %s26
          %p713 = scmp.lt.s32.totalorder %s712, 63
          %s714 = scalar_select %p713, %s712, 63
          %p715 = scmp.lt.s32.totalorder %s27, 0
          %s716 = scalar_select %p715, %s27, 0
          %s717 = sadd.s32 %s716, %s714
          %s718 = smul.addr %s717, 4
          %s719 = scalar_lea.vmem %s3, %s718
        $region101: #{blazeneo_forward.10} parent=96 // pred_fallthru
          _
      $region97: #{blazeneo_forward.10} parent=5 // pred_fallthru
        _
    $region6: #{blazeneo_forward.10} parent=1 // loop_footer
      %s17 = sadd.s32 1, %s13
    $region7: #{blazeneo_forward.10} parent=1 // loop_footer_branch
      %12 = sbr.rel target = $region3
    $region8: #{blazeneo_forward.10} parent=1 // loop_exit
      _
    %720 = vsyncpa [#allocation5], 1
    %s721 = scalar_lea.sflag [#allocation5], 1
    %722 = vsyncpa %s721, 1
    %723 = vsyncpa [#allocation7], 1

// kernel: blazeneo_forward.11
$region0: #{blazeneo_forward.11}
  #allocation0 [shape = 'u32[]', space=smem, size = 0x4, offset = 0x4, fixed_abs, tag = 'smem constant byte address 0x4 - core index']
  #allocation1 [shape = 'u32[72,128]{1,0:T(1,128)}', space=vmem, size = 0x9000, scoped, tag = 'internal scratch']
  #allocation2 [shape = 'f32[128,128]{1,0:T(8,128)}', space=vmem, size = 0x10000, scoped, tag = 'scratch operand']
  %s0 = inlined_call_operand.vmem [shape: bf16[128,640], index: 0, kind: input, shape index: {}]
  %s1 = inlined_call_operand.hbm [shape: bf16[640,384], index: 1, kind: input, shape index: {}]
  %s2 = inlined_call_operand.hbm [shape: f32[1,384], index: 2, kind: input, shape index: {}]
  %s3 = inlined_call_operand.vmem [shape: bf16[128,384], index: 3, kind: output, shape index: {}]
  %s4 = sld [smem:[#allocation0]]
  $region139: #{blazeneo_forward.11} parent=0
    _
  %s6 = ssub.s32 1, %s4
  %s7 = scalar_select 0, %s6, %s4
  $region1: #{blazeneo_forward.11} parent=0
    #allocation3 [shape = 'u8[65536]{0}', space=vmem, size = 0x10000, scoped, tag = 'input window, operand 0']
    #allocation4 [shape = 'u8[65536]{0}', space=vmem, size = 0x10000, scoped, tag = 'input window, operand 1']
    #allocation5 [shape = 's32[2]{0}', space=sflag, size = 0x8, scoped, tag = 'scoped memory for blazeneo_forward.11']
    #allocation6 [shape = 'u8[1024]{0}', space=vmem, size = 0x400, scoped, tag = 'input window, operand 2']
    #allocation7 [shape = 's32[2]{0}', space=sflag, size = 0x8, scoped, tag = 'scoped memory for blazeneo_forward.11']
    #allocation8 [shape = 'u8[65536]{0}', space=vmem, size = 0x10000, scoped, tag = 'output window, operand 0']
    %8 = vsyncpa [#allocation5], 0
    %s9 = scalar_lea.sflag [#allocation5], 1
    %10 = vsyncpa %s9, 0
    %11 = vsyncpa [#allocation7], 0
    %s12 = scalar_lea.sflag [#allocation7], 1
    %13 = vsyncpa %s12, 0
    loop: start=0, step=1, limit=17
    $region2: #{blazeneo_forward.11} parent=1 // loop_pre_header
      _
    $region3: #{blazeneo_forward.11} parent=1 // loop_header
      %s15 = sphi 0, %s19
      %p16 = scmp.ge.s32.totalorder %s15, 17
      %s22 = sphi 0, %s41
      %s23 = sphi 0, %s37
      %s24 = sphi 0, %s33
      %s25 = sphi 0, %s22
      %s26 = sphi 0, %s23
      %s27 = sphi 0, %s24
      %s28 = sphi 0, %s25
      %s29 = sphi 0, %s26
      %s30 = sphi 0, %s27
      %s46 = sphi 0, %s48
      %s49 = sphi 0, %s46
      %s50 = sphi 0, %s49
      %s66 = sphi 0, %s50
      %s74 = sphi 0, %s76
      %s77 = sphi 0, %s74
      %s78 = sphi 0, %s77
      %s94 = sphi 0, %s78
      %s100 = sphi 0, %s102
      %s103 = sphi 0, %s100
      %s104 = sphi 0, %s103
      %s120 = sphi 0, %s104
      %s128 = sphi 0, %s130
      %s131 = sphi 0, %s128
      %s132 = sphi 0, %s131
      %s148 = sphi 0, %s132
    $region4: #{blazeneo_forward.11} parent=1 // loop_header_branch
      %18 = sbr.rel (%p16) target = $region8
    $region5: #{blazeneo_forward.11} parent=1 // loop_body
      %s20 = ssub.s32 %s15, 1
      %s21 = ssub.s32 %s15, 2
      %s31 = sadd.s32 1, %s24
      %p32 = scmp.ge.s32.totalorder %s31, 5
      %s33 = scalar_select %p32, 0, %s31
      %s34 = sadd.s32 1, %s23
      %s35 = scalar_select %p32, %s34, %s23
      %p36 = scmp.ge.s32.totalorder %s35, 3
      %s37 = scalar_select %p36, 0, %s35
      %s38 = sadd.s32 1, %s22
      %s39 = scalar_select %p36, %s38, %s22
      %p40 = scmp.ge.s32.totalorder %s39, 1
      %s41 = scalar_select %p40, 0, %s39
      %s42 = ssub.s32 %s22, %s41
      %s43 = ssub.s32 %s24, %s33
      %s44 = sor.u32 %s42, %s43
      %p45 = scmp.eq.s32.totalorder %s44, 0
      %s47 = sadd.s32 %s46, 1
      %s48 = scalar_select %p45, %s46, %s47
      %p51 = pneg %p45
      %p52 = scmp.eq.s32.totalorder %s15, 14
      %p53 = por %p51, %p52
      %p54 = scmp.ne.s32.totalorder %s46, %s49
      %p55 = scmp.eq.s32.totalorder %s15, 0
      %p56 = por %p54, %p55
      %p57 = scmp.ne.s32.totalorder %s46, %s49
      %p58 = scmp.eq.s32.totalorder %s20, 14
      %p59 = por %p57, %p58
      %p60 = scmp.ne.s32.totalorder %s49, %s50
      %p61 = scmp.eq.s32.totalorder %s20, 0
      %p62 = por %p60, %p61
      %p63 = scmp.ne.s32.totalorder %s49, %s50
      %p64 = scmp.eq.s32.totalorder %s21, 14
      %p65 = por %p63, %p64
      %p67 = scmp.ne.s32.totalorder %s50, %s66
      %p68 = scmp.eq.s32.totalorder %s21, 0
      %p69 = por %p67, %p68
      %s70 = ssub.s32 %s24, %s33
      %s71 = ssub.s32 %s23, %s37
      %s72 = sor.u32 %s70, %s71
      %p73 = scmp.eq.s32.totalorder %s72, 0
      %s75 = sadd.s32 %s74, 1
      %s76 = scalar_select %p73, %s74, %s75
      %p79 = pneg %p73
      %p80 = scmp.eq.s32.totalorder %s15, 14
      %p81 = por %p79, %p80
      %p82 = scmp.ne.s32.totalorder %s74, %s77
      %p83 = scmp.eq.s32.totalorder %s15, 0
      %p84 = por %p82, %p83
      %p85 = scmp.ne.s32.totalorder %s74, %s77
      %p86 = scmp.eq.s32.totalorder %s20, 14
      %p87 = por %p85, %p86
      %p88 = scmp.ne.s32.totalorder %s77, %s78
      %p89 = scmp.eq.s32.totalorder %s20, 0
      %p90 = por %p88, %p89
      %p91 = scmp.ne.s32.totalorder %s77, %s78
      %p92 = scmp.eq.s32.totalorder %s21, 14
      %p93 = por %p91, %p92
      %p95 = scmp.ne.s32.totalorder %s78, %s94
      %p96 = scmp.eq.s32.totalorder %s21, 0
      %p97 = por %p95, %p96
      %s98 = ssub.s32 %s23, %s37
      %p99 = scmp.eq.s32.totalorder %s98, 0
      %s101 = sadd.s32 %s100, 1
      %s102 = scalar_select %p99, %s100, %s101
      %p105 = pneg %p99
      %p106 = scmp.eq.s32.totalorder %s15, 14
      %p107 = por %p105, %p106
      %p108 = scmp.ne.s32.totalorder %s100, %s103
      %p109 = scmp.eq.s32.totalorder %s15, 0
      %p110 = por %p108, %p109
      %p111 = scmp.ne.s32.totalorder %s100, %s103
      %p112 = scmp.eq.s32.totalorder %s20, 14
      %p113 = por %p111, %p112
      %p114 = scmp.ne.s32.totalorder %s103, %s104
      %p115 = scmp.eq.s32.totalorder %s20, 0
      %p116 = por %p114, %p115
      %p117 = scmp.ne.s32.totalorder %s103, %s104
      %p118 = scmp.eq.s32.totalorder %s21, 14
      %p119 = por %p117, %p118
      %p121 = scmp.ne.s32.totalorder %s104, %s120
      %p122 = scmp.eq.s32.totalorder %s21, 0
      %p123 = por %p121, %p122
      %s124 = ssub.s32 %s22, %s41
      %s125 = ssub.s32 %s23, %s37
      %s126 = sor.u32 %s124, %s125
      %p127 = scmp.eq.s32.totalorder %s126, 0
      %s129 = sadd.s32 %s128, 1
      %s130 = scalar_select %p127, %s128, %s129
      %p133 = pneg %p127
      %p134 = scmp.eq.s32.totalorder %s15, 14
      %p135 = por %p133, %p134
      %p136 = scmp.ne.s32.totalorder %s128, %s131
      %p137 = scmp.eq.s32.totalorder %s15, 0
      %p138 = por %p136, %p137
      %p139 = scmp.ne.s32.totalorder %s128, %s131
      %p140 = scmp.eq.s32.totalorder %s20, 14
      %p141 = por %p139, %p140
      %p142 = scmp.ne.s32.totalorder %s131, %s132
      %p143 = scmp.eq.s32.totalorder %s20, 0
      %p144 = por %p142, %p143
      %p145 = scmp.ne.s32.totalorder %s131, %s132
      %p146 = scmp.eq.s32.totalorder %s21, 14
      %p147 = por %p145, %p146
      %p149 = scmp.ne.s32.totalorder %s132, %s148
      %p150 = scmp.eq.s32.totalorder %s21, 0
      %p151 = por %p149, %p150
      %p152 = scmp.le.s32.totalorder 1, %s15
      %p153 = scmp.lt.s32.totalorder %s15, 16
      %p154 = pnand %p152, %p153
      %p155 = pneg %p154
      // Predicated region
      $region9: #{blazeneo_forward.11} parent=5 // pred_check
        _
      $region10: #{blazeneo_forward.11} parent=5 // pred_check_branch
        %157 = sbr.rel (%p154) target = $region12
      $region11: #{blazeneo_forward.11} parent=5 // pred_region
        %s158 = ssub.s32 %s15, 1
      $region12: #{blazeneo_forward.11} parent=5 // pred_fallthru
        _
      %p159 = scmp.lt.s32.totalorder %s15, 15
      // Predicated region
      $region13: #{blazeneo_forward.11} parent=5 // pred_check
        %p160 = pneg %p159
      $region14: #{blazeneo_forward.11} parent=5 // pred_check_branch
        %162 = sbr.rel (%p160) target = $region16
      $region15: #{blazeneo_forward.11} parent=5 // pred_region
        // Predicated region
        $region17: #{blazeneo_forward.11} parent=15 // pred_check
          %p163 = pneg %p56
        $region18: #{blazeneo_forward.11} parent=15 // pred_check_branch
          %165 = sbr.rel (%p163) target = $region20
        $region19: #{blazeneo_forward.11} parent=15 // pred_region
          %s166 = sand.u32 %s46, 1
          %s167 = sand.u32 %s46, 1
          %s168 = smul.addr %s167, 64
          %s169 = scalar_lea.vmem [#allocation3], %s168
          %s170 = smul.u32 16, %s22
          %s171 = smul.addr %s170, 5
          %s172 = sadd.s32 %s24, %s171
          %s173 = smul.addr %s172, 4
          %s174 = scalar_lea.vmem %s0, %s173
          // Predicated region
          $region21: #{blazeneo_forward.11} parent=19 // pred_check
            _
          $region22: #{blazeneo_forward.11} parent=19 // pred_check_branch
            %176 = sbr.rel (0) target = $region24
          $region23: #{blazeneo_forward.11} parent=19 // pred_region
            // Predicated region
            $region25: #{blazeneo_forward.11} parent=23 // pred_check
              _
            $region26: #{blazeneo_forward.11} parent=23 // pred_check_branch
              %178 = sbr.rel target = $region28
            $region27: #{blazeneo_forward.11} parent=23 // pred_region
              // Predicated region
              $region40: #{blazeneo_forward.11} parent=27 // pred_check
                _
              $region41: #{blazeneo_forward.11} parent=27 // pred_check_branch
                %224 = sbr.rel (0) target = $region43
              $region42: #{blazeneo_forward.11} parent=27 // pred_region
                loop: start=0, step=1, limit=1
                $region44: #{blazeneo_forward.11} parent=42 // loop_pre_header
                  _
                $region45: #{blazeneo_forward.11} parent=42 // loop_header
                  %s226 = sphi 0, %s230
                  %p227 = scmp.ge.s32.totalorder %s226, 1
                  %s231 = sphi %s174, %s174
                  %s232 = sphi %s169, %s169
                $region46: #{blazeneo_forward.11} parent=42 // loop_header_branch
                  %229 = sbr.rel (%p227) target = $region50
                $region47: #{blazeneo_forward.11} parent=42 // loop_body
                  _
                $region48: #{blazeneo_forward.11} parent=42 // loop_footer
                  %s230 = sadd.s32 1, %s226
                $region49: #{blazeneo_forward.11} parent=42 // loop_footer_branch
                  %225 = sbr.rel target = $region45
                $region50: #{blazeneo_forward.11} parent=42 // loop_exit
                  _
                %s234 = ssub.s32 16, 1
                loop: start=0, step=1, limit=1
                $region51: #{blazeneo_forward.11} parent=42 // loop_pre_header
                  _
                $region52: #{blazeneo_forward.11} parent=42 // loop_header
                  %s236 = sphi 0, %s240
                  %p237 = scmp.ge.s32.totalorder %s236, 1
                  %s241 = sphi %s174, %s174
                  %s242 = sphi %s169, %s169
                $region53: #{blazeneo_forward.11} parent=42 // loop_header_branch
                  %239 = sbr.rel (%p237) target = $region57
                $region54: #{blazeneo_forward.11} parent=42 // loop_body
                  %v243 = vld [vmem:[%s241] sm:%s234]
                  %244 = vst [vmem:[%s242] sm:%s234] %v243
                  %v245 = vld [vmem:[%s241 + $0x14] sm:%s234]
                  %246 = vst [vmem:[%s242 + $0x4] sm:%s234] %v245
                  %v247 = vld [vmem:[%s241 + $0x28] sm:%s234]
                  %248 = vst [vmem:[%s242 + $0x8] sm:%s234] %v247
                  %v249 = vld [vmem:[%s241 + $0x3c] sm:%s234]
                  %250 = vst [vmem:[%s242 + $0xc] sm:%s234] %v249
                  %v251 = vld [vmem:[%s241 + $0x50] sm:%s234]
                  %252 = vst [vmem:[%s242 + $0x10] sm:%s234] %v251
                  %v253 = vld [vmem:[%s241 + $0x64] sm:%s234]
                  %254 = vst [vmem:[%s242 + $0x14] sm:%s234] %v253
                  %v255 = vld [vmem:[%s241 + $0x78] sm:%s234]
                  %256 = vst [vmem:[%s242 + $0x18] sm:%s234] %v255
                  %v257 = vld [vmem:[%s241 + $0x8c] sm:%s234]
                  %258 = vst [vmem:[%s242 + $0x1c] sm:%s234] %v257
                  %v259 = vld [vmem:[%s241 + $0xa0] sm:%s234]
                  %260 = vst [vmem:[%s242 + $0x20] sm:%s234] %v259
                  %v261 = vld [vmem:[%s241 + $0xb4] sm:%s234]
                  %262 = vst [vmem:[%s242 + $0x24] sm:%s234] %v261
                  %v263 = vld [vmem:[%s241 + $0xc8] sm:%s234]
                  %264 = vst [vmem:[%s242 + $0x28] sm:%s234] %v263
                  %v265 = vld [vmem:[%s241 + $0xdc] sm:%s234]
                  %266 = vst [vmem:[%s242 + $0x2c] sm:%s234] %v265
                  %v267 = vld [vmem:[%s241 + $0xf0] sm:%s234]
                  %268 = vst [vmem:[%s242 + $0x30] sm:%s234] %v267
                  %v269 = vld [vmem:[%s241 + $0x104] sm:%s234]
                  %270 = vst [vmem:[%s242 + $0x34] sm:%s234] %v269
                  %v271 = vld [vmem:[%s241 + $0x118] sm:%s234]
                  %272 = vst [vmem:[%s242 + $0x38] sm:%s234] %v271
                  %v273 = vld [vmem:[%s241 + $0x12c] sm:%s234]
                  %274 = vst [vmem:[%s242 + $0x3c] sm:%s234] %v273
                $region55: #{blazeneo_forward.11} parent=42 // loop_footer
                  %s240 = sadd.s32 1, %s236
                $region56: #{blazeneo_forward.11} parent=42 // loop_footer_branch
                  %235 = sbr.rel target = $region52
                $region57: #{blazeneo_forward.11} parent=42 // loop_exit
                  _
              $region43: #{blazeneo_forward.11} parent=27 // pred_fallthru
                _
            $region28: #{blazeneo_forward.11} parent=23 // pred_fallthru
              _
            // Predicated region
            $region29: #{blazeneo_forward.11} parent=23 // pred_check
              _
            $region30: #{blazeneo_forward.11} parent=23 // pred_check_branch
              %180 = sbr.rel (0) target = $region32
            $region31: #{blazeneo_forward.11} parent=23 // pred_region
              %s182 = ssub.s32 16, 1
              loop: start=0, step=1, limit=1
              $region33: #{blazeneo_forward.11} parent=31 // loop_pre_header
                _
              $region34: #{blazeneo_forward.11} parent=31 // loop_header
                %s184 = sphi 0, %s188
                %p185 = scmp.ge.s32.totalorder %s184, 1
                %s189 = sphi %s174, %s174
                %s190 = sphi %s169, %s169
              $region35: #{blazeneo_forward.11} parent=31 // loop_header_branch
                %187 = sbr.rel (%p185) target = $region39
              $region36: #{blazeneo_forward.11} parent=31 // loop_body
                %v191 = vld [vmem:[%s189] sm:%s182]
                %192 = vst [vmem:[%s190] sm:%s182] %v191
                %v193 = vld [vmem:[%s189 + $0x14] sm:%s182]
                %194 = vst [vmem:[%s190 + $0x4] sm:%s182] %v193
                %v195 = vld [vmem:[%s189 + $0x28] sm:%s182]
                %196 = vst [vmem:[%s190 + $0x8] sm:%s182] %v195
                %v197 = vld [vmem:[%s189 + $0x3c] sm:%s182]
                %198 = vst [vmem:[%s190 + $0xc] sm:%s182] %v197
                %v199 = vld [vmem:[%s189 + $0x50] sm:%s182]
                %200 = vst [vmem:[%s190 + $0x10] sm:%s182] %v199
                %v201 = vld [vmem:[%s189 + $0x64] sm:%s182]
                %202 = vst [vmem:[%s190 + $0x14] sm:%s182] %v201
                %v203 = vld [vmem:[%s189 + $0x78] sm:%s182]
                %204 = vst [vmem:[%s190 + $0x18] sm:%s182] %v203
                %v205 = vld [vmem:[%s189 + $0x8c] sm:%s182]
                %206 = vst [vmem:[%s190 + $0x1c] sm:%s182] %v205
                %v207 = vld [vmem:[%s189 + $0xa0] sm:%s182]
                %208 = vst [vmem:[%s190 + $0x20] sm:%s182] %v207
                %v209 = vld [vmem:[%s189 + $0xb4] sm:%s182]
                %210 = vst [vmem:[%s190 + $0x24] sm:%s182] %v209
                %v211 = vld [vmem:[%s189 + $0xc8] sm:%s182]
                %212 = vst [vmem:[%s190 + $0x28] sm:%s182] %v211
                %v213 = vld [vmem:[%s189 + $0xdc] sm:%s182]
                %214 = vst [vmem:[%s190 + $0x2c] sm:%s182] %v213
                %v215 = vld [vmem:[%s189 + $0xf0] sm:%s182]
                %216 = vst [vmem:[%s190 + $0x30] sm:%s182] %v215
                %v217 = vld [vmem:[%s189 + $0x104] sm:%s182]
                %218 = vst [vmem:[%s190 + $0x34] sm:%s182] %v217
                %v219 = vld [vmem:[%s189 + $0x118] sm:%s182]
                %220 = vst [vmem:[%s190 + $0x38] sm:%s182] %v219
                %v221 = vld [vmem:[%s189 + $0x12c] sm:%s182]
                %222 = vst [vmem:[%s190 + $0x3c] sm:%s182] %v221
              $region37: #{blazeneo_forward.11} parent=31 // loop_footer
                %s188 = sadd.s32 1, %s184
              $region38: #{blazeneo_forward.11} parent=31 // loop_footer_branch
                %183 = sbr.rel target = $region34
              $region39: #{blazeneo_forward.11} parent=31 // loop_exit
                _
            $region32: #{blazeneo_forward.11} parent=23 // pred_fallthru
              _
          $region24: #{blazeneo_forward.11} parent=19 // pred_fallthru
            _
          %275 = vnop
        $region20: #{blazeneo_forward.11} parent=15 // pred_fallthru
          _
        // Predicated region
        $region58: #{blazeneo_forward.11} parent=15 // pred_check
          %p276 = pneg %p84
        $region59: #{blazeneo_forward.11} parent=15 // pred_check_branch
          %278 = sbr.rel (%p276) target = $region61
        $region60: #{blazeneo_forward.11} parent=15 // pred_region
          %s279 = sand.u32 %s74, 1
          %s280 = scalar_lea.sflag [#allocation5], %s279
          %s281 = sand.u32 %s74, 1
          %s282 = smul.addr %s281, 64
          %s283 = scalar_lea.vmem [#allocation4], %s282
          %s284 = smul.u32 16, %s24
          %286 = vsyncadd %s280, 0
          %s287 = smul.addr %s284, 3
          %s288 = sadd.s32 %s23, %s287
          %s289 = smul.addr %s288, 4
          %s290 = scalar_lea.hbm %s1, %s289
          %s291 = sshll.u32 %s290, 4
          %s292 = int_to_ptr.hbm [resolvable:$true] %s291
          %s293 = sshll.u32 %s283, 4
          %s294 = int_to_ptr.vmem [resolvable:$true] %s293
          %299 = dma.hbm_to_vmem [thread:$0]  %s292, 1024, %s294, %s280, 192, 64, 4
        $region61: #{blazeneo_forward.11} parent=15 // pred_fallthru
          _
        // Predicated region
        $region62: #{blazeneo_forward.11} parent=15 // pred_check
          %p300 = pneg %p110
        $region63: #{blazeneo_forward.11} parent=15 // pred_check_branch
          %302 = sbr.rel (%p300) target = $region65
        $region64: #{blazeneo_forward.11} parent=15 // pred_region
          %s303 = sand.u32 %s100, 1
          %s304 = scalar_lea.sflag [#allocation7], %s303
          %s305 = sand.u32 %s100, 1
          %s306 = scalar_lea.vmem [#allocation6], %s305
          %308 = vsyncadd %s304, 0
          %s309 = scalar_lea.hbm %s2, %s23
          %s311 = sshll.u32 %s309, 4
          %s312 = int_to_ptr.hbm [resolvable:$true] %s311
          %s313 = sshll.u32 %s306, 4
          %s314 = int_to_ptr.vmem [resolvable:$true] %s313
          %316 = dma.hbm_to_vmem [thread:$0]  %s312, 16, %s314, %s304
        $region65: #{blazeneo_forward.11} parent=15 // pred_fallthru
          _
      $region16: #{blazeneo_forward.11} parent=5 // pred_fallthru
        _
      %p317 = scmp.le.s32.totalorder 1, %s15
      %p318 = scmp.lt.s32.totalorder %s15, 16
      %p319 = pnand %p317, %p318
      %p320 = pneg %p319
      // Predicated region
      $region66: #{blazeneo_forward.11} parent=5 // pred_check
        _
      $region67: #{blazeneo_forward.11} parent=5 // pred_check_branch
        %322 = sbr.rel (%p319) target = $region69
      $region68: #{blazeneo_forward.11} parent=5 // pred_region
        %s323 = ssub.s32 %s15, 1
        %s324 = sand.u32 %s49, 1
        %s325 = sand.u32 %s49, 1
        %s326 = smul.addr %s325, 64
        %s327 = scalar_lea.vmem [#allocation3], %s326
        // Predicated region
        $region70: #{blazeneo_forward.11} parent=68 // pred_check
          %p328 = pneg %p62
        $region71: #{blazeneo_forward.11} parent=68 // pred_check_branch
          %330 = sbr.rel (%p328) target = $region73
        $region72: #{blazeneo_forward.11} parent=68 // pred_region
          _
        $region73: #{blazeneo_forward.11} parent=68 // pred_fallthru
          _
        %s331 = sand.u32 %s77, 1
        %s332 = scalar_lea.sflag [#allocation5], %s331
        %s333 = sand.u32 %s77, 1
        %s334 = smul.addr %s333, 64
        %s335 = scalar_lea.vmem [#allocation4], %s334
        // Predicated region
        $region74: #{blazeneo_forward.11} parent=68 // pred_check
          %p336 = pneg %p90
        $region75: #{blazeneo_forward.11} parent=68 // pred_check_branch
          %338 = sbr.rel (%p336) target = $region77
        $region76: #{blazeneo_forward.11} parent=68 // pred_region
          %340 = dma.done %s332, 1024
        $region77: #{blazeneo_forward.11} parent=68 // pred_fallthru
          _
        %s341 = sand.u32 %s103, 1
        %s342 = scalar_lea.sflag [#allocation7], %s341
        %s343 = sand.u32 %s103, 1
        %s344 = scalar_lea.vmem [#allocation6], %s343
        // Predicated region
        $region78: #{blazeneo_forward.11} parent=68 // pred_check
          %p345 = pneg %p116
        $region79: #{blazeneo_forward.11} parent=68 // pred_check_branch
          %347 = sbr.rel (%p345) target = $region81
        $region80: #{blazeneo_forward.11} parent=68 // pred_region
          %349 = dma.done %s342, 16
        $region81: #{blazeneo_forward.11} parent=68 // pred_fallthru
          _
        %s350 = sand.u32 %s49, 1
        %s351 = sand.u32 %s49, 1
        %s352 = smul.addr %s351, 64
        %s353 = scalar_lea.vmem [#allocation3], %s352
        %p354 = pneg %p62
        %p355 = pneg %p59
        %s356 = sand.u32 %s77, 1
        %s357 = scalar_lea.sflag [#allocation5], %s356
        %s358 = sand.u32 %s77, 1
        %s359 = smul.addr %s358, 64
        %s360 = scalar_lea.vmem [#allocation4], %s359
        %p361 = pneg %p90
        %p362 = pneg %p87
        %s363 = sand.u32 %s103, 1
        %s364 = scalar_lea.sflag [#allocation7], %s363
        %s365 = sand.u32 %s103, 1
        %s366 = scalar_lea.vmem [#allocation6], %s365
        %p367 = pneg %p116
        %p368 = pneg %p113
        %p369 = pneg %p144
        %p370 = pneg %p141
        %s371 = sand.u32 %s131, 1
        %s372 = sand.u32 %s131, 1
        %s373 = smul.addr %s372, 64
        %s374 = scalar_lea.vmem [#allocation8], %s373
        %s375 = smul.u32 16, %s25
        %s376 = smul.u32 16, %s27
        %s377 = smul.u32 16, %s25
        %p378 = scmp.eq.s32.totalorder %s27, 0
        // Predicated region
        $region82: #{blazeneo_forward.11} parent=68 // pred_check
          %p379 = pneg %p378
        $region83: #{blazeneo_forward.11} parent=68 // pred_check_branch
          %381 = sbr.rel (%p379) target = $region85
        $region84: #{blazeneo_forward.11} parent=68 // pred_region
          %v382 = vld [vmem:[%s344] sm:$0x1]
          %v384 = vperm.slane %v382, 0
          %386 = vst [vmem:[#allocation2] sm:$0xff] %v384
          %387 = vst [vmem:[#allocation2 + $0x8] sm:$0xff] %v384
          %388 = vst [vmem:[#allocation2 + $0x10] sm:$0xff] %v384
          %389 = vst [vmem:[#allocation2 + $0x18] sm:$0xff] %v384
          %390 = vst [vmem:[#allocation2 + $0x20] sm:$0xff] %v384
          %391 = vst [vmem:[#allocation2 + $0x28] sm:$0xff] %v384
          %392 = vst [vmem:[#allocation2 + $0x30] sm:$0xff] %v384
          %393 = vst [vmem:[#allocation2 + $0x38] sm:$0xff] %v384
          %394 = vst [vmem:[#allocation2 + $0x40] sm:$0xff] %v384
          %395 = vst [vmem:[#allocation2 + $0x48] sm:$0xff] %v384
          %396 = vst [vmem:[#allocation2 + $0x50] sm:$0xff] %v384
          %397 = vst [vmem:[#allocation2 + $0x58] sm:$0xff] %v384
          %398 = vst [vmem:[#allocation2 + $0x60] sm:$0xff] %v384
          %399 = vst [vmem:[#allocation2 + $0x68] sm:$0xff] %v384
          %400 = vst [vmem:[#allocation2 + $0x70] sm:$0xff] %v384
          %401 = vst [vmem:[#allocation2 + $0x78] sm:$0xff] %v384
        $region85: #{blazeneo_forward.11} parent=68 // pred_fallthru
          _
        %v402 = vld [vmem:[#allocation2] sm:$0xff]
        %v403 = vld [vmem:[#allocation2 + $0x8] sm:$0xff]
        %v404 = vld [vmem:[#allocation2 + $0x10] sm:$0xff]
        %v405 = vld [vmem:[#allocation2 + $0x18] sm:$0xff]
        %v406 = vld [vmem:[#allocation2 + $0x20] sm:$0xff]
        %v407 = vld [vmem:[#allocation2 + $0x28] sm:$0xff]
        %v408 = vld [vmem:[#allocation2 + $0x30] sm:$0xff]
        %v409 = vld [vmem:[#allocation2 + $0x38] sm:$0xff]
        %v410 = vld [vmem:[#allocation2 + $0x40] sm:$0xff]
        %v411 = vld [vmem:[#allocation2 + $0x48] sm:$0xff]
        %v412 = vld [vmem:[#allocation2 + $0x50] sm:$0xff]
        %v413 = vld [vmem:[#allocation2 + $0x58] sm:$0xff]
        %v414 = vld [vmem:[#allocation2 + $0x60] sm:$0xff]
        %v415 = vld [vmem:[#allocation2 + $0x68] sm:$0xff]
        %v416 = vld [vmem:[#allocation2 + $0x70] sm:$0xff]
        %v417 = vld [vmem:[#allocation2 + $0x78] sm:$0xff]
        %v418 = vld [vmem:[%s327] sm:$0xf]
        %v419 = vld [vmem:[%s327 + $0x4] sm:$0xf]
        %v420 = vld [vmem:[%s327 + $0x8] sm:$0xf]
        %v421 = vld [vmem:[%s327 + $0xc] sm:$0xf]
        %v422 = vld [vmem:[%s327 + $0x10] sm:$0xf]
        %v423 = vld [vmem:[%s327 + $0x14] sm:$0xf]
        %v424 = vld [vmem:[%s327 + $0x18] sm:$0xf]
        %v425 = vld [vmem:[%s327 + $0x1c] sm:$0xf]
        %v426 = vld [vmem:[%s327 + $0x20] sm:$0xf]
        %v427 = vld [vmem:[%s327 + $0x24] sm:$0xf]
        %v428 = vld [vmem:[%s327 + $0x28] sm:$0xf]
        %v429 = vld [vmem:[%s327 + $0x2c] sm:$0xf]
        %v430 = vld [vmem:[%s327 + $0x30] sm:$0xf]
        %v431 = vld [vmem:[%s327 + $0x34] sm:$0xf]
        %v432 = vld [vmem:[%s327 + $0x38] sm:$0xf]
        %v433 = vld [vmem:[%s327 + $0x3c] sm:$0xf]
        %v434 = vld [vmem:[%s335] sm:$0xf]
        %v435 = vld [vmem:[%s335 + $0x4] sm:$0xf]
        %v436 = vld [vmem:[%s335 + $0x8] sm:$0xf]
        %v437 = vld [vmem:[%s335 + $0xc] sm:$0xf]
        %v438 = vld [vmem:[%s335 + $0x10] sm:$0xf]
        %v439 = vld [vmem:[%s335 + $0x14] sm:$0xf]
        %v440 = vld [vmem:[%s335 + $0x18] sm:$0xf]
        %v441 = vld [vmem:[%s335 + $0x1c] sm:$0xf]
        %v442 = vld [vmem:[%s335 + $0x20] sm:$0xf]
        %v443 = vld [vmem:[%s335 + $0x24] sm:$0xf]
        %v444 = vld [vmem:[%s335 + $0x28] sm:$0xf]
        %v445 = vld [vmem:[%s335 + $0x2c] sm:$0xf]
        %v446 = vld [vmem:[%s335 + $0x30] sm:$0xf]
        %v447 = vld [vmem:[%s335 + $0x34] sm:$0xf]
        %v448 = vld [vmem:[%s335 + $0x38] sm:$0xf]
        %v449 = vld [vmem:[%s335 + $0x3c] sm:$0xf]
        %v466 = vunpack.c.l.b16 %v418
        %v467 = vunpack.c.l.b16 %v419
        %v468 = vunpack.c.l.b16 %v420
        %v469 = vunpack.c.l.b16 %v421
        %v470 = vunpack.c.l.b16 %v422
        %v471 = vunpack.c.l.b16 %v423
        %v472 = vunpack.c.l.b16 %v424
        %v473 = vunpack.c.l.b16 %v425
        %v474 = vunpack.c.l.b16 %v426
        %v475 = vunpack.c.l.b16 %v427
        %v476 = vunpack.c.l.b16 %v428
        %v477 = vunpack.c.l.b16 %v429
        %v478 = vunpack.c.l.b16 %v430
        %v479 = vunpack.c.l.b16 %v431
        %v480 = vunpack.c.l.b16 %v432
        %v481 = vunpack.c.l.b16 %v433
        %v482 = vpack.c.b16 %v467, %v466
        %v483 = vpack.c.b16 %v469, %v468
        %v484 = vpack.c.b16 %v471, %v470
        %v485 = vpack.c.b16 %v473, %v472
        %v486 = vpack.c.b16 %v475, %v474
        %v487 = vpack.c.b16 %v477, %v476
        %v488 = vpack.c.b16 %v479, %v478
        %v489 = vpack.c.b16 %v481, %v480
        %v514 = vunpack.c.l.b16 %v434
        %v515 = vunpack.c.l.b16 %v435
        %v516 = vunpack.c.l.b16 %v436
        %v517 = vunpack.c.l.b16 %v437
        %v518 = vunpack.c.l.b16 %v438
        %v519 = vunpack.c.l.b16 %v439
        %v520 = vunpack.c.l.b16 %v440
        %v521 = vunpack.c.l.b16 %v441
        %v522 = vunpack.c.l.b16 %v442
        %v523 = vunpack.c.l.b16 %v443
        %v524 = vunpack.c.l.b16 %v444
        %v525 = vunpack.c.l.b16 %v445
        %v526 = vunpack.c.l.b16 %v446
        %v527 = vunpack.c.l.b16 %v447
        %v528 = vunpack.c.l.b16 %v448
        %v529 = vunpack.c.l.b16 %v449
        %v530 = vpack.c.b16 %v515, %v514
        %v531 = vpack.c.b16 %v517, %v516
        %v532 = vpack.c.b16 %v519, %v518
        %v533 = vpack.c.b16 %v521, %v520
        %v534 = vpack.c.b16 %v523, %v522
        %v535 = vpack.c.b16 %v525, %v524
        %v536 = vpack.c.b16 %v527, %v526
        %v537 = vpack.c.b16 %v529, %v528
        %546 = vmatpush.bf16.msra.mxu0 %v537
        %547 = vmatpush.bf16.msra.mxu0 %v536
        %548 = vmatpush.bf16.msra.mxu0 %v535
        %549 = vmatpush.bf16.msra.mxu0 %v534
        %550 = vmatpush.bf16.msra.mxu0 %v533
        %551 = vmatpush.bf16.msra.mxu0 %v532
        %552 = vmatpush.bf16.msra.mxu0 %v531
        %553 = vmatpush.bf16.msra.mxu0 %v530
        %554 = vmatmul.bf16.gmra.mxu0 %v482
        %v555 = vpop.f32.mrf.mxu0
        %v556 = vadd.f32 0.0, %v555
        %v557 = vpop.f32.mrf.mxu0
        %v558 = vadd.f32 0.0, %v557
        %559 = vmatmul.bf16.gmra.mxu0 %v483
        %v560 = vpop.f32.mrf.mxu0
        %v561 = vadd.f32 0.0, %v560
        %v562 = vpop.f32.mrf.mxu0
        %v563 = vadd.f32 0.0, %v562
        %564 = vmatmul.bf16.gmra.mxu0 %v484
        %v565 = vpop.f32.mrf.mxu0
        %v566 = vadd.f32 0.0, %v565
        %v567 = vpop.f32.mrf.mxu0
        %v568 = vadd.f32 0.0, %v567
        %569 = vmatmul.bf16.gmra.mxu0 %v485
        %v570 = vpop.f32.mrf.mxu0
        %v571 = vadd.f32 0.0, %v570
        %v572 = vpop.f32.mrf.mxu0
        %v573 = vadd.f32 0.0, %v572
        %574 = vmatmul.bf16.gmra.mxu0 %v486
        %v575 = vpop.f32.mrf.mxu0
        %v576 = vadd.f32 0.0, %v575
        %v577 = vpop.f32.mrf.mxu0
        %v578 = vadd.f32 0.0, %v577
        %579 = vmatmul.bf16.gmra.mxu0 %v487
        %v580 = vpop.f32.mrf.mxu0
        %v581 = vadd.f32 0.0, %v580
        %v582 = vpop.f32.mrf.mxu0
        %v583 = vadd.f32 0.0, %v582
        %584 = vmatmul.bf16.gmra.mxu0 %v488
        %v585 = vpop.f32.mrf.mxu0
        %v586 = vadd.f32 0.0, %v585
        %v587 = vpop.f32.mrf.mxu0
        %v588 = vadd.f32 0.0, %v587
        %589 = vmatmul.bf16.gmra.mxu0 %v489
        %v590 = vpop.f32.mrf.mxu0
        %v591 = vadd.f32 0.0, %v590
        %v592 = vpop.f32.mrf.mxu0
        %v593 = vadd.f32 0.0, %v592
        %594 = vdwg.mxu0
        %v595 = vadd.f32 %v402, %v556
        %v596 = vadd.f32 %v403, %v558
        %v597 = vadd.f32 %v404, %v561
        %v598 = vadd.f32 %v405, %v563
        %v599 = vadd.f32 %v406, %v566
        %v600 = vadd.f32 %v407, %v568
        %v601 = vadd.f32 %v408, %v571
        %v602 = vadd.f32 %v409, %v573
        %v603 = vadd.f32 %v410, %v576
        %v604 = vadd.f32 %v411, %v578
        %v605 = vadd.f32 %v412, %v581
        %v606 = vadd.f32 %v413, %v583
        %v607 = vadd.f32 %v414, %v586
        %v608 = vadd.f32 %v415, %v588
        %v609 = vadd.f32 %v416, %v591
        %v610 = vadd.f32 %v417, %v593
        %611 = vst [vmem:[#allocation2] sm:$0xff] %v595
        %612 = vst [vmem:[#allocation2 + $0x8] sm:$0xff] %v596
        %613 = vst [vmem:[#allocation2 + $0x10] sm:$0xff] %v597
        %614 = vst [vmem:[#allocation2 + $0x18] sm:$0xff] %v598
        %615 = vst [vmem:[#allocation2 + $0x20] sm:$0xff] %v599
        %616 = vst [vmem:[#allocation2 + $0x28] sm:$0xff] %v600
        %617 = vst [vmem:[#allocation2 + $0x30] sm:$0xff] %v601
        %618 = vst [vmem:[#allocation2 + $0x38] sm:$0xff] %v602
        %619 = vst [vmem:[#allocation2 + $0x40] sm:$0xff] %v603
        %620 = vst [vmem:[#allocation2 + $0x48] sm:$0xff] %v604
        %621 = vst [vmem:[#allocation2 + $0x50] sm:$0xff] %v605
        %622 = vst [vmem:[#allocation2 + $0x58] sm:$0xff] %v606
        %623 = vst [vmem:[#allocation2 + $0x60] sm:$0xff] %v607
        %624 = vst [vmem:[#allocation2 + $0x68] sm:$0xff] %v608
        %625 = vst [vmem:[#allocation2 + $0x70] sm:$0xff] %v609
        %626 = vst [vmem:[#allocation2 + $0x78] sm:$0xff] %v610
        %p627 = scmp.eq.s32.totalorder %s27, 4
        // Predicated region
        $region86: #{blazeneo_forward.11} parent=68 // pred_check
          %p628 = pneg %p627
        $region87: #{blazeneo_forward.11} parent=68 // pred_check_branch
          %630 = sbr.rel (%p628) target = $region89
        $region88: #{blazeneo_forward.11} parent=68 // pred_region
          %v631 = vld [vmem:[#allocation2] sm:$0xff]
          %v632 = vld [vmem:[#allocation2 + $0x8] sm:$0xff]
          %v633 = vld [vmem:[#allocation2 + $0x10] sm:$0xff]
          %v634 = vld [vmem:[#allocation2 + $0x18] sm:$0xff]
          %v635 = vld [vmem:[#allocation2 + $0x20] sm:$0xff]
          %v636 = vld [vmem:[#allocation2 + $0x28] sm:$0xff]
          %v637 = vld [vmem:[#allocation2 + $0x30] sm:$0xff]
          %v638 = vld [vmem:[#allocation2 + $0x38] sm:$0xff]
          %v639 = vld [vmem:[#allocation2 + $0x40] sm:$0xff]
          %v640 = vld [vmem:[#allocation2 + $0x48] sm:$0xff]
          %v641 = vld [vmem:[#allocation2 + $0x50] sm:$0xff]
          %v642 = vld [vmem:[#allocation2 + $0x58] sm:$0xff]
          %v643 = vld [vmem:[#allocation2 + $0x60] sm:$0xff]
          %v644 = vld [vmem:[#allocation2 + $0x68] sm:$0xff]
          %v645 = vld [vmem:[#allocation2 + $0x70] sm:$0xff]
          %v646 = vld [vmem:[#allocation2 + $0x78] sm:$0xff]
          %v647 = vmax.f32 %v631, 0.0
          %v648 = vmax.f32 %v632, 0.0
          %v649 = vmax.f32 %v633, 0.0
          %v650 = vmax.f32 %v634, 0.0
          %v651 = vmax.f32 %v635, 0.0
          %v652 = vmax.f32 %v636, 0.0
          %v653 = vmax.f32 %v637, 0.0
          %v654 = vmax.f32 %v638, 0.0
          %v655 = vmax.f32 %v639, 0.0
          %v656 = vmax.f32 %v640, 0.0
          %v657 = vmax.f32 %v641, 0.0
          %v658 = vmax.f32 %v642, 0.0
          %v659 = vmax.f32 %v643, 0.0
          %v660 = vmax.f32 %v644, 0.0
          %v661 = vmax.f32 %v645, 0.0
          %v662 = vmax.f32 %v646, 0.0
          %v663 = vpack.c.bf16 %v647, %v647
          %v664 = vpack.c.bf16 %v648, %v648
          %v665 = vpack.c.bf16 %v649, %v649
          %v666 = vpack.c.bf16 %v650, %v650
          %v667 = vpack.c.bf16 %v651, %v651
          %v668 = vpack.c.bf16 %v652, %v652
          %v669 = vpack.c.bf16 %v653, %v653
          %v670 = vpack.c.bf16 %v654, %v654
          %v671 = vpack.c.bf16 %v655, %v655
          %v672 = vpack.c.bf16 %v656, %v656
          %v673 = vpack.c.bf16 %v657, %v657
          %v674 = vpack.c.bf16 %v658, %v658
          %v675 = vpack.c.bf16 %v659, %v659
          %v676 = vpack.c.bf16 %v660, %v660
          %v677 = vpack.c.bf16 %v661, %v661
          %v678 = vpack.c.bf16 %v662, %v662
          %679 = vst [vmem:[%s374] sm:$0xf] %v663
          %680 = vst [vmem:[%s374 + $0x4] sm:$0xf] %v664
          %681 = vst [vmem:[%s374 + $0x8] sm:$0xf] %v665
          %682 = vst [vmem:[%s374 + $0xc] sm:$0xf] %v666
          %683 = vst [vmem:[%s374 + $0x10] sm:$0xf] %v667
          %684 = vst [vmem:[%s374 + $0x14] sm:$0xf] %v668
          %685 = vst [vmem:[%s374 + $0x18] sm:$0xf] %v669
          %686 = vst [vmem:[%s374 + $0x1c] sm:$0xf] %v670
          %687 = vst [vmem:[%s374 + $0x20] sm:$0xf] %v671
          %688 = vst [vmem:[%s374 + $0x24] sm:$0xf] %v672
          %689 = vst [vmem:[%s374 + $0x28] sm:$0xf] %v673
          %690 = vst [vmem:[%s374 + $0x2c] sm:$0xf] %v674
          %691 = vst [vmem:[%s374 + $0x30] sm:$0xf] %v675
          %692 = vst [vmem:[%s374 + $0x34] sm:$0xf] %v676
          %693 = vst [vmem:[%s374 + $0x38] sm:$0xf] %v677
          %694 = vst [vmem:[%s374 + $0x3c] sm:$0xf] %v678
        $region89: #{blazeneo_forward.11} parent=68 // pred_fallthru
          _
        %s695 = sand.u32 %s131, 1
        %s696 = sand.u32 %s131, 1
        %s697 = smul.addr %s696, 64
        %s698 = scalar_lea.vmem [#allocation8], %s697
        // Predicated region
        $region90: #{blazeneo_forward.11} parent=68 // pred_check
          %p699 = pneg %p141
        $region91: #{blazeneo_forward.11} parent=68 // pred_check_branch
          %701 = sbr.rel (%p699) target = $region93
        $region92: #{blazeneo_forward.11} parent=68 // pred_region
          %s702 = smul.u32 16, %s25
          %s703 = smul.addr %s702, 3
          %s704 = sadd.s32 %s26, %s703
          %s705 = smul.addr %s704, 4
          %s706 = scalar_lea.vmem %s3, %s705
          // Predicated region
          $region94: #{blazeneo_forward.11} parent=92 // pred_check
            _
          $region95: #{blazeneo_forward.11} parent=92 // pred_check_branch
            %708 = sbr.rel (0) target = $region97
          $region96: #{blazeneo_forward.11} parent=92 // pred_region
            // Predicated region
            $region98: #{blazeneo_forward.11} parent=96 // pred_check
              _
            $region99: #{blazeneo_forward.11} parent=96 // pred_check_branch
              %710 = sbr.rel target = $region101
            $region100: #{blazeneo_forward.11} parent=96 // pred_region
              // Predicated region
              $region113: #{blazeneo_forward.11} parent=100 // pred_check
                _
              $region114: #{blazeneo_forward.11} parent=100 // pred_check_branch
                %756 = sbr.rel (0) target = $region116
              $region115: #{blazeneo_forward.11} parent=100 // pred_region
                loop: start=0, step=1, limit=1
                $region117: #{blazeneo_forward.11} parent=115 // loop_pre_header
                  _
                $region118: #{blazeneo_forward.11} parent=115 // loop_header
                  %s758 = sphi 0, %s762
                  %p759 = scmp.ge.s32.totalorder %s758, 1
                  %s763 = sphi %s698, %s698
                  %s764 = sphi %s706, %s706
                $region119: #{blazeneo_forward.11} parent=115 // loop_header_branch
                  %761 = sbr.rel (%p759) target = $region123
                $region120: #{blazeneo_forward.11} parent=115 // loop_body
                  _
                $region121: #{blazeneo_forward.11} parent=115 // loop_footer
                  %s762 = sadd.s32 1, %s758
                $region122: #{blazeneo_forward.11} parent=115 // loop_footer_branch
                  %757 = sbr.rel target = $region118
                $region123: #{blazeneo_forward.11} parent=115 // loop_exit
                  _
                %s766 = ssub.s32 16, 1
                loop: start=0, step=1, limit=1
                $region124: #{blazeneo_forward.11} parent=115 // loop_pre_header
                  _
                $region125: #{blazeneo_forward.11} parent=115 // loop_header
                  %s768 = sphi 0, %s772
                  %p769 = scmp.ge.s32.totalorder %s768, 1
                  %s773 = sphi %s698, %s698
                  %s774 = sphi %s706, %s706
                $region126: #{blazeneo_forward.11} parent=115 // loop_header_branch
                  %771 = sbr.rel (%p769) target = $region130
                $region127: #{blazeneo_forward.11} parent=115 // loop_body
                  %v775 = vld [vmem:[%s773] sm:%s766]
                  %776 = vst [vmem:[%s774] sm:%s766] %v775
                  %v777 = vld [vmem:[%s773 + $0x4] sm:%s766]
                  %778 = vst [vmem:[%s774 + $0xc] sm:%s766] %v777
                  %v779 = vld [vmem:[%s773 + $0x8] sm:%s766]
                  %780 = vst [vmem:[%s774 + $0x18] sm:%s766] %v779
                  %v781 = vld [vmem:[%s773 + $0xc] sm:%s766]
                  %782 = vst [vmem:[%s774 + $0x24] sm:%s766] %v781
                  %v783 = vld [vmem:[%s773 + $0x10] sm:%s766]
                  %784 = vst [vmem:[%s774 + $0x30] sm:%s766] %v783
                  %v785 = vld [vmem:[%s773 + $0x14] sm:%s766]
                  %786 = vst [vmem:[%s774 + $0x3c] sm:%s766] %v785
                  %v787 = vld [vmem:[%s773 + $0x18] sm:%s766]
                  %788 = vst [vmem:[%s774 + $0x48] sm:%s766] %v787
                  %v789 = vld [vmem:[%s773 + $0x1c] sm:%s766]
                  %790 = vst [vmem:[%s774 + $0x54] sm:%s766] %v789
                  %v791 = vld [vmem:[%s773 + $0x20] sm:%s766]
                  %792 = vst [vmem:[%s774 + $0x60] sm:%s766] %v791
                  %v793 = vld [vmem:[%s773 + $0x24] sm:%s766]
                  %794 = vst [vmem:[%s774 + $0x6c] sm:%s766] %v793
                  %v795 = vld [vmem:[%s773 + $0x28] sm:%s766]
                  %796 = vst [vmem:[%s774 + $0x78] sm:%s766] %v795
                  %v797 = vld [vmem:[%s773 + $0x2c] sm:%s766]
                  %798 = vst [vmem:[%s774 + $0x84] sm:%s766] %v797
                  %v799 = vld [vmem:[%s773 + $0x30] sm:%s766]
                  %800 = vst [vmem:[%s774 + $0x90] sm:%s766] %v799
                  %v801 = vld [vmem:[%s773 + $0x34] sm:%s766]
                  %802 = vst [vmem:[%s774 + $0x9c] sm:%s766] %v801
                  %v803 = vld [vmem:[%s773 + $0x38] sm:%s766]
                  %804 = vst [vmem:[%s774 + $0xa8] sm:%s766] %v803
                  %v805 = vld [vmem:[%s773 + $0x3c] sm:%s766]
                  %806 = vst [vmem:[%s774 + $0xb4] sm:%s766] %v805
                $region128: #{blazeneo_forward.11} parent=115 // loop_footer
                  %s772 = sadd.s32 1, %s768
                $region129: #{blazeneo_forward.11} parent=115 // loop_footer_branch
                  %767 = sbr.rel target = $region125
                $region130: #{blazeneo_forward.11} parent=115 // loop_exit
                  _
              $region116: #{blazeneo_forward.11} parent=100 // pred_fallthru
                _
            $region101: #{blazeneo_forward.11} parent=96 // pred_fallthru
              _
            // Predicated region
            $region102: #{blazeneo_forward.11} parent=96 // pred_check
              _
            $region103: #{blazeneo_forward.11} parent=96 // pred_check_branch
              %712 = sbr.rel (0) target = $region105
            $region104: #{blazeneo_forward.11} parent=96 // pred_region
              %s714 = ssub.s32 16, 1
              loop: start=0, step=1, limit=1
              $region106: #{blazeneo_forward.11} parent=104 // loop_pre_header
                _
              $region107: #{blazeneo_forward.11} parent=104 // loop_header
                %s716 = sphi 0, %s720
                %p717 = scmp.ge.s32.totalorder %s716, 1
                %s721 = sphi %s698, %s698
                %s722 = sphi %s706, %s706
              $region108: #{blazeneo_forward.11} parent=104 // loop_header_branch
                %719 = sbr.rel (%p717) target = $region112
              $region109: #{blazeneo_forward.11} parent=104 // loop_body
                %v723 = vld [vmem:[%s721] sm:%s714]
                %724 = vst [vmem:[%s722] sm:%s714] %v723
                %v725 = vld [vmem:[%s721 + $0x4] sm:%s714]
                %726 = vst [vmem:[%s722 + $0xc] sm:%s714] %v725
                %v727 = vld [vmem:[%s721 + $0x8] sm:%s714]
                %728 = vst [vmem:[%s722 + $0x18] sm:%s714] %v727
                %v729 = vld [vmem:[%s721 + $0xc] sm:%s714]
                %730 = vst [vmem:[%s722 + $0x24] sm:%s714] %v729
                %v731 = vld [vmem:[%s721 + $0x10] sm:%s714]
                %732 = vst [vmem:[%s722 + $0x30] sm:%s714] %v731
                %v733 = vld [vmem:[%s721 + $0x14] sm:%s714]
                %734 = vst [vmem:[%s722 + $0x3c] sm:%s714] %v733
                %v735 = vld [vmem:[%s721 + $0x18] sm:%s714]
                %736 = vst [vmem:[%s722 + $0x48] sm:%s714] %v735
                %v737 = vld [vmem:[%s721 + $0x1c] sm:%s714]
                %738 = vst [vmem:[%s722 + $0x54] sm:%s714] %v737
                %v739 = vld [vmem:[%s721 + $0x20] sm:%s714]
                %740 = vst [vmem:[%s722 + $0x60] sm:%s714] %v739
                %v741 = vld [vmem:[%s721 + $0x24] sm:%s714]
                %742 = vst [vmem:[%s722 + $0x6c] sm:%s714] %v741
                %v743 = vld [vmem:[%s721 + $0x28] sm:%s714]
                %744 = vst [vmem:[%s722 + $0x78] sm:%s714] %v743
                %v745 = vld [vmem:[%s721 + $0x2c] sm:%s714]
                %746 = vst [vmem:[%s722 + $0x84] sm:%s714] %v745
                %v747 = vld [vmem:[%s721 + $0x30] sm:%s714]
                %748 = vst [vmem:[%s722 + $0x90] sm:%s714] %v747
                %v749 = vld [vmem:[%s721 + $0x34] sm:%s714]
                %750 = vst [vmem:[%s722 + $0x9c] sm:%s714] %v749
                %v751 = vld [vmem:[%s721 + $0x38] sm:%s714]
                %752 = vst [vmem:[%s722 + $0xa8] sm:%s714] %v751
                %v753 = vld [vmem:[%s721 + $0x3c] sm:%s714]
                %754 = vst [vmem:[%s722 + $0xb4] sm:%s714] %v753
              $region110: #{blazeneo_forward.11} parent=104 // loop_footer
                %s720 = sadd.s32 1, %s716
              $region111: #{blazeneo_forward.11} parent=104 // loop_footer_branch
                %715 = sbr.rel target = $region107
              $region112: #{blazeneo_forward.11} parent=104 // loop_exit
                _
            $region105: #{blazeneo_forward.11} parent=96 // pred_fallthru
              _
          $region97: #{blazeneo_forward.11} parent=92 // pred_fallthru
            _
          %807 = vnop
        $region93: #{blazeneo_forward.11} parent=68 // pred_fallthru
          _
      $region69: #{blazeneo_forward.11} parent=5 // pred_fallthru
        _
      %p808 = scmp.le.s32.totalorder 2, %s15
      // Predicated region
      $region131: #{blazeneo_forward.11} parent=5 // pred_check
        %p809 = pneg %p808
      $region132: #{blazeneo_forward.11} parent=5 // pred_check_branch
        %811 = sbr.rel (%p809) target = $region134
      $region133: #{blazeneo_forward.11} parent=5 // pred_region
        %s812 = ssub.s32 %s15, 2
        // Predicated region
        $region135: #{blazeneo_forward.11} parent=133 // pred_check
          %p813 = pneg %p147
        $region136: #{blazeneo_forward.11} parent=133 // pred_check_branch
          %815 = sbr.rel (%p813) target = $region138
        $region137: #{blazeneo_forward.11} parent=133 // pred_region
          %s816 = sand.u32 %s132, 1
          %s817 = sand.u32 %s132, 1
          %s818 = smul.addr %s817, 64
          %s819 = scalar_lea.vmem [#allocation8], %s818
        $region138: #{blazeneo_forward.11} parent=133 // pred_fallthru
          _
      $region134: #{blazeneo_forward.11} parent=5 // pred_fallthru
        _
    $region6: #{blazeneo_forward.11} parent=1 // loop_footer
      %s19 = sadd.s32 1, %s15
    $region7: #{blazeneo_forward.11} parent=1 // loop_footer_branch
      %14 = sbr.rel target = $region3
    $region8: #{blazeneo_forward.11} parent=1 // loop_exit
      _
    %820 = vsyncpa [#allocation5], 1
    %s821 = scalar_lea.sflag [#allocation5], 1
    %822 = vsyncpa %s821, 1
    %823 = vsyncpa [#allocation7], 1
    %s824 = scalar_lea.sflag [#allocation7], 1
    %825 = vsyncpa %s824, 1

// kernel: blazeneo_forward.14
$region0: #{blazeneo_forward.14}
  #allocation0 [shape = 'u32[]', space=smem, size = 0x4, offset = 0x4, fixed_abs, tag = 'smem constant byte address 0x4 - core index']
  #allocation1 [shape = 'u32[72,128]{1,0:T(1,128)}', space=vmem, size = 0x9000, scoped, tag = 'internal scratch']
  #allocation2 [shape = 'f32[128,128]{1,0:T(8,128)}', space=vmem, size = 0x10000, scoped, tag = 'scratch operand']
  %s0 = inlined_call_operand.vmem [shape: bf16[128,384], index: 0, kind: input, shape index: {}]
  %s1 = inlined_call_operand.hbm [shape: bf16[384,128], index: 1, kind: input, shape index: {}]
  %s2 = inlined_call_operand.hbm [shape: f32[1,128], index: 2, kind: input, shape index: {}]
  %s3 = inlined_call_operand.vmem [shape: bf16[128,128], index: 3, kind: output, shape index: {}]
  %s4 = sld [smem:[#allocation0]]
  $region102: #{blazeneo_forward.14} parent=0
    _
  %s6 = ssub.s32 1, %s4
  %s7 = scalar_select 0, %s6, %s4
  $region1: #{blazeneo_forward.14} parent=0
    #allocation3 [shape = 'u8[65536]{0}', space=vmem, size = 0x10000, scoped, tag = 'input window, operand 0']
    #allocation4 [shape = 'u8[65536]{0}', space=vmem, size = 0x10000, scoped, tag = 'input window, operand 1']
    #allocation5 [shape = 's32[2]{0}', space=sflag, size = 0x8, scoped, tag = 'scoped memory for blazeneo_forward.14']
    #allocation6 [shape = 'u8[512]{0}', space=vmem, size = 0x400, scoped, tag = 'input window, operand 2, single buffered']
    #allocation7 [shape = 's32[1]{0}', space=sflag, size = 0x4, scoped, tag = 'scoped memory for blazeneo_forward.14']
    %8 = vsyncpa [#allocation5], 0
    %s9 = scalar_lea.sflag [#allocation5], 1
    %10 = vsyncpa %s9, 0
    %11 = vsyncpa [#allocation7], 0
    loop: start=0, step=1, limit=5
    $region2: #{blazeneo_forward.14} parent=1 // loop_pre_header
      _
    $region3: #{blazeneo_forward.14} parent=1 // loop_header
      %s13 = sphi 0, %s17
      %p14 = scmp.ge.s32.totalorder %s13, 5
      %s20 = sphi 0, %s39
      %s21 = sphi 0, %s35
      %s22 = sphi 0, %s31
      %s23 = sphi 0, %s20
      %s24 = sphi 0, %s21
      %s25 = sphi 0, %s22
      %s26 = sphi 0, %s23
      %s27 = sphi 0, %s24
      %s28 = sphi 0, %s25
      %s44 = sphi 0, %s46
      %s47 = sphi 0, %s44
      %s48 = sphi 0, %s47
      %s64 = sphi 0, %s48
      %s72 = sphi 0, %s74
      %s75 = sphi 0, %s72
      %s76 = sphi 0, %s75
      %s92 = sphi 0, %s76
      %s98 = sphi 0, %s100
      %s101 = sphi 0, %s98
      %s102 = sphi 0, %s101
      %s118 = sphi 0, %s102
      %s126 = sphi 0, %s128
      %s129 = sphi 0, %s126
      %s130 = sphi 0, %s129
      %s146 = sphi 0, %s130
    $region4: #{blazeneo_forward.14} parent=1 // loop_header_branch
      %16 = sbr.rel (%p14) target = $region8
    $region5: #{blazeneo_forward.14} parent=1 // loop_body
      %s18 = ssub.s32 %s13, 1
      %s19 = ssub.s32 %s13, 2
      %s29 = sadd.s32 1, %s22
      %p30 = scmp.ge.s32.totalorder %s29, 3
      %s31 = scalar_select %p30, 0, %s29
      %s32 = sadd.s32 1, %s21
      %s33 = scalar_select %p30, %s32, %s21
      %p34 = scmp.ge.s32.totalorder %s33, 1
      %s35 = scalar_select %p34, 0, %s33
      %s36 = sadd.s32 1, %s20
      %s37 = scalar_select %p34, %s36, %s20
      %p38 = scmp.ge.s32.totalorder %s37, 1
      %s39 = scalar_select %p38, 0, %s37
      %s40 = ssub.s32 %s20, %s39
      %s41 = ssub.s32 %s22, %s31
      %s42 = sor.u32 %s40, %s41
      %p43 = scmp.eq.s32.totalorder %s42, 0
      %s45 = sadd.s32 %s44, 1
      %s46 = scalar_select %p43, %s44, %s45
      %p49 = pneg %p43
      %p50 = scmp.eq.s32.totalorder %s13, 2
      %p51 = por %p49, %p50
      %p52 = scmp.ne.s32.totalorder %s44, %s47
      %p53 = scmp.eq.s32.totalorder %s13, 0
      %p54 = por %p52, %p53
      %p55 = scmp.ne.s32.totalorder %s44, %s47
      %p56 = scmp.eq.s32.totalorder %s18, 2
      %p57 = por %p55, %p56
      %p58 = scmp.ne.s32.totalorder %s47, %s48
      %p59 = scmp.eq.s32.totalorder %s18, 0
      %p60 = por %p58, %p59
      %p61 = scmp.ne.s32.totalorder %s47, %s48
      %p62 = scmp.eq.s32.totalorder %s19, 2
      %p63 = por %p61, %p62
      %p65 = scmp.ne.s32.totalorder %s48, %s64
      %p66 = scmp.eq.s32.totalorder %s19, 0
      %p67 = por %p65, %p66
      %s68 = ssub.s32 %s22, %s31
      %s69 = ssub.s32 %s21, %s35
      %s70 = sor.u32 %s68, %s69
      %p71 = scmp.eq.s32.totalorder %s70, 0
      %s73 = sadd.s32 %s72, 1
      %s74 = scalar_select %p71, %s72, %s73
      %p77 = pneg %p71
      %p78 = scmp.eq.s32.totalorder %s13, 2
      %p79 = por %p77, %p78
      %p80 = scmp.ne.s32.totalorder %s72, %s75
      %p81 = scmp.eq.s32.totalorder %s13, 0
      %p82 = por %p80, %p81
      %p83 = scmp.ne.s32.totalorder %s72, %s75
      %p84 = scmp.eq.s32.totalorder %s18, 2
      %p85 = por %p83, %p84
      %p86 = scmp.ne.s32.totalorder %s75, %s76
      %p87 = scmp.eq.s32.totalorder %s18, 0
      %p88 = por %p86, %p87
      %p89 = scmp.ne.s32.totalorder %s75, %s76
      %p90 = scmp.eq.s32.totalorder %s19, 2
      %p91 = por %p89, %p90
      %p93 = scmp.ne.s32.totalorder %s76, %s92
      %p94 = scmp.eq.s32.totalorder %s19, 0
      %p95 = por %p93, %p94
      %s96 = ssub.s32 %s21, %s35
      %p97 = scmp.eq.s32.totalorder %s96, 0
      %s99 = sadd.s32 %s98, 1
      %s100 = scalar_select %p97, %s98, %s99
      %p103 = pneg %p97
      %p104 = scmp.eq.s32.totalorder %s13, 2
      %p105 = por %p103, %p104
      %p106 = scmp.ne.s32.totalorder %s98, %s101
      %p107 = scmp.eq.s32.totalorder %s13, 0
      %p108 = por %p106, %p107
      %p109 = scmp.ne.s32.totalorder %s98, %s101
      %p110 = scmp.eq.s32.totalorder %s18, 2
      %p111 = por %p109, %p110
      %p112 = scmp.ne.s32.totalorder %s101, %s102
      %p113 = scmp.eq.s32.totalorder %s18, 0
      %p114 = por %p112, %p113
      %p115 = scmp.ne.s32.totalorder %s101, %s102
      %p116 = scmp.eq.s32.totalorder %s19, 2
      %p117 = por %p115, %p116
      %p119 = scmp.ne.s32.totalorder %s102, %s118
      %p120 = scmp.eq.s32.totalorder %s19, 0
      %p121 = por %p119, %p120
      %s122 = ssub.s32 %s20, %s39
      %s123 = ssub.s32 %s21, %s35
      %s124 = sor.u32 %s122, %s123
      %p125 = scmp.eq.s32.totalorder %s124, 0
      %s127 = sadd.s32 %s126, 1
      %s128 = scalar_select %p125, %s126, %s127
      %p131 = pneg %p125
      %p132 = scmp.eq.s32.totalorder %s13, 2
      %p133 = por %p131, %p132
      %p134 = scmp.ne.s32.totalorder %s126, %s129
      %p135 = scmp.eq.s32.totalorder %s13, 0
      %p136 = por %p134, %p135
      %p137 = scmp.ne.s32.totalorder %s126, %s129
      %p138 = scmp.eq.s32.totalorder %s18, 2
      %p139 = por %p137, %p138
      %p140 = scmp.ne.s32.totalorder %s129, %s130
      %p141 = scmp.eq.s32.totalorder %s18, 0
      %p142 = por %p140, %p141
      %p143 = scmp.ne.s32.totalorder %s129, %s130
      %p144 = scmp.eq.s32.totalorder %s19, 2
      %p145 = por %p143, %p144
      %p147 = scmp.ne.s32.totalorder %s130, %s146
      %p148 = scmp.eq.s32.totalorder %s19, 0
      %p149 = por %p147, %p148
      %p150 = scmp.le.s32.totalorder 1, %s13
      %p151 = scmp.lt.s32.totalorder %s13, 4
      %p152 = pnand %p150, %p151
      %p153 = pneg %p152
      // Predicated region
      $region9: #{blazeneo_forward.14} parent=5 // pred_check
        _
      $region10: #{blazeneo_forward.14} parent=5 // pred_check_branch
        %155 = sbr.rel (%p152) target = $region12
      $region11: #{blazeneo_forward.14} parent=5 // pred_region
        %s156 = ssub.s32 %s13, 1
        // Predicated region
        $region13: #{blazeneo_forward.14} parent=11 // pred_check
          %p157 = pneg %p114
        $region14: #{blazeneo_forward.14} parent=11 // pred_check_branch
          %159 = sbr.rel (%p157) target = $region16
        $region15: #{blazeneo_forward.14} parent=11 // pred_region
          %161 = vsyncadd [#allocation7], 0
          %s162 = scalar_lea.hbm %s2, %s24
          %s164 = sshll.u32 %s162, 4
          %s165 = int_to_ptr.hbm [resolvable:$true] %s164
          %s166 = sshll.u32 [#allocation6], 4
          %s167 = int_to_ptr.vmem [resolvable:$true] %s166
          %169 = dma.hbm_to_vmem [thread:$0]  %s165, 16, %s167, [#allocation7]
        $region16: #{blazeneo_forward.14} parent=11 // pred_fallthru
          _
      $region12: #{blazeneo_forward.14} parent=5 // pred_fallthru
        _
      %p170 = scmp.lt.s32.totalorder %s13, 3
      // Predicated region
      $region17: #{blazeneo_forward.14} parent=5 // pred_check
        %p171 = pneg %p170
      $region18: #{blazeneo_forward.14} parent=5 // pred_check_branch
        %173 = sbr.rel (%p171) target = $region20
      $region19: #{blazeneo_forward.14} parent=5 // pred_region
        // Predicated region
        $region21: #{blazeneo_forward.14} parent=19 // pred_check
          %p174 = pneg %p54
        $region22: #{blazeneo_forward.14} parent=19 // pred_check_branch
          %176 = sbr.rel (%p174) target = $region24
        $region23: #{blazeneo_forward.14} parent=19 // pred_region
          %s177 = sand.u32 %s44, 1
          %s178 = sand.u32 %s44, 1
          %s179 = smul.addr %s178, 64
          %s180 = scalar_lea.vmem [#allocation3], %s179
          %s181 = smul.u32 16, %s20
          %s182 = smul.addr %s181, 3
          %s183 = sadd.s32 %s22, %s182
          %s184 = smul.addr %s183, 4
          %s185 = scalar_lea.vmem %s0, %s184
          // Predicated region
          $region25: #{blazeneo_forward.14} parent=23 // pred_check
            _
          $region26: #{blazeneo_forward.14} parent=23 // pred_check_branch
            %187 = sbr.rel (0) target = $region28
          $region27: #{blazeneo_forward.14} parent=23 // pred_region
            // Predicated region
            $region29: #{blazeneo_forward.14} parent=27 // pred_check
              _
            $region30: #{blazeneo_forward.14} parent=27 // pred_check_branch
              %189 = sbr.rel target = $region32
            $region31: #{blazeneo_forward.14} parent=27 // pred_region
              // Predicated region
              $region44: #{blazeneo_forward.14} parent=31 // pred_check
                _
              $region45: #{blazeneo_forward.14} parent=31 // pred_check_branch
                %235 = sbr.rel (0) target = $region47
              $region46: #{blazeneo_forward.14} parent=31 // pred_region
                loop: start=0, step=1, limit=1
                $region48: #{blazeneo_forward.14} parent=46 // loop_pre_header
                  _
                $region49: #{blazeneo_forward.14} parent=46 // loop_header
                  %s237 = sphi 0, %s241
                  %p238 = scmp.ge.s32.totalorder %s237, 1
                  %s242 = sphi %s185, %s185
                  %s243 = sphi %s180, %s180
                $region50: #{blazeneo_forward.14} parent=46 // loop_header_branch
                  %240 = sbr.rel (%p238) target = $region54
                $region51: #{blazeneo_forward.14} parent=46 // loop_body
                  _
                $region52: #{blazeneo_forward.14} parent=46 // loop_footer
                  %s241 = sadd.s32 1, %s237
                $region53: #{blazeneo_forward.14} parent=46 // loop_footer_branch
                  %236 = sbr.rel target = $region49
                $region54: #{blazeneo_forward.14} parent=46 // loop_exit
                  _
                %s245 = ssub.s32 16, 1
                loop: start=0, step=1, limit=1
                $region55: #{blazeneo_forward.14} parent=46 // loop_pre_header
                  _
                $region56: #{blazeneo_forward.14} parent=46 // loop_header
                  %s247 = sphi 0, %s251
                  %p248 = scmp.ge.s32.totalorder %s247, 1
                  %s252 = sphi %s185, %s185
                  %s253 = sphi %s180, %s180
                $region57: #{blazeneo_forward.14} parent=46 // loop_header_branch
                  %250 = sbr.rel (%p248) target = $region61
                $region58: #{blazeneo_forward.14} parent=46 // loop_body
                  %v254 = vld [vmem:[%s252] sm:%s245]
                  %255 = vst [vmem:[%s253] sm:%s245] %v254
                  %v256 = vld [vmem:[%s252 + $0xc] sm:%s245]
                  %257 = vst [vmem:[%s253 + $0x4] sm:%s245] %v256
                  %v258 = vld [vmem:[%s252 + $0x18] sm:%s245]
                  %259 = vst [vmem:[%s253 + $0x8] sm:%s245] %v258
                  %v260 = vld [vmem:[%s252 + $0x24] sm:%s245]
                  %261 = vst [vmem:[%s253 + $0xc] sm:%s245] %v260
                  %v262 = vld [vmem:[%s252 + $0x30] sm:%s245]
                  %263 = vst [vmem:[%s253 + $0x10] sm:%s245] %v262
                  %v264 = vld [vmem:[%s252 + $0x3c] sm:%s245]
                  %265 = vst [vmem:[%s253 + $0x14] sm:%s245] %v264
                  %v266 = vld [vmem:[%s252 + $0x48] sm:%s245]
                  %267 = vst [vmem:[%s253 + $0x18] sm:%s245] %v266
                  %v268 = vld [vmem:[%s252 + $0x54] sm:%s245]
                  %269 = vst [vmem:[%s253 + $0x1c] sm:%s245] %v268
                  %v270 = vld [vmem:[%s252 + $0x60] sm:%s245]
                  %271 = vst [vmem:[%s253 + $0x20] sm:%s245] %v270
                  %v272 = vld [vmem:[%s252 + $0x6c] sm:%s245]
                  %273 = vst [vmem:[%s253 + $0x24] sm:%s245] %v272
                  %v274 = vld [vmem:[%s252 + $0x78] sm:%s245]
                  %275 = vst [vmem:[%s253 + $0x28] sm:%s245] %v274
                  %v276 = vld [vmem:[%s252 + $0x84] sm:%s245]
                  %277 = vst [vmem:[%s253 + $0x2c] sm:%s245] %v276
                  %v278 = vld [vmem:[%s252 + $0x90] sm:%s245]
                  %279 = vst [vmem:[%s253 + $0x30] sm:%s245] %v278
                  %v280 = vld [vmem:[%s252 + $0x9c] sm:%s245]
                  %281 = vst [vmem:[%s253 + $0x34] sm:%s245] %v280
                  %v282 = vld [vmem:[%s252 + $0xa8] sm:%s245]
                  %283 = vst [vmem:[%s253 + $0x38] sm:%s245] %v282
                  %v284 = vld [vmem:[%s252 + $0xb4] sm:%s245]
                  %285 = vst [vmem:[%s253 + $0x3c] sm:%s245] %v284
                $region59: #{blazeneo_forward.14} parent=46 // loop_footer
                  %s251 = sadd.s32 1, %s247
                $region60: #{blazeneo_forward.14} parent=46 // loop_footer_branch
                  %246 = sbr.rel target = $region56
                $region61: #{blazeneo_forward.14} parent=46 // loop_exit
                  _
              $region47: #{blazeneo_forward.14} parent=31 // pred_fallthru
                _
            $region32: #{blazeneo_forward.14} parent=27 // pred_fallthru
              _
            // Predicated region
            $region33: #{blazeneo_forward.14} parent=27 // pred_check
              _
            $region34: #{blazeneo_forward.14} parent=27 // pred_check_branch
              %191 = sbr.rel (0) target = $region36
            $region35: #{blazeneo_forward.14} parent=27 // pred_region
              %s193 = ssub.s32 16, 1
              loop: start=0, step=1, limit=1
              $region37: #{blazeneo_forward.14} parent=35 // loop_pre_header
                _
              $region38: #{blazeneo_forward.14} parent=35 // loop_header
                %s195 = sphi 0, %s199
                %p196 = scmp.ge.s32.totalorder %s195, 1
                %s200 = sphi %s185, %s185
                %s201 = sphi %s180, %s180
              $region39: #{blazeneo_forward.14} parent=35 // loop_header_branch
                %198 = sbr.rel (%p196) target = $region43
              $region40: #{blazeneo_forward.14} parent=35 // loop_body
                %v202 = vld [vmem:[%s200] sm:%s193]
                %203 = vst [vmem:[%s201] sm:%s193] %v202
                %v204 = vld [vmem:[%s200 + $0xc] sm:%s193]
                %205 = vst [vmem:[%s201 + $0x4] sm:%s193] %v204
                %v206 = vld [vmem:[%s200 + $0x18] sm:%s193]
                %207 = vst [vmem:[%s201 + $0x8] sm:%s193] %v206
                %v208 = vld [vmem:[%s200 + $0x24] sm:%s193]
                %209 = vst [vmem:[%s201 + $0xc] sm:%s193] %v208
                %v210 = vld [vmem:[%s200 + $0x30] sm:%s193]
                %211 = vst [vmem:[%s201 + $0x10] sm:%s193] %v210
                %v212 = vld [vmem:[%s200 + $0x3c] sm:%s193]
                %213 = vst [vmem:[%s201 + $0x14] sm:%s193] %v212
                %v214 = vld [vmem:[%s200 + $0x48] sm:%s193]
                %215 = vst [vmem:[%s201 + $0x18] sm:%s193] %v214
                %v216 = vld [vmem:[%s200 + $0x54] sm:%s193]
                %217 = vst [vmem:[%s201 + $0x1c] sm:%s193] %v216
                %v218 = vld [vmem:[%s200 + $0x60] sm:%s193]
                %219 = vst [vmem:[%s201 + $0x20] sm:%s193] %v218
                %v220 = vld [vmem:[%s200 + $0x6c] sm:%s193]
                %221 = vst [vmem:[%s201 + $0x24] sm:%s193] %v220
                %v222 = vld [vmem:[%s200 + $0x78] sm:%s193]
                %223 = vst [vmem:[%s201 + $0x28] sm:%s193] %v222
                %v224 = vld [vmem:[%s200 + $0x84] sm:%s193]
                %225 = vst [vmem:[%s201 + $0x2c] sm:%s193] %v224
                %v226 = vld [vmem:[%s200 + $0x90] sm:%s193]
                %227 = vst [vmem:[%s201 + $0x30] sm:%s193] %v226
                %v228 = vld [vmem:[%s200 + $0x9c] sm:%s193]
                %229 = vst [vmem:[%s201 + $0x34] sm:%s193] %v228
                %v230 = vld [vmem:[%s200 + $0xa8] sm:%s193]
                %231 = vst [vmem:[%s201 + $0x38] sm:%s193] %v230
                %v232 = vld [vmem:[%s200 + $0xb4] sm:%s193]
                %233 = vst [vmem:[%s201 + $0x3c] sm:%s193] %v232
              $region41: #{blazeneo_forward.14} parent=35 // loop_footer
                %s199 = sadd.s32 1, %s195
              $region42: #{blazeneo_forward.14} parent=35 // loop_footer_branch
                %194 = sbr.rel target = $region38
              $region43: #{blazeneo_forward.14} parent=35 // loop_exit
                _
            $region36: #{blazeneo_forward.14} parent=27 // pred_fallthru
              _
          $region28: #{blazeneo_forward.14} parent=23 // pred_fallthru
            _
          %286 = vnop
        $region24: #{blazeneo_forward.14} parent=19 // pred_fallthru
          _
        // Predicated region
        $region62: #{blazeneo_forward.14} parent=19 // pred_check
          %p287 = pneg %p82
        $region63: #{blazeneo_forward.14} parent=19 // pred_check_branch
          %289 = sbr.rel (%p287) target = $region65
        $region64: #{blazeneo_forward.14} parent=19 // pred_region
          %s290 = sand.u32 %s72, 1
          %s291 = scalar_lea.sflag [#allocation5], %s290
          %s292 = sand.u32 %s72, 1
          %s293 = smul.addr %s292, 64
          %s294 = scalar_lea.vmem [#allocation4], %s293
          %s295 = smul.u32 16, %s22
          %297 = vsyncadd %s291, 0
          %s298 = sadd.s32 %s21, %s295
          %s299 = smul.addr %s298, 4
          %s300 = scalar_lea.hbm %s1, %s299
          %s301 = sshll.u32 %s300, 4
          %s302 = int_to_ptr.hbm [resolvable:$true] %s301
          %s303 = sshll.u32 %s294, 4
          %s304 = int_to_ptr.vmem [resolvable:$true] %s303
          %309 = dma.hbm_to_vmem [thread:$0]  %s302, 1024, %s304, %s291, 64, 64, 4
        $region65: #{blazeneo_forward.14} parent=19 // pred_fallthru
          _
      $region20: #{blazeneo_forward.14} parent=5 // pred_fallthru
        _
      %p310 = scmp.le.s32.totalorder 1, %s13
      %p311 = scmp.lt.s32.totalorder %s13, 4
      %p312 = pnand %p310, %p311
      %p313 = pneg %p312
      // Predicated region
      $region66: #{blazeneo_forward.14} parent=5 // pred_check
        _
      $region67: #{blazeneo_forward.14} parent=5 // pred_check_branch
        %315 = sbr.rel (%p312) target = $region69
      $region68: #{blazeneo_forward.14} parent=5 // pred_region
        %s316 = ssub.s32 %s13, 1
        %s317 = sand.u32 %s47, 1
        %s318 = sand.u32 %s47, 1
        %s319 = smul.addr %s318, 64
        %s320 = scalar_lea.vmem [#allocation3], %s319
        // Predicated region
        $region70: #{blazeneo_forward.14} parent=68 // pred_check
          %p321 = pneg %p60
        $region71: #{blazeneo_forward.14} parent=68 // pred_check_branch
          %323 = sbr.rel (%p321) target = $region73
        $region72: #{blazeneo_forward.14} parent=68 // pred_region
          _
        $region73: #{blazeneo_forward.14} parent=68 // pred_fallthru
          _
        %s324 = sand.u32 %s75, 1
        %s325 = scalar_lea.sflag [#allocation5], %s324
        %s326 = sand.u32 %s75, 1
        %s327 = smul.addr %s326, 64
        %s328 = scalar_lea.vmem [#allocation4], %s327
        // Predicated region
        $region74: #{blazeneo_forward.14} parent=68 // pred_check
          %p329 = pneg %p88
        $region75: #{blazeneo_forward.14} parent=68 // pred_check_branch
          %331 = sbr.rel (%p329) target = $region77
        $region76: #{blazeneo_forward.14} parent=68 // pred_region
          %333 = dma.done %s325, 1024
        $region77: #{blazeneo_forward.14} parent=68 // pred_fallthru
          _
        // Predicated region
        $region78: #{blazeneo_forward.14} parent=68 // pred_check
          %p334 = pneg %p114
        $region79: #{blazeneo_forward.14} parent=68 // pred_check_branch
          %336 = sbr.rel (%p334) target = $region81
        $region80: #{blazeneo_forward.14} parent=68 // pred_region
          %338 = dma.done [#allocation7], 16
        $region81: #{blazeneo_forward.14} parent=68 // pred_fallthru
          _
        %s339 = sand.u32 %s47, 1
        %s340 = sand.u32 %s47, 1
        %s341 = smul.addr %s340, 64
        %s342 = scalar_lea.vmem [#allocation3], %s341
        %p343 = pneg %p60
        %p344 = pneg %p57
        %s345 = sand.u32 %s75, 1
        %s346 = scalar_lea.sflag [#allocation5], %s345
        %s347 = sand.u32 %s75, 1
        %s348 = smul.addr %s347, 64
        %s349 = scalar_lea.vmem [#allocation4], %s348
        %p350 = pneg %p88
        %p351 = pneg %p85
        %p352 = pneg %p114
        %p353 = pneg %p111
        %p354 = pneg %p142
        %p355 = pneg %p139
        %s356 = smul.u32 16, %s23
        %p357 = scmp.lt.s32.totalorder %s356, 15
        %s358 = scalar_select %p357, %s356, 15
        %p359 = scmp.lt.s32.totalorder %s24, 0
        %s360 = scalar_select %p359, %s24, 0
        %s361 = sadd.s32 %s360, %s358
        %s362 = smul.addr %s361, 4
        %s363 = scalar_lea.vmem %s3, %s362
        %s364 = smul.u32 16, %s23
        %s365 = smul.u32 16, %s25
        %s366 = smul.u32 16, %s23
        %p367 = scmp.lt.s32.totalorder %s366, 15
        %s368 = scalar_select %p367, %s366, 15
        %p369 = scmp.lt.s32.totalorder %s24, 0
        %s370 = scalar_select %p369, %s24, 0
        %s371 = sadd.s32 %s370, %s368
        %s372 = smul.addr %s371, 4
        %s373 = scalar_lea.vmem %s3, %s372
        %s374 = smul.u32 16, %s23
        %p375 = scmp.eq.s32.totalorder %s25, 0
        // Predicated region
        $region82: #{blazeneo_forward.14} parent=68 // pred_check
          %p376 = pneg %p375
        $region83: #{blazeneo_forward.14} parent=68 // pred_check_branch
          %378 = sbr.rel (%p376) target = $region85
        $region84: #{blazeneo_forward.14} parent=68 // pred_region
          %v379 = vld [vmem:[#allocation6] sm:$0x1]
          %v381 = vperm.slane %v379, 0
          %383 = vst [vmem:[#allocation2] sm:$0xff] %v381
          %384 = vst [vmem:[#allocation2 + $0x8] sm:$0xff] %v381
          %385 = vst [vmem:[#allocation2 + $0x10] sm:$0xff] %v381
          %386 = vst [vmem:[#allocation2 + $0x18] sm:$0xff] %v381
          %387 = vst [vmem:[#allocation2 + $0x20] sm:$0xff] %v381
          %388 = vst [vmem:[#allocation2 + $0x28] sm:$0xff] %v381
          %389 = vst [vmem:[#allocation2 + $0x30] sm:$0xff] %v381
          %390 = vst [vmem:[#allocation2 + $0x38] sm:$0xff] %v381
          %391 = vst [vmem:[#allocation2 + $0x40] sm:$0xff] %v381
          %392 = vst [vmem:[#allocation2 + $0x48] sm:$0xff] %v381
          %393 = vst [vmem:[#allocation2 + $0x50] sm:$0xff] %v381
          %394 = vst [vmem:[#allocation2 + $0x58] sm:$0xff] %v381
          %395 = vst [vmem:[#allocation2 + $0x60] sm:$0xff] %v381
          %396 = vst [vmem:[#allocation2 + $0x68] sm:$0xff] %v381
          %397 = vst [vmem:[#allocation2 + $0x70] sm:$0xff] %v381
          %398 = vst [vmem:[#allocation2 + $0x78] sm:$0xff] %v381
        $region85: #{blazeneo_forward.14} parent=68 // pred_fallthru
          _
        %v399 = vld [vmem:[#allocation2] sm:$0xff]
        %v400 = vld [vmem:[#allocation2 + $0x8] sm:$0xff]
        %v401 = vld [vmem:[#allocation2 + $0x10] sm:$0xff]
        %v402 = vld [vmem:[#allocation2 + $0x18] sm:$0xff]
        %v403 = vld [vmem:[#allocation2 + $0x20] sm:$0xff]
        %v404 = vld [vmem:[#allocation2 + $0x28] sm:$0xff]
        %v405 = vld [vmem:[#allocation2 + $0x30] sm:$0xff]
        %v406 = vld [vmem:[#allocation2 + $0x38] sm:$0xff]
        %v407 = vld [vmem:[#allocation2 + $0x40] sm:$0xff]
        %v408 = vld [vmem:[#allocation2 + $0x48] sm:$0xff]
        %v409 = vld [vmem:[#allocation2 + $0x50] sm:$0xff]
        %v410 = vld [vmem:[#allocation2 + $0x58] sm:$0xff]
        %v411 = vld [vmem:[#allocation2 + $0x60] sm:$0xff]
        %v412 = vld [vmem:[#allocation2 + $0x68] sm:$0xff]
        %v413 = vld [vmem:[#allocation2 + $0x70] sm:$0xff]
        %v414 = vld [vmem:[#allocation2 + $0x78] sm:$0xff]
        %v415 = vld [vmem:[%s320] sm:$0xf]
        %v416 = vld [vmem:[%s320 + $0x4] sm:$0xf]
        %v417 = vld [vmem:[%s320 + $0x8] sm:$0xf]
        %v418 = vld [vmem:[%s320 + $0xc] sm:$0xf]
        %v419 = vld [vmem:[%s320 + $0x10] sm:$0xf]
        %v420 = vld [vmem:[%s320 + $0x14] sm:$0xf]
        %v421 = vld [vmem:[%s320 + $0x18] sm:$0xf]
        %v422 = vld [vmem:[%s320 + $0x1c] sm:$0xf]
        %v423 = vld [vmem:[%s320 + $0x20] sm:$0xf]
        %v424 = vld [vmem:[%s320 + $0x24] sm:$0xf]
        %v425 = vld [vmem:[%s320 + $0x28] sm:$0xf]
        %v426 = vld [vmem:[%s320 + $0x2c] sm:$0xf]
        %v427 = vld [vmem:[%s320 + $0x30] sm:$0xf]
        %v428 = vld [vmem:[%s320 + $0x34] sm:$0xf]
        %v429 = vld [vmem:[%s320 + $0x38] sm:$0xf]
        %v430 = vld [vmem:[%s320 + $0x3c] sm:$0xf]
        %v431 = vld [vmem:[%s328] sm:$0xf]
        %v432 = vld [vmem:[%s328 + $0x4] sm:$0xf]
        %v433 = vld [vmem:[%s328 + $0x8] sm:$0xf]
        %v434 = vld [vmem:[%s328 + $0xc] sm:$0xf]
        %v435 = vld [vmem:[%s328 + $0x10] sm:$0xf]
        %v436 = vld [vmem:[%s328 + $0x14] sm:$0xf]
        %v437 = vld [vmem:[%s328 + $0x18] sm:$0xf]
        %v438 = vld [vmem:[%s328 + $0x1c] sm:$0xf]
        %v439 = vld [vmem:[%s328 + $0x20] sm:$0xf]
        %v440 = vld [vmem:[%s328 + $0x24] sm:$0xf]
        %v441 = vld [vmem:[%s328 + $0x28] sm:$0xf]
        %v442 = vld [vmem:[%s328 + $0x2c] sm:$0xf]
        %v443 = vld [vmem:[%s328 + $0x30] sm:$0xf]
        %v444 = vld [vmem:[%s328 + $0x34] sm:$0xf]
        %v445 = vld [vmem:[%s328 + $0x38] sm:$0xf]
        %v446 = vld [vmem:[%s328 + $0x3c] sm:$0xf]
        %v463 = vunpack.c.l.b16 %v415
        %v464 = vunpack.c.l.b16 %v416
        %v465 = vunpack.c.l.b16 %v417
        %v466 = vunpack.c.l.b16 %v418
        %v467 = vunpack.c.l.b16 %v419
        %v468 = vunpack.c.l.b16 %v420
        %v469 = vunpack.c.l.b16 %v421
        %v470 = vunpack.c.l.b16 %v422
        %v471 = vunpack.c.l.b16 %v423
        %v472 = vunpack.c.l.b16 %v424
        %v473 = vunpack.c.l.b16 %v425
        %v474 = vunpack.c.l.b16 %v426
        %v475 = vunpack.c.l.b16 %v427
        %v476 = vunpack.c.l.b16 %v428
        %v477 = vunpack.c.l.b16 %v429
        %v478 = vunpack.c.l.b16 %v430
        %v479 = vpack.c.b16 %v464, %v463
        %v480 = vpack.c.b16 %v466, %v465
        %v481 = vpack.c.b16 %v468, %v467
        %v482 = vpack.c.b16 %v470, %v469
        %v483 = vpack.c.b16 %v472, %v471
        %v484 = vpack.c.b16 %v474, %v473
        %v485 = vpack.c.b16 %v476, %v475
        %v486 = vpack.c.b16 %v478, %v477
        %v511 = vunpack.c.l.b16 %v431
        %v512 = vunpack.c.l.b16 %v432
        %v513 = vunpack.c.l.b16 %v433
        %v514 = vunpack.c.l.b16 %v434
        %v515 = vunpack.c.l.b16 %v435
        %v516 = vunpack.c.l.b16 %v436
        %v517 = vunpack.c.l.b16 %v437
        %v518 = vunpack.c.l.b16 %v438
        %v519 = vunpack.c.l.b16 %v439
        %v520 = vunpack.c.l.b16 %v440
        %v521 = vunpack.c.l.b16 %v441
        %v522 = vunpack.c.l.b16 %v442
        %v523 = vunpack.c.l.b16 %v443
        %v524 = vunpack.c.l.b16 %v444
        %v525 = vunpack.c.l.b16 %v445
        %v526 = vunpack.c.l.b16 %v446
        %v527 = vpack.c.b16 %v512, %v511
        %v528 = vpack.c.b16 %v514, %v513
        %v529 = vpack.c.b16 %v516, %v515
        %v530 = vpack.c.b16 %v518, %v517
        %v531 = vpack.c.b16 %v520, %v519
        %v532 = vpack.c.b16 %v522, %v521
        %v533 = vpack.c.b16 %v524, %v523
        %v534 = vpack.c.b16 %v526, %v525
        %543 = vmatpush.bf16.msra.mxu0 %v534
        %544 = vmatpush.bf16.msra.mxu0 %v533
        %545 = vmatpush.bf16.msra.mxu0 %v532
        %546 = vmatpush.bf16.msra.mxu0 %v531
        %547 = vmatpush.bf16.msra.mxu0 %v530
        %548 = vmatpush.bf16.msra.mxu0 %v529
        %549 = vmatpush.bf16.msra.mxu0 %v528
        %550 = vmatpush.bf16.msra.mxu0 %v527
        %551 = vmatmul.bf16.gmra.mxu0 %v479
        %v552 = vpop.f32.mrf.mxu0
        %v553 = vadd.f32 0.0, %v552
        %v554 = vpop.f32.mrf.mxu0
        %v555 = vadd.f32 0.0, %v554
        %556 = vmatmul.bf16.gmra.mxu0 %v480
        %v557 = vpop.f32.mrf.mxu0
        %v558 = vadd.f32 0.0, %v557
        %v559 = vpop.f32.mrf.mxu0
        %v560 = vadd.f32 0.0, %v559
        %561 = vmatmul.bf16.gmra.mxu0 %v481
        %v562 = vpop.f32.mrf.mxu0
        %v563 = vadd.f32 0.0, %v562
        %v564 = vpop.f32.mrf.mxu0
        %v565 = vadd.f32 0.0, %v564
        %566 = vmatmul.bf16.gmra.mxu0 %v482
        %v567 = vpop.f32.mrf.mxu0
        %v568 = vadd.f32 0.0, %v567
        %v569 = vpop.f32.mrf.mxu0
        %v570 = vadd.f32 0.0, %v569
        %571 = vmatmul.bf16.gmra.mxu0 %v483
        %v572 = vpop.f32.mrf.mxu0
        %v573 = vadd.f32 0.0, %v572
        %v574 = vpop.f32.mrf.mxu0
        %v575 = vadd.f32 0.0, %v574
        %576 = vmatmul.bf16.gmra.mxu0 %v484
        %v577 = vpop.f32.mrf.mxu0
        %v578 = vadd.f32 0.0, %v577
        %v579 = vpop.f32.mrf.mxu0
        %v580 = vadd.f32 0.0, %v579
        %581 = vmatmul.bf16.gmra.mxu0 %v485
        %v582 = vpop.f32.mrf.mxu0
        %v583 = vadd.f32 0.0, %v582
        %v584 = vpop.f32.mrf.mxu0
        %v585 = vadd.f32 0.0, %v584
        %586 = vmatmul.bf16.gmra.mxu0 %v486
        %v587 = vpop.f32.mrf.mxu0
        %v588 = vadd.f32 0.0, %v587
        %v589 = vpop.f32.mrf.mxu0
        %v590 = vadd.f32 0.0, %v589
        %591 = vdwg.mxu0
        %v592 = vadd.f32 %v399, %v553
        %v593 = vadd.f32 %v400, %v555
        %v594 = vadd.f32 %v401, %v558
        %v595 = vadd.f32 %v402, %v560
        %v596 = vadd.f32 %v403, %v563
        %v597 = vadd.f32 %v404, %v565
        %v598 = vadd.f32 %v405, %v568
        %v599 = vadd.f32 %v406, %v570
        %v600 = vadd.f32 %v407, %v573
        %v601 = vadd.f32 %v408, %v575
        %v602 = vadd.f32 %v409, %v578
        %v603 = vadd.f32 %v410, %v580
        %v604 = vadd.f32 %v411, %v583
        %v605 = vadd.f32 %v412, %v585
        %v606 = vadd.f32 %v413, %v588
        %v607 = vadd.f32 %v414, %v590
        %608 = vst [vmem:[#allocation2] sm:$0xff] %v592
        %609 = vst [vmem:[#allocation2 + $0x8] sm:$0xff] %v593
        %610 = vst [vmem:[#allocation2 + $0x10] sm:$0xff] %v594
        %611 = vst [vmem:[#allocation2 + $0x18] sm:$0xff] %v595
        %612 = vst [vmem:[#allocation2 + $0x20] sm:$0xff] %v596
        %613 = vst [vmem:[#allocation2 + $0x28] sm:$0xff] %v597
        %614 = vst [vmem:[#allocation2 + $0x30] sm:$0xff] %v598
        %615 = vst [vmem:[#allocation2 + $0x38] sm:$0xff] %v599
        %616 = vst [vmem:[#allocation2 + $0x40] sm:$0xff] %v600
        %617 = vst [vmem:[#allocation2 + $0x48] sm:$0xff] %v601
        %618 = vst [vmem:[#allocation2 + $0x50] sm:$0xff] %v602
        %619 = vst [vmem:[#allocation2 + $0x58] sm:$0xff] %v603
        %620 = vst [vmem:[#allocation2 + $0x60] sm:$0xff] %v604
        %621 = vst [vmem:[#allocation2 + $0x68] sm:$0xff] %v605
        %622 = vst [vmem:[#allocation2 + $0x70] sm:$0xff] %v606
        %623 = vst [vmem:[#allocation2 + $0x78] sm:$0xff] %v607
        %p624 = scmp.eq.s32.totalorder %s25, 2
        // Predicated region
        $region86: #{blazeneo_forward.14} parent=68 // pred_check
          %p625 = pneg %p624
        $region87: #{blazeneo_forward.14} parent=68 // pred_check_branch
          %627 = sbr.rel (%p625) target = $region89
        $region88: #{blazeneo_forward.14} parent=68 // pred_region
          %v628 = vld [vmem:[#allocation2] sm:$0xff]
          %v629 = vld [vmem:[#allocation2 + $0x8] sm:$0xff]
          %v630 = vld [vmem:[#allocation2 + $0x10] sm:$0xff]
          %v631 = vld [vmem:[#allocation2 + $0x18] sm:$0xff]
          %v632 = vld [vmem:[#allocation2 + $0x20] sm:$0xff]
          %v633 = vld [vmem:[#allocation2 + $0x28] sm:$0xff]
          %v634 = vld [vmem:[#allocation2 + $0x30] sm:$0xff]
          %v635 = vld [vmem:[#allocation2 + $0x38] sm:$0xff]
          %v636 = vld [vmem:[#allocation2 + $0x40] sm:$0xff]
          %v637 = vld [vmem:[#allocation2 + $0x48] sm:$0xff]
          %v638 = vld [vmem:[#allocation2 + $0x50] sm:$0xff]
          %v639 = vld [vmem:[#allocation2 + $0x58] sm:$0xff]
          %v640 = vld [vmem:[#allocation2 + $0x60] sm:$0xff]
          %v641 = vld [vmem:[#allocation2 + $0x68] sm:$0xff]
          %v642 = vld [vmem:[#allocation2 + $0x70] sm:$0xff]
          %v643 = vld [vmem:[#allocation2 + $0x78] sm:$0xff]
          %v644 = vmax.f32 %v628, 0.0
          %v645 = vmax.f32 %v629, 0.0
          %v646 = vmax.f32 %v630, 0.0
          %v647 = vmax.f32 %v631, 0.0
          %v648 = vmax.f32 %v632, 0.0
          %v649 = vmax.f32 %v633, 0.0
          %v650 = vmax.f32 %v634, 0.0
          %v651 = vmax.f32 %v635, 0.0
          %v652 = vmax.f32 %v636, 0.0
          %v653 = vmax.f32 %v637, 0.0
          %v654 = vmax.f32 %v638, 0.0
          %v655 = vmax.f32 %v639, 0.0
          %v656 = vmax.f32 %v640, 0.0
          %v657 = vmax.f32 %v641, 0.0
          %v658 = vmax.f32 %v642, 0.0
          %v659 = vmax.f32 %v643, 0.0
          %v660 = vpack.c.bf16 %v644, %v644
          %v661 = vpack.c.bf16 %v645, %v645
          %v662 = vpack.c.bf16 %v646, %v646
          %v663 = vpack.c.bf16 %v647, %v647
          %v664 = vpack.c.bf16 %v648, %v648
          %v665 = vpack.c.bf16 %v649, %v649
          %v666 = vpack.c.bf16 %v650, %v650
          %v667 = vpack.c.bf16 %v651, %v651
          %v668 = vpack.c.bf16 %v652, %v652
          %v669 = vpack.c.bf16 %v653, %v653
          %v670 = vpack.c.bf16 %v654, %v654
          %v671 = vpack.c.bf16 %v655, %v655
          %v672 = vpack.c.bf16 %v656, %v656
          %v673 = vpack.c.bf16 %v657, %v657
          %v674 = vpack.c.bf16 %v658, %v658
          %v675 = vpack.c.bf16 %v659, %v659
          %676 = vst [vmem:[%s373] sm:$0xf] %v660
          %677 = vst [vmem:[%s373 + $0x4] sm:$0xf] %v661
          %678 = vst [vmem:[%s373 + $0x8] sm:$0xf] %v662
          %679 = vst [vmem:[%s373 + $0xc] sm:$0xf] %v663
          %680 = vst [vmem:[%s373 + $0x10] sm:$0xf] %v664
          %681 = vst [vmem:[%s373 + $0x14] sm:$0xf] %v665
          %682 = vst [vmem:[%s373 + $0x18] sm:$0xf] %v666
          %683 = vst [vmem:[%s373 + $0x1c] sm:$0xf] %v667
          %684 = vst [vmem:[%s373 + $0x20] sm:$0xf] %v668
          %685 = vst [vmem:[%s373 + $0x24] sm:$0xf] %v669
          %686 = vst [vmem:[%s373 + $0x28] sm:$0xf] %v670
          %687 = vst [vmem:[%s373 + $0x2c] sm:$0xf] %v671
          %688 = vst [vmem:[%s373 + $0x30] sm:$0xf] %v672
          %689 = vst [vmem:[%s373 + $0x34] sm:$0xf] %v673
          %690 = vst [vmem:[%s373 + $0x38] sm:$0xf] %v674
          %691 = vst [vmem:[%s373 + $0x3c] sm:$0xf] %v675
        $region89: #{blazeneo_forward.14} parent=68 // pred_fallthru
          _
        %s692 = smul.u32 16, %s23
        %p693 = scmp.lt.s32.totalorder %s692, 15
        %s694 = scalar_select %p693, %s692, 15
        %p695 = scmp.lt.s32.totalorder %s24, 0
        %s696 = scalar_select %p695, %s24, 0
        %s697 = sadd.s32 %s696, %s694
        %s698 = smul.addr %s697, 4
        %s699 = scalar_lea.vmem %s3, %s698
        // Predicated region
        $region90: #{blazeneo_forward.14} parent=68 // pred_check
          %p700 = pneg %p139
        $region91: #{blazeneo_forward.14} parent=68 // pred_check_branch
          %702 = sbr.rel (%p700) target = $region93
        $region92: #{blazeneo_forward.14} parent=68 // pred_region
          %s703 = smul.u32 16, %s23
        $region93: #{blazeneo_forward.14} parent=68 // pred_fallthru
          _
        // Predicated region
        $region94: #{blazeneo_forward.14} parent=68 // pred_check
          %p704 = pneg %p139
        $region95: #{blazeneo_forward.14} parent=68 // pred_check_branch
          %706 = sbr.rel (%p704) target = $region97
        $region96: #{blazeneo_forward.14} parent=68 // pred_region
          %s707 = smul.u32 16, %s23
          %p708 = scmp.lt.s32.totalorder %s707, 15
          %s709 = scalar_select %p708, %s707, 15
          %p710 = scmp.lt.s32.totalorder %s24, 0
          %s711 = scalar_select %p710, %s24, 0
          %s712 = sadd.s32 %s711, %s709
          %s713 = smul.addr %s712, 4
          %s714 = scalar_lea.vmem %s3, %s713
        $region97: #{blazeneo_forward.14} parent=68 // pred_fallthru
          _
      $region69: #{blazeneo_forward.14} parent=5 // pred_fallthru
        _
      %p715 = scmp.le.s32.totalorder 2, %s13
      // Predicated region
      $region98: #{blazeneo_forward.14} parent=5 // pred_check
        %p716 = pneg %p715
      $region99: #{blazeneo_forward.14} parent=5 // pred_check_branch
        %718 = sbr.rel (%p716) target = $region101
      $region100: #{blazeneo_forward.14} parent=5 // pred_region
        %s719 = ssub.s32 %s13, 2
      $region101: #{blazeneo_forward.14} parent=5 // pred_fallthru
        _
    $region6: #{blazeneo_forward.14} parent=1 // loop_footer
      %s17 = sadd.s32 1, %s13
    $region7: #{blazeneo_forward.14} parent=1 // loop_footer_branch
      %12 = sbr.rel target = $region3
    $region8: #{blazeneo_forward.14} parent=1 // loop_exit
      _
    %720 = vsyncpa [#allocation5], 1
    %s721 = scalar_lea.sflag [#allocation5], 1
    %722 = vsyncpa %s721, 1
    %723 = vsyncpa [#allocation7], 1

// kernel: blazeneo_forward.12
$region0: #{blazeneo_forward.12}
  #allocation0 [shape = 'u32[]', space=smem, size = 0x4, offset = 0x4, fixed_abs, tag = 'smem constant byte address 0x4 - core index']
  #allocation1 [shape = 'u32[72,128]{1,0:T(1,128)}', space=vmem, size = 0x9000, scoped, tag = 'internal scratch']
  #allocation2 [shape = 'f32[32,128]{1,0:T(8,128)}', space=vmem, size = 0x4000, scoped, tag = 'scratch operand']
  %s0 = inlined_call_operand.vmem [shape: bf16[32,3072], index: 0, kind: input, shape index: {}]
  %s1 = inlined_call_operand.hbm [shape: bf16[3072,640], index: 1, kind: input, shape index: {}]
  %s2 = inlined_call_operand.vmem [shape: f32[1,640], index: 2, kind: input, shape index: {}]
  %s3 = inlined_call_operand.vmem [shape: bf16[32,640], index: 3, kind: output, shape index: {}]
  %s4 = sld [smem:[#allocation0]]
  $region117: #{blazeneo_forward.12} parent=0
    _
  %s6 = ssub.s32 1, %s4
  %s7 = scalar_select 0, %s6, %s4
  $region1: #{blazeneo_forward.12} parent=0
    #allocation3 [shape = 'u8[65536]{0}', space=vmem, size = 0x10000, scoped, tag = 'input window, operand 0']
    #allocation4 [shape = 'u8[262144]{0}', space=vmem, size = 0x40000, scoped, tag = 'input window, operand 1']
    #allocation5 [shape = 's32[2]{0}', space=sflag, size = 0x8, scoped, tag = 'scoped memory for blazeneo_forward.12']
    #allocation6 [shape = 'u8[16384]{0}', space=vmem, size = 0x4000, scoped, tag = 'output window, operand 0']
    %8 = vsyncpa [#allocation5], 0
    %s9 = scalar_lea.sflag [#allocation5], 1
    %10 = vsyncpa %s9, 0
    loop: start=0, step=1, limit=32
    $region2: #{blazeneo_forward.12} parent=1 // loop_pre_header
      _
    $region3: #{blazeneo_forward.12} parent=1 // loop_header
      %s12 = sphi 0, %s16
      %p13 = scmp.ge.s32.totalorder %s12, 32
      %s19 = sphi 0, %s38
      %s20 = sphi 0, %s34
      %s21 = sphi 0, %s30
      %s22 = sphi 0, %s19
      %s23 = sphi 0, %s20
      %s24 = sphi 0, %s21
      %s25 = sphi 0, %s22
      %s26 = sphi 0, %s23
      %s27 = sphi 0, %s24
      %s43 = sphi 0, %s45
      %s46 = sphi 0, %s43
      %s47 = sphi 0, %s46
      %s63 = sphi 0, %s47
      %s71 = sphi 0, %s73
      %s74 = sphi 0, %s71
      %s75 = sphi 0, %s74
      %s91 = sphi 0, %s75
      %s97 = sphi 0, %s99
      %s100 = sphi 0, %s97
      %s101 = sphi 0, %s100
      %s117 = sphi 0, %s101
      %s125 = sphi 0, %s127
      %s128 = sphi 0, %s125
      %s129 = sphi 0, %s128
      %s145 = sphi 0, %s129
    $region4: #{blazeneo_forward.12} parent=1 // loop_header_branch
      %15 = sbr.rel (%p13) target = $region8
    $region5: #{blazeneo_forward.12} parent=1 // loop_body
      %s17 = ssub.s32 %s12, 1
      %s18 = ssub.s32 %s12, 2
      %s28 = sadd.s32 1, %s21
      %p29 = scmp.ge.s32.totalorder %s28, 6
      %s30 = scalar_select %p29, 0, %s28
      %s31 = sadd.s32 1, %s20
      %s32 = scalar_select %p29, %s31, %s20
      %p33 = scmp.ge.s32.totalorder %s32, 5
      %s34 = scalar_select %p33, 0, %s32
      %s35 = sadd.s32 1, %s19
      %s36 = scalar_select %p33, %s35, %s19
      %p37 = scmp.ge.s32.totalorder %s36, 1
      %s38 = scalar_select %p37, 0, %s36
      %s39 = ssub.s32 %s19, %s38
      %s40 = ssub.s32 %s21, %s30
      %s41 = sor.u32 %s39, %s40
      %p42 = scmp.eq.s32.totalorder %s41, 0
      %s44 = sadd.s32 %s43, 1
      %s45 = scalar_select %p42, %s43, %s44
      %p48 = pneg %p42
      %p49 = scmp.eq.s32.totalorder %s12, 29
      %p50 = por %p48, %p49
      %p51 = scmp.ne.s32.totalorder %s43, %s46
      %p52 = scmp.eq.s32.totalorder %s12, 0
      %p53 = por %p51, %p52
      %p54 = scmp.ne.s32.totalorder %s43, %s46
      %p55 = scmp.eq.s32.totalorder %s17, 29
      %p56 = por %p54, %p55
      %p57 = scmp.ne.s32.totalorder %s46, %s47
      %p58 = scmp.eq.s32.totalorder %s17, 0
      %p59 = por %p57, %p58
      %p60 = scmp.ne.s32.totalorder %s46, %s47
      %p61 = scmp.eq.s32.totalorder %s18, 29
      %p62 = por %p60, %p61
      %p64 = scmp.ne.s32.totalorder %s47, %s63
      %p65 = scmp.eq.s32.totalorder %s18, 0
      %p66 = por %p64, %p65
      %s67 = ssub.s32 %s21, %s30
      %s68 = ssub.s32 %s20, %s34
      %s69 = sor.u32 %s67, %s68
      %p70 = scmp.eq.s32.totalorder %s69, 0
      %s72 = sadd.s32 %s71, 1
      %s73 = scalar_select %p70, %s71, %s72
      %p76 = pneg %p70
      %p77 = scmp.eq.s32.totalorder %s12, 29
      %p78 = por %p76, %p77
      %p79 = scmp.ne.s32.totalorder %s71, %s74
      %p80 = scmp.eq.s32.totalorder %s12, 0
      %p81 = por %p79, %p80
      %p82 = scmp.ne.s32.totalorder %s71, %s74
      %p83 = scmp.eq.s32.totalorder %s17, 29
      %p84 = por %p82, %p83
      %p85 = scmp.ne.s32.totalorder %s74, %s75
      %p86 = scmp.eq.s32.totalorder %s17, 0
      %p87 = por %p85, %p86
      %p88 = scmp.ne.s32.totalorder %s74, %s75
      %p89 = scmp.eq.s32.totalorder %s18, 29
      %p90 = por %p88, %p89
      %p92 = scmp.ne.s32.totalorder %s75, %s91
      %p93 = scmp.eq.s32.totalorder %s18, 0
      %p94 = por %p92, %p93
      %s95 = ssub.s32 %s20, %s34
      %p96 = scmp.eq.s32.totalorder %s95, 0
      %s98 = sadd.s32 %s97, 1
      %s99 = scalar_select %p96, %s97, %s98
      %p102 = pneg %p96
      %p103 = scmp.eq.s32.totalorder %s12, 29
      %p104 = por %p102, %p103
      %p105 = scmp.ne.s32.totalorder %s97, %s100
      %p106 = scmp.eq.s32.totalorder %s12, 0
      %p107 = por %p105, %p106
      %p108 = scmp.ne.s32.totalorder %s97, %s100
      %p109 = scmp.eq.s32.totalorder %s17, 29
      %p110 = por %p108, %p109
      %p111 = scmp.ne.s32.totalorder %s100, %s101
      %p112 = scmp.eq.s32.totalorder %s17, 0
      %p113 = por %p111, %p112
      %p114 = scmp.ne.s32.totalorder %s100, %s101
      %p115 = scmp.eq.s32.totalorder %s18, 29
      %p116 = por %p114, %p115
      %p118 = scmp.ne.s32.totalorder %s101, %s117
      %p119 = scmp.eq.s32.totalorder %s18, 0
      %p120 = por %p118, %p119
      %s121 = ssub.s32 %s19, %s38
      %s122 = ssub.s32 %s20, %s34
      %s123 = sor.u32 %s121, %s122
      %p124 = scmp.eq.s32.totalorder %s123, 0
      %s126 = sadd.s32 %s125, 1
      %s127 = scalar_select %p124, %s125, %s126
      %p130 = pneg %p124
      %p131 = scmp.eq.s32.totalorder %s12, 29
      %p132 = por %p130, %p131
      %p133 = scmp.ne.s32.totalorder %s125, %s128
      %p134 = scmp.eq.s32.totalorder %s12, 0
      %p135 = por %p133, %p134
      %p136 = scmp.ne.s32.totalorder %s125, %s128
      %p137 = scmp.eq.s32.totalorder %s17, 29
      %p138 = por %p136, %p137
      %p139 = scmp.ne.s32.totalorder %s128, %s129
      %p140 = scmp.eq.s32.totalorder %s17, 0
      %p141 = por %p139, %p140
      %p142 = scmp.ne.s32.totalorder %s128, %s129
      %p143 = scmp.eq.s32.totalorder %s18, 29
      %p144 = por %p142, %p143
      %p146 = scmp.ne.s32.totalorder %s129, %s145
      %p147 = scmp.eq.s32.totalorder %s18, 0
      %p148 = por %p146, %p147
      %p149 = scmp.le.s32.totalorder 1, %s12
      %p150 = scmp.lt.s32.totalorder %s12, 31
      %p151 = pnand %p149, %p150
      %p152 = pneg %p151
      // Predicated region
      $region9: #{blazeneo_forward.12} parent=5 // pred_check
        _
      $region10: #{blazeneo_forward.12} parent=5 // pred_check_branch
        %154 = sbr.rel (%p151) target = $region12
      $region11: #{blazeneo_forward.12} parent=5 // pred_region
        %s155 = ssub.s32 %s12, 1
      $region12: #{blazeneo_forward.12} parent=5 // pred_fallthru
        _
      %p156 = scmp.lt.s32.totalorder %s12, 30
      // Predicated region
      $region13: #{blazeneo_forward.12} parent=5 // pred_check
        %p157 = pneg %p156
      $region14: #{blazeneo_forward.12} parent=5 // pred_check_branch
        %159 = sbr.rel (%p157) target = $region16
      $region15: #{blazeneo_forward.12} parent=5 // pred_region
        // Predicated region
        $region17: #{blazeneo_forward.12} parent=15 // pred_check
          %p160 = pneg %p53
        $region18: #{blazeneo_forward.12} parent=15 // pred_check_branch
          %162 = sbr.rel (%p160) target = $region20
        $region19: #{blazeneo_forward.12} parent=15 // pred_region
          %s163 = sand.u32 %s43, 1
          %s164 = sand.u32 %s43, 1
          %s165 = smul.addr %s164, 64
          %s166 = scalar_lea.vmem [#allocation3], %s165
          %s167 = smul.u32 4, %s19
          %s168 = smul.u32 4, %s21
          %s169 = smul.addr %s167, 24
          %s170 = sadd.s32 %s168, %s169
          %s171 = smul.addr %s170, 4
          %s172 = scalar_lea.vmem %s0, %s171
          // Predicated region
          $region21: #{blazeneo_forward.12} parent=19 // pred_check
            _
          $region22: #{blazeneo_forward.12} parent=19 // pred_check_branch
            %174 = sbr.rel (0) target = $region24
          $region23: #{blazeneo_forward.12} parent=19 // pred_region
            // Predicated region
            $region25: #{blazeneo_forward.12} parent=23 // pred_check
              _
            $region26: #{blazeneo_forward.12} parent=23 // pred_check_branch
              %176 = sbr.rel (0) target = $region28
            $region27: #{blazeneo_forward.12} parent=23 // pred_region
              loop: start=0, step=1, limit=1
              $region29: #{blazeneo_forward.12} parent=27 // loop_pre_header
                _
              $region30: #{blazeneo_forward.12} parent=27 // loop_header
                %s178 = sphi 0, %s182
                %p179 = scmp.ge.s32.totalorder %s178, 1
                %s183 = sphi %s172, %s172
                %s184 = sphi %s166, %s166
              $region31: #{blazeneo_forward.12} parent=27 // loop_header_branch
                %181 = sbr.rel (%p179) target = $region35
              $region32: #{blazeneo_forward.12} parent=27 // loop_body
                %v185 = vld [vmem:[%s183] sm:$0xff]
                %186 = vst [vmem:[%s184] sm:$0xff] %v185
                %v187 = vld [vmem:[%s183 + $0x8] sm:$0xff]
                %188 = vst [vmem:[%s184 + $0x8] sm:$0xff] %v187
                %v189 = vld [vmem:[%s183 + $0x60] sm:$0xff]
                %190 = vst [vmem:[%s184 + $0x10] sm:$0xff] %v189
                %v191 = vld [vmem:[%s183 + $0x68] sm:$0xff]
                %192 = vst [vmem:[%s184 + $0x18] sm:$0xff] %v191
                %v193 = vld [vmem:[%s183 + $0xc0] sm:$0xff]
                %194 = vst [vmem:[%s184 + $0x20] sm:$0xff] %v193
                %v195 = vld [vmem:[%s183 + $0xc8] sm:$0xff]
                %196 = vst [vmem:[%s184 + $0x28] sm:$0xff] %v195
                %v197 = vld [vmem:[%s183 + $0x120] sm:$0xff]
                %198 = vst [vmem:[%s184 + $0x30] sm:$0xff] %v197
                %v199 = vld [vmem:[%s183 + $0x128] sm:$0xff]
                %200 = vst [vmem:[%s184 + $0x38] sm:$0xff] %v199
              $region33: #{blazeneo_forward.12} parent=27 // loop_footer
                %s182 = sadd.s32 1, %s178
              $region34: #{blazeneo_forward.12} parent=27 // loop_footer_branch
                %177 = sbr.rel target = $region30
              $region35: #{blazeneo_forward.12} parent=27 // loop_exit
                _
            $region28: #{blazeneo_forward.12} parent=23 // pred_fallthru
              _
            // Predicated region
            $region36: #{blazeneo_forward.12} parent=23 // pred_check
              _
            $region37: #{blazeneo_forward.12} parent=23 // pred_check_branch
              %202 = sbr.rel target = $region39
            $region38: #{blazeneo_forward.12} parent=23 // pred_region
              _
            $region39: #{blazeneo_forward.12} parent=23 // pred_fallthru
              _
          $region24: #{blazeneo_forward.12} parent=19 // pred_fallthru
            _
          %203 = vnop
        $region20: #{blazeneo_forward.12} parent=15 // pred_fallthru
          _
        // Predicated region
        $region40: #{blazeneo_forward.12} parent=15 // pred_check
          %p204 = pneg %p81
        $region41: #{blazeneo_forward.12} parent=15 // pred_check_branch
          %206 = sbr.rel (%p204) target = $region43
        $region42: #{blazeneo_forward.12} parent=15 // pred_region
          %s207 = sand.u32 %s71, 1
          %s208 = scalar_lea.sflag [#allocation5], %s207
          %s209 = sand.u32 %s71, 1
          %s210 = smul.addr %s209, 256
          %s211 = scalar_lea.vmem [#allocation4], %s210
          %s212 = smul.u32 64, %s21
          %214 = vsyncadd %s208, 0
          %s215 = smul.addr %s212, 5
          %s216 = sadd.s32 %s20, %s215
          %s217 = smul.addr %s216, 4
          %s218 = scalar_lea.hbm %s1, %s217
          %s219 = sshll.u32 %s218, 4
          %s220 = int_to_ptr.hbm [resolvable:$true] %s219
          %s221 = sshll.u32 %s211, 4
          %s222 = int_to_ptr.vmem [resolvable:$true] %s221
          %227 = dma.hbm_to_vmem [thread:$0]  %s220, 4096, %s222, %s208, 320, 64, 4
        $region43: #{blazeneo_forward.12} parent=15 // pred_fallthru
          _
        // Predicated region
        $region44: #{blazeneo_forward.12} parent=15 // pred_check
          %p228 = pneg %p107
        $region45: #{blazeneo_forward.12} parent=15 // pred_check_branch
          %230 = sbr.rel (%p228) target = $region47
        $region46: #{blazeneo_forward.12} parent=15 // pred_region
          %p231 = scmp.lt.s32.totalorder %s20, 4
          %s232 = scalar_select %p231, %s20, 4
          %s233 = scalar_lea.vmem %s2, %s232
        $region47: #{blazeneo_forward.12} parent=15 // pred_fallthru
          _
      $region16: #{blazeneo_forward.12} parent=5 // pred_fallthru
        _
      %p234 = scmp.le.s32.totalorder 1, %s12
      %p235 = scmp.lt.s32.totalorder %s12, 31
      %p236 = pnand %p234, %p235
      %p237 = pneg %p236
      // Predicated region
      $region48: #{blazeneo_forward.12} parent=5 // pred_check
        _
      $region49: #{blazeneo_forward.12} parent=5 // pred_check_branch
        %239 = sbr.rel (%p236) target = $region51
      $region50: #{blazeneo_forward.12} parent=5 // pred_region
        %s240 = ssub.s32 %s12, 1
        %s241 = sand.u32 %s46, 1
        %s242 = sand.u32 %s46, 1
        %s243 = smul.addr %s242, 64
        %s244 = scalar_lea.vmem [#allocation3], %s243
        // Predicated region
        $region52: #{blazeneo_forward.12} parent=50 // pred_check
          %p245 = pneg %p59
        $region53: #{blazeneo_forward.12} parent=50 // pred_check_branch
          %247 = sbr.rel (%p245) target = $region55
        $region54: #{blazeneo_forward.12} parent=50 // pred_region
          _
        $region55: #{blazeneo_forward.12} parent=50 // pred_fallthru
          _
        %s248 = sand.u32 %s74, 1
        %s249 = scalar_lea.sflag [#allocation5], %s248
        %s250 = sand.u32 %s74, 1
        %s251 = smul.addr %s250, 256
        %s252 = scalar_lea.vmem [#allocation4], %s251
        // Predicated region
        $region56: #{blazeneo_forward.12} parent=50 // pred_check
          %p253 = pneg %p87
        $region57: #{blazeneo_forward.12} parent=50 // pred_check_branch
          %255 = sbr.rel (%p253) target = $region59
        $region58: #{blazeneo_forward.12} parent=50 // pred_region
          %257 = dma.done %s249, 4096
        $region59: #{blazeneo_forward.12} parent=50 // pred_fallthru
          _
        %s258 = sand.u32 %s46, 1
        %s259 = sand.u32 %s46, 1
        %s260 = smul.addr %s259, 64
        %s261 = scalar_lea.vmem [#allocation3], %s260
        %p262 = pneg %p59
        %p263 = pneg %p56
        %s264 = sand.u32 %s74, 1
        %s265 = scalar_lea.sflag [#allocation5], %s264
        %s266 = sand.u32 %s74, 1
        %s267 = smul.addr %s266, 256
        %s268 = scalar_lea.vmem [#allocation4], %s267
        %p269 = pneg %p87
        %p270 = pneg %p84
        %p271 = scmp.lt.s32.totalorder %s23, 4
        %s272 = scalar_select %p271, %s23, 4
        %s273 = scalar_lea.vmem %s2, %s272
        %p274 = pneg %p113
        %p275 = pneg %p110
        %p276 = pneg %p141
        %p277 = pneg %p138
        %s278 = sand.u32 %s128, 1
        %s279 = sand.u32 %s128, 1
        %s280 = smul.addr %s279, 16
        %s281 = scalar_lea.vmem [#allocation6], %s280
        %s282 = smul.u32 4, %s22
        %s283 = smul.u32 4, %s24
        %s284 = smul.u32 64, %s24
        %p285 = scmp.lt.s32.totalorder %s23, 4
        %s286 = scalar_select %p285, %s23, 4
        %s287 = scalar_lea.vmem %s2, %s286
        %s288 = smul.u32 4, %s22
        %p289 = scmp.eq.s32.totalorder %s24, 0
        // Predicated region
        $region60: #{blazeneo_forward.12} parent=50 // pred_check
          %p290 = pneg %p289
        $region61: #{blazeneo_forward.12} parent=50 // pred_check_branch
          %292 = sbr.rel (%p290) target = $region63
        $region62: #{blazeneo_forward.12} parent=50 // pred_region
          %v293 = vld [vmem:[%s287] sm:$0x1]
          %v295 = vperm.slane %v293, 0
          %297 = vst [vmem:[#allocation2] sm:$0xff] %v295
          %298 = vst [vmem:[#allocation2 + $0x8] sm:$0xff] %v295
          %299 = vst [vmem:[#allocation2 + $0x10] sm:$0xff] %v295
          %300 = vst [vmem:[#allocation2 + $0x18] sm:$0xff] %v295
        $region63: #{blazeneo_forward.12} parent=50 // pred_fallthru
          _
        %v301 = vld [vmem:[#allocation2] sm:$0xff]
        %v302 = vld [vmem:[#allocation2 + $0x8] sm:$0xff]
        %v303 = vld [vmem:[#allocation2 + $0x10] sm:$0xff]
        %v304 = vld [vmem:[#allocation2 + $0x18] sm:$0xff]
        %v305 = vld [vmem:[%s244] sm:$0xff]
        %v306 = vld [vmem:[%s244 + $0x8] sm:$0xff]
        %v307 = vld [vmem:[%s244 + $0x10] sm:$0xff]
        %v308 = vld [vmem:[%s244 + $0x18] sm:$0xff]
        %v309 = vld [vmem:[%s244 + $0x20] sm:$0xff]
        %v310 = vld [vmem:[%s244 + $0x28] sm:$0xff]
        %v311 = vld [vmem:[%s244 + $0x30] sm:$0xff]
        %v312 = vld [vmem:[%s244 + $0x38] sm:$0xff]
        %v313 = vld [vmem:[%s252] sm:$0xf]
        %v314 = vld [vmem:[%s252 + $0x4] sm:$0xf]
        %v315 = vld [vmem:[%s252 + $0x8] sm:$0xf]
        %v316 = vld [vmem:[%s252 + $0xc] sm:$0xf]
        %v317 = vld [vmem:[%s252 + $0x10] sm:$0xf]
        %v318 = vld [vmem:[%s252 + $0x14] sm:$0xf]
        %v319 = vld [vmem:[%s252 + $0x18] sm:$0xf]
        %v320 = vld [vmem:[%s252 + $0x1c] sm:$0xf]
        %v321 = vld [vmem:[%s252 + $0x20] sm:$0xf]
        %v322 = vld [vmem:[%s252 + $0x24] sm:$0xf]
        %v323 = vld [vmem:[%s252 + $0x28] sm:$0xf]
        %v324 = vld [vmem:[%s252 + $0x2c] sm:$0xf]
        %v325 = vld [vmem:[%s252 + $0x30] sm:$0xf]
        %v326 = vld [vmem:[%s252 + $0x34] sm:$0xf]
        %v327 = vld [vmem:[%s252 + $0x38] sm:$0xf]
        %v328 = vld [vmem:[%s252 + $0x3c] sm:$0xf]
        %v329 = vld [vmem:[%s252 + $0x40] sm:$0xf]
        %v330 = vld [vmem:[%s252 + $0x44] sm:$0xf]
        %v331 = vld [vmem:[%s252 + $0x48] sm:$0xf]
        %v332 = vld [vmem:[%s252 + $0x4c] sm:$0xf]
        %v333 = vld [vmem:[%s252 + $0x50] sm:$0xf]
        %v334 = vld [vmem:[%s252 + $0x54] sm:$0xf]
        %v335 = vld [vmem:[%s252 + $0x58] sm:$0xf]
        %v336 = vld [vmem:[%s252 + $0x5c] sm:$0xf]
        %v337 = vld [vmem:[%s252 + $0x60] sm:$0xf]
        %v338 = vld [vmem:[%s252 + $0x64] sm:$0xf]
        %v339 = vld [vmem:[%s252 + $0x68] sm:$0xf]
        %v340 = vld [vmem:[%s252 + $0x6c] sm:$0xf]
        %v341 = vld [vmem:[%s252 + $0x70] sm:$0xf]
        %v342 = vld [vmem:[%s252 + $0x74] sm:$0xf]
        %v343 = vld [vmem:[%s252 + $0x78] sm:$0xf]
        %v344 = vld [vmem:[%s252 + $0x7c] sm:$0xf]
        %v345 = vld [vmem:[%s252 + $0x80] sm:$0xf]
        %v346 = vld [vmem:[%s252 + $0x84] sm:$0xf]
        %v347 = vld [vmem:[%s252 + $0x88] sm:$0xf]
        %v348 = vld [vmem:[%s252 + $0x8c] sm:$0xf]
        %v349 = vld [vmem:[%s252 + $0x90] sm:$0xf]
        %v350 = vld [vmem:[%s252 + $0x94] sm:$0xf]
        %v351 = vld [vmem:[%s252 + $0x98] sm:$0xf]
        %v352 = vld [vmem:[%s252 + $0x9c] sm:$0xf]
        %v353 = vld [vmem:[%s252 + $0xa0] sm:$0xf]
        %v354 = vld [vmem:[%s252 + $0xa4] sm:$0xf]
        %v355 = vld [vmem:[%s252 + $0xa8] sm:$0xf]
        %v356 = vld [vmem:[%s252 + $0xac] sm:$0xf]
        %v357 = vld [vmem:[%s252 + $0xb0] sm:$0xf]
        %v358 = vld [vmem:[%s252 + $0xb4] sm:$0xf]
        %v359 = vld [vmem:[%s252 + $0xb8] sm:$0xf]
        %v360 = vld [vmem:[%s252 + $0xbc] sm:$0xf]
        %v361 = vld [vmem:[%s252 + $0xc0] sm:$0xf]
        %v362 = vld [vmem:[%s252 + $0xc4] sm:$0xf]
        %v363 = vld [vmem:[%s252 + $0xc8] sm:$0xf]
        %v364 = vld [vmem:[%s252 + $0xcc] sm:$0xf]
        %v365 = vld [vmem:[%s252 + $0xd0] sm:$0xf]
        %v366 = vld [vmem:[%s252 + $0xd4] sm:$0xf]
        %v367 = vld [vmem:[%s252 + $0xd8] sm:$0xf]
        %v368 = vld [vmem:[%s252 + $0xdc] sm:$0xf]
        %v369 = vld [vmem:[%s252 + $0xe0] sm:$0xf]
        %v370 = vld [vmem:[%s252 + $0xe4] sm:$0xf]
        %v371 = vld [vmem:[%s252 + $0xe8] sm:$0xf]
        %v372 = vld [vmem:[%s252 + $0xec] sm:$0xf]
        %v373 = vld [vmem:[%s252 + $0xf0] sm:$0xf]
        %v374 = vld [vmem:[%s252 + $0xf4] sm:$0xf]
        %v375 = vld [vmem:[%s252 + $0xf8] sm:$0xf]
        %v376 = vld [vmem:[%s252 + $0xfc] sm:$0xf]
        %v385 = vunpack.c.l.b16 %v305
        %v386 = vunpack.c.h.b16 %v305
        %v387 = vunpack.c.l.b16 %v306
        %v388 = vunpack.c.h.b16 %v306
        %v389 = vunpack.c.l.b16 %v307
        %v390 = vunpack.c.h.b16 %v307
        %v391 = vunpack.c.l.b16 %v308
        %v392 = vunpack.c.h.b16 %v308
        %v393 = vunpack.c.l.b16 %v309
        %v394 = vunpack.c.h.b16 %v309
        %v395 = vunpack.c.l.b16 %v310
        %v396 = vunpack.c.h.b16 %v310
        %v397 = vunpack.c.l.b16 %v311
        %v398 = vunpack.c.h.b16 %v311
        %v399 = vunpack.c.l.b16 %v312
        %v400 = vunpack.c.h.b16 %v312
        %v401 = vpack.c.b16 %v389, %v385
        %v402 = vpack.c.b16 %v390, %v386
        %v403 = vpack.c.b16 %v391, %v387
        %v404 = vpack.c.b16 %v392, %v388
        %v405 = vpack.c.b16 %v397, %v393
        %v406 = vpack.c.b16 %v398, %v394
        %v407 = vpack.c.b16 %v399, %v395
        %v408 = vpack.c.b16 %v400, %v396
        %v481 = vunpack.c.l.b16 %v313
        %v482 = vunpack.c.l.b16 %v314
        %v483 = vunpack.c.l.b16 %v315
        %v484 = vunpack.c.l.b16 %v316
        %v485 = vunpack.c.l.b16 %v317
        %v486 = vunpack.c.l.b16 %v318
        %v487 = vunpack.c.l.b16 %v319
        %v488 = vunpack.c.l.b16 %v320
        %v489 = vunpack.c.l.b16 %v321
        %v490 = vunpack.c.l.b16 %v322
        %v491 = vunpack.c.l.b16 %v323
        %v492 = vunpack.c.l.b16 %v324
        %v493 = vunpack.c.l.b16 %v325
        %v494 = vunpack.c.l.b16 %v326
        %v495 = vunpack.c.l.b16 %v327
        %v496 = vunpack.c.l.b16 %v328
        %v497 = vunpack.c.l.b16 %v329
        %v498 = vunpack.c.l.b16 %v330
        %v499 = vunpack.c.l.b16 %v331
        %v500 = vunpack.c.l.b16 %v332
        %v501 = vunpack.c.l.b16 %v333
        %v502 = vunpack.c.l.b16 %v334
        %v503 = vunpack.c.l.b16 %v335
        %v504 = vunpack.c.l.b16 %v336
        %v505 = vunpack.c.l.b16 %v337
        %v506 = vunpack.c.l.b16 %v338
        %v507 = vunpack.c.l.b16 %v339
        %v508 = vunpack.c.l.b16 %v340
        %v509 = vunpack.c.l.b16 %v341
        %v510 = vunpack.c.l.b16 %v342
        %v511 = vunpack.c.l.b16 %v343
        %v512 = vunpack.c.l.b16 %v344
        %v513 = vunpack.c.l.b16 %v345
        %v514 = vunpack.c.l.b16 %v346
        %v515 = vunpack.c.l.b16 %v347
        %v516 = vunpack.c.l.b16 %v348
        %v517 = vunpack.c.l.b16 %v349
        %v518 = vunpack.c.l.b16 %v350
        %v519 = vunpack.c.l.b16 %v351
        %v520 = vunpack.c.l.b16 %v352
        %v521 = vunpack.c.l.b16 %v353
        %v522 = vunpack.c.l.b16 %v354
        %v523 = vunpack.c.l.b16 %v355
        %v524 = vunpack.c.l.b16 %v356
        %v525 = vunpack.c.l.b16 %v357
        %v526 = vunpack.c.l.b16 %v358
        %v527 = vunpack.c.l.b16 %v359
        %v528 = vunpack.c.l.b16 %v360
        %v529 = vunpack.c.l.b16 %v361
        %v530 = vunpack.c.l.b16 %v362
        %v531 = vunpack.c.l.b16 %v363
        %v532 = vunpack.c.l.b16 %v364
        %v533 = vunpack.c.l.b16 %v365
        %v534 = vunpack.c.l.b16 %v366
        %v535 = vunpack.c.l.b16 %v367
        %v536 = vunpack.c.l.b16 %v368
        %v537 = vunpack.c.l.b16 %v369
        %v538 = vunpack.c.l.b16 %v370
        %v539 = vunpack.c.l.b16 %v371
        %v540 = vunpack.c.l.b16 %v372
        %v541 = vunpack.c.l.b16 %v373
        %v542 = vunpack.c.l.b16 %v374
        %v543 = vunpack.c.l.b16 %v375
        %v544 = vunpack.c.l.b16 %v376
        %v545 = vpack.c.b16 %v482, %v481
        %v546 = vpack.c.b16 %v484, %v483
        %v547 = vpack.c.b16 %v486, %v485
        %v548 = vpack.c.b16 %v488, %v487
        %v549 = vpack.c.b16 %v490, %v489
        %v550 = vpack.c.b16 %v492, %v491
        %v551 = vpack.c.b16 %v494, %v493
        %v552 = vpack.c.b16 %v496, %v495
        %v553 = vpack.c.b16 %v498, %v497
        %v554 = vpack.c.b16 %v500, %v499
        %v555 = vpack.c.b16 %v502, %v501
        %v556 = vpack.c.b16 %v504, %v503
        %v557 = vpack.c.b16 %v506, %v505
        %v558 = vpack.c.b16 %v508, %v507
        %v559 = vpack.c.b16 %v510, %v509
        %v560 = vpack.c.b16 %v512, %v511
        %v561 = vpack.c.b16 %v514, %v513
        %v562 = vpack.c.b16 %v516, %v515
        %v563 = vpack.c.b16 %v518, %v517
        %v564 = vpack.c.b16 %v520, %v519
        %v565 = vpack.c.b16 %v522, %v521
        %v566 = vpack.c.b16 %v524, %v523
        %v567 = vpack.c.b16 %v526, %v525
        %v568 = vpack.c.b16 %v528, %v527
        %v569 = vpack.c.b16 %v530, %v529
        %v570 = vpack.c.b16 %v532, %v531
        %v571 = vpack.c.b16 %v534, %v533
        %v572 = vpack.c.b16 %v536, %v535
        %v573 = vpack.c.b16 %v538, %v537
        %v574 = vpack.c.b16 %v540, %v539
        %v575 = vpack.c.b16 %v542, %v541
        %v576 = vpack.c.b16 %v544, %v543
        %609 = vmatpush.bf16.msra.mxu0 %v552
        %610 = vmatpush.bf16.msra.mxu0 %v551
        %611 = vmatpush.bf16.msra.mxu0 %v550
        %612 = vmatpush.bf16.msra.mxu0 %v549
        %613 = vmatpush.bf16.msra.mxu0 %v548
        %614 = vmatpush.bf16.msra.mxu0 %v547
        %615 = vmatpush.bf16.msra.mxu0 %v546
        %616 = vmatpush.bf16.msra.mxu0 %v545
        %617 = vmatmul.bf16.gmra.mxu0 %v401
        %v618 = vpop.f32.mrf.mxu0
        %v619 = vadd.f32 0.0, %v618
        %v620 = vpop.f32.mrf.mxu0
        %v621 = vadd.f32 0.0, %v620
        %622 = vmatmul.bf16.gmra.mxu0 %v405
        %v623 = vpop.f32.mrf.mxu0
        %v624 = vadd.f32 0.0, %v623
        %v625 = vpop.f32.mrf.mxu0
        %v626 = vadd.f32 0.0, %v625
        %627 = vdwg.mxu0
        %628 = vmatpush.bf16.msra.mxu0 %v560
        %629 = vmatpush.bf16.msra.mxu0 %v559
        %630 = vmatpush.bf16.msra.mxu0 %v558
        %631 = vmatpush.bf16.msra.mxu0 %v557
        %632 = vmatpush.bf16.msra.mxu0 %v556
        %633 = vmatpush.bf16.msra.mxu0 %v555
        %634 = vmatpush.bf16.msra.mxu0 %v554
        %635 = vmatpush.bf16.msra.mxu0 %v553
        %636 = vmatmul.bf16.gmra.mxu0 %v402
        %v637 = vpop.f32.mrf.mxu0
        %v638 = vadd.f32 %v619, %v637
        %v639 = vpop.f32.mrf.mxu0
        %v640 = vadd.f32 %v621, %v639
        %641 = vmatmul.bf16.gmra.mxu0 %v406
        %v642 = vpop.f32.mrf.mxu0
        %v643 = vadd.f32 %v624, %v642
        %v644 = vpop.f32.mrf.mxu0
        %v645 = vadd.f32 %v626, %v644
        %646 = vdwg.mxu0
        %647 = vmatpush.bf16.msra.mxu0 %v568
        %648 = vmatpush.bf16.msra.mxu0 %v567
        %649 = vmatpush.bf16.msra.mxu0 %v566
        %650 = vmatpush.bf16.msra.mxu0 %v565
        %651 = vmatpush.bf16.msra.mxu0 %v564
        %652 = vmatpush.bf16.msra.mxu0 %v563
        %653 = vmatpush.bf16.msra.mxu0 %v562
        %654 = vmatpush.bf16.msra.mxu0 %v561
        %655 = vmatmul.bf16.gmra.mxu0 %v403
        %v656 = vpop.f32.mrf.mxu0
        %v657 = vadd.f32 %v638, %v656
        %v658 = vpop.f32.mrf.mxu0
        %v659 = vadd.f32 %v640, %v658
        %660 = vmatmul.bf16.gmra.mxu0 %v407
        %v661 = vpop.f32.mrf.mxu0
        %v662 = vadd.f32 %v643, %v661
        %v663 = vpop.f32.mrf.mxu0
        %v664 = vadd.f32 %v645, %v663
        %665 = vdwg.mxu0
        %666 = vmatpush.bf16.msra.mxu0 %v576
        %667 = vmatpush.bf16.msra.mxu0 %v575
        %668 = vmatpush.bf16.msra.mxu0 %v574
        %669 = vmatpush.bf16.msra.mxu0 %v573
        %670 = vmatpush.bf16.msra.mxu0 %v572
        %671 = vmatpush.bf16.msra.mxu0 %v571
        %672 = vmatpush.bf16.msra.mxu0 %v570
        %673 = vmatpush.bf16.msra.mxu0 %v569
        %674 = vmatmul.bf16.gmra.mxu0 %v404
        %v675 = vpop.f32.mrf.mxu0
        %v676 = vadd.f32 %v657, %v675
        %v677 = vpop.f32.mrf.mxu0
        %v678 = vadd.f32 %v659, %v677
        %679 = vmatmul.bf16.gmra.mxu0 %v408
        %v680 = vpop.f32.mrf.mxu0
        %v681 = vadd.f32 %v662, %v680
        %v682 = vpop.f32.mrf.mxu0
        %v683 = vadd.f32 %v664, %v682
        %684 = vdwg.mxu0
        %v685 = vadd.f32 %v301, %v676
        %v686 = vadd.f32 %v302, %v678
        %v687 = vadd.f32 %v303, %v681
        %v688 = vadd.f32 %v304, %v683
        %689 = vst [vmem:[#allocation2] sm:$0xff] %v685
        %690 = vst [vmem:[#allocation2 + $0x8] sm:$0xff] %v686
        %691 = vst [vmem:[#allocation2 + $0x10] sm:$0xff] %v687
        %692 = vst [vmem:[#allocation2 + $0x18] sm:$0xff] %v688
        %p693 = scmp.eq.s32.totalorder %s24, 5
        // Predicated region
        $region64: #{blazeneo_forward.12} parent=50 // pred_check
          %p694 = pneg %p693
        $region65: #{blazeneo_forward.12} parent=50 // pred_check_branch
          %696 = sbr.rel (%p694) target = $region67
        $region66: #{blazeneo_forward.12} parent=50 // pred_region
          %v697 = vld [vmem:[#allocation2] sm:$0xff]
          %v698 = vld [vmem:[#allocation2 + $0x8] sm:$0xff]
          %v699 = vld [vmem:[#allocation2 + $0x10] sm:$0xff]
          %v700 = vld [vmem:[#allocation2 + $0x18] sm:$0xff]
          %v701 = vmax.f32 %v697, 0.0
          %v702 = vmax.f32 %v698, 0.0
          %v703 = vmax.f32 %v699, 0.0
          %v704 = vmax.f32 %v700, 0.0
          %v705 = vpack.c.bf16 %v701, %v701
          %v706 = vpack.c.bf16 %v702, %v702
          %v707 = vpack.c.bf16 %v703, %v703
          %v708 = vpack.c.bf16 %v704, %v704
          %709 = vst [vmem:[%s281] sm:$0xf] %v705
          %710 = vst [vmem:[%s281 + $0x4] sm:$0xf] %v706
          %711 = vst [vmem:[%s281 + $0x8] sm:$0xf] %v707
          %712 = vst [vmem:[%s281 + $0xc] sm:$0xf] %v708
        $region67: #{blazeneo_forward.12} parent=50 // pred_fallthru
          _
        %s713 = sand.u32 %s128, 1
        %s714 = sand.u32 %s128, 1
        %s715 = smul.addr %s714, 16
        %s716 = scalar_lea.vmem [#allocation6], %s715
        // Predicated region
        $region68: #{blazeneo_forward.12} parent=50 // pred_check
          %p717 = pneg %p138
        $region69: #{blazeneo_forward.12} parent=50 // pred_check_branch
          %719 = sbr.rel (%p717) target = $region71
        $region70: #{blazeneo_forward.12} parent=50 // pred_region
          %s720 = smul.u32 4, %s22
          %s721 = smul.addr %s720, 5
          %s722 = sadd.s32 %s23, %s721
          %s723 = smul.addr %s722, 4
          %s724 = scalar_lea.vmem %s3, %s723
          // Predicated region
          $region72: #{blazeneo_forward.12} parent=70 // pred_check
            _
          $region73: #{blazeneo_forward.12} parent=70 // pred_check_branch
            %726 = sbr.rel (0) target = $region75
          $region74: #{blazeneo_forward.12} parent=70 // pred_region
            // Predicated region
            $region76: #{blazeneo_forward.12} parent=74 // pred_check
              _
            $region77: #{blazeneo_forward.12} parent=74 // pred_check_branch
              %728 = sbr.rel target = $region79
            $region78: #{blazeneo_forward.12} parent=74 // pred_region
              // Predicated region
              $region91: #{blazeneo_forward.12} parent=78 // pred_check
                _
              $region92: #{blazeneo_forward.12} parent=78 // pred_check_branch
                %750 = sbr.rel (0) target = $region94
              $region93: #{blazeneo_forward.12} parent=78 // pred_region
                loop: start=0, step=1, limit=1
                $region95: #{blazeneo_forward.12} parent=93 // loop_pre_header
                  _
                $region96: #{blazeneo_forward.12} parent=93 // loop_header
                  %s752 = sphi 0, %s756
                  %p753 = scmp.ge.s32.totalorder %s752, 1
                  %s757 = sphi %s716, %s716
                  %s758 = sphi %s724, %s724
                $region97: #{blazeneo_forward.12} parent=93 // loop_header_branch
                  %755 = sbr.rel (%p753) target = $region101
                $region98: #{blazeneo_forward.12} parent=93 // loop_body
                  _
                $region99: #{blazeneo_forward.12} parent=93 // loop_footer
                  %s756 = sadd.s32 1, %s752
                $region100: #{blazeneo_forward.12} parent=93 // loop_footer_branch
                  %751 = sbr.rel target = $region96
                $region101: #{blazeneo_forward.12} parent=93 // loop_exit
                  _
                %s760 = ssub.s32 16, 1
                loop: start=0, step=1, limit=1
                $region102: #{blazeneo_forward.12} parent=93 // loop_pre_header
                  _
                $region103: #{blazeneo_forward.12} parent=93 // loop_header
                  %s762 = sphi 0, %s766
                  %p763 = scmp.ge.s32.totalorder %s762, 1
                  %s767 = sphi %s716, %s716
                  %s768 = sphi %s724, %s724
                $region104: #{blazeneo_forward.12} parent=93 // loop_header_branch
                  %765 = sbr.rel (%p763) target = $region108
                $region105: #{blazeneo_forward.12} parent=93 // loop_body
                  %v769 = vld [vmem:[%s767] sm:%s760]
                  %770 = vst [vmem:[%s768] sm:%s760] %v769
                  %v771 = vld [vmem:[%s767 + $0x4] sm:%s760]
                  %772 = vst [vmem:[%s768 + $0x14] sm:%s760] %v771
                  %v773 = vld [vmem:[%s767 + $0x8] sm:%s760]
                  %774 = vst [vmem:[%s768 + $0x28] sm:%s760] %v773
                  %v775 = vld [vmem:[%s767 + $0xc] sm:%s760]
                  %776 = vst [vmem:[%s768 + $0x3c] sm:%s760] %v775
                $region106: #{blazeneo_forward.12} parent=93 // loop_footer
                  %s766 = sadd.s32 1, %s762
                $region107: #{blazeneo_forward.12} parent=93 // loop_footer_branch
                  %761 = sbr.rel target = $region103
                $region108: #{blazeneo_forward.12} parent=93 // loop_exit
                  _
              $region94: #{blazeneo_forward.12} parent=78 // pred_fallthru
                _
            $region79: #{blazeneo_forward.12} parent=74 // pred_fallthru
              _
            // Predicated region
            $region80: #{blazeneo_forward.12} parent=74 // pred_check
              _
            $region81: #{blazeneo_forward.12} parent=74 // pred_check_branch
              %730 = sbr.rel (0) target = $region83
            $region82: #{blazeneo_forward.12} parent=74 // pred_region
              %s732 = ssub.s32 16, 1
              loop: start=0, step=1, limit=1
              $region84: #{blazeneo_forward.12} parent=82 // loop_pre_header
                _
              $region85: #{blazeneo_forward.12} parent=82 // loop_header
                %s734 = sphi 0, %s738
                %p735 = scmp.ge.s32.totalorder %s734, 1
                %s739 = sphi %s716, %s716
                %s740 = sphi %s724, %s724
              $region86: #{blazeneo_forward.12} parent=82 // loop_header_branch
                %737 = sbr.rel (%p735) target = $region90
              $region87: #{blazeneo_forward.12} parent=82 // loop_body
                %v741 = vld [vmem:[%s739] sm:%s732]
                %742 = vst [vmem:[%s740] sm:%s732] %v741
                %v743 = vld [vmem:[%s739 + $0x4] sm:%s732]
                %744 = vst [vmem:[%s740 + $0x14] sm:%s732] %v743
                %v745 = vld [vmem:[%s739 + $0x8] sm:%s732]
                %746 = vst [vmem:[%s740 + $0x28] sm:%s732] %v745
                %v747 = vld [vmem:[%s739 + $0xc] sm:%s732]
                %748 = vst [vmem:[%s740 + $0x3c] sm:%s732] %v747
              $region88: #{blazeneo_forward.12} parent=82 // loop_footer
                %s738 = sadd.s32 1, %s734
              $region89: #{blazeneo_forward.12} parent=82 // loop_footer_branch
                %733 = sbr.rel target = $region85
              $region90: #{blazeneo_forward.12} parent=82 // loop_exit
                _
            $region83: #{blazeneo_forward.12} parent=74 // pred_fallthru
              _
          $region75: #{blazeneo_forward.12} parent=70 // pred_fallthru
            _
          %777 = vnop
        $region71: #{blazeneo_forward.12} parent=50 // pred_fallthru
          _
      $region51: #{blazeneo_forward.12} parent=5 // pred_fallthru
        _
      %p778 = scmp.le.s32.totalorder 2, %s12
      // Predicated region
      $region109: #{blazeneo_forward.12} parent=5 // pred_check
        %p779 = pneg %p778
      $region110: #{blazeneo_forward.12} parent=5 // pred_check_branch
        %781 = sbr.rel (%p779) target = $region112
      $region111: #{blazeneo_forward.12} parent=5 // pred_region
        %s782 = ssub.s32 %s12, 2
        // Predicated region
        $region113: #{blazeneo_forward.12} parent=111 // pred_check
          %p783 = pneg %p144
        $region114: #{blazeneo_forward.12} parent=111 // pred_check_branch
          %785 = sbr.rel (%p783) target = $region116
        $region115: #{blazeneo_forward.12} parent=111 // pred_region
          %s786 = sand.u32 %s129, 1
          %s787 = sand.u32 %s129, 1
          %s788 = smul.addr %s787, 16
          %s789 = scalar_lea.vmem [#allocation6], %s788
        $region116: #{blazeneo_forward.12} parent=111 // pred_fallthru
          _
      $region112: #{blazeneo_forward.12} parent=5 // pred_fallthru
        _
    $region6: #{blazeneo_forward.12} parent=1 // loop_footer
      %s16 = sadd.s32 1, %s12
    $region7: #{blazeneo_forward.12} parent=1 // loop_footer_branch
      %11 = sbr.rel target = $region3
    $region8: #{blazeneo_forward.12} parent=1 // loop_exit
      _
    %790 = vsyncpa [#allocation5], 1
    %s791 = scalar_lea.sflag [#allocation5], 1
    %792 = vsyncpa %s791, 1

// kernel: blazeneo_forward.15
$region0: #{blazeneo_forward.15}
  #allocation0 [shape = 'u32[]', space=smem, size = 0x4, offset = 0x4, fixed_abs, tag = 'smem constant byte address 0x4 - core index']
  #allocation1 [shape = 'u32[72,128]{1,0:T(1,128)}', space=vmem, size = 0x9000, scoped, tag = 'internal scratch']
  #allocation2 [shape = 'f32[32,128]{1,0:T(8,128)}', space=vmem, size = 0x4000, scoped, tag = 'scratch operand']
  %s0 = inlined_call_operand.vmem [shape: bf16[32,640], index: 0, kind: input, shape index: {}]
  %s1 = inlined_call_operand.vmem [shape: bf16[640,128], index: 1, kind: input, shape index: {}]
  %s2 = inlined_call_operand.vmem [shape: f32[1,128], index: 2, kind: input, shape index: {}]
  %s3 = inlined_call_operand.vmem [shape: bf16[32,128], index: 3, kind: output, shape index: {}]
  %s4 = sld [smem:[#allocation0]]
  $region94: #{blazeneo_forward.15} parent=0
    _
  %s6 = ssub.s32 1, %s4
  %s7 = scalar_select 0, %s6, %s4
  $region1: #{blazeneo_forward.15} parent=0
    #allocation3 [shape = 'u8[16384]{0}', space=vmem, size = 0x4000, scoped, tag = 'input window, operand 0']
    loop: start=0, step=1, limit=7
    $region2: #{blazeneo_forward.15} parent=1 // loop_pre_header
      _
    $region3: #{blazeneo_forward.15} parent=1 // loop_header
      %s9 = sphi 0, %s13
      %p10 = scmp.ge.s32.totalorder %s9, 7
      %s16 = sphi 0, %s35
      %s17 = sphi 0, %s31
      %s18 = sphi 0, %s27
      %s19 = sphi 0, %s16
      %s20 = sphi 0, %s17
      %s21 = sphi 0, %s18
      %s22 = sphi 0, %s19
      %s23 = sphi 0, %s20
      %s24 = sphi 0, %s21
      %s40 = sphi 0, %s42
      %s43 = sphi 0, %s40
      %s44 = sphi 0, %s43
      %s60 = sphi 0, %s44
      %s68 = sphi 0, %s70
      %s71 = sphi 0, %s68
      %s72 = sphi 0, %s71
      %s88 = sphi 0, %s72
      %s94 = sphi 0, %s96
      %s97 = sphi 0, %s94
      %s98 = sphi 0, %s97
      %s114 = sphi 0, %s98
      %s122 = sphi 0, %s124
      %s125 = sphi 0, %s122
      %s126 = sphi 0, %s125
      %s142 = sphi 0, %s126
    $region4: #{blazeneo_forward.15} parent=1 // loop_header_branch
      %12 = sbr.rel (%p10) target = $region8
    $region5: #{blazeneo_forward.15} parent=1 // loop_body
      %s14 = ssub.s32 %s9, 1
      %s15 = ssub.s32 %s9, 2
      %s25 = sadd.s32 1, %s18
      %p26 = scmp.ge.s32.totalorder %s25, 5
      %s27 = scalar_select %p26, 0, %s25
      %s28 = sadd.s32 1, %s17
      %s29 = scalar_select %p26, %s28, %s17
      %p30 = scmp.ge.s32.totalorder %s29, 1
      %s31 = scalar_select %p30, 0, %s29
      %s32 = sadd.s32 1, %s16
      %s33 = scalar_select %p30, %s32, %s16
      %p34 = scmp.ge.s32.totalorder %s33, 1
      %s35 = scalar_select %p34, 0, %s33
      %s36 = ssub.s32 %s16, %s35
      %s37 = ssub.s32 %s18, %s27
      %s38 = sor.u32 %s36, %s37
      %p39 = scmp.eq.s32.totalorder %s38, 0
      %s41 = sadd.s32 %s40, 1
      %s42 = scalar_select %p39, %s40, %s41
      %p45 = pneg %p39
      %p46 = scmp.eq.s32.totalorder %s9, 4
      %p47 = por %p45, %p46
      %p48 = scmp.ne.s32.totalorder %s40, %s43
      %p49 = scmp.eq.s32.totalorder %s9, 0
      %p50 = por %p48, %p49
      %p51 = scmp.ne.s32.totalorder %s40, %s43
      %p52 = scmp.eq.s32.totalorder %s14, 4
      %p53 = por %p51, %p52
      %p54 = scmp.ne.s32.totalorder %s43, %s44
      %p55 = scmp.eq.s32.totalorder %s14, 0
      %p56 = por %p54, %p55
      %p57 = scmp.ne.s32.totalorder %s43, %s44
      %p58 = scmp.eq.s32.totalorder %s15, 4
      %p59 = por %p57, %p58
      %p61 = scmp.ne.s32.totalorder %s44, %s60
      %p62 = scmp.eq.s32.totalorder %s15, 0
      %p63 = por %p61, %p62
      %s64 = ssub.s32 %s18, %s27
      %s65 = ssub.s32 %s17, %s31
      %s66 = sor.u32 %s64, %s65
      %p67 = scmp.eq.s32.totalorder %s66, 0
      %s69 = sadd.s32 %s68, 1
      %s70 = scalar_select %p67, %s68, %s69
      %p73 = pneg %p67
      %p74 = scmp.eq.s32.totalorder %s9, 4
      %p75 = por %p73, %p74
      %p76 = scmp.ne.s32.totalorder %s68, %s71
      %p77 = scmp.eq.s32.totalorder %s9, 0
      %p78 = por %p76, %p77
      %p79 = scmp.ne.s32.totalorder %s68, %s71
      %p80 = scmp.eq.s32.totalorder %s14, 4
      %p81 = por %p79, %p80
      %p82 = scmp.ne.s32.totalorder %s71, %s72
      %p83 = scmp.eq.s32.totalorder %s14, 0
      %p84 = por %p82, %p83
      %p85 = scmp.ne.s32.totalorder %s71, %s72
      %p86 = scmp.eq.s32.totalorder %s15, 4
      %p87 = por %p85, %p86
      %p89 = scmp.ne.s32.totalorder %s72, %s88
      %p90 = scmp.eq.s32.totalorder %s15, 0
      %p91 = por %p89, %p90
      %s92 = ssub.s32 %s17, %s31
      %p93 = scmp.eq.s32.totalorder %s92, 0
      %s95 = sadd.s32 %s94, 1
      %s96 = scalar_select %p93, %s94, %s95
      %p99 = pneg %p93
      %p100 = scmp.eq.s32.totalorder %s9, 4
      %p101 = por %p99, %p100
      %p102 = scmp.ne.s32.totalorder %s94, %s97
      %p103 = scmp.eq.s32.totalorder %s9, 0
      %p104 = por %p102, %p103
      %p105 = scmp.ne.s32.totalorder %s94, %s97
      %p106 = scmp.eq.s32.totalorder %s14, 4
      %p107 = por %p105, %p106
      %p108 = scmp.ne.s32.totalorder %s97, %s98
      %p109 = scmp.eq.s32.totalorder %s14, 0
      %p110 = por %p108, %p109
      %p111 = scmp.ne.s32.totalorder %s97, %s98
      %p112 = scmp.eq.s32.totalorder %s15, 4
      %p113 = por %p111, %p112
      %p115 = scmp.ne.s32.totalorder %s98, %s114
      %p116 = scmp.eq.s32.totalorder %s15, 0
      %p117 = por %p115, %p116
      %s118 = ssub.s32 %s16, %s35
      %s119 = ssub.s32 %s17, %s31
      %s120 = sor.u32 %s118, %s119
      %p121 = scmp.eq.s32.totalorder %s120, 0
      %s123 = sadd.s32 %s122, 1
      %s124 = scalar_select %p121, %s122, %s123
      %p127 = pneg %p121
      %p128 = scmp.eq.s32.totalorder %s9, 4
      %p129 = por %p127, %p128
      %p130 = scmp.ne.s32.totalorder %s122, %s125
      %p131 = scmp.eq.s32.totalorder %s9, 0
      %p132 = por %p130, %p131
      %p133 = scmp.ne.s32.totalorder %s122, %s125
      %p134 = scmp.eq.s32.totalorder %s14, 4
      %p135 = por %p133, %p134
      %p136 = scmp.ne.s32.totalorder %s125, %s126
      %p137 = scmp.eq.s32.totalorder %s14, 0
      %p138 = por %p136, %p137
      %p139 = scmp.ne.s32.totalorder %s125, %s126
      %p140 = scmp.eq.s32.totalorder %s15, 4
      %p141 = por %p139, %p140
      %p143 = scmp.ne.s32.totalorder %s126, %s142
      %p144 = scmp.eq.s32.totalorder %s15, 0
      %p145 = por %p143, %p144
      %p146 = scmp.le.s32.totalorder 1, %s9
      %p147 = scmp.lt.s32.totalorder %s9, 6
      %p148 = pnand %p146, %p147
      %p149 = pneg %p148
      // Predicated region
      $region9: #{blazeneo_forward.15} parent=5 // pred_check
        _
      $region10: #{blazeneo_forward.15} parent=5 // pred_check_branch
        %151 = sbr.rel (%p148) target = $region12
      $region11: #{blazeneo_forward.15} parent=5 // pred_region
        %s152 = ssub.s32 %s9, 1
        // Predicated region
        $region13: #{blazeneo_forward.15} parent=11 // pred_check
          %p153 = pneg %p110
        $region14: #{blazeneo_forward.15} parent=11 // pred_check_branch
          %155 = sbr.rel (%p153) target = $region16
        $region15: #{blazeneo_forward.15} parent=11 // pred_region
          %p156 = scmp.lt.s32.totalorder %s20, 0
          %s157 = scalar_select %p156, %s20, 0
          %s158 = scalar_lea.vmem %s2, %s157
        $region16: #{blazeneo_forward.15} parent=11 // pred_fallthru
          _
      $region12: #{blazeneo_forward.15} parent=5 // pred_fallthru
        _
      %p159 = scmp.lt.s32.totalorder %s9, 5
      // Predicated region
      $region17: #{blazeneo_forward.15} parent=5 // pred_check
        %p160 = pneg %p159
      $region18: #{blazeneo_forward.15} parent=5 // pred_check_branch
        %162 = sbr.rel (%p160) target = $region20
      $region19: #{blazeneo_forward.15} parent=5 // pred_region
        // Predicated region
        $region21: #{blazeneo_forward.15} parent=19 // pred_check
          %p163 = pneg %p50
        $region22: #{blazeneo_forward.15} parent=19 // pred_check_branch
          %165 = sbr.rel (%p163) target = $region24
        $region23: #{blazeneo_forward.15} parent=19 // pred_region
          %s166 = sand.u32 %s40, 1
          %s167 = sand.u32 %s40, 1
          %s168 = smul.addr %s167, 16
          %s169 = scalar_lea.vmem [#allocation3], %s168
          %s170 = smul.u32 4, %s16
          %s171 = smul.addr %s170, 5
          %s172 = sadd.s32 %s18, %s171
          %s173 = smul.addr %s172, 4
          %s174 = scalar_lea.vmem %s0, %s173
          // Predicated region
          $region25: #{blazeneo_forward.15} parent=23 // pred_check
            _
          $region26: #{blazeneo_forward.15} parent=23 // pred_check_branch
            %176 = sbr.rel (0) target = $region28
          $region27: #{blazeneo_forward.15} parent=23 // pred_region
            // Predicated region
            $region29: #{blazeneo_forward.15} parent=27 // pred_check
              _
            $region30: #{blazeneo_forward.15} parent=27 // pred_check_branch
              %178 = sbr.rel target = $region32
            $region31: #{blazeneo_forward.15} parent=27 // pred_region
              // Predicated region
              $region44: #{blazeneo_forward.15} parent=31 // pred_check
                _
              $region45: #{blazeneo_forward.15} parent=31 // pred_check_branch
                %200 = sbr.rel (0) target = $region47
              $region46: #{blazeneo_forward.15} parent=31 // pred_region
                loop: start=0, step=1, limit=1
                $region48: #{blazeneo_forward.15} parent=46 // loop_pre_header
                  _
                $region49: #{blazeneo_forward.15} parent=46 // loop_header
                  %s202 = sphi 0, %s206
                  %p203 = scmp.ge.s32.totalorder %s202, 1
                  %s207 = sphi %s174, %s174
                  %s208 = sphi %s169, %s169
                $region50: #{blazeneo_forward.15} parent=46 // loop_header_branch
                  %205 = sbr.rel (%p203) target = $region54
                $region51: #{blazeneo_forward.15} parent=46 // loop_body
                  _
                $region52: #{blazeneo_forward.15} parent=46 // loop_footer
                  %s206 = sadd.s32 1, %s202
                $region53: #{blazeneo_forward.15} parent=46 // loop_footer_branch
                  %201 = sbr.rel target = $region49
                $region54: #{blazeneo_forward.15} parent=46 // loop_exit
                  _
                %s210 = ssub.s32 16, 1
                loop: start=0, step=1, limit=1
                $region55: #{blazeneo_forward.15} parent=46 // loop_pre_header
                  _
                $region56: #{blazeneo_forward.15} parent=46 // loop_header
                  %s212 = sphi 0, %s216
                  %p213 = scmp.ge.s32.totalorder %s212, 1
                  %s217 = sphi %s174, %s174
                  %s218 = sphi %s169, %s169
                $region57: #{blazeneo_forward.15} parent=46 // loop_header_branch
                  %215 = sbr.rel (%p213) target = $region61
                $region58: #{blazeneo_forward.15} parent=46 // loop_body
                  %v219 = vld [vmem:[%s217] sm:%s210]
                  %220 = vst [vmem:[%s218] sm:%s210] %v219
                  %v221 = vld [vmem:[%s217 + $0x14] sm:%s210]
                  %222 = vst [vmem:[%s218 + $0x4] sm:%s210] %v221
                  %v223 = vld [vmem:[%s217 + $0x28] sm:%s210]
                  %224 = vst [vmem:[%s218 + $0x8] sm:%s210] %v223
                  %v225 = vld [vmem:[%s217 + $0x3c] sm:%s210]
                  %226 = vst [vmem:[%s218 + $0xc] sm:%s210] %v225
                $region59: #{blazeneo_forward.15} parent=46 // loop_footer
                  %s216 = sadd.s32 1, %s212
                $region60: #{blazeneo_forward.15} parent=46 // loop_footer_branch
                  %211 = sbr.rel target = $region56
                $region61: #{blazeneo_forward.15} parent=46 // loop_exit
                  _
              $region47: #{blazeneo_forward.15} parent=31 // pred_fallthru
                _
            $region32: #{blazeneo_forward.15} parent=27 // pred_fallthru
              _
            // Predicated region
            $region33: #{blazeneo_forward.15} parent=27 // pred_check
              _
            $region34: #{blazeneo_forward.15} parent=27 // pred_check_branch
              %180 = sbr.rel (0) target = $region36
            $region35: #{blazeneo_forward.15} parent=27 // pred_region
              %s182 = ssub.s32 16, 1
              loop: start=0, step=1, limit=1
              $region37: #{blazeneo_forward.15} parent=35 // loop_pre_header
                _
              $region38: #{blazeneo_forward.15} parent=35 // loop_header
                %s184 = sphi 0, %s188
                %p185 = scmp.ge.s32.totalorder %s184, 1
                %s189 = sphi %s174, %s174
                %s190 = sphi %s169, %s169
              $region39: #{blazeneo_forward.15} parent=35 // loop_header_branch
                %187 = sbr.rel (%p185) target = $region43
              $region40: #{blazeneo_forward.15} parent=35 // loop_body
                %v191 = vld [vmem:[%s189] sm:%s182]
                %192 = vst [vmem:[%s190] sm:%s182] %v191
                %v193 = vld [vmem:[%s189 + $0x14] sm:%s182]
                %194 = vst [vmem:[%s190 + $0x4] sm:%s182] %v193
                %v195 = vld [vmem:[%s189 + $0x28] sm:%s182]
                %196 = vst [vmem:[%s190 + $0x8] sm:%s182] %v195
                %v197 = vld [vmem:[%s189 + $0x3c] sm:%s182]
                %198 = vst [vmem:[%s190 + $0xc] sm:%s182] %v197
              $region41: #{blazeneo_forward.15} parent=35 // loop_footer
                %s188 = sadd.s32 1, %s184
              $region42: #{blazeneo_forward.15} parent=35 // loop_footer_branch
                %183 = sbr.rel target = $region38
              $region43: #{blazeneo_forward.15} parent=35 // loop_exit
                _
            $region36: #{blazeneo_forward.15} parent=27 // pred_fallthru
              _
          $region28: #{blazeneo_forward.15} parent=23 // pred_fallthru
            _
          %227 = vnop
        $region24: #{blazeneo_forward.15} parent=19 // pred_fallthru
          _
        // Predicated region
        $region62: #{blazeneo_forward.15} parent=19 // pred_check
          %p228 = pneg %p78
        $region63: #{blazeneo_forward.15} parent=19 // pred_check_branch
          %230 = sbr.rel (%p228) target = $region65
        $region64: #{blazeneo_forward.15} parent=19 // pred_region
          %s231 = smul.u32 16, %s18
          %p232 = scmp.lt.s32.totalorder %s231, 79
          %s233 = scalar_select %p232, %s231, 79
          %p234 = scmp.lt.s32.totalorder %s17, 0
          %s235 = scalar_select %p234, %s17, 0
          %s236 = sadd.s32 %s235, %s233
          %s237 = smul.addr %s236, 4
          %s238 = scalar_lea.vmem %s1, %s237
          %s239 = smul.u32 16, %s18
        $region65: #{blazeneo_forward.15} parent=19 // pred_fallthru
          _
      $region20: #{blazeneo_forward.15} parent=5 // pred_fallthru
        _
      %p240 = scmp.le.s32.totalorder 1, %s9
      %p241 = scmp.lt.s32.totalorder %s9, 6
      %p242 = pnand %p240, %p241
      %p243 = pneg %p242
      // Predicated region
      $region66: #{blazeneo_forward.15} parent=5 // pred_check
        _
      $region67: #{blazeneo_forward.15} parent=5 // pred_check_branch
        %245 = sbr.rel (%p242) target = $region69
      $region68: #{blazeneo_forward.15} parent=5 // pred_region
        %s246 = ssub.s32 %s9, 1
        %s247 = sand.u32 %s43, 1
        %s248 = sand.u32 %s43, 1
        %s249 = smul.addr %s248, 16
        %s250 = scalar_lea.vmem [#allocation3], %s249
        // Predicated region
        $region70: #{blazeneo_forward.15} parent=68 // pred_check
          %p251 = pneg %p56
        $region71: #{blazeneo_forward.15} parent=68 // pred_check_branch
          %253 = sbr.rel (%p251) target = $region73
        $region72: #{blazeneo_forward.15} parent=68 // pred_region
          _
        $region73: #{blazeneo_forward.15} parent=68 // pred_fallthru
          _
        %s254 = sand.u32 %s43, 1
        %s255 = sand.u32 %s43, 1
        %s256 = smul.addr %s255, 16
        %s257 = scalar_lea.vmem [#allocation3], %s256
        %p258 = pneg %p56
        %p259 = pneg %p53
        %s260 = smul.u32 16, %s21
        %p261 = scmp.lt.s32.totalorder %s260, 79
        %s262 = scalar_select %p261, %s260, 79
        %p263 = scmp.lt.s32.totalorder %s20, 0
        %s264 = scalar_select %p263, %s20, 0
        %s265 = sadd.s32 %s264, %s262
        %s266 = smul.addr %s265, 4
        %s267 = scalar_lea.vmem %s1, %s266
        %p268 = pneg %p84
        %p269 = pneg %p81
        %p270 = scmp.lt.s32.totalorder %s20, 0
        %s271 = scalar_select %p270, %s20, 0
        %s272 = scalar_lea.vmem %s2, %s271
        %p273 = pneg %p110
        %p274 = pneg %p107
        %p275 = pneg %p138
        %p276 = pneg %p135
        %s277 = smul.u32 4, %s19
        %p278 = scmp.lt.s32.totalorder %s277, 3
        %s279 = scalar_select %p278, %s277, 3
        %p280 = scmp.lt.s32.totalorder %s20, 0
        %s281 = scalar_select %p280, %s20, 0
        %s282 = sadd.s32 %s281, %s279
        %s283 = smul.addr %s282, 4
        %s284 = scalar_lea.vmem %s3, %s283
        %s285 = smul.u32 4, %s19
        %s286 = smul.u32 16, %s21
        %p287 = scmp.lt.s32.totalorder %s286, 79
        %s288 = scalar_select %p287, %s286, 79
        %p289 = scmp.lt.s32.totalorder %s20, 0
        %s290 = scalar_select %p289, %s20, 0
        %s291 = sadd.s32 %s290, %s288
        %s292 = smul.addr %s291, 4
        %s293 = scalar_lea.vmem %s1, %s292
        %s294 = smul.u32 16, %s21
        %p295 = scmp.lt.s32.totalorder %s20, 0
        %s296 = scalar_select %p295, %s20, 0
        %s297 = scalar_lea.vmem %s2, %s296
        %s298 = smul.u32 4, %s19
        %p299 = scmp.lt.s32.totalorder %s298, 3
        %s300 = scalar_select %p299, %s298, 3
        %p301 = scmp.lt.s32.totalorder %s20, 0
        %s302 = scalar_select %p301, %s20, 0
        %s303 = sadd.s32 %s302, %s300
        %s304 = smul.addr %s303, 4
        %s305 = scalar_lea.vmem %s3, %s304
        %s306 = smul.u32 4, %s19
        %p307 = scmp.eq.s32.totalorder %s21, 0
        // Predicated region
        $region74: #{blazeneo_forward.15} parent=68 // pred_check
          %p308 = pneg %p307
        $region75: #{blazeneo_forward.15} parent=68 // pred_check_branch
          %310 = sbr.rel (%p308) target = $region77
        $region76: #{blazeneo_forward.15} parent=68 // pred_region
          %v311 = vld [vmem:[%s297] sm:$0x1]
          %v313 = vperm.slane %v311, 0
          %315 = vst [vmem:[#allocation2] sm:$0xff] %v313
          %316 = vst [vmem:[#allocation2 + $0x8] sm:$0xff] %v313
          %317 = vst [vmem:[#allocation2 + $0x10] sm:$0xff] %v313
          %318 = vst [vmem:[#allocation2 + $0x18] sm:$0xff] %v313
        $region77: #{blazeneo_forward.15} parent=68 // pred_fallthru
          _
        %v319 = vld [vmem:[#allocation2] sm:$0xff]
        %v320 = vld [vmem:[#allocation2 + $0x8] sm:$0xff]
        %v321 = vld [vmem:[#allocation2 + $0x10] sm:$0xff]
        %v322 = vld [vmem:[#allocation2 + $0x18] sm:$0xff]
        %v323 = vld [vmem:[%s250] sm:$0xf]
        %v324 = vld [vmem:[%s250 + $0x4] sm:$0xf]
        %v325 = vld [vmem:[%s250 + $0x8] sm:$0xf]
        %v326 = vld [vmem:[%s250 + $0xc] sm:$0xf]
        %v327 = vld [vmem:[%s293] sm:$0xf]
        %v328 = vld [vmem:[%s293 + $0x4] sm:$0xf]
        %v329 = vld [vmem:[%s293 + $0x8] sm:$0xf]
        %v330 = vld [vmem:[%s293 + $0xc] sm:$0xf]
        %v331 = vld [vmem:[%s293 + $0x10] sm:$0xf]
        %v332 = vld [vmem:[%s293 + $0x14] sm:$0xf]
        %v333 = vld [vmem:[%s293 + $0x18] sm:$0xf]
        %v334 = vld [vmem:[%s293 + $0x1c] sm:$0xf]
        %v335 = vld [vmem:[%s293 + $0x20] sm:$0xf]
        %v336 = vld [vmem:[%s293 + $0x24] sm:$0xf]
        %v337 = vld [vmem:[%s293 + $0x28] sm:$0xf]
        %v338 = vld [vmem:[%s293 + $0x2c] sm:$0xf]
        %v339 = vld [vmem:[%s293 + $0x30] sm:$0xf]
        %v340 = vld [vmem:[%s293 + $0x34] sm:$0xf]
        %v341 = vld [vmem:[%s293 + $0x38] sm:$0xf]
        %v342 = vld [vmem:[%s293 + $0x3c] sm:$0xf]
        %v347 = vunpack.c.l.b16 %v323
        %v348 = vunpack.c.l.b16 %v324
        %v349 = vunpack.c.l.b16 %v325
        %v350 = vunpack.c.l.b16 %v326
        %v351 = vpack.c.b16 %v348, %v347
        %v352 = vpack.c.b16 %v350, %v349
        %v371 = vunpack.c.l.b16 %v327
        %v372 = vunpack.c.l.b16 %v328
        %v373 = vunpack.c.l.b16 %v329
        %v374 = vunpack.c.l.b16 %v330
        %v375 = vunpack.c.l.b16 %v331
        %v376 = vunpack.c.l.b16 %v332
        %v377 = vunpack.c.l.b16 %v333
        %v378 = vunpack.c.l.b16 %v334
        %v379 = vunpack.c.l.b16 %v335
        %v380 = vunpack.c.l.b16 %v336
        %v381 = vunpack.c.l.b16 %v337
        %v382 = vunpack.c.l.b16 %v338
        %v383 = vunpack.c.l.b16 %v339
        %v384 = vunpack.c.l.b16 %v340
        %v385 = vunpack.c.l.b16 %v341
        %v386 = vunpack.c.l.b16 %v342
        %v387 = vpack.c.b16 %v372, %v371
        %v388 = vpack.c.b16 %v374, %v373
        %v389 = vpack.c.b16 %v376, %v375
        %v390 = vpack.c.b16 %v378, %v377
        %v391 = vpack.c.b16 %v380, %v379
        %v392 = vpack.c.b16 %v382, %v381
        %v393 = vpack.c.b16 %v384, %v383
        %v394 = vpack.c.b16 %v386, %v385
        %403 = vmatpush.bf16.msra.mxu0 %v394
        %404 = vmatpush.bf16.msra.mxu0 %v393
        %405 = vmatpush.bf16.msra.mxu0 %v392
        %406 = vmatpush.bf16.msra.mxu0 %v391
        %407 = vmatpush.bf16.msra.mxu0 %v390
        %408 = vmatpush.bf16.msra.mxu0 %v389
        %409 = vmatpush.bf16.msra.mxu0 %v388
        %410 = vmatpush.bf16.msra.mxu0 %v387
        %411 = vmatmul.bf16.gmra.mxu0 %v351
        %v412 = vpop.f32.mrf.mxu0
        %v413 = vadd.f32 0.0, %v412
        %v414 = vpop.f32.mrf.mxu0
        %v415 = vadd.f32 0.0, %v414
        %416 = vmatmul.bf16.gmra.mxu0 %v352
        %v417 = vpop.f32.mrf.mxu0
        %v418 = vadd.f32 0.0, %v417
        %v419 = vpop.f32.mrf.mxu0
        %v420 = vadd.f32 0.0, %v419
        %421 = vdwg.mxu0
        %v422 = vadd.f32 %v319, %v413
        %v423 = vadd.f32 %v320, %v415
        %v424 = vadd.f32 %v321, %v418
        %v425 = vadd.f32 %v322, %v420
        %426 = vst [vmem:[#allocation2] sm:$0xff] %v422
        %427 = vst [vmem:[#allocation2 + $0x8] sm:$0xff] %v423
        %428 = vst [vmem:[#allocation2 + $0x10] sm:$0xff] %v424
        %429 = vst [vmem:[#allocation2 + $0x18] sm:$0xff] %v425
        %p430 = scmp.eq.s32.totalorder %s21, 4
        // Predicated region
        $region78: #{blazeneo_forward.15} parent=68 // pred_check
          %p431 = pneg %p430
        $region79: #{blazeneo_forward.15} parent=68 // pred_check_branch
          %433 = sbr.rel (%p431) target = $region81
        $region80: #{blazeneo_forward.15} parent=68 // pred_region
          %v434 = vld [vmem:[#allocation2] sm:$0xff]
          %v435 = vld [vmem:[#allocation2 + $0x8] sm:$0xff]
          %v436 = vld [vmem:[#allocation2 + $0x10] sm:$0xff]
          %v437 = vld [vmem:[#allocation2 + $0x18] sm:$0xff]
          %v438 = vmax.f32 %v434, 0.0
          %v439 = vmax.f32 %v435, 0.0
          %v440 = vmax.f32 %v436, 0.0
          %v441 = vmax.f32 %v437, 0.0
          %v442 = vpack.c.bf16 %v438, %v438
          %v443 = vpack.c.bf16 %v439, %v439
          %v444 = vpack.c.bf16 %v440, %v440
          %v445 = vpack.c.bf16 %v441, %v441
          %446 = vst [vmem:[%s305] sm:$0xf] %v442
          %447 = vst [vmem:[%s305 + $0x4] sm:$0xf] %v443
          %448 = vst [vmem:[%s305 + $0x8] sm:$0xf] %v444
          %449 = vst [vmem:[%s305 + $0xc] sm:$0xf] %v445
        $region81: #{blazeneo_forward.15} parent=68 // pred_fallthru
          _
        %s450 = smul.u32 4, %s19
        %p451 = scmp.lt.s32.totalorder %s450, 3
        %s452 = scalar_select %p451, %s450, 3
        %p453 = scmp.lt.s32.totalorder %s20, 0
        %s454 = scalar_select %p453, %s20, 0
        %s455 = sadd.s32 %s454, %s452
        %s456 = smul.addr %s455, 4
        %s457 = scalar_lea.vmem %s3, %s456
        // Predicated region
        $region82: #{blazeneo_forward.15} parent=68 // pred_check
          %p458 = pneg %p135
        $region83: #{blazeneo_forward.15} parent=68 // pred_check_branch
          %460 = sbr.rel (%p458) target = $region85
        $region84: #{blazeneo_forward.15} parent=68 // pred_region
          %s461 = smul.u32 4, %s19
        $region85: #{blazeneo_forward.15} parent=68 // pred_fallthru
          _
        // Predicated region
        $region86: #{blazeneo_forward.15} parent=68 // pred_check
          %p462 = pneg %p135
        $region87: #{blazeneo_forward.15} parent=68 // pred_check_branch
          %464 = sbr.rel (%p462) target = $region89
        $region88: #{blazeneo_forward.15} parent=68 // pred_region
          %s465 = smul.u32 4, %s19
          %p466 = scmp.lt.s32.totalorder %s465, 3
          %s467 = scalar_select %p466, %s465, 3
          %p468 = scmp.lt.s32.totalorder %s20, 0
          %s469 = scalar_select %p468, %s20, 0
          %s470 = sadd.s32 %s469, %s467
          %s471 = smul.addr %s470, 4
          %s472 = scalar_lea.vmem %s3, %s471
        $region89: #{blazeneo_forward.15} parent=68 // pred_fallthru
          _
      $region69: #{blazeneo_forward.15} parent=5 // pred_fallthru
        _
      %p473 = scmp.le.s32.totalorder 2, %s9
      // Predicated region
      $region90: #{blazeneo_forward.15} parent=5 // pred_check
        %p474 = pneg %p473
      $region91: #{blazeneo_forward.15} parent=5 // pred_check_branch
        %476 = sbr.rel (%p474) target = $region93
      $region92: #{blazeneo_forward.15} parent=5 // pred_region
        %s477 = ssub.s32 %s9, 2
      $region93: #{blazeneo_forward.15} parent=5 // pred_fallthru
        _
    $region6: #{blazeneo_forward.15} parent=1 // loop_footer
      %s13 = sadd.s32 1, %s9
    $region7: #{blazeneo_forward.15} parent=1 // loop_footer_branch
      %8 = sbr.rel target = $region3
    $region8: #{blazeneo_forward.15} parent=1 // loop_exit
      _

// kernel: blazeneo_forward.16
$region0: #{blazeneo_forward.16}
  #allocation0 [shape = 'u32[]', space=smem, size = 0x4, offset = 0x4, fixed_abs, tag = 'smem constant byte address 0x4 - core index']
  #allocation1 [shape = 'u32[72,128]{1,0:T(1,128)}', space=vmem, size = 0x9000, scoped, tag = 'internal scratch']
  #allocation2 [shape = 'f32[16,128]{1,0:T(8,128)}', space=vmem, size = 0x2000, scoped, tag = 'scratch operand']
  %s0 = inlined_call_operand.vmem [shape: bf16[16,1024], index: 0, kind: input, shape index: {}]
  %s1 = inlined_call_operand.vmem [shape: bf16[1024,128], index: 1, kind: input, shape index: {}]
  %s2 = inlined_call_operand.vmem [shape: f32[1,128], index: 2, kind: input, shape index: {}]
  %s3 = inlined_call_operand.vmem [shape: bf16[16,128], index: 3, kind: output, shape index: {}]
  %s4 = sld [smem:[#allocation0]]
  $region76: #{blazeneo_forward.16} parent=0
    _
  %s6 = ssub.s32 1, %s4
  %s7 = scalar_select 0, %s6, %s4
  $region1: #{blazeneo_forward.16} parent=0
    #allocation3 [shape = 'u8[32768]{0}', space=vmem, size = 0x8000, scoped, tag = 'input window, operand 0']
    loop: start=0, step=1, limit=4
    $region2: #{blazeneo_forward.16} parent=1 // loop_pre_header
      _
    $region3: #{blazeneo_forward.16} parent=1 // loop_header
      %s9 = sphi 0, %s13
      %p10 = scmp.ge.s32.totalorder %s9, 4
      %s16 = sphi 0, %s35
      %s17 = sphi 0, %s31
      %s18 = sphi 0, %s27
      %s19 = sphi 0, %s16
      %s20 = sphi 0, %s17
      %s21 = sphi 0, %s18
      %s22 = sphi 0, %s19
      %s23 = sphi 0, %s20
      %s24 = sphi 0, %s21
      %s40 = sphi 0, %s42
      %s43 = sphi 0, %s40
      %s44 = sphi 0, %s43
      %s60 = sphi 0, %s44
      %s68 = sphi 0, %s70
      %s71 = sphi 0, %s68
      %s72 = sphi 0, %s71
      %s88 = sphi 0, %s72
      %s94 = sphi 0, %s96
      %s97 = sphi 0, %s94
      %s98 = sphi 0, %s97
      %s114 = sphi 0, %s98
      %s122 = sphi 0, %s124
      %s125 = sphi 0, %s122
      %s126 = sphi 0, %s125
      %s142 = sphi 0, %s126
    $region4: #{blazeneo_forward.16} parent=1 // loop_header_branch
      %12 = sbr.rel (%p10) target = $region8
    $region5: #{blazeneo_forward.16} parent=1 // loop_body
      %s14 = ssub.s32 %s9, 1
      %s15 = ssub.s32 %s9, 2
      %s25 = sadd.s32 1, %s18
      %p26 = scmp.ge.s32.totalorder %s25, 2
      %s27 = scalar_select %p26, 0, %s25
      %s28 = sadd.s32 1, %s17
      %s29 = scalar_select %p26, %s28, %s17
      %p30 = scmp.ge.s32.totalorder %s29, 1
      %s31 = scalar_select %p30, 0, %s29
      %s32 = sadd.s32 1, %s16
      %s33 = scalar_select %p30, %s32, %s16
      %p34 = scmp.ge.s32.totalorder %s33, 1
      %s35 = scalar_select %p34, 0, %s33
      %s36 = ssub.s32 %s16, %s35
      %s37 = ssub.s32 %s18, %s27
      %s38 = sor.u32 %s36, %s37
      %p39 = scmp.eq.s32.totalorder %s38, 0
      %s41 = sadd.s32 %s40, 1
      %s42 = scalar_select %p39, %s40, %s41
      %p45 = pneg %p39
      %p46 = scmp.eq.s32.totalorder %s9, 1
      %p47 = por %p45, %p46
      %p48 = scmp.ne.s32.totalorder %s40, %s43
      %p49 = scmp.eq.s32.totalorder %s9, 0
      %p50 = por %p48, %p49
      %p51 = scmp.ne.s32.totalorder %s40, %s43
      %p52 = scmp.eq.s32.totalorder %s14, 1
      %p53 = por %p51, %p52
      %p54 = scmp.ne.s32.totalorder %s43, %s44
      %p55 = scmp.eq.s32.totalorder %s14, 0
      %p56 = por %p54, %p55
      %p57 = scmp.ne.s32.totalorder %s43, %s44
      %p58 = scmp.eq.s32.totalorder %s15, 1
      %p59 = por %p57, %p58
      %p61 = scmp.ne.s32.totalorder %s44, %s60
      %p62 = scmp.eq.s32.totalorder %s15, 0
      %p63 = por %p61, %p62
      %s64 = ssub.s32 %s18, %s27
      %s65 = ssub.s32 %s17, %s31
      %s66 = sor.u32 %s64, %s65
      %p67 = scmp.eq.s32.totalorder %s66, 0
      %s69 = sadd.s32 %s68, 1
      %s70 = scalar_select %p67, %s68, %s69
      %p73 = pneg %p67
      %p74 = scmp.eq.s32.totalorder %s9, 1
      %p75 = por %p73, %p74
      %p76 = scmp.ne.s32.totalorder %s68, %s71
      %p77 = scmp.eq.s32.totalorder %s9, 0
      %p78 = por %p76, %p77
      %p79 = scmp.ne.s32.totalorder %s68, %s71
      %p80 = scmp.eq.s32.totalorder %s14, 1
      %p81 = por %p79, %p80
      %p82 = scmp.ne.s32.totalorder %s71, %s72
      %p83 = scmp.eq.s32.totalorder %s14, 0
      %p84 = por %p82, %p83
      %p85 = scmp.ne.s32.totalorder %s71, %s72
      %p86 = scmp.eq.s32.totalorder %s15, 1
      %p87 = por %p85, %p86
      %p89 = scmp.ne.s32.totalorder %s72, %s88
      %p90 = scmp.eq.s32.totalorder %s15, 0
      %p91 = por %p89, %p90
      %s92 = ssub.s32 %s17, %s31
      %p93 = scmp.eq.s32.totalorder %s92, 0
      %s95 = sadd.s32 %s94, 1
      %s96 = scalar_select %p93, %s94, %s95
      %p99 = pneg %p93
      %p100 = scmp.eq.s32.totalorder %s9, 1
      %p101 = por %p99, %p100
      %p102 = scmp.ne.s32.totalorder %s94, %s97
      %p103 = scmp.eq.s32.totalorder %s9, 0
      %p104 = por %p102, %p103
      %p105 = scmp.ne.s32.totalorder %s94, %s97
      %p106 = scmp.eq.s32.totalorder %s14, 1
      %p107 = por %p105, %p106
      %p108 = scmp.ne.s32.totalorder %s97, %s98
      %p109 = scmp.eq.s32.totalorder %s14, 0
      %p110 = por %p108, %p109
      %p111 = scmp.ne.s32.totalorder %s97, %s98
      %p112 = scmp.eq.s32.totalorder %s15, 1
      %p113 = por %p111, %p112
      %p115 = scmp.ne.s32.totalorder %s98, %s114
      %p116 = scmp.eq.s32.totalorder %s15, 0
      %p117 = por %p115, %p116
      %s118 = ssub.s32 %s16, %s35
      %s119 = ssub.s32 %s17, %s31
      %s120 = sor.u32 %s118, %s119
      %p121 = scmp.eq.s32.totalorder %s120, 0
      %s123 = sadd.s32 %s122, 1
      %s124 = scalar_select %p121, %s122, %s123
      %p127 = pneg %p121
      %p128 = scmp.eq.s32.totalorder %s9, 1
      %p129 = por %p127, %p128
      %p130 = scmp.ne.s32.totalorder %s122, %s125
      %p131 = scmp.eq.s32.totalorder %s9, 0
      %p132 = por %p130, %p131
      %p133 = scmp.ne.s32.totalorder %s122, %s125
      %p134 = scmp.eq.s32.totalorder %s14, 1
      %p135 = por %p133, %p134
      %p136 = scmp.ne.s32.totalorder %s125, %s126
      %p137 = scmp.eq.s32.totalorder %s14, 0
      %p138 = por %p136, %p137
      %p139 = scmp.ne.s32.totalorder %s125, %s126
      %p140 = scmp.eq.s32.totalorder %s15, 1
      %p141 = por %p139, %p140
      %p143 = scmp.ne.s32.totalorder %s126, %s142
      %p144 = scmp.eq.s32.totalorder %s15, 0
      %p145 = por %p143, %p144
      %p146 = scmp.le.s32.totalorder 1, %s9
      %p147 = scmp.lt.s32.totalorder %s9, 3
      %p148 = pnand %p146, %p147
      %p149 = pneg %p148
      // Predicated region
      $region9: #{blazeneo_forward.16} parent=5 // pred_check
        _
      $region10: #{blazeneo_forward.16} parent=5 // pred_check_branch
        %151 = sbr.rel (%p148) target = $region12
      $region11: #{blazeneo_forward.16} parent=5 // pred_region
        %s152 = ssub.s32 %s9, 1
        // Predicated region
        $region13: #{blazeneo_forward.16} parent=11 // pred_check
          %p153 = pneg %p110
        $region14: #{blazeneo_forward.16} parent=11 // pred_check_branch
          %155 = sbr.rel (%p153) target = $region16
        $region15: #{blazeneo_forward.16} parent=11 // pred_region
          %p156 = scmp.lt.s32.totalorder %s20, 0
          %s157 = scalar_select %p156, %s20, 0
          %s158 = scalar_lea.vmem %s2, %s157
        $region16: #{blazeneo_forward.16} parent=11 // pred_fallthru
          _
      $region12: #{blazeneo_forward.16} parent=5 // pred_fallthru
        _
      %p159 = scmp.lt.s32.totalorder %s9, 2
      // Predicated region
      $region17: #{blazeneo_forward.16} parent=5 // pred_check
        %p160 = pneg %p159
      $region18: #{blazeneo_forward.16} parent=5 // pred_check_branch
        %162 = sbr.rel (%p160) target = $region20
      $region19: #{blazeneo_forward.16} parent=5 // pred_region
        // Predicated region
        $region21: #{blazeneo_forward.16} parent=19 // pred_check
          %p163 = pneg %p50
        $region22: #{blazeneo_forward.16} parent=19 // pred_check_branch
          %165 = sbr.rel (%p163) target = $region24
        $region23: #{blazeneo_forward.16} parent=19 // pred_region
          %s166 = sand.u32 %s40, 1
          %s167 = sand.u32 %s40, 1
          %s168 = smul.addr %s167, 32
          %s169 = scalar_lea.vmem [#allocation3], %s168
          %s170 = smul.u32 2, %s16
          %s171 = smul.u32 4, %s18
          %s172 = smul.addr %s170, 8
          %s173 = sadd.s32 %s171, %s172
          %s174 = smul.addr %s173, 4
          %s175 = scalar_lea.vmem %s0, %s174
          // Predicated region
          $region25: #{blazeneo_forward.16} parent=23 // pred_check
            _
          $region26: #{blazeneo_forward.16} parent=23 // pred_check_branch
            %177 = sbr.rel (0) target = $region28
          $region27: #{blazeneo_forward.16} parent=23 // pred_region
            // Predicated region
            $region29: #{blazeneo_forward.16} parent=27 // pred_check
              _
            $region30: #{blazeneo_forward.16} parent=27 // pred_check_branch
              %179 = sbr.rel (0) target = $region32
            $region31: #{blazeneo_forward.16} parent=27 // pred_region
              loop: start=0, step=1, limit=1
              $region33: #{blazeneo_forward.16} parent=31 // loop_pre_header
                _
              $region34: #{blazeneo_forward.16} parent=31 // loop_header
                %s181 = sphi 0, %s185
                %p182 = scmp.ge.s32.totalorder %s181, 1
                %s186 = sphi %s175, %s175
                %s187 = sphi %s169, %s169
              $region35: #{blazeneo_forward.16} parent=31 // loop_header_branch
                %184 = sbr.rel (%p182) target = $region39
              $region36: #{blazeneo_forward.16} parent=31 // loop_body
                %v188 = vld [vmem:[%s186] sm:$0xff]
                %189 = vst [vmem:[%s187] sm:$0xff] %v188
                %v190 = vld [vmem:[%s186 + $0x8] sm:$0xff]
                %191 = vst [vmem:[%s187 + $0x8] sm:$0xff] %v190
                %v192 = vld [vmem:[%s186 + $0x20] sm:$0xff]
                %193 = vst [vmem:[%s187 + $0x10] sm:$0xff] %v192
                %v194 = vld [vmem:[%s186 + $0x28] sm:$0xff]
                %195 = vst [vmem:[%s187 + $0x18] sm:$0xff] %v194
              $region37: #{blazeneo_forward.16} parent=31 // loop_footer
                %s185 = sadd.s32 1, %s181
              $region38: #{blazeneo_forward.16} parent=31 // loop_footer_branch
                %180 = sbr.rel target = $region34
              $region39: #{blazeneo_forward.16} parent=31 // loop_exit
                _
            $region32: #{blazeneo_forward.16} parent=27 // pred_fallthru
              _
            // Predicated region
            $region40: #{blazeneo_forward.16} parent=27 // pred_check
              _
            $region41: #{blazeneo_forward.16} parent=27 // pred_check_branch
              %197 = sbr.rel target = $region43
            $region42: #{blazeneo_forward.16} parent=27 // pred_region
              _
            $region43: #{blazeneo_forward.16} parent=27 // pred_fallthru
              _
          $region28: #{blazeneo_forward.16} parent=23 // pred_fallthru
            _
          %198 = vnop
        $region24: #{blazeneo_forward.16} parent=19 // pred_fallthru
          _
        // Predicated region
        $region44: #{blazeneo_forward.16} parent=19 // pred_check
          %p199 = pneg %p78
        $region45: #{blazeneo_forward.16} parent=19 // pred_check_branch
          %201 = sbr.rel (%p199) target = $region47
        $region46: #{blazeneo_forward.16} parent=19 // pred_region
          %s202 = smul.u32 64, %s18
          %p203 = scmp.lt.s32.totalorder %s202, 127
          %s204 = scalar_select %p203, %s202, 127
          %p205 = scmp.lt.s32.totalorder %s17, 0
          %s206 = scalar_select %p205, %s17, 0
          %s207 = sadd.s32 %s206, %s204
          %s208 = smul.addr %s207, 4
          %s209 = scalar_lea.vmem %s1, %s208
          %s210 = smul.u32 64, %s18
        $region47: #{blazeneo_forward.16} parent=19 // pred_fallthru
          _
      $region20: #{blazeneo_forward.16} parent=5 // pred_fallthru
        _
      %p211 = scmp.le.s32.totalorder 1, %s9
      %p212 = scmp.lt.s32.totalorder %s9, 3
      %p213 = pnand %p211, %p212
      %p214 = pneg %p213
      // Predicated region
      $region48: #{blazeneo_forward.16} parent=5 // pred_check
        _
      $region49: #{blazeneo_forward.16} parent=5 // pred_check_branch
        %216 = sbr.rel (%p213) target = $region51
      $region50: #{blazeneo_forward.16} parent=5 // pred_region
        %s217 = ssub.s32 %s9, 1
        %s218 = sand.u32 %s43, 1
        %s219 = sand.u32 %s43, 1
        %s220 = smul.addr %s219, 32
        %s221 = scalar_lea.vmem [#allocation3], %s220
        // Predicated region
        $region52: #{blazeneo_forward.16} parent=50 // pred_check
          %p222 = pneg %p56
        $region53: #{blazeneo_forward.16} parent=50 // pred_check_branch
          %224 = sbr.rel (%p222) target = $region55
        $region54: #{blazeneo_forward.16} parent=50 // pred_region
          _
        $region55: #{blazeneo_forward.16} parent=50 // pred_fallthru
          _
        %s225 = sand.u32 %s43, 1
        %s226 = sand.u32 %s43, 1
        %s227 = smul.addr %s226, 32
        %s228 = scalar_lea.vmem [#allocation3], %s227
        %p229 = pneg %p56
        %p230 = pneg %p53
        %s231 = smul.u32 64, %s21
        %p232 = scmp.lt.s32.totalorder %s231, 127
        %s233 = scalar_select %p232, %s231, 127
        %p234 = scmp.lt.s32.totalorder %s20, 0
        %s235 = scalar_select %p234, %s20, 0
        %s236 = sadd.s32 %s235, %s233
        %s237 = smul.addr %s236, 4
        %s238 = scalar_lea.vmem %s1, %s237
        %p239 = pneg %p84
        %p240 = pneg %p81
        %p241 = scmp.lt.s32.totalorder %s20, 0
        %s242 = scalar_select %p241, %s20, 0
        %s243 = scalar_lea.vmem %s2, %s242
        %p244 = pneg %p110
        %p245 = pneg %p107
        %p246 = pneg %p138
        %p247 = pneg %p135
        %s248 = smul.u32 2, %s19
        %p249 = scmp.lt.s32.totalorder %s248, 1
        %s250 = scalar_select %p249, %s248, 1
        %p251 = scmp.lt.s32.totalorder %s20, 0
        %s252 = scalar_select %p251, %s20, 0
        %s253 = sadd.s32 %s252, %s250
        %s254 = smul.addr %s253, 4
        %s255 = scalar_lea.vmem %s3, %s254
        %s256 = smul.u32 2, %s19
        %s257 = smul.u32 4, %s21
        %s258 = smul.u32 64, %s21
        %p259 = scmp.lt.s32.totalorder %s258, 127
        %s260 = scalar_select %p259, %s258, 127
        %p261 = scmp.lt.s32.totalorder %s20, 0
        %s262 = scalar_select %p261, %s20, 0
        %s263 = sadd.s32 %s262, %s260
        %s264 = smul.addr %s263, 4
        %s265 = scalar_lea.vmem %s1, %s264
        %s266 = smul.u32 64, %s21
        %p267 = scmp.lt.s32.totalorder %s20, 0
        %s268 = scalar_select %p267, %s20, 0
        %s269 = scalar_lea.vmem %s2, %s268
        %s270 = smul.u32 2, %s19
        %p271 = scmp.lt.s32.totalorder %s270, 1
        %s272 = scalar_select %p271, %s270, 1
        %p273 = scmp.lt.s32.totalorder %s20, 0
        %s274 = scalar_select %p273, %s20, 0
        %s275 = sadd.s32 %s274, %s272
        %s276 = smul.addr %s275, 4
        %s277 = scalar_lea.vmem %s3, %s276
        %s278 = smul.u32 2, %s19
        %p279 = scmp.eq.s32.totalorder %s21, 0
        // Predicated region
        $region56: #{blazeneo_forward.16} parent=50 // pred_check
          %p280 = pneg %p279
        $region57: #{blazeneo_forward.16} parent=50 // pred_check_branch
          %282 = sbr.rel (%p280) target = $region59
        $region58: #{blazeneo_forward.16} parent=50 // pred_region
          %v283 = vld [vmem:[%s269] sm:$0x1]
          %v285 = vperm.slane %v283, 0
          %287 = vst [vmem:[#allocation2] sm:$0xff] %v285
          %288 = vst [vmem:[#allocation2 + $0x8] sm:$0xff] %v285
        $region59: #{blazeneo_forward.16} parent=50 // pred_fallthru
          _
        %v289 = vld [vmem:[#allocation2] sm:$0xff]
        %v290 = vld [vmem:[#allocation2 + $0x8] sm:$0xff]
        %v291 = vld [vmem:[%s221] sm:$0xff]
        %v292 = vld [vmem:[%s221 + $0x8] sm:$0xff]
        %v293 = vld [vmem:[%s221 + $0x10] sm:$0xff]
        %v294 = vld [vmem:[%s221 + $0x18] sm:$0xff]
        %v295 = vld [vmem:[%s265] sm:$0xf]
        %v296 = vld [vmem:[%s265 + $0x4] sm:$0xf]
        %v297 = vld [vmem:[%s265 + $0x8] sm:$0xf]
        %v298 = vld [vmem:[%s265 + $0xc] sm:$0xf]
        %v299 = vld [vmem:[%s265 + $0x10] sm:$0xf]
        %v300 = vld [vmem:[%s265 + $0x14] sm:$0xf]
        %v301 = vld [vmem:[%s265 + $0x18] sm:$0xf]
        %v302 = vld [vmem:[%s265 + $0x1c] sm:$0xf]
        %v303 = vld [vmem:[%s265 + $0x20] sm:$0xf]
        %v304 = vld [vmem:[%s265 + $0x24] sm:$0xf]
        %v305 = vld [vmem:[%s265 + $0x28] sm:$0xf]
        %v306 = vld [vmem:[%s265 + $0x2c] sm:$0xf]
        %v307 = vld [vmem:[%s265 + $0x30] sm:$0xf]
        %v308 = vld [vmem:[%s265 + $0x34] sm:$0xf]
        %v309 = vld [vmem:[%s265 + $0x38] sm:$0xf]
        %v310 = vld [vmem:[%s265 + $0x3c] sm:$0xf]
        %v311 = vld [vmem:[%s265 + $0x40] sm:$0xf]
        %v312 = vld [vmem:[%s265 + $0x44] sm:$0xf]
        %v313 = vld [vmem:[%s265 + $0x48] sm:$0xf]
        %v314 = vld [vmem:[%s265 + $0x4c] sm:$0xf]
        %v315 = vld [vmem:[%s265 + $0x50] sm:$0xf]
        %v316 = vld [vmem:[%s265 + $0x54] sm:$0xf]
        %v317 = vld [vmem:[%s265 + $0x58] sm:$0xf]
        %v318 = vld [vmem:[%s265 + $0x5c] sm:$0xf]
        %v319 = vld [vmem:[%s265 + $0x60] sm:$0xf]
        %v320 = vld [vmem:[%s265 + $0x64] sm:$0xf]
        %v321 = vld [vmem:[%s265 + $0x68] sm:$0xf]
        %v322 = vld [vmem:[%s265 + $0x6c] sm:$0xf]
        %v323 = vld [vmem:[%s265 + $0x70] sm:$0xf]
        %v324 = vld [vmem:[%s265 + $0x74] sm:$0xf]
        %v325 = vld [vmem:[%s265 + $0x78] sm:$0xf]
        %v326 = vld [vmem:[%s265 + $0x7c] sm:$0xf]
        %v327 = vld [vmem:[%s265 + $0x80] sm:$0xf]
        %v328 = vld [vmem:[%s265 + $0x84] sm:$0xf]
        %v329 = vld [vmem:[%s265 + $0x88] sm:$0xf]
        %v330 = vld [vmem:[%s265 + $0x8c] sm:$0xf]
        %v331 = vld [vmem:[%s265 + $0x90] sm:$0xf]
        %v332 = vld [vmem:[%s265 + $0x94] sm:$0xf]
        %v333 = vld [vmem:[%s265 + $0x98] sm:$0xf]
        %v334 = vld [vmem:[%s265 + $0x9c] sm:$0xf]
        %v335 = vld [vmem:[%s265 + $0xa0] sm:$0xf]
        %v336 = vld [vmem:[%s265 + $0xa4] sm:$0xf]
        %v337 = vld [vmem:[%s265 + $0xa8] sm:$0xf]
        %v338 = vld [vmem:[%s265 + $0xac] sm:$0xf]
        %v339 = vld [vmem:[%s265 + $0xb0] sm:$0xf]
        %v340 = vld [vmem:[%s265 + $0xb4] sm:$0xf]
        %v341 = vld [vmem:[%s265 + $0xb8] sm:$0xf]
        %v342 = vld [vmem:[%s265 + $0xbc] sm:$0xf]
        %v343 = vld [vmem:[%s265 + $0xc0] sm:$0xf]
        %v344 = vld [vmem:[%s265 + $0xc4] sm:$0xf]
        %v345 = vld [vmem:[%s265 + $0xc8] sm:$0xf]
        %v346 = vld [vmem:[%s265 + $0xcc] sm:$0xf]
        %v347 = vld [vmem:[%s265 + $0xd0] sm:$0xf]
        %v348 = vld [vmem:[%s265 + $0xd4] sm:$0xf]
        %v349 = vld [vmem:[%s265 + $0xd8] sm:$0xf]
        %v350 = vld [vmem:[%s265 + $0xdc] sm:$0xf]
        %v351 = vld [vmem:[%s265 + $0xe0] sm:$0xf]
        %v352 = vld [vmem:[%s265 + $0xe4] sm:$0xf]
        %v353 = vld [vmem:[%s265 + $0xe8] sm:$0xf]
        %v354 = vld [vmem:[%s265 + $0xec] sm:$0xf]
        %v355 = vld [vmem:[%s265 + $0xf0] sm:$0xf]
        %v356 = vld [vmem:[%s265 + $0xf4] sm:$0xf]
        %v357 = vld [vmem:[%s265 + $0xf8] sm:$0xf]
        %v358 = vld [vmem:[%s265 + $0xfc] sm:$0xf]
        %v363 = vunpack.c.l.b16 %v291
        %v364 = vunpack.c.h.b16 %v291
        %v365 = vunpack.c.l.b16 %v292
        %v366 = vunpack.c.h.b16 %v292
        %v367 = vunpack.c.l.b16 %v293
        %v368 = vunpack.c.h.b16 %v293
        %v369 = vunpack.c.l.b16 %v294
        %v370 = vunpack.c.h.b16 %v294
        %v371 = vpack.c.b16 %v367, %v363
        %v372 = vpack.c.b16 %v368, %v364
        %v373 = vpack.c.b16 %v369, %v365
        %v374 = vpack.c.b16 %v370, %v366
        %v443 = vunpack.c.l.b16 %v295
        %v444 = vunpack.c.l.b16 %v296
        %v445 = vunpack.c.l.b16 %v297
        %v446 = vunpack.c.l.b16 %v298
        %v447 = vunpack.c.l.b16 %v299
        %v448 = vunpack.c.l.b16 %v300
        %v449 = vunpack.c.l.b16 %v301
        %v450 = vunpack.c.l.b16 %v302
        %v451 = vunpack.c.l.b16 %v303
        %v452 = vunpack.c.l.b16 %v304
        %v453 = vunpack.c.l.b16 %v305
        %v454 = vunpack.c.l.b16 %v306
        %v455 = vunpack.c.l.b16 %v307
        %v456 = vunpack.c.l.b16 %v308
        %v457 = vunpack.c.l.b16 %v309
        %v458 = vunpack.c.l.b16 %v310
        %v459 = vunpack.c.l.b16 %v311
        %v460 = vunpack.c.l.b16 %v312
        %v461 = vunpack.c.l.b16 %v313
        %v462 = vunpack.c.l.b16 %v314
        %v463 = vunpack.c.l.b16 %v315
        %v464 = vunpack.c.l.b16 %v316
        %v465 = vunpack.c.l.b16 %v317
        %v466 = vunpack.c.l.b16 %v318
        %v467 = vunpack.c.l.b16 %v319
        %v468 = vunpack.c.l.b16 %v320
        %v469 = vunpack.c.l.b16 %v321
        %v470 = vunpack.c.l.b16 %v322
        %v471 = vunpack.c.l.b16 %v323
        %v472 = vunpack.c.l.b16 %v324
        %v473 = vunpack.c.l.b16 %v325
        %v474 = vunpack.c.l.b16 %v326
        %v475 = vunpack.c.l.b16 %v327
        %v476 = vunpack.c.l.b16 %v328
        %v477 = vunpack.c.l.b16 %v329
        %v478 = vunpack.c.l.b16 %v330
        %v479 = vunpack.c.l.b16 %v331
        %v480 = vunpack.c.l.b16 %v332
        %v481 = vunpack.c.l.b16 %v333
        %v482 = vunpack.c.l.b16 %v334
        %v483 = vunpack.c.l.b16 %v335
        %v484 = vunpack.c.l.b16 %v336
        %v485 = vunpack.c.l.b16 %v337
        %v486 = vunpack.c.l.b16 %v338
        %v487 = vunpack.c.l.b16 %v339
        %v488 = vunpack.c.l.b16 %v340
        %v489 = vunpack.c.l.b16 %v341
        %v490 = vunpack.c.l.b16 %v342
        %v491 = vunpack.c.l.b16 %v343
        %v492 = vunpack.c.l.b16 %v344
        %v493 = vunpack.c.l.b16 %v345
        %v494 = vunpack.c.l.b16 %v346
        %v495 = vunpack.c.l.b16 %v347
        %v496 = vunpack.c.l.b16 %v348
        %v497 = vunpack.c.l.b16 %v349
        %v498 = vunpack.c.l.b16 %v350
        %v499 = vunpack.c.l.b16 %v351
        %v500 = vunpack.c.l.b16 %v352
        %v501 = vunpack.c.l.b16 %v353
        %v502 = vunpack.c.l.b16 %v354
        %v503 = vunpack.c.l.b16 %v355
        %v504 = vunpack.c.l.b16 %v356
        %v505 = vunpack.c.l.b16 %v357
        %v506 = vunpack.c.l.b16 %v358
        %v507 = vpack.c.b16 %v444, %v443
        %v508 = vpack.c.b16 %v446, %v445
        %v509 = vpack.c.b16 %v448, %v447
        %v510 = vpack.c.b16 %v450, %v449
        %v511 = vpack.c.b16 %v452, %v451
        %v512 = vpack.c.b16 %v454, %v453
        %v513 = vpack.c.b16 %v456, %v455
        %v514 = vpack.c.b16 %v458, %v457
        %v515 = vpack.c.b16 %v460, %v459
        %v516 = vpack.c.b16 %v462, %v461
        %v517 = vpack.c.b16 %v464, %v463
        %v518 = vpack.c.b16 %v466, %v465
        %v519 = vpack.c.b16 %v468, %v467
        %v520 = vpack.c.b16 %v470, %v469
        %v521 = vpack.c.b16 %v472, %v471
        %v522 = vpack.c.b16 %v474, %v473
        %v523 = vpack.c.b16 %v476, %v475
        %v524 = vpack.c.b16 %v478, %v477
        %v525 = vpack.c.b16 %v480, %v479
        %v526 = vpack.c.b16 %v482, %v481
        %v527 = vpack.c.b16 %v484, %v483
        %v528 = vpack.c.b16 %v486, %v485
        %v529 = vpack.c.b16 %v488, %v487
        %v530 = vpack.c.b16 %v490, %v489
        %v531 = vpack.c.b16 %v492, %v491
        %v532 = vpack.c.b16 %v494, %v493
        %v533 = vpack.c.b16 %v496, %v495
        %v534 = vpack.c.b16 %v498, %v497
        %v535 = vpack.c.b16 %v500, %v499
        %v536 = vpack.c.b16 %v502, %v501
        %v537 = vpack.c.b16 %v504, %v503
        %v538 = vpack.c.b16 %v506, %v505
        %571 = vmatpush.bf16.msra.mxu0 %v514
        %572 = vmatpush.bf16.msra.mxu0 %v513
        %573 = vmatpush.bf16.msra.mxu0 %v512
        %574 = vmatpush.bf16.msra.mxu0 %v511
        %575 = vmatpush.bf16.msra.mxu0 %v510
        %576 = vmatpush.bf16.msra.mxu0 %v509
        %577 = vmatpush.bf16.msra.mxu0 %v508
        %578 = vmatpush.bf16.msra.mxu0 %v507
        %579 = vmatmul.bf16.gmra.mxu0 %v371
        %v580 = vpop.f32.mrf.mxu0
        %v581 = vadd.f32 0.0, %v580
        %v582 = vpop.f32.mrf.mxu0
        %v583 = vadd.f32 0.0, %v582
        %584 = vdwg.mxu0
        %585 = vmatpush.bf16.msra.mxu0 %v522
        %586 = vmatpush.bf16.msra.mxu0 %v521
        %587 = vmatpush.bf16.msra.mxu0 %v520
        %588 = vmatpush.bf16.msra.mxu0 %v519
        %589 = vmatpush.bf16.msra.mxu0 %v518
        %590 = vmatpush.bf16.msra.mxu0 %v517
        %591 = vmatpush.bf16.msra.mxu0 %v516
        %592 = vmatpush.bf16.msra.mxu0 %v515
        %593 = vmatmul.bf16.gmra.mxu0 %v372
        %v594 = vpop.f32.mrf.mxu0
        %v595 = vadd.f32 %v581, %v594
        %v596 = vpop.f32.mrf.mxu0
        %v597 = vadd.f32 %v583, %v596
        %598 = vdwg.mxu0
        %599 = vmatpush.bf16.msra.mxu0 %v530
        %600 = vmatpush.bf16.msra.mxu0 %v529
        %601 = vmatpush.bf16.msra.mxu0 %v528
        %602 = vmatpush.bf16.msra.mxu0 %v527
        %603 = vmatpush.bf16.msra.mxu0 %v526
        %604 = vmatpush.bf16.msra.mxu0 %v525
        %605 = vmatpush.bf16.msra.mxu0 %v524
        %606 = vmatpush.bf16.msra.mxu0 %v523
        %607 = vmatmul.bf16.gmra.mxu0 %v373
        %v608 = vpop.f32.mrf.mxu0
        %v609 = vadd.f32 %v595, %v608
        %v610 = vpop.f32.mrf.mxu0
        %v611 = vadd.f32 %v597, %v610
        %612 = vdwg.mxu0
        %613 = vmatpush.bf16.msra.mxu0 %v538
        %614 = vmatpush.bf16.msra.mxu0 %v537
        %615 = vmatpush.bf16.msra.mxu0 %v536
        %616 = vmatpush.bf16.msra.mxu0 %v535
        %617 = vmatpush.bf16.msra.mxu0 %v534
        %618 = vmatpush.bf16.msra.mxu0 %v533
        %619 = vmatpush.bf16.msra.mxu0 %v532
        %620 = vmatpush.bf16.msra.mxu0 %v531
        %621 = vmatmul.bf16.gmra.mxu0 %v374
        %v622 = vpop.f32.mrf.mxu0
        %v623 = vadd.f32 %v609, %v622
        %v624 = vpop.f32.mrf.mxu0
        %v625 = vadd.f32 %v611, %v624
        %626 = vdwg.mxu0
        %v627 = vadd.f32 %v289, %v623
        %v628 = vadd.f32 %v290, %v625
        %629 = vst [vmem:[#allocation2] sm:$0xff] %v627
        %630 = vst [vmem:[#allocation2 + $0x8] sm:$0xff] %v628
        %p631 = scmp.eq.s32.totalorder %s21, 1
        // Predicated region
        $region60: #{blazeneo_forward.16} parent=50 // pred_check
          %p632 = pneg %p631
        $region61: #{blazeneo_forward.16} parent=50 // pred_check_branch
          %634 = sbr.rel (%p632) target = $region63
        $region62: #{blazeneo_forward.16} parent=50 // pred_region
          %v635 = vld [vmem:[#allocation2] sm:$0xff]
          %v636 = vld [vmem:[#allocation2 + $0x8] sm:$0xff]
          %v637 = vmax.f32 %v635, 0.0
          %v638 = vmax.f32 %v636, 0.0
          %v639 = vpack.c.bf16 %v637, %v637
          %v640 = vpack.c.bf16 %v638, %v638
          %641 = vst [vmem:[%s277] sm:$0xf] %v639
          %642 = vst [vmem:[%s277 + $0x4] sm:$0xf] %v640
        $region63: #{blazeneo_forward.16} parent=50 // pred_fallthru
          _
        %s643 = smul.u32 2, %s19
        %p644 = scmp.lt.s32.totalorder %s643, 1
        %s645 = scalar_select %p644, %s643, 1
        %p646 = scmp.lt.s32.totalorder %s20, 0
        %s647 = scalar_select %p646, %s20, 0
        %s648 = sadd.s32 %s647, %s645
        %s649 = smul.addr %s648, 4
        %s650 = scalar_lea.vmem %s3, %s649
        // Predicated region
        $region64: #{blazeneo_forward.16} parent=50 // pred_check
          %p651 = pneg %p135
        $region65: #{blazeneo_forward.16} parent=50 // pred_check_branch
          %653 = sbr.rel (%p651) target = $region67
        $region66: #{blazeneo_forward.16} parent=50 // pred_region
          %s654 = smul.u32 2, %s19
        $region67: #{blazeneo_forward.16} parent=50 // pred_fallthru
          _
        // Predicated region
        $region68: #{blazeneo_forward.16} parent=50 // pred_check
          %p655 = pneg %p135
        $region69: #{blazeneo_forward.16} parent=50 // pred_check_branch
          %657 = sbr.rel (%p655) target = $region71
        $region70: #{blazeneo_forward.16} parent=50 // pred_region
          %s658 = smul.u32 2, %s19
          %p659 = scmp.lt.s32.totalorder %s658, 1
          %s660 = scalar_select %p659, %s658, 1
          %p661 = scmp.lt.s32.totalorder %s20, 0
          %s662 = scalar_select %p661, %s20, 0
          %s663 = sadd.s32 %s662, %s660
          %s664 = smul.addr %s663, 4
          %s665 = scalar_lea.vmem %s3, %s664
        $region71: #{blazeneo_forward.16} parent=50 // pred_fallthru
          _
      $region51: #{blazeneo_forward.16} parent=5 // pred_fallthru
        _
      %p666 = scmp.le.s32.totalorder 2, %s9
      // Predicated region
      $region72: #{blazeneo_forward.16} parent=5 // pred_check
        %p667 = pneg %p666
      $region73: #{blazeneo_forward.16} parent=5 // pred_check_branch
        %669 = sbr.rel (%p667) target = $region75
      $region74: #{blazeneo_forward.16} parent=5 // pred_region
        %s670 = ssub.s32 %s9, 2
      $region75: #{blazeneo_forward.16} parent=5 // pred_fallthru
        _
    $region6: #{blazeneo_forward.16} parent=1 // loop_footer
      %s13 = sadd.s32 1, %s9
    $region7: #{blazeneo_forward.16} parent=1 // loop_footer_branch
      %8 = sbr.rel target = $region3
    $region8: #{blazeneo_forward.16} parent=1 // loop_exit
      _

// kernel: blazeneo_forward.13
$region0: #{blazeneo_forward.13}
  #allocation0 [shape = 'u32[]', space=smem, size = 0x4, offset = 0x4, fixed_abs, tag = 'smem constant byte address 0x4 - core index']
  #allocation1 [shape = 'u32[72,128]{1,0:T(1,128)}', space=vmem, size = 0x9000, scoped, tag = 'internal scratch']
  #allocation2 [shape = 'f32[16,256]{1,0:T(8,128)}', space=vmem, size = 0x4000, scoped, tag = 'scratch operand']
  %s0 = inlined_call_operand.vmem [shape: bf16[16,6144], index: 0, kind: input, shape index: {}]
  %s1 = inlined_call_operand.vmem [shape: bf16[6144,1024], index: 1, kind: input, shape index: {}]
  %s2 = inlined_call_operand.vmem [shape: f32[1,1024], index: 2, kind: input, shape index: {}]
  %s3 = inlined_call_operand.vmem [shape: bf16[16,1024], index: 3, kind: output, shape index: {}]
  %s4 = sld [smem:[#allocation0]]
  $region148: #{blazeneo_forward.13} parent=0
    _
  %s6 = ssub.s32 1, %s4
  %s7 = scalar_select 0, %s6, %s4
  $region1: #{blazeneo_forward.13} parent=0
    #allocation3 [shape = 'u8[32768]{0}', space=vmem, size = 0x8000, scoped, tag = 'input window, operand 0']
    #allocation4 [shape = 'u8[524288]{0}', space=vmem, size = 0x80000, scoped, tag = 'input window, operand 1']
    #allocation5 [shape = 'u8[16384]{0}', space=vmem, size = 0x4000, scoped, tag = 'output window, operand 0']
    loop: start=0, step=1, limit=50
    $region2: #{blazeneo_forward.13} parent=1 // loop_pre_header
      _
    $region3: #{blazeneo_forward.13} parent=1 // loop_header
      %s9 = sphi 0, %s13
      %p10 = scmp.ge.s32.totalorder %s9, 50
      %s16 = sphi 0, %s35
      %s17 = sphi 0, %s31
      %s18 = sphi 0, %s27
      %s19 = sphi 0, %s16
      %s20 = sphi 0, %s17
      %s21 = sphi 0, %s18
      %s22 = sphi 0, %s19
      %s23 = sphi 0, %s20
      %s24 = sphi 0, %s21
      %s40 = sphi 0, %s42
      %s43 = sphi 0, %s40
      %s44 = sphi 0, %s43
      %s60 = sphi 0, %s44
      %s68 = sphi 0, %s70
      %s71 = sphi 0, %s68
      %s72 = sphi 0, %s71
      %s88 = sphi 0, %s72
      %s94 = sphi 0, %s96
      %s97 = sphi 0, %s94
      %s98 = sphi 0, %s97
      %s114 = sphi 0, %s98
      %s122 = sphi 0, %s124
      %s125 = sphi 0, %s122
      %s126 = sphi 0, %s125
      %s142 = sphi 0, %s126
    $region4: #{blazeneo_forward.13} parent=1 // loop_header_branch
      %12 = sbr.rel (%p10) target = $region8
    $region5: #{blazeneo_forward.13} parent=1 // loop_body
      %s14 = ssub.s32 %s9, 1
      %s15 = ssub.s32 %s9, 2
      %s25 = sadd.s32 1, %s18
      %p26 = scmp.ge.s32.totalorder %s25, 12
      %s27 = scalar_select %p26, 0, %s25
      %s28 = sadd.s32 1, %s17
      %s29 = scalar_select %p26, %s28, %s17
      %p30 = scmp.ge.s32.totalorder %s29, 4
      %s31 = scalar_select %p30, 0, %s29
      %s32 = sadd.s32 1, %s16
      %s33 = scalar_select %p30, %s32, %s16
      %p34 = scmp.ge.s32.totalorder %s33, 1
      %s35 = scalar_select %p34, 0, %s33
      %s36 = ssub.s32 %s16, %s35
      %s37 = ssub.s32 %s18, %s27
      %s38 = sor.u32 %s36, %s37
      %p39 = scmp.eq.s32.totalorder %s38, 0
      %s41 = sadd.s32 %s40, 1
      %s42 = scalar_select %p39, %s40, %s41
      %p45 = pneg %p39
      %p46 = scmp.eq.s32.totalorder %s9, 47
      %p47 = por %p45, %p46
      %p48 = scmp.ne.s32.totalorder %s40, %s43
      %p49 = scmp.eq.s32.totalorder %s9, 0
      %p50 = por %p48, %p49
      %p51 = scmp.ne.s32.totalorder %s40, %s43
      %p52 = scmp.eq.s32.totalorder %s14, 47
      %p53 = por %p51, %p52
      %p54 = scmp.ne.s32.totalorder %s43, %s44
      %p55 = scmp.eq.s32.totalorder %s14, 0
      %p56 = por %p54, %p55
      %p57 = scmp.ne.s32.totalorder %s43, %s44
      %p58 = scmp.eq.s32.totalorder %s15, 47
      %p59 = por %p57, %p58
      %p61 = scmp.ne.s32.totalorder %s44, %s60
      %p62 = scmp.eq.s32.totalorder %s15, 0
      %p63 = por %p61, %p62
      %s64 = ssub.s32 %s18, %s27
      %s65 = ssub.s32 %s17, %s31
      %s66 = sor.u32 %s64, %s65
      %p67 = scmp.eq.s32.totalorder %s66, 0
      %s69 = sadd.s32 %s68, 1
      %s70 = scalar_select %p67, %s68, %s69
      %p73 = pneg %p67
      %p74 = scmp.eq.s32.totalorder %s9, 47
      %p75 = por %p73, %p74
      %p76 = scmp.ne.s32.totalorder %s68, %s71
      %p77 = scmp.eq.s32.totalorder %s9, 0
      %p78 = por %p76, %p77
      %p79 = scmp.ne.s32.totalorder %s68, %s71
      %p80 = scmp.eq.s32.totalorder %s14, 47
      %p81 = por %p79, %p80
      %p82 = scmp.ne.s32.totalorder %s71, %s72
      %p83 = scmp.eq.s32.totalorder %s14, 0
      %p84 = por %p82, %p83
      %p85 = scmp.ne.s32.totalorder %s71, %s72
      %p86 = scmp.eq.s32.totalorder %s15, 47
      %p87 = por %p85, %p86
      %p89 = scmp.ne.s32.totalorder %s72, %s88
      %p90 = scmp.eq.s32.totalorder %s15, 0
      %p91 = por %p89, %p90
      %s92 = ssub.s32 %s17, %s31
      %p93 = scmp.eq.s32.totalorder %s92, 0
      %s95 = sadd.s32 %s94, 1
      %s96 = scalar_select %p93, %s94, %s95
      %p99 = pneg %p93
      %p100 = scmp.eq.s32.totalorder %s9, 47
      %p101 = por %p99, %p100
      %p102 = scmp.ne.s32.totalorder %s94, %s97
      %p103 = scmp.eq.s32.totalorder %s9, 0
      %p104 = por %p102, %p103
      %p105 = scmp.ne.s32.totalorder %s94, %s97
      %p106 = scmp.eq.s32.totalorder %s14, 47
      %p107 = por %p105, %p106
      %p108 = scmp.ne.s32.totalorder %s97, %s98
      %p109 = scmp.eq.s32.totalorder %s14, 0
      %p110 = por %p108, %p109
      %p111 = scmp.ne.s32.totalorder %s97, %s98
      %p112 = scmp.eq.s32.totalorder %s15, 47
      %p113 = por %p111, %p112
      %p115 = scmp.ne.s32.totalorder %s98, %s114
      %p116 = scmp.eq.s32.totalorder %s15, 0
      %p117 = por %p115, %p116
      %s118 = ssub.s32 %s16, %s35
      %s119 = ssub.s32 %s17, %s31
      %s120 = sor.u32 %s118, %s119
      %p121 = scmp.eq.s32.totalorder %s120, 0
      %s123 = sadd.s32 %s122, 1
      %s124 = scalar_select %p121, %s122, %s123
      %p127 = pneg %p121
      %p128 = scmp.eq.s32.totalorder %s9, 47
      %p129 = por %p127, %p128
      %p130 = scmp.ne.s32.totalorder %s122, %s125
      %p131 = scmp.eq.s32.totalorder %s9, 0
      %p132 = por %p130, %p131
      %p133 = scmp.ne.s32.totalorder %s122, %s125
      %p134 = scmp.eq.s32.totalorder %s14, 47
      %p135 = por %p133, %p134
      %p136 = scmp.ne.s32.totalorder %s125, %s126
      %p137 = scmp.eq.s32.totalorder %s14, 0
      %p138 = por %p136, %p137
      %p139 = scmp.ne.s32.totalorder %s125, %s126
      %p140 = scmp.eq.s32.totalorder %s15, 47
      %p141 = por %p139, %p140
      %p143 = scmp.ne.s32.totalorder %s126, %s142
      %p144 = scmp.eq.s32.totalorder %s15, 0
      %p145 = por %p143, %p144
      %p146 = scmp.le.s32.totalorder 1, %s9
      %p147 = scmp.lt.s32.totalorder %s9, 49
      %p148 = pnand %p146, %p147
      %p149 = pneg %p148
      // Predicated region
      $region9: #{blazeneo_forward.13} parent=5 // pred_check
        _
      $region10: #{blazeneo_forward.13} parent=5 // pred_check_branch
        %151 = sbr.rel (%p148) target = $region12
      $region11: #{blazeneo_forward.13} parent=5 // pred_region
        %s152 = ssub.s32 %s9, 1
      $region12: #{blazeneo_forward.13} parent=5 // pred_fallthru
        _
      %p153 = scmp.lt.s32.totalorder %s9, 48
      // Predicated region
      $region13: #{blazeneo_forward.13} parent=5 // pred_check
        %p154 = pneg %p153
      $region14: #{blazeneo_forward.13} parent=5 // pred_check_branch
        %156 = sbr.rel (%p154) target = $region16
      $region15: #{blazeneo_forward.13} parent=5 // pred_region
        // Predicated region
        $region17: #{blazeneo_forward.13} parent=15 // pred_check
          %p157 = pneg %p50
        $region18: #{blazeneo_forward.13} parent=15 // pred_check_branch
          %159 = sbr.rel (%p157) target = $region20
        $region19: #{blazeneo_forward.13} parent=15 // pred_region
          %s160 = sand.u32 %s40, 1
          %s161 = sand.u32 %s40, 1
          %s162 = smul.addr %s161, 32
          %s163 = scalar_lea.vmem [#allocation3], %s162
          %s164 = smul.u32 2, %s16
          %s165 = smul.u32 4, %s18
          %s166 = smul.addr %s164, 48
          %s167 = sadd.s32 %s165, %s166
          %s168 = smul.addr %s167, 4
          %s169 = scalar_lea.vmem %s0, %s168
          // Predicated region
          $region21: #{blazeneo_forward.13} parent=19 // pred_check
            _
          $region22: #{blazeneo_forward.13} parent=19 // pred_check_branch
            %171 = sbr.rel (0) target = $region24
          $region23: #{blazeneo_forward.13} parent=19 // pred_region
            // Predicated region
            $region25: #{blazeneo_forward.13} parent=23 // pred_check
              _
            $region26: #{blazeneo_forward.13} parent=23 // pred_check_branch
              %173 = sbr.rel (0) target = $region28
            $region27: #{blazeneo_forward.13} parent=23 // pred_region
              loop: start=0, step=1, limit=1
              $region29: #{blazeneo_forward.13} parent=27 // loop_pre_header
                _
              $region30: #{blazeneo_forward.13} parent=27 // loop_header
                %s175 = sphi 0, %s179
                %p176 = scmp.ge.s32.totalorder %s175, 1
                %s180 = sphi %s169, %s169
                %s181 = sphi %s163, %s163
              $region31: #{blazeneo_forward.13} parent=27 // loop_header_branch
                %178 = sbr.rel (%p176) target = $region35
              $region32: #{blazeneo_forward.13} parent=27 // loop_body
                %v182 = vld [vmem:[%s180] sm:$0xff]
                %183 = vst [vmem:[%s181] sm:$0xff] %v182
                %v184 = vld [vmem:[%s180 + $0x8] sm:$0xff]
                %185 = vst [vmem:[%s181 + $0x8] sm:$0xff] %v184
                %v186 = vld [vmem:[%s180 + $0xc0] sm:$0xff]
                %187 = vst [vmem:[%s181 + $0x10] sm:$0xff] %v186
                %v188 = vld [vmem:[%s180 + $0xc8] sm:$0xff]
                %189 = vst [vmem:[%s181 + $0x18] sm:$0xff] %v188
              $region33: #{blazeneo_forward.13} parent=27 // loop_footer
                %s179 = sadd.s32 1, %s175
              $region34: #{blazeneo_forward.13} parent=27 // loop_footer_branch
                %174 = sbr.rel target = $region30
              $region35: #{blazeneo_forward.13} parent=27 // loop_exit
                _
            $region28: #{blazeneo_forward.13} parent=23 // pred_fallthru
              _
            // Predicated region
            $region36: #{blazeneo_forward.13} parent=23 // pred_check
              _
            $region37: #{blazeneo_forward.13} parent=23 // pred_check_branch
              %191 = sbr.rel target = $region39
            $region38: #{blazeneo_forward.13} parent=23 // pred_region
              _
            $region39: #{blazeneo_forward.13} parent=23 // pred_fallthru
              _
          $region24: #{blazeneo_forward.13} parent=19 // pred_fallthru
            _
          %192 = vnop
        $region20: #{blazeneo_forward.13} parent=15 // pred_fallthru
          _
        // Predicated region
        $region40: #{blazeneo_forward.13} parent=15 // pred_check
          %p193 = pneg %p78
        $region41: #{blazeneo_forward.13} parent=15 // pred_check_branch
          %195 = sbr.rel (%p193) target = $region43
        $region42: #{blazeneo_forward.13} parent=15 // pred_region
          %s196 = sand.u32 %s68, 1
          %s197 = sand.u32 %s68, 1
          %s198 = smul.addr %s197, 512
          %s199 = scalar_lea.vmem [#allocation4], %s198
          %s200 = smul.u32 64, %s18
          %s201 = smul.u32 2, %s17
          %s202 = smul.addr %s200, 8
          %s203 = sadd.s32 %s201, %s202
          %s204 = smul.addr %s203, 4
          %s205 = scalar_lea.vmem %s1, %s204
          // Predicated region
          $region44: #{blazeneo_forward.13} parent=42 // pred_check
            _
          $region45: #{blazeneo_forward.13} parent=42 // pred_check_branch
            %207 = sbr.rel (0) target = $region47
          $region46: #{blazeneo_forward.13} parent=42 // pred_region
            // Predicated region
            $region48: #{blazeneo_forward.13} parent=46 // pred_check
              _
            $region49: #{blazeneo_forward.13} parent=46 // pred_check_branch
              %209 = sbr.rel (0) target = $region51
            $region50: #{blazeneo_forward.13} parent=46 // pred_region
              // Predicated region
              $region63: #{blazeneo_forward.13} parent=50 // pred_check
                _
              $region64: #{blazeneo_forward.13} parent=50 // pred_check_branch
                %351 = sbr.rel (0) target = $region66
              $region65: #{blazeneo_forward.13} parent=50 // pred_region
                loop: start=0, step=1, limit=1
                $region67: #{blazeneo_forward.13} parent=65 // loop_pre_header
                  _
                $region68: #{blazeneo_forward.13} parent=65 // loop_header
                  %s353 = sphi 0, %s357
                  %p354 = scmp.ge.s32.totalorder %s353, 1
                  %s358 = sphi %s205, %s205
                  %s359 = sphi %s199, %s199
                $region69: #{blazeneo_forward.13} parent=65 // loop_header_branch
                  %356 = sbr.rel (%p354) target = $region73
                $region70: #{blazeneo_forward.13} parent=65 // loop_body
                  %v360 = vld [vmem:[%s358] sm:$0xff]
                  %361 = vst [vmem:[%s359] sm:$0xff] %v360
                  %v362 = vld [vmem:[%s358 + $0x20] sm:$0xff]
                  %363 = vst [vmem:[%s359 + $0x8] sm:$0xff] %v362
                  %v364 = vld [vmem:[%s358 + $0x40] sm:$0xff]
                  %365 = vst [vmem:[%s359 + $0x10] sm:$0xff] %v364
                  %v366 = vld [vmem:[%s358 + $0x60] sm:$0xff]
                  %367 = vst [vmem:[%s359 + $0x18] sm:$0xff] %v366
                  %v368 = vld [vmem:[%s358 + $0x80] sm:$0xff]
                  %369 = vst [vmem:[%s359 + $0x20] sm:$0xff] %v368
                  %v370 = vld [vmem:[%s358 + $0xa0] sm:$0xff]
                  %371 = vst [vmem:[%s359 + $0x28] sm:$0xff] %v370
                  %v372 = vld [vmem:[%s358 + $0xc0] sm:$0xff]
                  %373 = vst [vmem:[%s359 + $0x30] sm:$0xff] %v372
                  %v374 = vld [vmem:[%s358 + $0xe0] sm:$0xff]
                  %375 = vst [vmem:[%s359 + $0x38] sm:$0xff] %v374
                  %v376 = vld [vmem:[%s358 + $0x100] sm:$0xff]
                  %377 = vst [vmem:[%s359 + $0x40] sm:$0xff] %v376
                  %v378 = vld [vmem:[%s358 + $0x120] sm:$0xff]
                  %379 = vst [vmem:[%s359 + $0x48] sm:$0xff] %v378
                  %v380 = vld [vmem:[%s358 + $0x140] sm:$0xff]
                  %381 = vst [vmem:[%s359 + $0x50] sm:$0xff] %v380
                  %v382 = vld [vmem:[%s358 + $0x160] sm:$0xff]
                  %383 = vst [vmem:[%s359 + $0x58] sm:$0xff] %v382
                  %v384 = vld [vmem:[%s358 + $0x180] sm:$0xff]
                  %385 = vst [vmem:[%s359 + $0x60] sm:$0xff] %v384
                  %v386 = vld [vmem:[%s358 + $0x1a0] sm:$0xff]
                  %387 = vst [vmem:[%s359 + $0x68] sm:$0xff] %v386
                  %v388 = vld [vmem:[%s358 + $0x1c0] sm:$0xff]
                  %389 = vst [vmem:[%s359 + $0x70] sm:$0xff] %v388
                  %v390 = vld [vmem:[%s358 + $0x1e0] sm:$0xff]
                  %391 = vst [vmem:[%s359 + $0x78] sm:$0xff] %v390
                  %v392 = vld [vmem:[%s358 + $0x200] sm:$0xff]
                  %393 = vst [vmem:[%s359 + $0x80] sm:$0xff] %v392
                  %v394 = vld [vmem:[%s358 + $0x220] sm:$0xff]
                  %395 = vst [vmem:[%s359 + $0x88] sm:$0xff] %v394
                  %v396 = vld [vmem:[%s358 + $0x240] sm:$0xff]
                  %397 = vst [vmem:[%s359 + $0x90] sm:$0xff] %v396
                  %v398 = vld [vmem:[%s358 + $0x260] sm:$0xff]
                  %399 = vst [vmem:[%s359 + $0x98] sm:$0xff] %v398
                  %v400 = vld [vmem:[%s358 + $0x280] sm:$0xff]
                  %401 = vst [vmem:[%s359 + $0xa0] sm:$0xff] %v400
                  %v402 = vld [vmem:[%s358 + $0x2a0] sm:$0xff]
                  %403 = vst [vmem:[%s359 + $0xa8] sm:$0xff] %v402
                  %v404 = vld [vmem:[%s358 + $0x2c0] sm:$0xff]
                  %405 = vst [vmem:[%s359 + $0xb0] sm:$0xff] %v404
                  %v406 = vld [vmem:[%s358 + $0x2e0] sm:$0xff]
                  %407 = vst [vmem:[%s359 + $0xb8] sm:$0xff] %v406
                  %v408 = vld [vmem:[%s358 + $0x300] sm:$0xff]
                  %409 = vst [vmem:[%s359 + $0xc0] sm:$0xff] %v408
                  %v410 = vld [vmem:[%s358 + $0x320] sm:$0xff]
                  %411 = vst [vmem:[%s359 + $0xc8] sm:$0xff] %v410
                  %v412 = vld [vmem:[%s358 + $0x340] sm:$0xff]
                  %413 = vst [vmem:[%s359 + $0xd0] sm:$0xff] %v412
                  %v414 = vld [vmem:[%s358 + $0x360] sm:$0xff]
                  %415 = vst [vmem:[%s359 + $0xd8] sm:$0xff] %v414
                  %v416 = vld [vmem:[%s358 + $0x380] sm:$0xff]
                  %417 = vst [vmem:[%s359 + $0xe0] sm:$0xff] %v416
                  %v418 = vld [vmem:[%s358 + $0x3a0] sm:$0xff]
                  %419 = vst [vmem:[%s359 + $0xe8] sm:$0xff] %v418
                  %v420 = vld [vmem:[%s358 + $0x3c0] sm:$0xff]
                  %421 = vst [vmem:[%s359 + $0xf0] sm:$0xff] %v420
                  %v422 = vld [vmem:[%s358 + $0x3e0] sm:$0xff]
                  %423 = vst [vmem:[%s359 + $0xf8] sm:$0xff] %v422
                  %v424 = vld [vmem:[%s358 + $0x400] sm:$0xff]
                  %425 = vst [vmem:[%s359 + $0x100] sm:$0xff] %v424
                  %v426 = vld [vmem:[%s358 + $0x420] sm:$0xff]
                  %427 = vst [vmem:[%s359 + $0x108] sm:$0xff] %v426
                  %v428 = vld [vmem:[%s358 + $0x440] sm:$0xff]
                  %429 = vst [vmem:[%s359 + $0x110] sm:$0xff] %v428
                  %v430 = vld [vmem:[%s358 + $0x460] sm:$0xff]
                  %431 = vst [vmem:[%s359 + $0x118] sm:$0xff] %v430
                  %v432 = vld [vmem:[%s358 + $0x480] sm:$0xff]
                  %433 = vst [vmem:[%s359 + $0x120] sm:$0xff] %v432
                  %v434 = vld [vmem:[%s358 + $0x4a0] sm:$0xff]
                  %435 = vst [vmem:[%s359 + $0x128] sm:$0xff] %v434
                  %v436 = vld [vmem:[%s358 + $0x4c0] sm:$0xff]
                  %437 = vst [vmem:[%s359 + $0x130] sm:$0xff] %v436
                  %v438 = vld [vmem:[%s358 + $0x4e0] sm:$0xff]
                  %439 = vst [vmem:[%s359 + $0x138] sm:$0xff] %v438
                  %v440 = vld [vmem:[%s358 + $0x500] sm:$0xff]
                  %441 = vst [vmem:[%s359 + $0x140] sm:$0xff] %v440
                  %v442 = vld [vmem:[%s358 + $0x520] sm:$0xff]
                  %443 = vst [vmem:[%s359 + $0x148] sm:$0xff] %v442
                  %v444 = vld [vmem:[%s358 + $0x540] sm:$0xff]
                  %445 = vst [vmem:[%s359 + $0x150] sm:$0xff] %v444
                  %v446 = vld [vmem:[%s358 + $0x560] sm:$0xff]
                  %447 = vst [vmem:[%s359 + $0x158] sm:$0xff] %v446
                  %v448 = vld [vmem:[%s358 + $0x580] sm:$0xff]
                  %449 = vst [vmem:[%s359 + $0x160] sm:$0xff] %v448
                  %v450 = vld [vmem:[%s358 + $0x5a0] sm:$0xff]
                  %451 = vst [vmem:[%s359 + $0x168] sm:$0xff] %v450
                  %v452 = vld [vmem:[%s358 + $0x5c0] sm:$0xff]
                  %453 = vst [vmem:[%s359 + $0x170] sm:$0xff] %v452
                  %v454 = vld [vmem:[%s358 + $0x5e0] sm:$0xff]
                  %455 = vst [vmem:[%s359 + $0x178] sm:$0xff] %v454
                  %v456 = vld [vmem:[%s358 + $0x600] sm:$0xff]
                  %457 = vst [vmem:[%s359 + $0x180] sm:$0xff] %v456
                  %v458 = vld [vmem:[%s358 + $0x620] sm:$0xff]
                  %459 = vst [vmem:[%s359 + $0x188] sm:$0xff] %v458
                  %v460 = vld [vmem:[%s358 + $0x640] sm:$0xff]
                  %461 = vst [vmem:[%s359 + $0x190] sm:$0xff] %v460
                  %v462 = vld [vmem:[%s358 + $0x660] sm:$0xff]
                  %463 = vst [vmem:[%s359 + $0x198] sm:$0xff] %v462
                  %v464 = vld [vmem:[%s358 + $0x680] sm:$0xff]
                  %465 = vst [vmem:[%s359 + $0x1a0] sm:$0xff] %v464
                  %v466 = vld [vmem:[%s358 + $0x6a0] sm:$0xff]
                  %467 = vst [vmem:[%s359 + $0x1a8] sm:$0xff] %v466
                  %v468 = vld [vmem:[%s358 + $0x6c0] sm:$0xff]
                  %469 = vst [vmem:[%s359 + $0x1b0] sm:$0xff] %v468
                  %v470 = vld [vmem:[%s358 + $0x6e0] sm:$0xff]
                  %471 = vst [vmem:[%s359 + $0x1b8] sm:$0xff] %v470
                  %v472 = vld [vmem:[%s358 + $0x700] sm:$0xff]
                  %473 = vst [vmem:[%s359 + $0x1c0] sm:$0xff] %v472
                  %v474 = vld [vmem:[%s358 + $0x720] sm:$0xff]
                  %475 = vst [vmem:[%s359 + $0x1c8] sm:$0xff] %v474
                  %v476 = vld [vmem:[%s358 + $0x740] sm:$0xff]
                  %477 = vst [vmem:[%s359 + $0x1d0] sm:$0xff] %v476
                  %v478 = vld [vmem:[%s358 + $0x760] sm:$0xff]
                  %479 = vst [vmem:[%s359 + $0x1d8] sm:$0xff] %v478
                  %v480 = vld [vmem:[%s358 + $0x780] sm:$0xff]
                  %481 = vst [vmem:[%s359 + $0x1e0] sm:$0xff] %v480
                  %v482 = vld [vmem:[%s358 + $0x7a0] sm:$0xff]
                  %483 = vst [vmem:[%s359 + $0x1e8] sm:$0xff] %v482
                  %v484 = vld [vmem:[%s358 + $0x7c0] sm:$0xff]
                  %485 = vst [vmem:[%s359 + $0x1f0] sm:$0xff] %v484
                  %v486 = vld [vmem:[%s358 + $0x7e0] sm:$0xff]
                  %487 = vst [vmem:[%s359 + $0x1f8] sm:$0xff] %v486
                $region71: #{blazeneo_forward.13} parent=65 // loop_footer
                  %s357 = sadd.s32 1, %s353
                $region72: #{blazeneo_forward.13} parent=65 // loop_footer_branch
                  %352 = sbr.rel target = $region68
                $region73: #{blazeneo_forward.13} parent=65 // loop_exit
                  _
              $region66: #{blazeneo_forward.13} parent=50 // pred_fallthru
                _
              // Predicated region
              $region74: #{blazeneo_forward.13} parent=50 // pred_check
                _
              $region75: #{blazeneo_forward.13} parent=50 // pred_check_branch
                %489 = sbr.rel target = $region77
              $region76: #{blazeneo_forward.13} parent=50 // pred_region
                _
              $region77: #{blazeneo_forward.13} parent=50 // pred_fallthru
                _
            $region51: #{blazeneo_forward.13} parent=46 // pred_fallthru
              _
            // Predicated region
            $region52: #{blazeneo_forward.13} parent=46 // pred_check
              _
            $region53: #{blazeneo_forward.13} parent=46 // pred_check_branch
              %211 = sbr.rel target = $region55
            $region54: #{blazeneo_forward.13} parent=46 // pred_region
              %s213 = ssub.s32 256, 1
              loop: start=0, step=1, limit=1
              $region56: #{blazeneo_forward.13} parent=54 // loop_pre_header
                _
              $region57: #{blazeneo_forward.13} parent=54 // loop_header
                %s215 = sphi 0, %s219
                %p216 = scmp.ge.s32.totalorder %s215, 1
                %s220 = sphi %s205, %s205
                %s221 = sphi %s199, %s199
              $region58: #{blazeneo_forward.13} parent=54 // loop_header_branch
                %218 = sbr.rel (%p216) target = $region62
              $region59: #{blazeneo_forward.13} parent=54 // loop_body
                %v222 = vld [vmem:[%s220] sm:%s213]
                %223 = vst [vmem:[%s221] sm:%s213] %v222
                %v224 = vld [vmem:[%s220 + $0x20] sm:%s213]
                %225 = vst [vmem:[%s221 + $0x8] sm:%s213] %v224
                %v226 = vld [vmem:[%s220 + $0x40] sm:%s213]
                %227 = vst [vmem:[%s221 + $0x10] sm:%s213] %v226
                %v228 = vld [vmem:[%s220 + $0x60] sm:%s213]
                %229 = vst [vmem:[%s221 + $0x18] sm:%s213] %v228
                %v230 = vld [vmem:[%s220 + $0x80] sm:%s213]
                %231 = vst [vmem:[%s221 + $0x20] sm:%s213] %v230
                %v232 = vld [vmem:[%s220 + $0xa0] sm:%s213]
                %233 = vst [vmem:[%s221 + $0x28] sm:%s213] %v232
                %v234 = vld [vmem:[%s220 + $0xc0] sm:%s213]
                %235 = vst [vmem:[%s221 + $0x30] sm:%s213] %v234
                %v236 = vld [vmem:[%s220 + $0xe0] sm:%s213]
                %237 = vst [vmem:[%s221 + $0x38] sm:%s213] %v236
                %v238 = vld [vmem:[%s220 + $0x100] sm:%s213]
                %239 = vst [vmem:[%s221 + $0x40] sm:%s213] %v238
                %v240 = vld [vmem:[%s220 + $0x120] sm:%s213]
                %241 = vst [vmem:[%s221 + $0x48] sm:%s213] %v240
                %v242 = vld [vmem:[%s220 + $0x140] sm:%s213]
                %243 = vst [vmem:[%s221 + $0x50] sm:%s213] %v242
                %v244 = vld [vmem:[%s220 + $0x160] sm:%s213]
                %245 = vst [vmem:[%s221 + $0x58] sm:%s213] %v244
                %v246 = vld [vmem:[%s220 + $0x180] sm:%s213]
                %247 = vst [vmem:[%s221 + $0x60] sm:%s213] %v246
                %v248 = vld [vmem:[%s220 + $0x1a0] sm:%s213]
                %249 = vst [vmem:[%s221 + $0x68] sm:%s213] %v248
                %v250 = vld [vmem:[%s220 + $0x1c0] sm:%s213]
                %251 = vst [vmem:[%s221 + $0x70] sm:%s213] %v250
                %v252 = vld [vmem:[%s220 + $0x1e0] sm:%s213]
                %253 = vst [vmem:[%s221 + $0x78] sm:%s213] %v252
                %v254 = vld [vmem:[%s220 + $0x200] sm:%s213]
                %255 = vst [vmem:[%s221 + $0x80] sm:%s213] %v254
                %v256 = vld [vmem:[%s220 + $0x220] sm:%s213]
                %257 = vst [vmem:[%s221 + $0x88] sm:%s213] %v256
                %v258 = vld [vmem:[%s220 + $0x240] sm:%s213]
                %259 = vst [vmem:[%s221 + $0x90] sm:%s213] %v258
                %v260 = vld [vmem:[%s220 + $0x260] sm:%s213]
                %261 = vst [vmem:[%s221 + $0x98] sm:%s213] %v260
                %v262 = vld [vmem:[%s220 + $0x280] sm:%s213]
                %263 = vst [vmem:[%s221 + $0xa0] sm:%s213] %v262
                %v264 = vld [vmem:[%s220 + $0x2a0] sm:%s213]
                %265 = vst [vmem:[%s221 + $0xa8] sm:%s213] %v264
                %v266 = vld [vmem:[%s220 + $0x2c0] sm:%s213]
                %267 = vst [vmem:[%s221 + $0xb0] sm:%s213] %v266
                %v268 = vld [vmem:[%s220 + $0x2e0] sm:%s213]
                %269 = vst [vmem:[%s221 + $0xb8] sm:%s213] %v268
                %v270 = vld [vmem:[%s220 + $0x300] sm:%s213]
                %271 = vst [vmem:[%s221 + $0xc0] sm:%s213] %v270
                %v272 = vld [vmem:[%s220 + $0x320] sm:%s213]
                %273 = vst [vmem:[%s221 + $0xc8] sm:%s213] %v272
                %v274 = vld [vmem:[%s220 + $0x340] sm:%s213]
                %275 = vst [vmem:[%s221 + $0xd0] sm:%s213] %v274
                %v276 = vld [vmem:[%s220 + $0x360] sm:%s213]
                %277 = vst [vmem:[%s221 + $0xd8] sm:%s213] %v276
                %v278 = vld [vmem:[%s220 + $0x380] sm:%s213]
                %279 = vst [vmem:[%s221 + $0xe0] sm:%s213] %v278
                %v280 = vld [vmem:[%s220 + $0x3a0] sm:%s213]
                %281 = vst [vmem:[%s221 + $0xe8] sm:%s213] %v280
                %v282 = vld [vmem:[%s220 + $0x3c0] sm:%s213]
                %283 = vst [vmem:[%s221 + $0xf0] sm:%s213] %v282
                %v284 = vld [vmem:[%s220 + $0x3e0] sm:%s213]
                %285 = vst [vmem:[%s221 + $0xf8] sm:%s213] %v284
                %v286 = vld [vmem:[%s220 + $0x400] sm:%s213]
                %287 = vst [vmem:[%s221 + $0x100] sm:%s213] %v286
                %v288 = vld [vmem:[%s220 + $0x420] sm:%s213]
                %289 = vst [vmem:[%s221 + $0x108] sm:%s213] %v288
                %v290 = vld [vmem:[%s220 + $0x440] sm:%s213]
                %291 = vst [vmem:[%s221 + $0x110] sm:%s213] %v290
                %v292 = vld [vmem:[%s220 + $0x460] sm:%s213]
                %293 = vst [vmem:[%s221 + $0x118] sm:%s213] %v292
                %v294 = vld [vmem:[%s220 + $0x480] sm:%s213]
                %295 = vst [vmem:[%s221 + $0x120] sm:%s213] %v294
                %v296 = vld [vmem:[%s220 + $0x4a0] sm:%s213]
                %297 = vst [vmem:[%s221 + $0x128] sm:%s213] %v296
                %v298 = vld [vmem:[%s220 + $0x4c0] sm:%s213]
                %299 = vst [vmem:[%s221 + $0x130] sm:%s213] %v298
                %v300 = vld [vmem:[%s220 + $0x4e0] sm:%s213]
                %301 = vst [vmem:[%s221 + $0x138] sm:%s213] %v300
                %v302 = vld [vmem:[%s220 + $0x500] sm:%s213]
                %303 = vst [vmem:[%s221 + $0x140] sm:%s213] %v302
                %v304 = vld [vmem:[%s220 + $0x520] sm:%s213]
                %305 = vst [vmem:[%s221 + $0x148] sm:%s213] %v304
                %v306 = vld [vmem:[%s220 + $0x540] sm:%s213]
                %307 = vst [vmem:[%s221 + $0x150] sm:%s213] %v306
                %v308 = vld [vmem:[%s220 + $0x560] sm:%s213]
                %309 = vst [vmem:[%s221 + $0x158] sm:%s213] %v308
                %v310 = vld [vmem:[%s220 + $0x580] sm:%s213]
                %311 = vst [vmem:[%s221 + $0x160] sm:%s213] %v310
                %v312 = vld [vmem:[%s220 + $0x5a0] sm:%s213]
                %313 = vst [vmem:[%s221 + $0x168] sm:%s213] %v312
                %v314 = vld [vmem:[%s220 + $0x5c0] sm:%s213]
                %315 = vst [vmem:[%s221 + $0x170] sm:%s213] %v314
                %v316 = vld [vmem:[%s220 + $0x5e0] sm:%s213]
                %317 = vst [vmem:[%s221 + $0x178] sm:%s213] %v316
                %v318 = vld [vmem:[%s220 + $0x600] sm:%s213]
                %319 = vst [vmem:[%s221 + $0x180] sm:%s213] %v318
                %v320 = vld [vmem:[%s220 + $0x620] sm:%s213]
                %321 = vst [vmem:[%s221 + $0x188] sm:%s213] %v320
                %v322 = vld [vmem:[%s220 + $0x640] sm:%s213]
                %323 = vst [vmem:[%s221 + $0x190] sm:%s213] %v322
                %v324 = vld [vmem:[%s220 + $0x660] sm:%s213]
                %325 = vst [vmem:[%s221 + $0x198] sm:%s213] %v324
                %v326 = vld [vmem:[%s220 + $0x680] sm:%s213]
                %327 = vst [vmem:[%s221 + $0x1a0] sm:%s213] %v326
                %v328 = vld [vmem:[%s220 + $0x6a0] sm:%s213]
                %329 = vst [vmem:[%s221 + $0x1a8] sm:%s213] %v328
                %v330 = vld [vmem:[%s220 + $0x6c0] sm:%s213]
                %331 = vst [vmem:[%s221 + $0x1b0] sm:%s213] %v330
                %v332 = vld [vmem:[%s220 + $0x6e0] sm:%s213]
                %333 = vst [vmem:[%s221 + $0x1b8] sm:%s213] %v332
                %v334 = vld [vmem:[%s220 + $0x700] sm:%s213]
                %335 = vst [vmem:[%s221 + $0x1c0] sm:%s213] %v334
                %v336 = vld [vmem:[%s220 + $0x720] sm:%s213]
                %337 = vst [vmem:[%s221 + $0x1c8] sm:%s213] %v336
                %v338 = vld [vmem:[%s220 + $0x740] sm:%s213]
                %339 = vst [vmem:[%s221 + $0x1d0] sm:%s213] %v338
                %v340 = vld [vmem:[%s220 + $0x760] sm:%s213]
                %341 = vst [vmem:[%s221 + $0x1d8] sm:%s213] %v340
                %v342 = vld [vmem:[%s220 + $0x780] sm:%s213]
                %343 = vst [vmem:[%s221 + $0x1e0] sm:%s213] %v342
                %v344 = vld [vmem:[%s220 + $0x7a0] sm:%s213]
                %345 = vst [vmem:[%s221 + $0x1e8] sm:%s213] %v344
                %v346 = vld [vmem:[%s220 + $0x7c0] sm:%s213]
                %347 = vst [vmem:[%s221 + $0x1f0] sm:%s213] %v346
                %v348 = vld [vmem:[%s220 + $0x7e0] sm:%s213]
                %349 = vst [vmem:[%s221 + $0x1f8] sm:%s213] %v348
              $region60: #{blazeneo_forward.13} parent=54 // loop_footer
                %s219 = sadd.s32 1, %s215
              $region61: #{blazeneo_forward.13} parent=54 // loop_footer_branch
                %214 = sbr.rel target = $region57
              $region62: #{blazeneo_forward.13} parent=54 // loop_exit
                _
            $region55: #{blazeneo_forward.13} parent=46 // pred_fallthru
              _
          $region47: #{blazeneo_forward.13} parent=42 // pred_fallthru
            _
          %490 = vnop
        $region43: #{blazeneo_forward.13} parent=15 // pred_fallthru
          _
        // Predicated region
        $region78: #{blazeneo_forward.13} parent=15 // pred_check
          %p491 = pneg %p104
        $region79: #{blazeneo_forward.13} parent=15 // pred_check_branch
          %493 = sbr.rel (%p491) target = $region81
        $region80: #{blazeneo_forward.13} parent=15 // pred_region
          %s494 = smul.u32 2, %s17
          %p495 = scmp.lt.s32.totalorder %s494, 7
          %s496 = scalar_select %p495, %s494, 7
          %s497 = scalar_lea.vmem %s2, %s496
          %s498 = smul.u32 2, %s17
        $region81: #{blazeneo_forward.13} parent=15 // pred_fallthru
          _
      $region16: #{blazeneo_forward.13} parent=5 // pred_fallthru
        _
      %p499 = scmp.le.s32.totalorder 1, %s9
      %p500 = scmp.lt.s32.totalorder %s9, 49
      %p501 = pnand %p499, %p500
      %p502 = pneg %p501
      // Predicated region
      $region82: #{blazeneo_forward.13} parent=5 // pred_check
        _
      $region83: #{blazeneo_forward.13} parent=5 // pred_check_branch
        %504 = sbr.rel (%p501) target = $region85
      $region84: #{blazeneo_forward.13} parent=5 // pred_region
        %s505 = ssub.s32 %s9, 1
        %s506 = sand.u32 %s43, 1
        %s507 = sand.u32 %s43, 1
        %s508 = smul.addr %s507, 32
        %s509 = scalar_lea.vmem [#allocation3], %s508
        // Predicated region
        $region86: #{blazeneo_forward.13} parent=84 // pred_check
          %p510 = pneg %p56
        $region87: #{blazeneo_forward.13} parent=84 // pred_check_branch
          %512 = sbr.rel (%p510) target = $region89
        $region88: #{blazeneo_forward.13} parent=84 // pred_region
          _
        $region89: #{blazeneo_forward.13} parent=84 // pred_fallthru
          _
        %s513 = sand.u32 %s71, 1
        %s514 = sand.u32 %s71, 1
        %s515 = smul.addr %s514, 512
        %s516 = scalar_lea.vmem [#allocation4], %s515
        // Predicated region
        $region90: #{blazeneo_forward.13} parent=84 // pred_check
          %p517 = pneg %p84
        $region91: #{blazeneo_forward.13} parent=84 // pred_check_branch
          %519 = sbr.rel (%p517) target = $region93
        $region92: #{blazeneo_forward.13} parent=84 // pred_region
          _
        $region93: #{blazeneo_forward.13} parent=84 // pred_fallthru
          _
        %s520 = sand.u32 %s43, 1
        %s521 = sand.u32 %s43, 1
        %s522 = smul.addr %s521, 32
        %s523 = scalar_lea.vmem [#allocation3], %s522
        %p524 = pneg %p56
        %p525 = pneg %p53
        %s526 = sand.u32 %s71, 1
        %s527 = sand.u32 %s71, 1
        %s528 = smul.addr %s527, 512
        %s529 = scalar_lea.vmem [#allocation4], %s528
        %p530 = pneg %p84
        %p531 = pneg %p81
        %s532 = smul.u32 2, %s20
        %p533 = scmp.lt.s32.totalorder %s532, 7
        %s534 = scalar_select %p533, %s532, 7
        %s535 = scalar_lea.vmem %s2, %s534
        %p536 = pneg %p110
        %p537 = pneg %p107
        %p538 = pneg %p138
        %p539 = pneg %p135
        %s540 = sand.u32 %s125, 1
        %s541 = sand.u32 %s125, 1
        %s542 = smul.addr %s541, 16
        %s543 = scalar_lea.vmem [#allocation5], %s542
        %s544 = smul.u32 2, %s19
        %s545 = smul.u32 4, %s21
        %s546 = smul.u32 64, %s21
        %s547 = smul.u32 2, %s20
        %s548 = smul.u32 2, %s20
        %p549 = scmp.lt.s32.totalorder %s548, 7
        %s550 = scalar_select %p549, %s548, 7
        %s551 = scalar_lea.vmem %s2, %s550
        %s552 = smul.u32 2, %s20
        %s553 = smul.u32 2, %s19
        %s554 = smul.u32 2, %s20
        %p555 = scmp.eq.s32.totalorder %s21, 0
        // Predicated region
        $region94: #{blazeneo_forward.13} parent=84 // pred_check
          %p556 = pneg %p555
        $region95: #{blazeneo_forward.13} parent=84 // pred_check_branch
          %558 = sbr.rel (%p556) target = $region97
        $region96: #{blazeneo_forward.13} parent=84 // pred_region
          %v559 = vld [vmem:[%s551] sm:$0x3]
          %v561 = vperm.slane %v559, 0
          %v562 = vperm.slane %v559, 1
          %565 = vst [vmem:[#allocation2] sm:$0xff] %v561
          %566 = vst [vmem:[#allocation2 + $0x8] sm:$0xff] %v562
          %567 = vst [vmem:[#allocation2 + $0x10] sm:$0xff] %v561
          %568 = vst [vmem:[#allocation2 + $0x18] sm:$0xff] %v562
        $region97: #{blazeneo_forward.13} parent=84 // pred_fallthru
          _
        %v569 = vld [vmem:[#allocation2] sm:$0xff]
        %v570 = vld [vmem:[#allocation2 + $0x8] sm:$0xff]
        %v571 = vld [vmem:[#allocation2 + $0x10] sm:$0xff]
        %v572 = vld [vmem:[#allocation2 + $0x18] sm:$0xff]
        %v573 = vld [vmem:[%s509] sm:$0xff]
        %v574 = vld [vmem:[%s509 + $0x8] sm:$0xff]
        %v575 = vld [vmem:[%s509 + $0x10] sm:$0xff]
        %v576 = vld [vmem:[%s509 + $0x18] sm:$0xff]
        %v577 = vld [vmem:[%s516] sm:$0xff]
        %v578 = vld [vmem:[%s516 + $0x8] sm:$0xff]
        %v579 = vld [vmem:[%s516 + $0x10] sm:$0xff]
        %v580 = vld [vmem:[%s516 + $0x18] sm:$0xff]
        %v581 = vld [vmem:[%s516 + $0x20] sm:$0xff]
        %v582 = vld [vmem:[%s516 + $0x28] sm:$0xff]
        %v583 = vld [vmem:[%s516 + $0x30] sm:$0xff]
        %v584 = vld [vmem:[%s516 + $0x38] sm:$0xff]
        %v585 = vld [vmem:[%s516 + $0x40] sm:$0xff]
        %v586 = vld [vmem:[%s516 + $0x48] sm:$0xff]
        %v587 = vld [vmem:[%s516 + $0x50] sm:$0xff]
        %v588 = vld [vmem:[%s516 + $0x58] sm:$0xff]
        %v589 = vld [vmem:[%s516 + $0x60] sm:$0xff]
        %v590 = vld [vmem:[%s516 + $0x68] sm:$0xff]
        %v591 = vld [vmem:[%s516 + $0x70] sm:$0xff]
        %v592 = vld [vmem:[%s516 + $0x78] sm:$0xff]
        %v593 = vld [vmem:[%s516 + $0x80] sm:$0xff]
        %v594 = vld [vmem:[%s516 + $0x88] sm:$0xff]
        %v595 = vld [vmem:[%s516 + $0x90] sm:$0xff]
        %v596 = vld [vmem:[%s516 + $0x98] sm:$0xff]
        %v597 = vld [vmem:[%s516 + $0xa0] sm:$0xff]
        %v598 = vld [vmem:[%s516 + $0xa8] sm:$0xff]
        %v599 = vld [vmem:[%s516 + $0xb0] sm:$0xff]
        %v600 = vld [vmem:[%s516 + $0xb8] sm:$0xff]
        %v601 = vld [vmem:[%s516 + $0xc0] sm:$0xff]
        %v602 = vld [vmem:[%s516 + $0xc8] sm:$0xff]
        %v603 = vld [vmem:[%s516 + $0xd0] sm:$0xff]
        %v604 = vld [vmem:[%s516 + $0xd8] sm:$0xff]
        %v605 = vld [vmem:[%s516 + $0xe0] sm:$0xff]
        %v606 = vld [vmem:[%s516 + $0xe8] sm:$0xff]
        %v607 = vld [vmem:[%s516 + $0xf0] sm:$0xff]
        %v608 = vld [vmem:[%s516 + $0xf8] sm:$0xff]
        %v609 = vld [vmem:[%s516 + $0x100] sm:$0xff]
        %v610 = vld [vmem:[%s516 + $0x108] sm:$0xff]
        %v611 = vld [vmem:[%s516 + $0x110] sm:$0xff]
        %v612 = vld [vmem:[%s516 + $0x118] sm:$0xff]
        %v613 = vld [vmem:[%s516 + $0x120] sm:$0xff]
        %v614 = vld [vmem:[%s516 + $0x128] sm:$0xff]
        %v615 = vld [vmem:[%s516 + $0x130] sm:$0xff]
        %v616 = vld [vmem:[%s516 + $0x138] sm:$0xff]
        %v617 = vld [vmem:[%s516 + $0x140] sm:$0xff]
        %v618 = vld [vmem:[%s516 + $0x148] sm:$0xff]
        %v619 = vld [vmem:[%s516 + $0x150] sm:$0xff]
        %v620 = vld [vmem:[%s516 + $0x158] sm:$0xff]
        %v621 = vld [vmem:[%s516 + $0x160] sm:$0xff]
        %v622 = vld [vmem:[%s516 + $0x168] sm:$0xff]
        %v623 = vld [vmem:[%s516 + $0x170] sm:$0xff]
        %v624 = vld [vmem:[%s516 + $0x178] sm:$0xff]
        %v625 = vld [vmem:[%s516 + $0x180] sm:$0xff]
        %v626 = vld [vmem:[%s516 + $0x188] sm:$0xff]
        %v627 = vld [vmem:[%s516 + $0x190] sm:$0xff]
        %v628 = vld [vmem:[%s516 + $0x198] sm:$0xff]
        %v629 = vld [vmem:[%s516 + $0x1a0] sm:$0xff]
        %v630 = vld [vmem:[%s516 + $0x1a8] sm:$0xff]
        %v631 = vld [vmem:[%s516 + $0x1b0] sm:$0xff]
        %v632 = vld [vmem:[%s516 + $0x1b8] sm:$0xff]
        %v633 = vld [vmem:[%s516 + $0x1c0] sm:$0xff]
        %v634 = vld [vmem:[%s516 + $0x1c8] sm:$0xff]
        %v635 = vld [vmem:[%s516 + $0x1d0] sm:$0xff]
        %v636 = vld [vmem:[%s516 + $0x1d8] sm:$0xff]
        %v637 = vld [vmem:[%s516 + $0x1e0] sm:$0xff]
        %v638 = vld [vmem:[%s516 + $0x1e8] sm:$0xff]
        %v639 = vld [vmem:[%s516 + $0x1f0] sm:$0xff]
        %v640 = vld [vmem:[%s516 + $0x1f8] sm:$0xff]
        %v645 = vunpack.c.l.b16 %v573
        %v646 = vunpack.c.h.b16 %v573
        %v647 = vunpack.c.l.b16 %v574
        %v648 = vunpack.c.h.b16 %v574
        %v649 = vunpack.c.l.b16 %v575
        %v650 = vunpack.c.h.b16 %v575
        %v651 = vunpack.c.l.b16 %v576
        %v652 = vunpack.c.h.b16 %v576
        %v653 = vpack.c.b16 %v649, %v645
        %v654 = vpack.c.b16 %v650, %v646
        %v655 = vpack.c.b16 %v651, %v647
        %v656 = vpack.c.b16 %v652, %v648
        %v725 = vunpack.c.l.b16 %v577
        %v726 = vunpack.c.h.b16 %v577
        %v727 = vunpack.c.l.b16 %v578
        %v728 = vunpack.c.h.b16 %v578
        %v729 = vunpack.c.l.b16 %v579
        %v730 = vunpack.c.h.b16 %v579
        %v731 = vunpack.c.l.b16 %v580
        %v732 = vunpack.c.h.b16 %v580
        %v733 = vunpack.c.l.b16 %v581
        %v734 = vunpack.c.h.b16 %v581
        %v735 = vunpack.c.l.b16 %v582
        %v736 = vunpack.c.h.b16 %v582
        %v737 = vunpack.c.l.b16 %v583
        %v738 = vunpack.c.h.b16 %v583
        %v739 = vunpack.c.l.b16 %v584
        %v740 = vunpack.c.h.b16 %v584
        %v741 = vunpack.c.l.b16 %v585
        %v742 = vunpack.c.h.b16 %v585
        %v743 = vunpack.c.l.b16 %v586
        %v744 = vunpack.c.h.b16 %v586
        %v745 = vunpack.c.l.b16 %v587
        %v746 = vunpack.c.h.b16 %v587
        %v747 = vunpack.c.l.b16 %v588
        %v748 = vunpack.c.h.b16 %v588
        %v749 = vunpack.c.l.b16 %v589
        %v750 = vunpack.c.h.b16 %v589
        %v751 = vunpack.c.l.b16 %v590
        %v752 = vunpack.c.h.b16 %v590
        %v753 = vunpack.c.l.b16 %v591
        %v754 = vunpack.c.h.b16 %v591
        %v755 = vunpack.c.l.b16 %v592
        %v756 = vunpack.c.h.b16 %v592
        %v757 = vunpack.c.l.b16 %v593
        %v758 = vunpack.c.h.b16 %v593
        %v759 = vunpack.c.l.b16 %v594
        %v760 = vunpack.c.h.b16 %v594
        %v761 = vunpack.c.l.b16 %v595
        %v762 = vunpack.c.h.b16 %v595
        %v763 = vunpack.c.l.b16 %v596
        %v764 = vunpack.c.h.b16 %v596
        %v765 = vunpack.c.l.b16 %v597
        %v766 = vunpack.c.h.b16 %v597
        %v767 = vunpack.c.l.b16 %v598
        %v768 = vunpack.c.h.b16 %v598
        %v769 = vunpack.c.l.b16 %v599
        %v770 = vunpack.c.h.b16 %v599
        %v771 = vunpack.c.l.b16 %v600
        %v772 = vunpack.c.h.b16 %v600
        %v773 = vunpack.c.l.b16 %v601
        %v774 = vunpack.c.h.b16 %v601
        %v775 = vunpack.c.l.b16 %v602
        %v776 = vunpack.c.h.b16 %v602
        %v777 = vunpack.c.l.b16 %v603
        %v778 = vunpack.c.h.b16 %v603
        %v779 = vunpack.c.l.b16 %v604
        %v780 = vunpack.c.h.b16 %v604
        %v781 = vunpack.c.l.b16 %v605
        %v782 = vunpack.c.h.b16 %v605
        %v783 = vunpack.c.l.b16 %v606
        %v784 = vunpack.c.h.b16 %v606
        %v785 = vunpack.c.l.b16 %v607
        %v786 = vunpack.c.h.b16 %v607
        %v787 = vunpack.c.l.b16 %v608
        %v788 = vunpack.c.h.b16 %v608
        %v789 = vunpack.c.l.b16 %v609
        %v790 = vunpack.c.h.b16 %v609
        %v791 = vunpack.c.l.b16 %v610
        %v792 = vunpack.c.h.b16 %v610
        %v793 = vunpack.c.l.b16 %v611
        %v794 = vunpack.c.h.b16 %v611
        %v795 = vunpack.c.l.b16 %v612
        %v796 = vunpack.c.h.b16 %v612
        %v797 = vunpack.c.l.b16 %v613
        %v798 = vunpack.c.h.b16 %v613
        %v799 = vunpack.c.l.b16 %v614
        %v800 = vunpack.c.h.b16 %v614
        %v801 = vunpack.c.l.b16 %v615
        %v802 = vunpack.c.h.b16 %v615
        %v803 = vunpack.c.l.b16 %v616
        %v804 = vunpack.c.h.b16 %v616
        %v805 = vunpack.c.l.b16 %v617
        %v806 = vunpack.c.h.b16 %v617
        %v807 = vunpack.c.l.b16 %v618
        %v808 = vunpack.c.h.b16 %v618
        %v809 = vunpack.c.l.b16 %v619
        %v810 = vunpack.c.h.b16 %v619
        %v811 = vunpack.c.l.b16 %v620
        %v812 = vunpack.c.h.b16 %v620
        %v813 = vunpack.c.l.b16 %v621
        %v814 = vunpack.c.h.b16 %v621
        %v815 = vunpack.c.l.b16 %v622
        %v816 = vunpack.c.h.b16 %v622
        %v817 = vunpack.c.l.b16 %v623
        %v818 = vunpack.c.h.b16 %v623
        %v819 = vunpack.c.l.b16 %v624
        %v820 = vunpack.c.h.b16 %v624
        %v821 = vunpack.c.l.b16 %v625
        %v822 = vunpack.c.h.b16 %v625
        %v823 = vunpack.c.l.b16 %v626
        %v824 = vunpack.c.h.b16 %v626
        %v825 = vunpack.c.l.b16 %v627
        %v826 = vunpack.c.h.b16 %v627
        %v827 = vunpack.c.l.b16 %v628
        %v828 = vunpack.c.h.b16 %v628
        %v829 = vunpack.c.l.b16 %v629
        %v830 = vunpack.c.h.b16 %v629
        %v831 = vunpack.c.l.b16 %v630
        %v832 = vunpack.c.h.b16 %v630
        %v833 = vunpack.c.l.b16 %v631
        %v834 = vunpack.c.h.b16 %v631
        %v835 = vunpack.c.l.b16 %v632
        %v836 = vunpack.c.h.b16 %v632
        %v837 = vunpack.c.l.b16 %v633
        %v838 = vunpack.c.h.b16 %v633
        %v839 = vunpack.c.l.b16 %v634
        %v840 = vunpack.c.h.b16 %v634
        %v841 = vunpack.c.l.b16 %v635
        %v842 = vunpack.c.h.b16 %v635
        %v843 = vunpack.c.l.b16 %v636
        %v844 = vunpack.c.h.b16 %v636
        %v845 = vunpack.c.l.b16 %v637
        %v846 = vunpack.c.h.b16 %v637
        %v847 = vunpack.c.l.b16 %v638
        %v848 = vunpack.c.h.b16 %v638
        %v849 = vunpack.c.l.b16 %v639
        %v850 = vunpack.c.h.b16 %v639
        %v851 = vunpack.c.l.b16 %v640
        %v852 = vunpack.c.h.b16 %v640
        %v853 = vpack.c.b16 %v727, %v725
        %v854 = vpack.c.b16 %v728, %v726
        %v855 = vpack.c.b16 %v731, %v729
        %v856 = vpack.c.b16 %v732, %v730
        %v857 = vpack.c.b16 %v735, %v733
        %v858 = vpack.c.b16 %v736, %v734
        %v859 = vpack.c.b16 %v739, %v737
        %v860 = vpack.c.b16 %v740, %v738
        %v861 = vpack.c.b16 %v743, %v741
        %v862 = vpack.c.b16 %v744, %v742
        %v863 = vpack.c.b16 %v747, %v745
        %v864 = vpack.c.b16 %v748, %v746
        %v865 = vpack.c.b16 %v751, %v749
        %v866 = vpack.c.b16 %v752, %v750
        %v867 = vpack.c.b16 %v755, %v753
        %v868 = vpack.c.b16 %v756, %v754
        %v869 = vpack.c.b16 %v759, %v757
        %v870 = vpack.c.b16 %v760, %v758
        %v871 = vpack.c.b16 %v763, %v761
        %v872 = vpack.c.b16 %v764, %v762
        %v873 = vpack.c.b16 %v767, %v765
        %v874 = vpack.c.b16 %v768, %v766
        %v875 = vpack.c.b16 %v771, %v769
        %v876 = vpack.c.b16 %v772, %v770
        %v877 = vpack.c.b16 %v775, %v773
        %v878 = vpack.c.b16 %v776, %v774
        %v879 = vpack.c.b16 %v779, %v777
        %v880 = vpack.c.b16 %v780, %v778
        %v881 = vpack.c.b16 %v783, %v781
        %v882 = vpack.c.b16 %v784, %v782
        %v883 = vpack.c.b16 %v787, %v785
        %v884 = vpack.c.b16 %v788, %v786
        %v885 = vpack.c.b16 %v791, %v789
        %v886 = vpack.c.b16 %v792, %v790
        %v887 = vpack.c.b16 %v795, %v793
        %v888 = vpack.c.b16 %v796, %v794
        %v889 = vpack.c.b16 %v799, %v797
        %v890 = vpack.c.b16 %v800, %v798
        %v891 = vpack.c.b16 %v803, %v801
        %v892 = vpack.c.b16 %v804, %v802
        %v893 = vpack.c.b16 %v807, %v805
        %v894 = vpack.c.b16 %v808, %v806
        %v895 = vpack.c.b16 %v811, %v809
        %v896 = vpack.c.b16 %v812, %v810
        %v897 = vpack.c.b16 %v815, %v813
        %v898 = vpack.c.b16 %v816, %v814
        %v899 = vpack.c.b16 %v819, %v817
        %v900 = vpack.c.b16 %v820, %v818
        %v901 = vpack.c.b16 %v823, %v821
        %v902 = vpack.c.b16 %v824, %v822
        %v903 = vpack.c.b16 %v827, %v825
        %v904 = vpack.c.b16 %v828, %v826
        %v905 = vpack.c.b16 %v831, %v829
        %v906 = vpack.c.b16 %v832, %v830
        %v907 = vpack.c.b16 %v835, %v833
        %v908 = vpack.c.b16 %v836, %v834
        %v909 = vpack.c.b16 %v839, %v837
        %v910 = vpack.c.b16 %v840, %v838
        %v911 = vpack.c.b16 %v843, %v841
        %v912 = vpack.c.b16 %v844, %v842
        %v913 = vpack.c.b16 %v847, %v845
        %v914 = vpack.c.b16 %v848, %v846
        %v915 = vpack.c.b16 %v851, %v849
        %v916 = vpack.c.b16 %v852, %v850
        %981 = vmatpush.bf16.msra.mxu0 %v867
        %982 = vmatpush.bf16.msra.mxu0 %v865
        %983 = vmatpush.bf16.msra.mxu0 %v863
        %984 = vmatpush.bf16.msra.mxu0 %v861
        %985 = vmatpush.bf16.msra.mxu0 %v859
        %986 = vmatpush.bf16.msra.mxu0 %v857
        %987 = vmatpush.bf16.msra.mxu0 %v855
        %988 = vmatpush.bf16.msra.mxu0 %v853
        %989 = vmatmul.bf16.gmra.mxu0 %v653
        %v990 = vpop.f32.mrf.mxu0
        %v991 = vadd.f32 0.0, %v990
        %v992 = vpop.f32.mrf.mxu0
        %v993 = vadd.f32 0.0, %v992
        %994 = vdwg.mxu0
        %995 = vmatpush.bf16.msra.mxu0 %v883
        %996 = vmatpush.bf16.msra.mxu0 %v881
        %997 = vmatpush.bf16.msra.mxu0 %v879
        %998 = vmatpush.bf16.msra.mxu0 %v877
        %999 = vmatpush.bf16.msra.mxu0 %v875
        %1000 = vmatpush.bf16.msra.mxu0 %v873
        %1001 = vmatpush.bf16.msra.mxu0 %v871
        %1002 = vmatpush.bf16.msra.mxu0 %v869
        %1003 = vmatmul.bf16.gmra.mxu0 %v654
        %v1004 = vpop.f32.mrf.mxu0
        %v1005 = vadd.f32 %v991, %v1004
        %v1006 = vpop.f32.mrf.mxu0
        %v1007 = vadd.f32 %v993, %v1006
        %1008 = vdwg.mxu0
        %1009 = vmatpush.bf16.msra.mxu0 %v899
        %1010 = vmatpush.bf16.msra.mxu0 %v897
        %1011 = vmatpush.bf16.msra.mxu0 %v895
        %1012 = vmatpush.bf16.msra.mxu0 %v893
        %1013 = vmatpush.bf16.msra.mxu0 %v891
        %1014 = vmatpush.bf16.msra.mxu0 %v889
        %1015 = vmatpush.bf16.msra.mxu0 %v887
        %1016 = vmatpush.bf16.msra.mxu0 %v885
        %1017 = vmatmul.bf16.gmra.mxu0 %v655
        %v1018 = vpop.f32.mrf.mxu0
        %v1019 = vadd.f32 %v1005, %v1018
        %v1020 = vpop.f32.mrf.mxu0
        %v1021 = vadd.f32 %v1007, %v1020
        %1022 = vdwg.mxu0
        %1023 = vmatpush.bf16.msra.mxu0 %v915
        %1024 = vmatpush.bf16.msra.mxu0 %v913
        %1025 = vmatpush.bf16.msra.mxu0 %v911
        %1026 = vmatpush.bf16.msra.mxu0 %v909
        %1027 = vmatpush.bf16.msra.mxu0 %v907
        %1028 = vmatpush.bf16.msra.mxu0 %v905
        %1029 = vmatpush.bf16.msra.mxu0 %v903
        %1030 = vmatpush.bf16.msra.mxu0 %v901
        %1031 = vmatmul.bf16.gmra.mxu0 %v656
        %v1032 = vpop.f32.mrf.mxu0
        %v1033 = vadd.f32 %v1019, %v1032
        %v1034 = vpop.f32.mrf.mxu0
        %v1035 = vadd.f32 %v1021, %v1034
        %1036 = vdwg.mxu0
        %1037 = vmatpush.bf16.msra.mxu0 %v868
        %1038 = vmatpush.bf16.msra.mxu0 %v866
        %1039 = vmatpush.bf16.msra.mxu0 %v864
        %1040 = vmatpush.bf16.msra.mxu0 %v862
        %1041 = vmatpush.bf16.msra.mxu0 %v860
        %1042 = vmatpush.bf16.msra.mxu0 %v858
        %1043 = vmatpush.bf16.msra.mxu0 %v856
        %1044 = vmatpush.bf16.msra.mxu0 %v854
        %1045 = vmatmul.bf16.gmra.mxu0 %v653
        %v1046 = vpop.f32.mrf.mxu0
        %v1047 = vadd.f32 0.0, %v1046
        %v1048 = vpop.f32.mrf.mxu0
        %v1049 = vadd.f32 0.0, %v1048
        %1050 = vdwg.mxu0
        %1051 = vmatpush.bf16.msra.mxu0 %v884
        %1052 = vmatpush.bf16.msra.mxu0 %v882
        %1053 = vmatpush.bf16.msra.mxu0 %v880
        %1054 = vmatpush.bf16.msra.mxu0 %v878
        %1055 = vmatpush.bf16.msra.mxu0 %v876
        %1056 = vmatpush.bf16.msra.mxu0 %v874
        %1057 = vmatpush.bf16.msra.mxu0 %v872
        %1058 = vmatpush.bf16.msra.mxu0 %v870
        %1059 = vmatmul.bf16.gmra.mxu0 %v654
        %v1060 = vpop.f32.mrf.mxu0
        %v1061 = vadd.f32 %v1047, %v1060
        %v1062 = vpop.f32.mrf.mxu0
        %v1063 = vadd.f32 %v1049, %v1062
        %1064 = vdwg.mxu0
        %1065 = vmatpush.bf16.msra.mxu0 %v900
        %1066 = vmatpush.bf16.msra.mxu0 %v898
        %1067 = vmatpush.bf16.msra.mxu0 %v896
        %1068 = vmatpush.bf16.msra.mxu0 %v894
        %1069 = vmatpush.bf16.msra.mxu0 %v892
        %1070 = vmatpush.bf16.msra.mxu0 %v890
        %1071 = vmatpush.bf16.msra.mxu0 %v888
        %1072 = vmatpush.bf16.msra.mxu0 %v886
        %1073 = vmatmul.bf16.gmra.mxu0 %v655
        %v1074 = vpop.f32.mrf.mxu0
        %v1075 = vadd.f32 %v1061, %v1074
        %v1076 = vpop.f32.mrf.mxu0
        %v1077 = vadd.f32 %v1063, %v1076
        %1078 = vdwg.mxu0
        %1079 = vmatpush.bf16.msra.mxu0 %v916
        %1080 = vmatpush.bf16.msra.mxu0 %v914
        %1081 = vmatpush.bf16.msra.mxu0 %v912
        %1082 = vmatpush.bf16.msra.mxu0 %v910
        %1083 = vmatpush.bf16.msra.mxu0 %v908
        %1084 = vmatpush.bf16.msra.mxu0 %v906
        %1085 = vmatpush.bf16.msra.mxu0 %v904
        %1086 = vmatpush.bf16.msra.mxu0 %v902
        %1087 = vmatmul.bf16.gmra.mxu0 %v656
        %v1088 = vpop.f32.mrf.mxu0
        %v1089 = vadd.f32 %v1075, %v1088
        %v1090 = vpop.f32.mrf.mxu0
        %v1091 = vadd.f32 %v1077, %v1090
        %1092 = vdwg.mxu0
        %v1093 = vadd.f32 %v569, %v1033
        %v1094 = vadd.f32 %v570, %v1089
        %v1095 = vadd.f32 %v571, %v1035
        %v1096 = vadd.f32 %v572, %v1091
        %1097 = vst [vmem:[#allocation2] sm:$0xff] %v1093
        %1098 = vst [vmem:[#allocation2 + $0x8] sm:$0xff] %v1094
        %1099 = vst [vmem:[#allocation2 + $0x10] sm:$0xff] %v1095
        %1100 = vst [vmem:[#allocation2 + $0x18] sm:$0xff] %v1096
        %p1101 = scmp.eq.s32.totalorder %s21, 11
        // Predicated region
        $region98: #{blazeneo_forward.13} parent=84 // pred_check
          %p1102 = pneg %p1101
        $region99: #{blazeneo_forward.13} parent=84 // pred_check_branch
          %1104 = sbr.rel (%p1102) target = $region101
        $region100: #{blazeneo_forward.13} parent=84 // pred_region
          %v1105 = vld [vmem:[#allocation2] sm:$0xff]
          %v1106 = vld [vmem:[#allocation2 + $0x8] sm:$0xff]
          %v1107 = vld [vmem:[#allocation2 + $0x10] sm:$0xff]
          %v1108 = vld [vmem:[#allocation2 + $0x18] sm:$0xff]
          %v1109 = vmax.f32 %v1105, 0.0
          %v1110 = vmax.f32 %v1106, 0.0
          %v1111 = vmax.f32 %v1107, 0.0
          %v1112 = vmax.f32 %v1108, 0.0
          %v1113 = vpack.c.bf16 %v1110, %v1109
          %v1114 = vpack.c.bf16 %v1112, %v1111
          %1115 = vst [vmem:[%s543] sm:$0xff] %v1113
          %1116 = vst [vmem:[%s543 + $0x8] sm:$0xff] %v1114
        $region101: #{blazeneo_forward.13} parent=84 // pred_fallthru
          _
        %s1117 = sand.u32 %s125, 1
        %s1118 = sand.u32 %s125, 1
        %s1119 = smul.addr %s1118, 16
        %s1120 = scalar_lea.vmem [#allocation5], %s1119
        // Predicated region
        $region102: #{blazeneo_forward.13} parent=84 // pred_check
          %p1121 = pneg %p135
        $region103: #{blazeneo_forward.13} parent=84 // pred_check_branch
          %1123 = sbr.rel (%p1121) target = $region105
        $region104: #{blazeneo_forward.13} parent=84 // pred_region
          %s1124 = smul.u32 2, %s19
          %s1125 = smul.u32 2, %s20
          %s1126 = smul.addr %s1124, 8
          %s1127 = sadd.s32 %s1125, %s1126
          %s1128 = smul.addr %s1127, 4
          %s1129 = scalar_lea.vmem %s3, %s1128
          // Predicated region
          $region106: #{blazeneo_forward.13} parent=104 // pred_check
            _
          $region107: #{blazeneo_forward.13} parent=104 // pred_check_branch
            %1131 = sbr.rel (0) target = $region109
          $region108: #{blazeneo_forward.13} parent=104 // pred_region
            // Predicated region
            $region110: #{blazeneo_forward.13} parent=108 // pred_check
              _
            $region111: #{blazeneo_forward.13} parent=108 // pred_check_branch
              %1133 = sbr.rel (0) target = $region113
            $region112: #{blazeneo_forward.13} parent=108 // pred_region
              // Predicated region
              $region125: #{blazeneo_forward.13} parent=112 // pred_check
                _
              $region126: #{blazeneo_forward.13} parent=112 // pred_check_branch
                %1151 = sbr.rel (0) target = $region128
              $region127: #{blazeneo_forward.13} parent=112 // pred_region
                loop: start=0, step=1, limit=1
                $region129: #{blazeneo_forward.13} parent=127 // loop_pre_header
                  _
                $region130: #{blazeneo_forward.13} parent=127 // loop_header
                  %s1153 = sphi 0, %s1157
                  %p1154 = scmp.ge.s32.totalorder %s1153, 1
                  %s1158 = sphi %s1120, %s1120
                  %s1159 = sphi %s1129, %s1129
                $region131: #{blazeneo_forward.13} parent=127 // loop_header_branch
                  %1156 = sbr.rel (%p1154) target = $region135
                $region132: #{blazeneo_forward.13} parent=127 // loop_body
                  %v1160 = vld [vmem:[%s1158] sm:$0xff]
                  %1161 = vst [vmem:[%s1159] sm:$0xff] %v1160
                  %v1162 = vld [vmem:[%s1158 + $0x8] sm:$0xff]
                  %1163 = vst [vmem:[%s1159 + $0x20] sm:$0xff] %v1162
                $region133: #{blazeneo_forward.13} parent=127 // loop_footer
                  %s1157 = sadd.s32 1, %s1153
                $region134: #{blazeneo_forward.13} parent=127 // loop_footer_branch
                  %1152 = sbr.rel target = $region130
                $region135: #{blazeneo_forward.13} parent=127 // loop_exit
                  _
              $region128: #{blazeneo_forward.13} parent=112 // pred_fallthru
                _
              // Predicated region
              $region136: #{blazeneo_forward.13} parent=112 // pred_check
                _
              $region137: #{blazeneo_forward.13} parent=112 // pred_check_branch
                %1165 = sbr.rel target = $region139
              $region138: #{blazeneo_forward.13} parent=112 // pred_region
                _
              $region139: #{blazeneo_forward.13} parent=112 // pred_fallthru
                _
            $region113: #{blazeneo_forward.13} parent=108 // pred_fallthru
              _
            // Predicated region
            $region114: #{blazeneo_forward.13} parent=108 // pred_check
              _
            $region115: #{blazeneo_forward.13} parent=108 // pred_check_branch
              %1135 = sbr.rel target = $region117
            $region116: #{blazeneo_forward.13} parent=108 // pred_region
              %s1137 = ssub.s32 256, 1
              loop: start=0, step=1, limit=1
              $region118: #{blazeneo_forward.13} parent=116 // loop_pre_header
                _
              $region119: #{blazeneo_forward.13} parent=116 // loop_header
                %s1139 = sphi 0, %s1143
                %p1140 = scmp.ge.s32.totalorder %s1139, 1
                %s1144 = sphi %s1120, %s1120
                %s1145 = sphi %s1129, %s1129
              $region120: #{blazeneo_forward.13} parent=116 // loop_header_branch
                %1142 = sbr.rel (%p1140) target = $region124
              $region121: #{blazeneo_forward.13} parent=116 // loop_body
                %v1146 = vld [vmem:[%s1144] sm:%s1137]
                %1147 = vst [vmem:[%s1145] sm:%s1137] %v1146
                %v1148 = vld [vmem:[%s1144 + $0x8] sm:%s1137]
                %1149 = vst [vmem:[%s1145 + $0x20] sm:%s1137] %v1148
              $region122: #{blazeneo_forward.13} parent=116 // loop_footer
                %s1143 = sadd.s32 1, %s1139
              $region123: #{blazeneo_forward.13} parent=116 // loop_footer_branch
                %1138 = sbr.rel target = $region119
              $region124: #{blazeneo_forward.13} parent=116 // loop_exit
                _
            $region117: #{blazeneo_forward.13} parent=108 // pred_fallthru
              _
          $region109: #{blazeneo_forward.13} parent=104 // pred_fallthru
            _
          %1166 = vnop
        $region105: #{blazeneo_forward.13} parent=84 // pred_fallthru
          _
      $region85: #{blazeneo_forward.13} parent=5 // pred_fallthru
        _
      %p1167 = scmp.le.s32.totalorder 2, %s9
      // Predicated region
      $region140: #{blazeneo_forward.13} parent=5 // pred_check
        %p1168 = pneg %p1167
      $region141: #{blazeneo_forward.13} parent=5 // pred_check_branch
        %1170 = sbr.rel (%p1168) target = $region143
      $region142: #{blazeneo_forward.13} parent=5 // pred_region
        %s1171 = ssub.s32 %s9, 2
        // Predicated region
        $region144: #{blazeneo_forward.13} parent=142 // pred_check
          %p1172 = pneg %p141
        $region145: #{blazeneo_forward.13} parent=142 // pred_check_branch
          %1174 = sbr.rel (%p1172) target = $region147
        $region146: #{blazeneo_forward.13} parent=142 // pred_region
          %s1175 = sand.u32 %s126, 1
          %s1176 = sand.u32 %s126, 1
          %s1177 = smul.addr %s1176, 16
          %s1178 = scalar_lea.vmem [#allocation5], %s1177
        $region147: #{blazeneo_forward.13} parent=142 // pred_fallthru
          _
      $region143: #{blazeneo_forward.13} parent=5 // pred_fallthru
        _
    $region6: #{blazeneo_forward.13} parent=1 // loop_footer
      %s13 = sadd.s32 1, %s9
    $region7: #{blazeneo_forward.13} parent=1 // loop_footer_branch
      %8 = sbr.rel target = $region3
    $region8: #{blazeneo_forward.13} parent=1 // loop_exit
      _

// kernel: blazeneo_forward.17
$region0: #{blazeneo_forward.17}
  #allocation0 [shape = 'u32[]', space=smem, size = 0x4, offset = 0x4, fixed_abs, tag = 'smem constant byte address 0x4 - core index']
  #allocation1 [shape = 'u32[72,128]{1,0:T(1,128)}', space=vmem, size = 0x9000, scoped, tag = 'internal scratch']
  %s0 = inlined_call_operand.vmem [shape: bf16[128,128], index: 0, kind: input, shape index: {}]
  %s1 = inlined_call_operand.vmem [shape: bf16[128,128], index: 1, kind: input, shape index: {}]
  %s2 = inlined_call_operand.vmem [shape: f32[1,128], index: 2, kind: input, shape index: {}]
  %s3 = inlined_call_operand.vmem [shape: bf16[128,128], index: 3, kind: input, shape index: {}]
  %s4 = inlined_call_operand.vmem [shape: f32[1,128], index: 4, kind: input, shape index: {}]
  %s5 = inlined_call_operand.vmem [shape: f32[128,128], index: 5, kind: output, shape index: {}]
  %s6 = sld [smem:[#allocation0]]
  $region30: #{blazeneo_forward.17} parent=0
    _
  %s8 = ssub.s32 1, %s6
  %s9 = scalar_select 0, %s8, %s6
  // Predicated region
  $region2: #{blazeneo_forward.17} parent=0 // pred_check
    _
  $region3: #{blazeneo_forward.17} parent=0 // pred_check_branch
    %11 = sbr.rel (0) target = $region5
  $region4: #{blazeneo_forward.17} parent=0 // pred_region
    _
  $region5: #{blazeneo_forward.17} parent=0 // pred_fallthru
    _
  // Predicated region
  $region6: #{blazeneo_forward.17} parent=0 // pred_check
    _
  $region7: #{blazeneo_forward.17} parent=0 // pred_check_branch
    %13 = sbr.rel (0) target = $region9
  $region8: #{blazeneo_forward.17} parent=0 // pred_region
    _
  $region9: #{blazeneo_forward.17} parent=0 // pred_fallthru
    _
  // Predicated region
  $region10: #{blazeneo_forward.17} parent=0 // pred_check
    _
  $region11: #{blazeneo_forward.17} parent=0 // pred_check_branch
    %15 = sbr.rel (0) target = $region13
  $region12: #{blazeneo_forward.17} parent=0 // pred_region
    _
  $region13: #{blazeneo_forward.17} parent=0 // pred_fallthru
    _
  // Predicated region
  $region14: #{blazeneo_forward.17} parent=0 // pred_check
    _
  $region15: #{blazeneo_forward.17} parent=0 // pred_check_branch
    %17 = sbr.rel (0) target = $region17
  $region16: #{blazeneo_forward.17} parent=0 // pred_region
    _
  $region17: #{blazeneo_forward.17} parent=0 // pred_fallthru
    _
  // Predicated region
  $region18: #{blazeneo_forward.17} parent=0 // pred_check
    _
  $region19: #{blazeneo_forward.17} parent=0 // pred_check_branch
    %19 = sbr.rel (0) target = $region21
  $region20: #{blazeneo_forward.17} parent=0 // pred_region
    _
  $region21: #{blazeneo_forward.17} parent=0 // pred_fallthru
    _
  %v20 = vld [vmem:[%s0] sm:$0xf]
  %v21 = vld [vmem:[%s0 + $0x4] sm:$0xf]
  %v22 = vld [vmem:[%s0 + $0x8] sm:$0xf]
  %v23 = vld [vmem:[%s0 + $0xc] sm:$0xf]
  %v24 = vld [vmem:[%s0 + $0x10] sm:$0xf]
  %v25 = vld [vmem:[%s0 + $0x14] sm:$0xf]
  %v26 = vld [vmem:[%s0 + $0x18] sm:$0xf]
  %v27 = vld [vmem:[%s0 + $0x1c] sm:$0xf]
  %v28 = vld [vmem:[%s0 + $0x20] sm:$0xf]
  %v29 = vld [vmem:[%s0 + $0x24] sm:$0xf]
  %v30 = vld [vmem:[%s0 + $0x28] sm:$0xf]
  %v31 = vld [vmem:[%s0 + $0x2c] sm:$0xf]
  %v32 = vld [vmem:[%s0 + $0x30] sm:$0xf]
  %v33 = vld [vmem:[%s0 + $0x34] sm:$0xf]
  %v34 = vld [vmem:[%s0 + $0x38] sm:$0xf]
  %v35 = vld [vmem:[%s0 + $0x3c] sm:$0xf]
  %v36 = vld [vmem:[%s1] sm:$0xf]
  %v37 = vld [vmem:[%s1 + $0x4] sm:$0xf]
  %v38 = vld [vmem:[%s1 + $0x8] sm:$0xf]
  %v39 = vld [vmem:[%s1 + $0xc] sm:$0xf]
  %v40 = vld [vmem:[%s1 + $0x10] sm:$0xf]
  %v41 = vld [vmem:[%s1 + $0x14] sm:$0xf]
  %v42 = vld [vmem:[%s1 + $0x18] sm:$0xf]
  %v43 = vld [vmem:[%s1 + $0x1c] sm:$0xf]
  %v44 = vld [vmem:[%s1 + $0x20] sm:$0xf]
  %v45 = vld [vmem:[%s1 + $0x24] sm:$0xf]
  %v46 = vld [vmem:[%s1 + $0x28] sm:$0xf]
  %v47 = vld [vmem:[%s1 + $0x2c] sm:$0xf]
  %v48 = vld [vmem:[%s1 + $0x30] sm:$0xf]
  %v49 = vld [vmem:[%s1 + $0x34] sm:$0xf]
  %v50 = vld [vmem:[%s1 + $0x38] sm:$0xf]
  %v51 = vld [vmem:[%s1 + $0x3c] sm:$0xf]
  %v52 = vld [vmem:[%s2] sm:$0x1]
  %v54 = vperm.slane %v52, 0
  %v72 = vunpack.c.l.b16 %v20
  %v73 = vunpack.c.l.b16 %v21
  %v74 = vunpack.c.l.b16 %v22
  %v75 = vunpack.c.l.b16 %v23
  %v76 = vunpack.c.l.b16 %v24
  %v77 = vunpack.c.l.b16 %v25
  %v78 = vunpack.c.l.b16 %v26
  %v79 = vunpack.c.l.b16 %v27
  %v80 = vunpack.c.l.b16 %v28
  %v81 = vunpack.c.l.b16 %v29
  %v82 = vunpack.c.l.b16 %v30
  %v83 = vunpack.c.l.b16 %v31
  %v84 = vunpack.c.l.b16 %v32
  %v85 = vunpack.c.l.b16 %v33
  %v86 = vunpack.c.l.b16 %v34
  %v87 = vunpack.c.l.b16 %v35
  %v88 = vpack.c.b16 %v73, %v72
  %v89 = vpack.c.b16 %v75, %v74
  %v90 = vpack.c.b16 %v77, %v76
  %v91 = vpack.c.b16 %v79, %v78
  %v92 = vpack.c.b16 %v81, %v80
  %v93 = vpack.c.b16 %v83, %v82
  %v94 = vpack.c.b16 %v85, %v84
  %v95 = vpack.c.b16 %v87, %v86
  %v120 = vunpack.c.l.b16 %v36
  %v121 = vunpack.c.l.b16 %v37
  %v122 = vunpack.c.l.b16 %v38
  %v123 = vunpack.c.l.b16 %v39
  %v124 = vunpack.c.l.b16 %v40
  %v125 = vunpack.c.l.b16 %v41
  %v126 = vunpack.c.l.b16 %v42
  %v127 = vunpack.c.l.b16 %v43
  %v128 = vunpack.c.l.b16 %v44
  %v129 = vunpack.c.l.b16 %v45
  %v130 = vunpack.c.l.b16 %v46
  %v131 = vunpack.c.l.b16 %v47
  %v132 = vunpack.c.l.b16 %v48
  %v133 = vunpack.c.l.b16 %v49
  %v134 = vunpack.c.l.b16 %v50
  %v135 = vunpack.c.l.b16 %v51
  %v136 = vpack.c.b16 %v121, %v120
  %v137 = vpack.c.b16 %v123, %v122
  %v138 = vpack.c.b16 %v125, %v124
  %v139 = vpack.c.b16 %v127, %v126
  %v140 = vpack.c.b16 %v129, %v128
  %v141 = vpack.c.b16 %v131, %v130
  %v142 = vpack.c.b16 %v133, %v132
  %v143 = vpack.c.b16 %v135, %v134
  %152 = vmatpush.bf16.msra.mxu0 %v143
  %153 = vmatpush.bf16.msra.mxu0 %v142
  %154 = vmatpush.bf16.msra.mxu0 %v141
  %155 = vmatpush.bf16.msra.mxu0 %v140
  %156 = vmatpush.bf16.msra.mxu0 %v139
  %157 = vmatpush.bf16.msra.mxu0 %v138
  %158 = vmatpush.bf16.msra.mxu0 %v137
  %159 = vmatpush.bf16.msra.mxu0 %v136
  %160 = vmatmul.bf16.gmra.mxu0 %v88
  %v161 = vpop.f32.mrf.mxu0
  %v162 = vadd.f32 %v54, %v161
  %v163 = vpop.f32.mrf.mxu0
  %v164 = vadd.f32 %v54, %v163
  %165 = vmatmul.bf16.gmra.mxu0 %v89
  %v166 = vpop.f32.mrf.mxu0
  %v167 = vadd.f32 %v54, %v166
  %v168 = vpop.f32.mrf.mxu0
  %v169 = vadd.f32 %v54, %v168
  %170 = vmatmul.bf16.gmra.mxu0 %v90
  %v171 = vpop.f32.mrf.mxu0
  %v172 = vadd.f32 %v54, %v171
  %v173 = vpop.f32.mrf.mxu0
  %v174 = vadd.f32 %v54, %v173
  %175 = vmatmul.bf16.gmra.mxu0 %v91
  %v176 = vpop.f32.mrf.mxu0
  %v177 = vadd.f32 %v54, %v176
  %v178 = vpop.f32.mrf.mxu0
  %v179 = vadd.f32 %v54, %v178
  %180 = vmatmul.bf16.gmra.mxu0 %v92
  %v181 = vpop.f32.mrf.mxu0
  %v182 = vadd.f32 %v54, %v181
  %v183 = vpop.f32.mrf.mxu0
  %v184 = vadd.f32 %v54, %v183
  %185 = vmatmul.bf16.gmra.mxu0 %v93
  %v186 = vpop.f32.mrf.mxu0
  %v187 = vadd.f32 %v54, %v186
  %v188 = vpop.f32.mrf.mxu0
  %v189 = vadd.f32 %v54, %v188
  %190 = vmatmul.bf16.gmra.mxu0 %v94
  %v191 = vpop.f32.mrf.mxu0
  %v192 = vadd.f32 %v54, %v191
  %v193 = vpop.f32.mrf.mxu0
  %v194 = vadd.f32 %v54, %v193
  %195 = vmatmul.bf16.gmra.mxu0 %v95
  %v196 = vpop.f32.mrf.mxu0
  %v197 = vadd.f32 %v54, %v196
  %v198 = vpop.f32.mrf.mxu0
  %v199 = vadd.f32 %v54, %v198
  %200 = vdwg.mxu0
  %v201 = vmax.f32 %v162, 0.0
  %v202 = vmax.f32 %v164, 0.0
  %v203 = vmax.f32 %v167, 0.0
  %v204 = vmax.f32 %v169, 0.0
  %v205 = vmax.f32 %v172, 0.0
  %v206 = vmax.f32 %v174, 0.0
  %v207 = vmax.f32 %v177, 0.0
  %v208 = vmax.f32 %v179, 0.0
  %v209 = vmax.f32 %v182, 0.0
  %v210 = vmax.f32 %v184, 0.0
  %v211 = vmax.f32 %v187, 0.0
  %v212 = vmax.f32 %v189, 0.0
  %v213 = vmax.f32 %v192, 0.0
  %v214 = vmax.f32 %v194, 0.0
  %v215 = vmax.f32 %v197, 0.0
  %v216 = vmax.f32 %v199, 0.0
  %v217 = vpack.c.bf16 %v202, %v201
  %v218 = vpack.c.bf16 %v204, %v203
  %v219 = vpack.c.bf16 %v206, %v205
  %v220 = vpack.c.bf16 %v208, %v207
  %v221 = vpack.c.bf16 %v210, %v209
  %v222 = vpack.c.bf16 %v212, %v211
  %v223 = vpack.c.bf16 %v214, %v213
  %v224 = vpack.c.bf16 %v216, %v215
  %v225 = vld [vmem:[%s3] sm:$0xf]
  %v226 = vld [vmem:[%s3 + $0x4] sm:$0xf]
  %v227 = vld [vmem:[%s3 + $0x8] sm:$0xf]
  %v228 = vld [vmem:[%s3 + $0xc] sm:$0xf]
  %v229 = vld [vmem:[%s3 + $0x10] sm:$0xf]
  %v230 = vld [vmem:[%s3 + $0x14] sm:$0xf]
  %v231 = vld [vmem:[%s3 + $0x18] sm:$0xf]
  %v232 = vld [vmem:[%s3 + $0x1c] sm:$0xf]
  %v233 = vld [vmem:[%s3 + $0x20] sm:$0xf]
  %v234 = vld [vmem:[%s3 + $0x24] sm:$0xf]
  %v235 = vld [vmem:[%s3 + $0x28] sm:$0xf]
  %v236 = vld [vmem:[%s3 + $0x2c] sm:$0xf]
  %v237 = vld [vmem:[%s3 + $0x30] sm:$0xf]
  %v238 = vld [vmem:[%s3 + $0x34] sm:$0xf]
  %v239 = vld [vmem:[%s3 + $0x38] sm:$0xf]
  %v240 = vld [vmem:[%s3 + $0x3c] sm:$0xf]
  %v241 = vld [vmem:[%s4] sm:$0x1]
  %v243 = vperm.slane %v241, 0
  %v261 = vunpack.c.l.b16 %v225
  %v262 = vunpack.c.l.b16 %v226
  %v263 = vunpack.c.l.b16 %v227
  %v264 = vunpack.c.l.b16 %v228
  %v265 = vunpack.c.l.b16 %v229
  %v266 = vunpack.c.l.b16 %v230
  %v267 = vunpack.c.l.b16 %v231
  %v268 = vunpack.c.l.b16 %v232
  %v269 = vunpack.c.l.b16 %v233
  %v270 = vunpack.c.l.b16 %v234
  %v271 = vunpack.c.l.b16 %v235
  %v272 = vunpack.c.l.b16 %v236
  %v273 = vunpack.c.l.b16 %v237
  %v274 = vunpack.c.l.b16 %v238
  %v275 = vunpack.c.l.b16 %v239
  %v276 = vunpack.c.l.b16 %v240
  %v277 = vpack.c.b16 %v262, %v261
  %v278 = vpack.c.b16 %v264, %v263
  %v279 = vpack.c.b16 %v266, %v265
  %v280 = vpack.c.b16 %v268, %v267
  %v281 = vpack.c.b16 %v270, %v269
  %v282 = vpack.c.b16 %v272, %v271
  %v283 = vpack.c.b16 %v274, %v273
  %v284 = vpack.c.b16 %v276, %v275
  %293 = vmatpush.bf16.msra.mxu0 %v284
  %294 = vmatpush.bf16.msra.mxu0 %v283
  %295 = vmatpush.bf16.msra.mxu0 %v282
  %296 = vmatpush.bf16.msra.mxu0 %v281
  %297 = vmatpush.bf16.msra.mxu0 %v280
  %298 = vmatpush.bf16.msra.mxu0 %v279
  %299 = vmatpush.bf16.msra.mxu0 %v278
  %300 = vmatpush.bf16.msra.mxu0 %v277
  %301 = vmatmul.bf16.gmra.mxu0 %v217
  %v302 = vpop.f32.mrf.mxu0
  %v303 = vadd.f32 %v243, %v302
  %v304 = vpop.f32.mrf.mxu0
  %v305 = vadd.f32 %v243, %v304
  %306 = vmatmul.bf16.gmra.mxu0 %v218
  %v307 = vpop.f32.mrf.mxu0
  %v308 = vadd.f32 %v243, %v307
  %v309 = vpop.f32.mrf.mxu0
  %v310 = vadd.f32 %v243, %v309
  %311 = vmatmul.bf16.gmra.mxu0 %v219
  %v312 = vpop.f32.mrf.mxu0
  %v313 = vadd.f32 %v243, %v312
  %v314 = vpop.f32.mrf.mxu0
  %v315 = vadd.f32 %v243, %v314
  %316 = vmatmul.bf16.gmra.mxu0 %v220
  %v317 = vpop.f32.mrf.mxu0
  %v318 = vadd.f32 %v243, %v317
  %v319 = vpop.f32.mrf.mxu0
  %v320 = vadd.f32 %v243, %v319
  %321 = vmatmul.bf16.gmra.mxu0 %v221
  %v322 = vpop.f32.mrf.mxu0
  %v323 = vadd.f32 %v243, %v322
  %v324 = vpop.f32.mrf.mxu0
  %v325 = vadd.f32 %v243, %v324
  %326 = vmatmul.bf16.gmra.mxu0 %v222
  %v327 = vpop.f32.mrf.mxu0
  %v328 = vadd.f32 %v243, %v327
  %v329 = vpop.f32.mrf.mxu0
  %v330 = vadd.f32 %v243, %v329
  %331 = vmatmul.bf16.gmra.mxu0 %v223
  %v332 = vpop.f32.mrf.mxu0
  %v333 = vadd.f32 %v243, %v332
  %v334 = vpop.f32.mrf.mxu0
  %v335 = vadd.f32 %v243, %v334
  %336 = vmatmul.bf16.gmra.mxu0 %v224
  %v337 = vpop.f32.mrf.mxu0
  %v338 = vadd.f32 %v243, %v337
  %v339 = vpop.f32.mrf.mxu0
  %v340 = vadd.f32 %v243, %v339
  %341 = vdwg.mxu0
  %342 = vst [vmem:[%s5] sm:$0xff] %v303
  %343 = vst [vmem:[%s5 + $0x8] sm:$0xff] %v305
  %344 = vst [vmem:[%s5 + $0x10] sm:$0xff] %v308
  %345 = vst [vmem:[%s5 + $0x18] sm:$0xff] %v310
  %346 = vst [vmem:[%s5 + $0x20] sm:$0xff] %v313
  %347 = vst [vmem:[%s5 + $0x28] sm:$0xff] %v315
  %348 = vst [vmem:[%s5 + $0x30] sm:$0xff] %v318
  %349 = vst [vmem:[%s5 + $0x38] sm:$0xff] %v320
  %350 = vst [vmem:[%s5 + $0x40] sm:$0xff] %v323
  %351 = vst [vmem:[%s5 + $0x48] sm:$0xff] %v325
  %352 = vst [vmem:[%s5 + $0x50] sm:$0xff] %v328
  %353 = vst [vmem:[%s5 + $0x58] sm:$0xff] %v330
  %354 = vst [vmem:[%s5 + $0x60] sm:$0xff] %v333
  %355 = vst [vmem:[%s5 + $0x68] sm:$0xff] %v335
  %356 = vst [vmem:[%s5 + $0x70] sm:$0xff] %v338
  %357 = vst [vmem:[%s5 + $0x78] sm:$0xff] %v340
  // Predicated region
  $region22: #{blazeneo_forward.17} parent=0 // pred_check
    _
  $region23: #{blazeneo_forward.17} parent=0 // pred_check_branch
    %359 = sbr.rel (0) target = $region25
  $region24: #{blazeneo_forward.17} parent=0 // pred_region
    _
  $region25: #{blazeneo_forward.17} parent=0 // pred_fallthru
    _
  // Predicated region
  $region26: #{blazeneo_forward.17} parent=0 // pred_check
    _
  $region27: #{blazeneo_forward.17} parent=0 // pred_check_branch
    %361 = sbr.rel (0) target = $region29
  $region28: #{blazeneo_forward.17} parent=0 // pred_region
    _
  $region29: #{blazeneo_forward.17} parent=0 // pred_fallthru
    _

</llo_original>
